<compile_context>
chip_gen: v7x
topology: tpu7x:2x2x1
jax: 0.10.0
libtpu: 0.0.40
codegen_flags: <defaults>
</compile_context>

<pallas_src>
import math
from functools import partial

import jax
import jax.numpy as jnp
from jax.experimental import pallas as pl
from jax.experimental.pallas import tpu as pltpu

NORM_EPS = 1e-6
NEG_INF = -1e30              # finite mask value (NaN-safe)
PAD_LEVEL = 1_000_000        # level for padded tokens (> every real level)
SEQ_ALIGN = 128              # sequence length padded to a multiple of this


# ----------------------------------------------------------------------------
# Hardware-derived knobs (guarded: always falls back to safe defaults)
# ----------------------------------------------------------------------------
def _derive_vmem_limit():
    try:
        cap = int(pltpu.get_tpu_info().vmem_capacity_bytes)
        lim = cap - 16 * 1024 * 1024          # leave headroom
        return max(32 * 1024 * 1024, min(lim, 112 * 1024 * 1024))
    except Exception:
        return 64 * 1024 * 1024


_VMEM_LIMIT = _derive_vmem_limit()


def _probe_buffered_one():
    """Check whether pipeline_mode=pl.Buffered(1) constructs, lowers and runs."""
    if not hasattr(pl, "Buffered"):
        return False
    try:
        def _copy(x_ref, o_ref):
            o_ref[...] = x_ref[...] + 1.0

        spec = pl.BlockSpec((8, 128), lambda i: (0, 0),
                            pipeline_mode=pl.Buffered(1))
        fn = pl.pallas_call(
            _copy,
            out_shape=jax.ShapeDtypeStruct((8, 128), jnp.float32),
            grid=(2,),
            in_specs=[spec],
            out_specs=pl.BlockSpec((8, 128), lambda i: (0, 0)),
        )
        jax.block_until_ready(fn(jnp.zeros((8, 128), jnp.float32)))
        return True
    except Exception:
        return False


_BUFFERED_ONE_OK = _probe_buffered_one()


def _resident_spec(block_shape, index_map):
    """BlockSpec for grid-constant (resident) operands: single-buffer if possible."""
    if _BUFFERED_ONE_OK:
        return pl.BlockSpec(block_shape, index_map, pipeline_mode=pl.Buffered(1))
    return pl.BlockSpec(block_shape, index_map)


def _cparams(sem):
    return pltpu.CompilerParams(dimension_semantics=sem,
                                vmem_limit_bytes=_VMEM_LIMIT)


# ----------------------------------------------------------------------------
# Small helpers
# ----------------------------------------------------------------------------
def _round_up(x, m):
    return ((x + m - 1) // m) * m


def _pick_tile(n, pref, quantum=128):
    """Largest multiple of `quantum` <= pref dividing n (n itself if n <= pref)."""
    if n <= pref:
        return n
    t = (pref // quantum) * quantum
    while t >= quantum:
        if n % t == 0:
            return t
        t -= quantum
    return n


def _layernorm_no_affine(z):
    mu = jnp.mean(z, axis=-1, keepdims=True)
    var = jnp.mean((z - mu) ** 2, axis=-1, keepdims=True)
    return (z - mu) * jax.lax.rsqrt(var + NORM_EPS)


# ----------------------------------------------------------------------------
# Kernels
# ----------------------------------------------------------------------------
def _linear2d_kernel(x_ref, w_ref, b_ref, o_ref):
    """o = x @ w + b  (x f32, w bf16, f32 accumulate)."""
    o_ref[...] = (jnp.dot(x_ref[...].astype(jnp.bfloat16), w_ref[...],
                          preferred_element_type=jnp.float32) + b_ref[...]
                  ).astype(o_ref.dtype)


def _silu_linear_kernel(cond_ref, w_ref, b_ref, o_ref):
    """o = SiLU(cond) @ w + b  (one grid step per stacked layer)."""
    c = cond_ref[...]
    s = c * jax.nn.sigmoid(c)
    o_ref[...] = (jnp.dot(s.astype(jnp.bfloat16), w_ref[...],
                          preferred_element_type=jnp.float32) + b_ref[...]
                  ).astype(o_ref.dtype)


def _qkv_kernel(x_ref, scale_ref, shift_ref, w_ref, b_ref, o_ref):
    """adaLN-modulated LayerNorm followed by the fused QKV projection."""
    h = (_layernorm_no_affine(x_ref[...]) * (1.0 + scale_ref[...])
         + shift_ref[...])                                        # (tl, C)
    o_ref[...] = (jnp.dot(h.astype(jnp.bfloat16), w_ref[...],
                          preferred_element_type=jnp.float32) + b_ref[...]
                  ).astype(o_ref.dtype)


def _flash_attn_kernel(last_ref, q_ref, k_ref, v_ref, lvlq_ref, lvlk_ref,
                       o_ref, m_sc, l_sc, acc_sc, *, hp, d):
    """Online-softmax attention for one (batch, head-group, q-tile); KV streamed.

    attn_scale is folded into Wq, so q arrives pre-scaled.  Fully-masked kv
    tiles (block-causal in levels) are skipped; their DMAs were redirected to
    the last valid tile by the index maps so they cost nothing.
    """
    qi = pl.program_id(2)
    ki = pl.program_id(3)

    @pl.when(ki == 0)
    def _():
        m_sc[...] = jnp.full_like(m_sc, NEG_INF)
        l_sc[...] = jnp.zeros_like(l_sc)
        acc_sc[...] = jnp.zeros_like(acc_sc)

    @pl.when(ki <= last_ref[qi])
    def _():
        mask = lvlq_ref[...] >= lvlk_ref[...]                      # (tq, tk)
        q = q_ref[...]                                             # (tq, hp*d) bf16
        k = k_ref[...]                                             # (tk, hp*d) bf16
        v = v_ref[...]
        for h in range(hp):
            lo, hi = h * d, (h + 1) * d
            s = jax.lax.dot_general(q[:, lo:hi], k[:, lo:hi],
                                    (((1,), (1,)), ((), ())),
                                    preferred_element_type=jnp.float32)
            s = jnp.where(mask, s, NEG_INF)
            m_prev = m_sc[h]                                       # (tq, 1)
            m_new = jnp.maximum(m_prev, jnp.max(s, axis=-1, keepdims=True))
            a = jnp.exp(m_prev - m_new)
            p = jnp.exp(s - m_new)                # masked entries underflow to 0
            l_sc[h] = a * l_sc[h] + jnp.sum(p, axis=-1, keepdims=True)
            acc_sc[:, lo:hi] = a * acc_sc[:, lo:hi] + jnp.dot(
                p.astype(v.dtype), v[:, lo:hi],
                preferred_element_type=jnp.float32)
            m_sc[h] = m_new

    @pl.when(ki == pl.num_programs(3) - 1)
    def _():
        parts = []
        for h in range(hp):
            inv = pl.reciprocal(l_sc[h], approx=True)              # (tq, 1)
            parts.append(acc_sc[:, h * d:(h + 1) * d] * inv)
        o_ref[...] = jnp.concatenate(parts, axis=-1).astype(o_ref.dtype)


def _post_kernel(x_ref, attn_ref, gamma1_ref, scale2_ref, shift2_ref, gamma2_ref,
                 projw_ref, projb_ref, fc1w_ref, fc1b_ref, fc2w_ref, fc2b_ref,
                 o_ref):
    """attn proj + residual, then adaLN2 + MLP(GELU-tanh) + residual (in place)."""
    x = x_ref[...]                                                 # (tl, C) f32
    proj = jnp.dot(attn_ref[...], projw_ref[...],
                   preferred_element_type=jnp.float32) + projb_ref[...]
    y = x + gamma1_ref[...] * proj
    h2 = _layernorm_no_affine(y) * (1.0 + scale2_ref[...]) + shift2_ref[...]
    f = jnp.dot(h2.astype(jnp.bfloat16), fc1w_ref[...],
                preferred_element_type=jnp.float32) + fc1b_ref[...]
    f = jax.nn.gelu(f, approximate=True)
    f2 = jnp.dot(f.astype(jnp.bfloat16), fc2w_ref[...],
                 preferred_element_type=jnp.float32) + fc2b_ref[...]
    o_ref[...] = (y + gamma2_ref[...] * f2).astype(o_ref.dtype)


def _head_kernel(x_ref, scale_ref, shift_ref, w_ref, b_ref, o_ref, h_sc):
    """AdaLNBeforeHead modulation (computed once per L tile) + head linear."""
    @pl.when(pl.program_id(2) == 0)
    def _():
        h = (_layernorm_no_affine(x_ref[...]) * (1.0 + scale_ref[...])
             + shift_ref[...])
        h_sc[...] = h.astype(h_sc.dtype)

    o_ref[...] = (jnp.dot(h_sc[...], w_ref[...],
                          preferred_element_type=jnp.float32) + b_ref[...]
                  ).astype(o_ref.dtype)


# ----------------------------------------------------------------------------
# pallas_call wrappers
# ----------------------------------------------------------------------------
def pallas_word_embed(x2d, w, b, *, tile_m=512):
    M, Cin = x2d.shape
    Cout = w.shape[1]
    Mp = _round_up(M, 128)
    if Mp != M:
        x2d = jnp.pad(x2d, ((0, Mp - M), (0, 0)))
    tm = _pick_tile(Mp, tile_m)
    out = pl.pallas_call(
        _linear2d_kernel,
        out_shape=jax.ShapeDtypeStruct((Mp, Cout), jnp.float32),
        grid=(Mp // tm,),
        in_specs=[pl.BlockSpec((tm, Cin), lambda i: (i, 0)),
                  _resident_spec((Cin, Cout), lambda i: (0, 0)),
                  _resident_spec((1, Cout), lambda i: (0, 0))],
        out_specs=pl.BlockSpec((tm, Cout), lambda i: (i, 0)),
        compiler_params=_cparams(("parallel",)),
    )(x2d, w, b)
    return out[:M] if Mp != M else out


def pallas_silu_linear_stack(cond, w_stack, b_stack):
    """SiLU(cond) @ w[l] + b[l] for every stacked layer l in one call."""
    depth, D, Cout = w_stack.shape
    B = cond.shape[0]
    return pl.pallas_call(
        _silu_linear_kernel,
        out_shape=jax.ShapeDtypeStruct((depth, B, Cout), jnp.float32),
        grid=(depth,),
        in_specs=[pl.BlockSpec((B, D), lambda l: (0, 0)),
                  pl.BlockSpec((None, D, Cout), lambda l: (l, 0, 0)),
                  pl.BlockSpec((None, 1, Cout), lambda l: (l, 0, 0))],
        out_specs=pl.BlockSpec((None, B, Cout), lambda l: (l, 0, 0)),
        compiler_params=_cparams(("parallel",)),
    )(cond, w_stack, b_stack)


def pallas_qkv(x, scale1, shift1, w_qkv, b_qkv, *, tile_l=512):
    """Fused adaLN-LN + single (C, 3C) QKV projection.  scale1/shift1: (B, 1, C)."""
    B, Lp, C = x.shape
    C3 = w_qkv.shape[1]
    tl = _pick_tile(Lp, tile_l)
    return pl.pallas_call(
        _qkv_kernel,
        out_shape=jax.ShapeDtypeStruct((B, Lp, C3), jnp.bfloat16),
        grid=(B, Lp // tl),
        in_specs=[pl.BlockSpec((None, tl, C), lambda b, i: (b, i, 0)),
                  pl.BlockSpec((None, 1, C), lambda b, i: (b, 0, 0)),
                  pl.BlockSpec((None, 1, C), lambda b, i: (b, 0, 0)),
                  _resident_spec((C, C3), lambda b, i: (0, 0)),
                  _resident_spec((1, C3), lambda b, i: (0, 0))],
        out_specs=pl.BlockSpec((None, tl, C3), lambda b, i: (b, i, 0)),
        compiler_params=_cparams(("parallel", "parallel")),
    )(x, scale1, shift1, w_qkv, b_qkv)


def pallas_flash_attn(qkv, lvl_pad, *, num_heads, head_dim,
                      tile_q=256, tile_kv=256):
    """Flash attention reading directly from the fused (B, Lp, 3C) QKV array.

    Output is (B, Lp, C) bf16 in the residual-stream channel layout (no XLA
    transposes).  Heads are packed per grid step so output tiles are 128-lane
    dense when head_dim=64.
    """
    B, Lp, C3 = qkv.shape
    C = C3 // 3
    H, d = num_heads, head_dim

    hp = max(1, min(H, 128 // max(d, 1)))         # heads per grid step
    while hp > 1 and H % hp:
        hp -= 1
    hpd = hp * d
    n_hg = H // hp
    n_cblk = C // hpd                             # channel blocks per q / k / v

    tq = _pick_tile(Lp, tile_q)
    tk = _pick_tile(Lp, tile_kv)
    nq, nk = Lp // tq, Lp // tk

    # Block-causal tile schedule: last valid kv tile per q tile.
    q_max = jnp.max(lvl_pad.reshape(nq, tq), axis=1)
    kv_min = jnp.min(lvl_pad.reshape(nk, tk), axis=1)
    valid = kv_min[None, :] <= q_max[:, None]                       # (nq, nk)
    kidx = jax.lax.broadcasted_iota(jnp.int32, (nq, nk), 1)
    kv_last = jnp.max(jnp.where(valid, kidx, 0), axis=1).astype(jnp.int32)

    lvl_col = lvl_pad.reshape(Lp, 1)
    lvl_row = lvl_pad.reshape(1, Lp)

    def q_index(b, hg, qi, ki, last_ref):
        return (b, qi, hg)

    def k_index(b, hg, qi, ki, last_ref):
        return (b, jnp.minimum(ki, last_ref[qi]), n_cblk + hg)

    def v_index(b, hg, qi, ki, last_ref):
        return (b, jnp.minimum(ki, last_ref[qi]), 2 * n_cblk + hg)

    def lvlq_index(b, hg, qi, ki, last_ref):
        return (qi, 0)

    def lvlk_index(b, hg, qi, ki, last_ref):
        return (0, jnp.minimum(ki, last_ref[qi]))

    kernel = partial(_flash_attn_kernel, hp=hp, d=d)
    grid_spec = pltpu.PrefetchScalarGridSpec(
        num_scalar_prefetch=1,
        grid=(B, n_hg, nq, nk),
        in_specs=[pl.BlockSpec((None, tq, hpd), q_index),
                  pl.BlockSpec((None, tk, hpd), k_index),
                  pl.BlockSpec((None, tk, hpd), v_index),
                  pl.BlockSpec((tq, 1), lvlq_index),
                  pl.BlockSpec((1, tk), lvlk_index)],
        out_specs=pl.BlockSpec((None, tq, hpd), q_index),
        scratch_shapes=[pltpu.VMEM((hp, tq, 1), jnp.float32),
                        pltpu.VMEM((hp, tq, 1), jnp.float32),
                        pltpu.VMEM((tq, hpd), jnp.float32)],
    )
    return pl.pallas_call(
        kernel,
        out_shape=jax.ShapeDtypeStruct((B, Lp, C), jnp.bfloat16),
        grid_spec=grid_spec,
        compiler_params=_cparams(
            ("parallel", "parallel", "parallel", "arbitrary")),
    )(kv_last, qkv, qkv, qkv, lvl_col, lvl_row)


def pallas_block_post(x, attn, gamma1, scale2, shift2, gamma2,
                      proj_w, proj_b, fc1_w, fc1_b, fc2_w, fc2_b, *, tile_l=512):
    B, Lp, C = x.shape
    Hm = fc1_w.shape[1]
    tl = _pick_tile(Lp, tile_l)
    sx = pl.BlockSpec((None, tl, C), lambda b, i: (b, i, 0))
    sbc = pl.BlockSpec((None, 1, C), lambda b, i: (b, 0, 0))
    return pl.pallas_call(
        _post_kernel,
        out_shape=jax.ShapeDtypeStruct((B, Lp, C), jnp.float32),
        grid=(B, Lp // tl),
        in_specs=[sx, sx, sbc, sbc, sbc, sbc,
                  _resident_spec((C, C), lambda b, i: (0, 0)),
                  _resident_spec((1, C), lambda b, i: (0, 0)),
                  _resident_spec((C, Hm), lambda b, i: (0, 0)),
                  _resident_spec((1, Hm), lambda b, i: (0, 0)),
                  _resident_spec((Hm, C), lambda b, i: (0, 0)),
                  _resident_spec((1, C), lambda b, i: (0, 0))],
        out_specs=sx,
        input_output_aliases={0: 0},          # residual stream updated in place
        compiler_params=_cparams(("parallel", "parallel")),
    )(x, attn, gamma1, scale2, shift2, gamma2,
      proj_w, proj_b, fc1_w, fc1_b, fc2_w, fc2_b)


def pallas_head(x, scale, shift, head_w, head_b, *, tile_l=512, tile_v=512):
    """AdaLNBeforeHead + classification head.  scale/shift: (B, 1, C)."""
    B, Lp, C = x.shape
    V = head_w.shape[1]
    tl = _pick_tile(Lp, tile_l)
    tv = _pick_tile(V, tile_v)
    return pl.pallas_call(
        _head_kernel,
        out_shape=jax.ShapeDtypeStruct((B, Lp, V), jnp.float32),
        grid=(B, Lp // tl, V // tv),
        in_specs=[pl.BlockSpec((None, tl, C), lambda b, li, vi: (b, li, 0)),
                  pl.BlockSpec((None, 1, C), lambda b, li, vi: (b, 0, 0)),
                  pl.BlockSpec((None, 1, C), lambda b, li, vi: (b, 0, 0)),
                  pl.BlockSpec((C, tv), lambda b, li, vi: (0, vi)),
                  pl.BlockSpec((1, tv), lambda b, li, vi: (0, vi))],
        out_specs=pl.BlockSpec((None, tl, tv), lambda b, li, vi: (b, li, vi)),
        scratch_shapes=[pltpu.VMEM((tl, C), jnp.bfloat16)],
        compiler_params=_cparams(("parallel", "parallel", "arbitrary")),
    )(x, scale, shift, head_w, head_b)


# ----------------------------------------------------------------------------
# Parameter construction (deterministic, synthetic; weights stored bf16)
# ----------------------------------------------------------------------------
def _trunc_normal(key, shape, std):
    return jax.random.truncated_normal(key, -2.0, 2.0, shape, jnp.float32) * std


def init_var_params(key, *, patch_nums, Cvae, C, D, num_heads, depth,
                    mlp_ratio, num_classes, vocab_size):
    L = sum(pn * pn for pn in patch_nums)
    first_l = patch_nums[0] ** 2
    hidden = round(C * mlp_ratio)
    head_dim = C // num_heads
    attn_scale = 0.25 / math.sqrt(head_dim)   # VAR SelfAttention, attn_l2_norm=False
    init_std = math.sqrt(1.0 / C / 3.0)
    bf16 = jnp.bfloat16

    keys = iter(jax.random.split(key, 16 + 8 * depth))
    p = {}
    p["class_emb"] = _trunc_normal(next(keys), (num_classes + 1, C), init_std)
    p["pos_start"] = _trunc_normal(next(keys), (1, first_l, C), init_std)
    p["pos_1LC"] = _trunc_normal(next(keys), (1, L, C), init_std)
    p["lvl_embed"] = _trunc_normal(next(keys), (len(patch_nums), C), init_std)

    # word_embed: nn.Linear(Cvae, C), stored pre-transposed (in, out) in bf16
    p["word_w"] = _trunc_normal(next(keys), (Cvae, C), 0.02).astype(bf16)
    p["word_b"] = jnp.zeros((1, C), jnp.float32)

    # per-token level indices (drive the block-causal mask inside the kernel)
    p["lvl_1L"] = jnp.concatenate(
        [jnp.full((pn * pn,), i, jnp.int32) for i, pn in enumerate(patch_nums)])

    # per-block adaLN linear, stacked over depth (hoisted out of block kernel)
    p["ada_w_all"] = _trunc_normal(next(keys), (depth, D, 6 * C), 0.02).astype(bf16)
    p["ada_b_all"] = jnp.zeros((depth, 1, 6 * C), jnp.float32)

    blocks = []
    for _ in range(depth):
        wq = _trunc_normal(next(keys), (C, C), 0.02) * attn_scale  # scale folded in
        wk = _trunc_normal(next(keys), (C, C), 0.02)
        wv = _trunc_normal(next(keys), (C, C), 0.02)
        blk = {
            # fused QKV weight (C, 3C); k bias is the zero_k_bias buffer
            "w_qkv": jnp.concatenate([wq, wk, wv], axis=1).astype(bf16),
            "b_qkv": jnp.zeros((1, 3 * C), jnp.float32),
            "proj_w": (_trunc_normal(next(keys), (C, C), 0.02)
                       / math.sqrt(2 * depth)).astype(bf16),
            "proj_b": jnp.zeros((1, C), jnp.float32),
            "fc1_w": _trunc_normal(next(keys), (C, hidden), 0.02).astype(bf16),
            "fc1_b": jnp.zeros((1, hidden), jnp.float32),
            "fc2_w": (_trunc_normal(next(keys), (hidden, C), 0.02)
                      / math.sqrt(2 * depth)).astype(bf16),
            "fc2_b": jnp.zeros((1, C), jnp.float32),
        }
        blocks.append(blk)
    p["blocks"] = blocks

    # AdaLNBeforeHead (stacked with leading dim 1 for the shared silu-linear kernel)
    p["head_nm_w"] = _trunc_normal(next(keys), (1, D, 2 * C), 0.02).astype(bf16)
    p["head_nm_b"] = jnp.zeros((1, 1, 2 * C), jnp.float32)
    p["head_w"] = (_trunc_normal(next(keys), (C, vocab_size), 0.02) * 0.02).astype(bf16)
    p["head_b"] = jnp.zeros((1, vocab_size), jnp.float32)
    return p


# ----------------------------------------------------------------------------
# VAR.forward (teacher-forcing training forward) in JAX + Pallas
# ----------------------------------------------------------------------------
def var_forward(params, label_B, x_BLCv_wo_first_l, drop_key, *,
                num_classes, cond_drop_rate, num_heads):
    B = x_BLCv_wo_first_l.shape[0]
    C = params["class_emb"].shape[1]
    L = params["pos_1LC"].shape[1]
    first_l = params["pos_start"].shape[1]
    head_dim = C // num_heads

    # conditional dropout of the class label (torch.rand -> jax.random here)
    rand = jax.random.uniform(drop_key, (B,), jnp.float32)
    label = jnp.where(rand < cond_drop_rate, num_classes, label_B)

    sos = cond_BD = params["class_emb"][label]                      # (B, C)
    sos = sos[:, None, :] + params["pos_start"]                     # (B, first_l, C)

    # word_embed as one tall 2-D matmul (B*(L-first_l), Cvae) @ (Cvae, C)
    x_wo = x_BLCv_wo_first_l.astype(jnp.float32)
    M = B * (L - first_l)
    we = pallas_word_embed(x_wo.reshape(M, -1), params["word_w"],
                           params["word_b"]).reshape(B, L - first_l, C)

    x_BLC = jnp.concatenate([sos, we], axis=1)                      # (B, L, C)
    lvl_pos = params["lvl_embed"][params["lvl_1L"]][None, :, :] + params["pos_1LC"]
    x_BLC = (x_BLC + lvl_pos).astype(jnp.float32)

    # pad the sequence once so every kernel gets aligned, MXU-friendly tiles;
    # pad tokens get a huge level so no real token ever attends to them
    Lp = _round_up(L, SEQ_ALIGN)
    pad = Lp - L
    if pad:
        x_BLC = jnp.pad(x_BLC, ((0, 0), (0, pad), (0, 0)))
        lvl_pad = jnp.concatenate(
            [params["lvl_1L"], jnp.full((pad,), PAD_LEVEL, jnp.int32)])
    else:
        lvl_pad = params["lvl_1L"]

    cond = cond_BD.astype(jnp.float32)

    # all per-layer adaLN modulation vectors in one tiny depth-gridded call
    ada_all = pallas_silu_linear_stack(cond, params["ada_w_all"], params["ada_b_all"])
    depth = params["ada_w_all"].shape[0]
    # (depth, 6, B, 1, C): [gamma1, gamma2, scale1, scale2, shift1, shift2]
    mods = ada_all.reshape(depth, B, 6, C).transpose(0, 2, 1, 3)[:, :, :, None, :]

    for l, blk in enumerate(params["blocks"]):
        gamma1, gamma2 = mods[l, 0], mods[l, 1]
        scale1, scale2 = mods[l, 2], mods[l, 3]
        shift1, shift2 = mods[l, 4], mods[l, 5]

        qkv = pallas_qkv(x_BLC, scale1, shift1, blk["w_qkv"], blk["b_qkv"])
        attn = pallas_flash_attn(qkv, lvl_pad,
                                 num_heads=num_heads, head_dim=head_dim)
        x_BLC = pallas_block_post(x_BLC, attn, gamma1, scale2, shift2, gamma2,
                                  blk["proj_w"], blk["proj_b"],
                                  blk["fc1_w"], blk["fc1_b"],
                                  blk["fc2_w"], blk["fc2_b"])

    # AdaLNBeforeHead modulation + head linear
    head_mod = pallas_silu_linear_stack(cond, params["head_nm_w"],
                                        params["head_nm_b"])[0]      # (B, 2C)
    hm = head_mod.reshape(B, 2, 1, C)
    logits = pallas_head(x_BLC, hm[:, 0], hm[:, 1],
                         params["head_w"], params["head_b"])          # (B, Lp, V)
    return logits[:, :L]


# TODO(synk): autoregressive_infer_cfg (KV-caching inference path + VQVAE
# codebook lookups / fhat_to_img) is not translated; only VAR.forward is.

# ----------------------------------------------------------------------------
# Demo
# ----------------------------------------------------------------------------
if __name__ == "__main__":
    # small, VAR-consistent config (head_dim = 64 like real VAR)
    patch_nums = (1, 2, 3)            # L = 1 + 4 + 9 = 14, first_l = 1
    Cvae = 16
    C = D = 128
    num_heads = 2
    depth = 2
    mlp_ratio = 4.0
    num_classes = 10
    vocab_size = 256
    cond_drop_rate = 0.1
    B = 2
    L = sum(pn * pn for pn in patch_nums)
    first_l = patch_nums[0] ** 2

    key = jax.random.PRNGKey(0)
    k_param, k_x, k_drop = jax.random.split(key, 3)

    params = init_var_params(
        k_param, patch_nums=patch_nums, Cvae=Cvae, C=C, D=D,
        num_heads=num_heads, depth=depth, mlp_ratio=mlp_ratio,
        num_classes=num_classes, vocab_size=vocab_size)

    label_B = jnp.array([3, 7], dtype=jnp.int32)                     # (B,)
    x_BLCv_wo_first_l = jax.random.normal(k_x, (B, L - first_l, Cvae), jnp.float32)

    fwd = jax.jit(partial(var_forward,
                          num_classes=num_classes,
                          cond_drop_rate=cond_drop_rate,
                          num_heads=num_heads))
    logits = fwd(params, label_B, x_BLCv_wo_first_l, k_drop)
    jax.block_until_ready(logits)

    assert logits.shape == (B, L, vocab_size), logits.shape
    assert logits.dtype == jnp.float32
    assert bool(jnp.all(jnp.isfinite(logits)))
    print("KERNEL_OK")
</pallas_src>

<mosaic_0001>
module attributes {stable_mosaic.version = 11 : i64} {
  func.func @_copy(%arg0: i32, %arg1: memref<8x128xf32, #tpu.memory_space<vmem>>, %arg2: memref<8x128xf32, #tpu.memory_space<vmem>>) attributes {dimension_semantics = [#tpu.dimension_semantics<arbitrary>], iteration_bounds = array<i64: 2>, scalar_prefetch = 0 : i64, scratch_operands = 0 : i64, tpu.core_type = #tpu.core_type<tc>, window_params = [{pipeline_mode = #tpu.pipeline_mode<synchronous>, transform_indices = @transform_0, window_bounds = array<i64: 8, 128>}, {pipeline_mode = #tpu.pipeline_mode<synchronous>, transform_indices = @transform_1, window_bounds = array<i64: 8, 128>}]} {
    %c0 = arith.constant 0 : index
    %c0_0 = arith.constant 0 : index
    %0 = vector.load %arg1[%c0, %c0_0] : memref<8x128xf32, #tpu.memory_space<vmem>>, vector<8x128xf32>
    %cst = arith.constant 1.000000e+00 : f32
    %1 = vector.broadcast %cst : f32 to vector<8x128xf32>
    %2 = arith.addf %0, %1 : vector<8x128xf32>
    %c0_1 = arith.constant 0 : index
    %c0_2 = arith.constant 0 : index
    %3 = vector.load %arg2[%c0_1, %c0_2] : memref<8x128xf32, #tpu.memory_space<vmem>>, vector<8x128xf32>
    tpu.vector_store %arg2[%c0_1, %c0_2], %2 {strides = array<i32>} : memref<8x128xf32, #tpu.memory_space<vmem>>, vector<8x128xf32>,
    return
  }
  func.func @transform_0(%arg0: i32) -> (i32, i32) {
    %c0_i32 = arith.constant 0 : i32
    %c0_i32_0 = arith.constant 0 : i32
    %c0_i32_1 = arith.constant 0 : i32
    return %c0_i32, %c0_i32_0 : i32, i32
  }
  func.func @transform_1(%arg0: i32) -> (i32, i32) {
    %c0_i32 = arith.constant 0 : i32
    %c0_i32_0 = arith.constant 0 : i32
    %c0_i32_1 = arith.constant 0 : i32
    return %c0_i32, %c0_i32_0 : i32, i32
  }
}

module attributes {stable_mosaic.version = 11 : i64} {
  func.func @_silu_linear_kernel(%arg0: i32, %arg1: memref<2x128xf32, #tpu.memory_space<vmem>>, %arg2: memref<1x128x768xbf16, #tpu.memory_space<vmem>>, %arg3: memref<1x1x768xf32, #tpu.memory_space<vmem>>, %arg4: memref<1x2x768xf32, #tpu.memory_space<vmem>>) attributes {dimension_semantics = [#tpu.dimension_semantics<parallel>], iteration_bounds = array<i64: 2>, scalar_prefetch = 0 : i64, scratch_operands = 0 : i64, tpu.core_type = #tpu.core_type<tc>, window_params = [{pipeline_mode = #tpu.pipeline_mode<synchronous>, transform_indices = @transform_0, window_bounds = array<i64: 2, 128>}, {transform_indices = @transform_1, window_bounds = array<i64: 1, 128, 768>}, {transform_indices = @transform_2, window_bounds = array<i64: 1, 1, 768>}, {transform_indices = @transform_3, window_bounds = array<i64: 1, 2, 768>}]} {
    %c0 = arith.constant 0 : index
    %c0_0 = arith.constant 0 : index
    %0 = vector.load %arg1[%c0, %c0_0] : memref<2x128xf32, #tpu.memory_space<vmem>>, vector<2x128xf32>
    %1 = arith.negf %0 : vector<2x128xf32>
    %2 = math.exp %1 : vector<2x128xf32>
    %cst = arith.constant 1.000000e+00 : f32
    %3 = vector.broadcast %cst : f32 to vector<2x128xf32>
    %4 = arith.addf %3, %2 : vector<2x128xf32>
    %5 = arith.divf %3, %4 : vector<2x128xf32>
    %6 = arith.mulf %0, %5 : vector<2x128xf32>
    %7 = arith.truncf %6 : vector<2x128xf32> to vector<2x128xbf16>
    %c0_1 = arith.constant 0 : index
    %c0_2 = arith.constant 0 : index
    %c0_3 = arith.constant 0 : index
    %8 = vector.load %arg2[%c0_1, %c0_2, %c0_3] : memref<1x128x768xbf16, #tpu.memory_space<vmem>>, vector<1x128x768xbf16>
    %9 = vector.shape_cast %8 : vector<1x128x768xbf16> to vector<128x768xbf16>
    %cst_4 = arith.constant dense<0.000000e+00> : vector<2x768xf32>
    %10 = tpu.matmul %7, %9, %cst_4 {dimension_numbers = #tpu.dot_dimension_numbers<[1], [0], [0], [1], [0, 0, 1, 1], [], []>} : vector<2x128xbf16>, vector<128x768xbf16>, vector<2x768xf32> -> vector<2x768xf32>
    %c0_5 = arith.constant 0 : index
    %c0_6 = arith.constant 0 : index
    %c0_7 = arith.constant 0 : index
    %11 = vector.load %arg3[%c0_5, %c0_6, %c0_7] : memref<1x1x768xf32, #tpu.memory_space<vmem>>, vector<1x1x768xf32>
    %12 = vector.shape_cast %11 : vector<1x1x768xf32> to vector<1x768xf32>
    %13 = vector.broadcast %12 : vector<1x768xf32> to vector<2x768xf32>
    %14 = arith.addf %10, %13 : vector<2x768xf32>
    %c0_8 = arith.constant 0 : index
    %c0_9 = arith.constant 0 : index
    %c0_10 = arith.constant 0 : index
    %15 = vector.load %arg4[%c0_8, %c0_9, %c0_10] : memref<1x2x768xf32, #tpu.memory_space<vmem>>, vector<1x2x768xf32>
    %16 = vector.shape_cast %15 : vector<1x2x768xf32> to vector<2x768xf32>
    %17 = vector.shape_cast %14 : vector<2x768xf32> to vector<1x2x768xf32>
    tpu.vector_store %arg4[%c0_8, %c0_9, %c0_10], %17 {strides = array<i32>} : memref<1x2x768xf32, #tpu.memory_space<vmem>>, vector<1x2x768xf32>,
    return
  }
  func.func @transform_0(%arg0: i32) -> (i32, i32) {
    %c0_i32 = arith.constant 0 : i32
    %c0_i32_0 = arith.constant 0 : i32
    %c0_i32_1 = arith.constant 0 : i32
    return %c0_i32, %c0_i32_0 : i32, i32
  }
  func.func @transform_1(%arg0: i32) -> (i32, i32, i32) {
    %c0_i32 = arith.constant 0 : i32
    %c0_i32_0 = arith.constant 0 : i32
    %c0_i32_1 = arith.constant 0 : i32
    return %arg0, %c0_i32, %c0_i32_0 : i32, i32, i32
  }
  func.func @transform_2(%arg0: i32) -> (i32, i32, i32) {
    %c0_i32 = arith.constant 0 : i32
    %c0_i32_0 = arith.constant 0 : i32
    %c0_i32_1 = arith.constant 0 : i32
    return %arg0, %c0_i32, %c0_i32_0 : i32, i32, i32
  }
  func.func @transform_3(%arg0: i32) -> (i32, i32, i32) {
    %c0_i32 = arith.constant 0 : i32
    %c0_i32_0 = arith.constant 0 : i32
    %c0_i32_1 = arith.constant 0 : i32
    return %arg0, %c0_i32, %c0_i32_0 : i32, i32, i32
  }
}

module attributes {stable_mosaic.version = 11 : i64} {
  func.func @_linear2d_kernel(%arg0: i32, %arg1: memref<128x16xf32, #tpu.memory_space<vmem>>, %arg2: memref<16x128xbf16, #tpu.memory_space<vmem>>, %arg3: memref<1x128xf32, #tpu.memory_space<vmem>>, %arg4: memref<128x128xf32, #tpu.memory_space<vmem>>) attributes {dimension_semantics = [#tpu.dimension_semantics<parallel>], iteration_bounds = array<i64: 1>, scalar_prefetch = 0 : i64, scratch_operands = 0 : i64, tpu.core_type = #tpu.core_type<tc>, window_params = [{transform_indices = @transform_0, window_bounds = array<i64: 128, 16>}, {pipeline_mode = #tpu.pipeline_mode<synchronous>, transform_indices = @transform_1, window_bounds = array<i64: 16, 128>}, {pipeline_mode = #tpu.pipeline_mode<synchronous>, transform_indices = @transform_2, window_bounds = array<i64: 1, 128>}, {transform_indices = @transform_3, window_bounds = array<i64: 128, 128>}]} {
    %c0 = arith.constant 0 : index
    %c0_0 = arith.constant 0 : index
    %0 = vector.load %arg1[%c0, %c0_0] : memref<128x16xf32, #tpu.memory_space<vmem>>, vector<128x16xf32>
    %1 = arith.truncf %0 : vector<128x16xf32> to vector<128x16xbf16>
    %c0_1 = arith.constant 0 : index
    %c0_2 = arith.constant 0 : index
    %2 = vector.load %arg2[%c0_1, %c0_2] : memref<16x128xbf16, #tpu.memory_space<vmem>>, vector<16x128xbf16>
    %cst = arith.constant dense<0.000000e+00> : vector<128x128xf32>
    %3 = tpu.matmul %1, %2, %cst {dimension_numbers = #tpu.dot_dimension_numbers<[1], [0], [0], [1], [0, 0, 1, 1], [], []>} : vector<128x16xbf16>, vector<16x128xbf16>, vector<128x128xf32> -> vector<128x128xf32>
    %c0_3 = arith.constant 0 : index
    %c0_4 = arith.constant 0 : index
    %4 = vector.load %arg3[%c0_3, %c0_4] : memref<1x128xf32, #tpu.memory_space<vmem>>, vector<1x128xf32>
    %5 = vector.broadcast %4 : vector<1x128xf32> to vector<128x128xf32>
    %6 = arith.addf %3, %5 : vector<128x128xf32>
    %c0_5 = arith.constant 0 : index
    %c0_6 = arith.constant 0 : index
    %7 = vector.load %arg4[%c0_5, %c0_6] : memref<128x128xf32, #tpu.memory_space<vmem>>, vector<128x128xf32>
    tpu.vector_store %arg4[%c0_5, %c0_6], %6 {strides = array<i32>} : memref<128x128xf32, #tpu.memory_space<vmem>>, vector<128x128xf32>,
    return
  }
  func.func @transform_0(%arg0: i32) -> (i32, i32) {
    %c0_i32 = arith.constant 0 : i32
    %c0_i32_0 = arith.constant 0 : i32
    return %arg0, %c0_i32 : i32, i32
  }
  func.func @transform_1(%arg0: i32) -> (i32, i32) {
    %c0_i32 = arith.constant 0 : i32
    %c0_i32_0 = arith.constant 0 : i32
    %c0_i32_1 = arith.constant 0 : i32
    return %c0_i32, %c0_i32_0 : i32, i32
  }
  func.func @transform_2(%arg0: i32) -> (i32, i32) {
    %c0_i32 = arith.constant 0 : i32
    %c0_i32_0 = arith.constant 0 : i32
    %c0_i32_1 = arith.constant 0 : i32
    return %c0_i32, %c0_i32_0 : i32, i32
  }
  func.func @transform_3(%arg0: i32) -> (i32, i32) {
    %c0_i32 = arith.constant 0 : i32
    %c0_i32_0 = arith.constant 0 : i32
    return %arg0, %c0_i32 : i32, i32
  }
}

module attributes {stable_mosaic.version = 11 : i64} {
  func.func @_qkv_kernel(%arg0: i32, %arg1: i32, %arg2: memref<1x128x128xf32, #tpu.memory_space<vmem>>, %arg3: memref<1x1x128xf32, #tpu.memory_space<vmem>>, %arg4: memref<1x1x128xf32, #tpu.memory_space<vmem>>, %arg5: memref<128x384xbf16, #tpu.memory_space<vmem>>, %arg6: memref<1x384xf32, #tpu.memory_space<vmem>>, %arg7: memref<1x128x384xbf16, #tpu.memory_space<vmem>>) attributes {dimension_semantics = [#tpu.dimension_semantics<parallel>, #tpu.dimension_semantics<parallel>], iteration_bounds = array<i64: 2, 1>, scalar_prefetch = 0 : i64, scratch_operands = 0 : i64, tpu.core_type = #tpu.core_type<tc>, window_params = [{transform_indices = @transform_0, window_bounds = array<i64: 1, 128, 128>}, {transform_indices = @transform_1, window_bounds = array<i64: 1, 1, 128>}, {transform_indices = @transform_2, window_bounds = array<i64: 1, 1, 128>}, {pipeline_mode = #tpu.pipeline_mode<synchronous>, transform_indices = @transform_3, window_bounds = array<i64: 128, 384>}, {pipeline_mode = #tpu.pipeline_mode<synchronous>, transform_indices = @transform_4, window_bounds = array<i64: 1, 384>}, {transform_indices = @transform_5, window_bounds = array<i64: 1, 128, 384>}]} {
    %c0 = arith.constant 0 : index
    %c0_0 = arith.constant 0 : index
    %c0_1 = arith.constant 0 : index
    %0 = vector.load %arg2[%c0, %c0_0, %c0_1] : memref<1x128x128xf32, #tpu.memory_space<vmem>>, vector<1x128x128xf32>
    %1 = vector.shape_cast %0 : vector<1x128x128xf32> to vector<128x128xf32>
    %cst = arith.constant dense<0.000000e+00> : vector<128xf32>
    %2 = vector.multi_reduction <add>, %1, %cst [1] : vector<128x128xf32> to vector<128xf32>
    %3 = vector.shape_cast %2 : vector<128xf32> to vector<128x1xf32>
    %cst_2 = arith.constant 1.280000e+02 : f32
    %4 = vector.broadcast %cst_2 : f32 to vector<128x1xf32>
    %5 = arith.divf %3, %4 : vector<128x1xf32>
    %6 = vector.broadcast %5 : vector<128x1xf32> to vector<128x128xf32>
    %7 = arith.subf %1, %6 : vector<128x128xf32>
    %8 = arith.mulf %7, %7 : vector<128x128xf32>
    %cst_3 = arith.constant dense<0.000000e+00> : vector<128xf32>
    %9 = vector.multi_reduction <add>, %8, %cst_3 [1] : vector<128x128xf32> to vector<128xf32>
    %10 = vector.shape_cast %9 : vector<128xf32> to vector<128x1xf32>
    %cst_4 = arith.constant 1.280000e+02 : f32
    %11 = vector.broadcast %cst_4 : f32 to vector<128x1xf32>
    %12 = arith.divf %10, %11 : vector<128x1xf32>
    %13 = vector.broadcast %5 : vector<128x1xf32> to vector<128x128xf32>
    %14 = arith.subf %1, %13 : vector<128x128xf32>
    %cst_5 = arith.constant 9.99999997E-7 : f32
    %15 = vector.broadcast %cst_5 : f32 to vector<128x1xf32>
    %16 = arith.addf %12, %15 : vector<128x1xf32>
    %17 = math.rsqrt %16 : vector<128x1xf32>
    %18 = vector.broadcast %17 : vector<128x1xf32> to vector<128x128xf32>
    %19 = arith.mulf %14, %18 : vector<128x128xf32>
    %c0_6 = arith.constant 0 : index
    %c0_7 = arith.constant 0 : index
    %c0_8 = arith.constant 0 : index
    %20 = vector.load %arg3[%c0_6, %c0_7, %c0_8] : memref<1x1x128xf32, #tpu.memory_space<vmem>>, vector<1x1x128xf32>
    %21 = vector.shape_cast %20 : vector<1x1x128xf32> to vector<1x128xf32>
    %cst_9 = arith.constant 1.000000e+00 : f32
    %22 = vector.broadcast %cst_9 : f32 to vector<1x128xf32>
    %23 = arith.addf %22, %21 : vector<1x128xf32>
    %24 = vector.broadcast %23 : vector<1x128xf32> to vector<128x128xf32>
    %25 = arith.mulf %19, %24 : vector<128x128xf32>
    %c0_10 = arith.constant 0 : index
    %c0_11 = arith.constant 0 : index
    %c0_12 = arith.constant 0 : index
    %26 = vector.load %arg4[%c0_10, %c0_11, %c0_12] : memref<1x1x128xf32, #tpu.memory_space<vmem>>, vector<1x1x128xf32>
    %27 = vector.shape_cast %26 : vector<1x1x128xf32> to vector<1x128xf32>
    %28 = vector.broadcast %27 : vector<1x128xf32> to vector<128x128xf32>
    %29 = arith.addf %25, %28 : vector<128x128xf32>
    %30 = arith.truncf %29 : vector<128x128xf32> to vector<128x128xbf16>
    %c0_13 = arith.constant 0 : index
    %c0_14 = arith.constant 0 : index
    %31 = vector.load %arg5[%c0_13, %c0_14] : memref<128x384xbf16, #tpu.memory_space<vmem>>, vector<128x384xbf16>
    %cst_15 = arith.constant dense<0.000000e+00> : vector<128x384xf32>
    %32 = tpu.matmul %30, %31, %cst_15 {dimension_numbers = #tpu.dot_dimension_numbers<[1], [0], [0], [1], [0, 0, 1, 1], [], []>} : vector<128x128xbf16>, vector<128x384xbf16>, vector<128x384xf32> -> vector<128x384xf32>
    %c0_16 = arith.constant 0 : index
    %c0_17 = arith.constant 0 : index
    %33 = vector.load %arg6[%c0_16, %c0_17] : memref<1x384xf32, #tpu.memory_space<vmem>>, vector<1x384xf32>
    %34 = vector.broadcast %33 : vector<1x384xf32> to vector<128x384xf32>
    %35 = arith.addf %32, %34 : vector<128x384xf32>
    %36 = arith.truncf %35 : vector<128x384xf32> to vector<128x384xbf16>
    %c0_18 = arith.constant 0 : index
    %c0_19 = arith.constant 0 : index
    %c0_20 = arith.constant 0 : index
    %37 = vector.load %arg7[%c0_18, %c0_19, %c0_20] : memref<1x128x384xbf16, #tpu.memory_space<vmem>>, vector<1x128x384xbf16>
    %38 = vector.shape_cast %37 : vector<1x128x384xbf16> to vector<128x384xbf16>
    %39 = vector.shape_cast %36 : vector<128x384xbf16> to vector<1x128x384xbf16>
    tpu.vector_store %arg7[%c0_18, %c0_19, %c0_20], %39 {strides = array<i32>} : memref<1x128x384xbf16, #tpu.memory_space<vmem>>, vector<1x128x384xbf16>,
    return
  }
  func.func @transform_0(%arg0: i32, %arg1: i32) -> (i32, i32, i32) {
    %c0_i32 = arith.constant 0 : i32
    %c0_i32_0 = arith.constant 0 : i32
    return %arg0, %arg1, %c0_i32 : i32, i32, i32
  }
  func.func @transform_1(%arg0: i32, %arg1: i32) -> (i32, i32, i32) {
    %c0_i32 = arith.constant 0 : i32
    %c0_i32_0 = arith.constant 0 : i32
    %c0_i32_1 = arith.constant 0 : i32
    return %arg0, %c0_i32, %c0_i32_0 : i32, i32, i32
  }
  func.func @transform_2(%arg0: i32, %arg1: i32) -> (i32, i32, i32) {
    %c0_i32 = arith.constant 0 : i32
    %c0_i32_0 = arith.constant 0 : i32
    %c0_i32_1 = arith.constant 0 : i32
    return %arg0, %c0_i32, %c0_i32_0 : i32, i32, i32
  }
  func.func @transform_3(%arg0: i32, %arg1: i32) -> (i32, i32) {
    %c0_i32 = arith.constant 0 : i32
    %c0_i32_0 = arith.constant 0 : i32
    %c0_i32_1 = arith.constant 0 : i32
    return %c0_i32, %c0_i32_0 : i32, i32
  }
  func.func @transform_4(%arg0: i32, %arg1: i32) -> (i32, i32) {
    %c0_i32 = arith.constant 0 : i32
    %c0_i32_0 = arith.constant 0 : i32
    %c0_i32_1 = arith.constant 0 : i32
    return %c0_i32, %c0_i32_0 : i32, i32
  }
  func.func @transform_5(%arg0: i32, %arg1: i32) -> (i32, i32, i32) {
    %c0_i32 = arith.constant 0 : i32
    %c0_i32_0 = arith.constant 0 : i32
    return %arg0, %arg1, %c0_i32 : i32, i32, i32
  }
}

module attributes {stable_mosaic.version = 11 : i64} {
  func.func @_flash_attn_kernel(%arg0: i32, %arg1: i32, %arg2: i32, %arg3: i32, %arg4: memref<1xi32, #tpu.memory_space<smem>>, %arg5: memref<1x128x128xbf16, #tpu.memory_space<vmem>>, %arg6: memref<1x128x128xbf16, #tpu.memory_space<vmem>>, %arg7: memref<1x128x128xbf16, #tpu.memory_space<vmem>>, %arg8: memref<128x1xi32, #tpu.memory_space<vmem>>, %arg9: memref<1x128xi32, #tpu.memory_space<vmem>>, %arg10: memref<1x128x128xbf16, #tpu.memory_space<vmem>>, %arg11: memref<2x128x1xf32, #tpu.memory_space<vmem>>, %arg12: memref<2x128x1xf32, #tpu.memory_space<vmem>>, %arg13: memref<128x128xf32, #tpu.memory_space<vmem>>) attributes {dimension_semantics = [#tpu.dimension_semantics<parallel>, #tpu.dimension_semantics<parallel>, #tpu.dimension_semantics<parallel>, #tpu.dimension_semantics<arbitrary>], iteration_bounds = array<i64: 2, 1, 1, 1>, scalar_prefetch = 1 : i64, scratch_operands = 3 : i64, tpu.core_type = #tpu.core_type<tc>, window_params = [{transform_indices = @transform_0, window_bounds = array<i64: 1, 128, 128>}, {transform_indices = @transform_1, window_bounds = array<i64: 1, 128, 128>}, {transform_indices = @transform_2, window_bounds = array<i64: 1, 128, 128>}, {transform_indices = @transform_3, window_bounds = array<i64: 128, 1>}, {transform_indices = @transform_4, window_bounds = array<i64: 1, 128>}, {transform_indices = @transform_5, window_bounds = array<i64: 1, 128, 128>}]} {
    %c0_i32 = arith.constant 0 : i32
    %0 = arith.cmpi eq, %arg3, %c0_i32 : i32
    %1 = arith.extui %0 : i1 to i32
    %c0_i32_0 = arith.constant 0 : i32
    %2 = arith.cmpi ne, %1, %c0_i32_0 : i32
    scf.if %2 {
      %cst = arith.constant -1.000000e+30 : f32
      %11 = vector.broadcast %cst : f32 to vector<2x128x1xf32>
      %c0 = arith.constant 0 : index
      %c0_4 = arith.constant 0 : index
      %c0_5 = arith.constant 0 : index
      %12 = vector.load %arg11[%c0, %c0_4, %c0_5] : memref<2x128x1xf32, #tpu.memory_space<vmem>>, vector<2x128x1xf32>
      tpu.vector_store %arg11[%c0, %c0_4, %c0_5], %11 {strides = array<i32>} : memref<2x128x1xf32, #tpu.memory_space<vmem>>, vector<2x128x1xf32>,
      %cst_6 = arith.constant 0.000000e+00 : f32
      %13 = vector.broadcast %cst_6 : f32 to vector<2x128x1xf32>
      %c0_7 = arith.constant 0 : index
      %c0_8 = arith.constant 0 : index
      %c0_9 = arith.constant 0 : index
      %14 = vector.load %arg12[%c0_7, %c0_8, %c0_9] : memref<2x128x1xf32, #tpu.memory_space<vmem>>, vector<2x128x1xf32>
      tpu.vector_store %arg12[%c0_7, %c0_8, %c0_9], %13 {strides = array<i32>} : memref<2x128x1xf32, #tpu.memory_space<vmem>>, vector<2x128x1xf32>,
      %cst_10 = arith.constant 0.000000e+00 : f32
      %15 = vector.broadcast %cst_10 : f32 to vector<128x128xf32>
      %c0_11 = arith.constant 0 : index
      %c0_12 = arith.constant 0 : index
      %16 = vector.load %arg13[%c0_11, %c0_12] : memref<128x128xf32, #tpu.memory_space<vmem>>, vector<128x128xf32>
      tpu.vector_store %arg13[%c0_11, %c0_12], %15 {strides = array<i32>} : memref<128x128xf32, #tpu.memory_space<vmem>>, vector<128x128xf32>,
    } else {
    }
    %3 = arith.index_cast %arg2 : i32 to index
    %4 = memref.load %arg4[%3] : memref<1xi32, #tpu.memory_space<smem>>
    %5 = arith.cmpi sle, %arg3, %4 : i32
    %6 = arith.extui %5 : i1 to i32
    %c0_i32_1 = arith.constant 0 : i32
    %7 = arith.cmpi ne, %6, %c0_i32_1 : i32
    scf.if %7 {
      %c0 = arith.constant 0 : index
      %c0_4 = arith.constant 0 : index
      %11 = vector.load %arg8[%c0, %c0_4] : memref<128x1xi32, #tpu.memory_space<vmem>>, vector<128x1xi32>
      %c0_5 = arith.constant 0 : index
      %c0_6 = arith.constant 0 : index
      %12 = vector.load %arg9[%c0_5, %c0_6] : memref<1x128xi32, #tpu.memory_space<vmem>>, vector<1x128xi32>
      %13 = vector.broadcast %11 : vector<128x1xi32> to vector<128x128xi32>
      %14 = vector.broadcast %12 : vector<1x128xi32> to vector<128x128xi32>
      %15 = arith.cmpi sge, %13, %14 : vector<128x128xi32>
      %c0_7 = arith.constant 0 : index
      %c0_8 = arith.constant 0 : index
      %c0_9 = arith.constant 0 : index
      %16 = vector.load %arg5[%c0_7, %c0_8, %c0_9] : memref<1x128x128xbf16, #tpu.memory_space<vmem>>, vector<1x128x128xbf16>
      %17 = vector.shape_cast %16 : vector<1x128x128xbf16> to vector<128x128xbf16>
      %c0_10 = arith.constant 0 : index
      %c0_11 = arith.constant 0 : index
      %c0_12 = arith.constant 0 : index
      %18 = vector.load %arg6[%c0_10, %c0_11, %c0_12] : memref<1x128x128xbf16, #tpu.memory_space<vmem>>, vector<1x128x128xbf16>
      %19 = vector.shape_cast %18 : vector<1x128x128xbf16> to vector<128x128xbf16>
      %c0_13 = arith.constant 0 : index
      %c0_14 = arith.constant 0 : index
      %c0_15 = arith.constant 0 : index
      %20 = vector.load %arg7[%c0_13, %c0_14, %c0_15] : memref<1x128x128xbf16, #tpu.memory_space<vmem>>, vector<1x128x128xbf16>
      %21 = vector.shape_cast %20 : vector<1x128x128xbf16> to vector<128x128xbf16>
      %22 = vector.extract_strided_slice %17 {offsets = [0, 0], sizes = [128, 64], strides = [1, 1]} : vector<128x128xbf16> to vector<128x64xbf16>
      %23 = vector.extract_strided_slice %19 {offsets = [0, 0], sizes = [128, 64], strides = [1, 1]} : vector<128x128xbf16> to vector<128x64xbf16>
      %cst = arith.constant dense<0.000000e+00> : vector<128x128xf32>
      %24 = tpu.matmul %22, %23, %cst {dimension_numbers = #tpu.dot_dimension_numbers<[1], [1], [0], [0], [0, 0, 1, 0], [], []>} : vector<128x64xbf16>, vector<128x64xbf16>, vector<128x128xf32> -> vector<128x128xf32>
      %cst_16 = arith.constant -1.000000e+30 : f32
      %25 = vector.broadcast %cst_16 : f32 to vector<128x128xf32>
      %26 = arith.select %15, %24, %25 : vector<128x128xi1>, vector<128x128xf32>
      %c0_17 = arith.constant 0 : index
      %c0_18 = arith.constant 0 : index
      %c0_19 = arith.constant 0 : index
      %27 = vector.load %arg11[%c0_17, %c0_18, %c0_19] : memref<2x128x1xf32, #tpu.memory_space<vmem>>, vector<1x128x1xf32>
      %28 = vector.shape_cast %27 : vector<1x128x1xf32> to vector<128x1xf32>
      %cst_20 = arith.constant dense<0xFF800000> : vector<128xf32>
      %29 = vector.multi_reduction <maximumf>, %26, %cst_20 [1] : vector<128x128xf32> to vector<128xf32>
      %30 = vector.shape_cast %29 : vector<128xf32> to vector<128x1xf32>
      %31 = arith.maximumf %28, %30 : vector<128x1xf32>
      %32 = arith.subf %28, %31 : vector<128x1xf32>
      %33 = math.exp %32 : vector<128x1xf32>
      %34 = vector.broadcast %31 : vector<128x1xf32> to vector<128x128xf32>
      %35 = arith.subf %26, %34 : vector<128x128xf32>
      %36 = math.exp %35 : vector<128x128xf32>
      %c0_21 = arith.constant 0 : index
      %c0_22 = arith.constant 0 : index
      %c0_23 = arith.constant 0 : index
      %37 = vector.load %arg12[%c0_21, %c0_22, %c0_23] : memref<2x128x1xf32, #tpu.memory_space<vmem>>, vector<1x128x1xf32>
      %38 = vector.shape_cast %37 : vector<1x128x1xf32> to vector<128x1xf32>
      %39 = arith.mulf %33, %38 : vector<128x1xf32>
      %cst_24 = arith.constant dense<0.000000e+00> : vector<128xf32>
      %40 = vector.multi_reduction <add>, %36, %cst_24 [1] : vector<128x128xf32> to vector<128xf32>
      %41 = vector.shape_cast %40 : vector<128xf32> to vector<128x1xf32>
      %42 = arith.addf %39, %41 : vector<128x1xf32>
      %c0_25 = arith.constant 0 : index
      %c0_26 = arith.constant 0 : index
      %c0_27 = arith.constant 0 : index
      %43 = vector.load %arg12[%c0_25, %c0_26, %c0_27] : memref<2x128x1xf32, #tpu.memory_space<vmem>>, vector<1x128x1xf32>
      %44 = vector.shape_cast %43 : vector<1x128x1xf32> to vector<128x1xf32>
      %45 = vector.shape_cast %42 : vector<128x1xf32> to vector<1x128x1xf32>
      tpu.vector_store %arg12[%c0_25, %c0_26, %c0_27], %45 {strides = array<i32>} : memref<2x128x1xf32, #tpu.memory_space<vmem>>, vector<1x128x1xf32>,
      %c0_28 = arith.constant 0 : index
      %c0_29 = arith.constant 0 : index
      %46 = vector.load %arg13[%c0_28, %c0_29] : memref<128x128xf32, #tpu.memory_space<vmem>>, vector<128x64xf32>
      %47 = vector.broadcast %33 : vector<128x1xf32> to vector<128x64xf32>
      %48 = arith.mulf %47, %46 : vector<128x64xf32>
      %49 = arith.truncf %36 : vector<128x128xf32> to vector<128x128xbf16>
      %50 = vector.extract_strided_slice %21 {offsets = [0, 0], sizes = [128, 64], strides = [1, 1]} : vector<128x128xbf16> to vector<128x64xbf16>
      %cst_30 = arith.constant dense<0.000000e+00> : vector<128x64xf32>
      %51 = tpu.matmul %49, %50, %cst_30 {dimension_numbers = #tpu.dot_dimension_numbers<[1], [0], [0], [1], [0, 0, 1, 1], [], []>} : vector<128x128xbf16>, vector<128x64xbf16>, vector<128x64xf32> -> vector<128x64xf32>
      %52 = arith.addf %48, %51 : vector<128x64xf32>
      %c0_31 = arith.constant 0 : index
      %c0_32 = arith.constant 0 : index
      %53 = vector.load %arg13[%c0_31, %c0_32] : memref<128x128xf32, #tpu.memory_space<vmem>>, vector<128x64xf32>
      tpu.vector_store %arg13[%c0_31, %c0_32], %52 {strides = array<i32>} : memref<128x128xf32, #tpu.memory_space<vmem>>, vector<128x64xf32>,
      %c0_33 = arith.constant 0 : index
      %c0_34 = arith.constant 0 : index
      %c0_35 = arith.constant 0 : index
      %54 = vector.load %arg11[%c0_33, %c0_34, %c0_35] : memref<2x128x1xf32, #tpu.memory_space<vmem>>, vector<1x128x1xf32>
      %55 = vector.shape_cast %54 : vector<1x128x1xf32> to vector<128x1xf32>
      %56 = vector.shape_cast %31 : vector<128x1xf32> to vector<1x128x1xf32>
      tpu.vector_store %arg11[%c0_33, %c0_34, %c0_35], %56 {strides = array<i32>} : memref<2x128x1xf32, #tpu.memory_space<vmem>>, vector<1x128x1xf32>,
      %57 = vector.extract_strided_slice %17 {offsets = [0, 64], sizes = [128, 64], strides = [1, 1]} : vector<128x128xbf16> to vector<128x64xbf16>
      %58 = vector.extract_strided_slice %19 {offsets = [0, 64], sizes = [128, 64], strides = [1, 1]} : vector<128x128xbf16> to vector<128x64xbf16>
      %cst_36 = arith.constant dense<0.000000e+00> : vector<128x128xf32>
      %59 = tpu.matmul %57, %58, %cst_36 {dimension_numbers = #tpu.dot_dimension_numbers<[1], [1], [0], [0], [0, 0, 1, 0], [], []>} : vector<128x64xbf16>, vector<128x64xbf16>, vector<128x128xf32> -> vector<128x128xf32>
      %cst_37 = arith.constant -1.000000e+30 : f32
      %60 = vector.broadcast %cst_37 : f32 to vector<128x128xf32>
      %61 = arith.select %15, %59, %60 : vector<128x128xi1>, vector<128x128xf32>
      %c1 = arith.constant 1 : index
      %c0_38 = arith.constant 0 : index
      %c0_39 = arith.constant 0 : index
      %62 = vector.load %arg11[%c1, %c0_38, %c0_39] : memref<2x128x1xf32, #tpu.memory_space<vmem>>, vector<1x128x1xf32>
      %63 = vector.shape_cast %62 : vector<1x128x1xf32> to vector<128x1xf32>
      %cst_40 = arith.constant dense<0xFF800000> : vector<128xf32>
      %64 = vector.multi_reduction <maximumf>, %61, %cst_40 [1] : vector<128x128xf32> to vector<128xf32>
      %65 = vector.shape_cast %64 : vector<128xf32> to vector<128x1xf32>
      %66 = arith.maximumf %63, %65 : vector<128x1xf32>
      %67 = arith.subf %63, %66 : vector<128x1xf32>
      %68 = math.exp %67 : vector<128x1xf32>
      %69 = vector.broadcast %66 : vector<128x1xf32> to vector<128x128xf32>
      %70 = arith.subf %61, %69 : vector<128x128xf32>
      %71 = math.exp %70 : vector<128x128xf32>
      %c1_41 = arith.constant 1 : index
      %c0_42 = arith.constant 0 : index
      %c0_43 = arith.constant 0 : index
      %72 = vector.load %arg12[%c1_41, %c0_42, %c0_43] : memref<2x128x1xf32, #tpu.memory_space<vmem>>, vector<1x128x1xf32>
      %73 = vector.shape_cast %72 : vector<1x128x1xf32> to vector<128x1xf32>
      %74 = arith.mulf %68, %73 : vector<128x1xf32>
      %cst_44 = arith.constant dense<0.000000e+00> : vector<128xf32>
      %75 = vector.multi_reduction <add>, %71, %cst_44 [1] : vector<128x128xf32> to vector<128xf32>
      %76 = vector.shape_cast %75 : vector<128xf32> to vector<128x1xf32>
      %77 = arith.addf %74, %76 : vector<128x1xf32>
      %c1_45 = arith.constant 1 : index
      %c0_46 = arith.constant 0 : index
      %c0_47 = arith.constant 0 : index
      %78 = vector.load %arg12[%c1_45, %c0_46, %c0_47] : memref<2x128x1xf32, #tpu.memory_space<vmem>>, vector<1x128x1xf32>
      %79 = vector.shape_cast %78 : vector<1x128x1xf32> to vector<128x1xf32>
      %80 = vector.shape_cast %77 : vector<128x1xf32> to vector<1x128x1xf32>
      tpu.vector_store %arg12[%c1_45, %c0_46, %c0_47], %80 {strides = array<i32>} : memref<2x128x1xf32, #tpu.memory_space<vmem>>, vector<1x128x1xf32>,
      %c0_48 = arith.constant 0 : index
      %c64 = arith.constant 64 : index
      %81 = vector.load %arg13[%c0_48, %c64] : memref<128x128xf32, #tpu.memory_space<vmem>>, vector<128x64xf32>
      %82 = vector.broadcast %68 : vector<128x1xf32> to vector<128x64xf32>
      %83 = arith.mulf %82, %81 : vector<128x64xf32>
      %84 = arith.truncf %71 : vector<128x128xf32> to vector<128x128xbf16>
      %85 = vector.extract_strided_slice %21 {offsets = [0, 64], sizes = [128, 64], strides = [1, 1]} : vector<128x128xbf16> to vector<128x64xbf16>
      %cst_49 = arith.constant dense<0.000000e+00> : vector<128x64xf32>
      %86 = tpu.matmul %84, %85, %cst_49 {dimension_numbers = #tpu.dot_dimension_numbers<[1], [0], [0], [1], [0, 0, 1, 1], [], []>} : vector<128x128xbf16>, vector<128x64xbf16>, vector<128x64xf32> -> vector<128x64xf32>
      %87 = arith.addf %83, %86 : vector<128x64xf32>
      %c0_50 = arith.constant 0 : index
      %c64_51 = arith.constant 64 : index
      %88 = vector.load %arg13[%c0_50, %c64_51] : memref<128x128xf32, #tpu.memory_space<vmem>>, vector<128x64xf32>
      tpu.vector_store %arg13[%c0_50, %c64_51], %87 {strides = array<i32>} : memref<128x128xf32, #tpu.memory_space<vmem>>, vector<128x64xf32>,
      %c1_52 = arith.constant 1 : index
      %c0_53 = arith.constant 0 : index
      %c0_54 = arith.constant 0 : index
      %89 = vector.load %arg11[%c1_52, %c0_53, %c0_54] : memref<2x128x1xf32, #tpu.memory_space<vmem>>, vector<1x128x1xf32>
      %90 = vector.shape_cast %89 : vector<1x128x1xf32> to vector<128x1xf32>
      %91 = vector.shape_cast %66 : vector<128x1xf32> to vector<1x128x1xf32>
      tpu.vector_store %arg11[%c1_52, %c0_53, %c0_54], %91 {strides = array<i32>} : memref<2x128x1xf32, #tpu.memory_space<vmem>>, vector<1x128x1xf32>,
    } else {
    }
    %c0_i32_2 = arith.constant 0 : i32
    %8 = arith.cmpi eq, %arg3, %c0_i32_2 : i32
    %9 = arith.extui %8 : i1 to i32
    %c0_i32_3 = arith.constant 0 : i32
    %10 = arith.cmpi ne, %9, %c0_i32_3 : i32
    scf.if %10 {
      %c0 = arith.constant 0 : index
      %c0_4 = arith.constant 0 : index
      %c0_5 = arith.constant 0 : index
      %11 = vector.load %arg12[%c0, %c0_4, %c0_5] : memref<2x128x1xf32, #tpu.memory_space<vmem>>, vector<1x128x1xf32>
      %12 = vector.shape_cast %11 : vector<1x128x1xf32> to vector<128x1xf32>
      %13 = tpu.reciprocal %12 {approx = true} : vector<128x1xf32> -> vector<128x1xf32>
      %c0_6 = arith.constant 0 : index
      %c0_7 = arith.constant 0 : index
      %14 = vector.load %arg13[%c0_6, %c0_7] : memref<128x128xf32, #tpu.memory_space<vmem>>, vector<128x64xf32>
      %15 = vector.broadcast %13 : vector<128x1xf32> to vector<128x64xf32>
      %16 = arith.mulf %14, %15 : vector<128x64xf32>
      %c1 = arith.constant 1 : index
      %c0_8 = arith.constant 0 : index
      %c0_9 = arith.constant 0 : index
      %17 = vector.load %arg12[%c1, %c0_8, %c0_9] : memref<2x128x1xf32, #tpu.memory_space<vmem>>, vector<1x128x1xf32>
      %18 = vector.shape_cast %17 : vector<1x128x1xf32> to vector<128x1xf32>
      %19 = tpu.reciprocal %18 {approx = true} : vector<128x1xf32> -> vector<128x1xf32>
      %c0_10 = arith.constant 0 : index
      %c64 = arith.constant 64 : index
      %20 = vector.load %arg13[%c0_10, %c64] : memref<128x128xf32, #tpu.memory_space<vmem>>, vector<128x64xf32>
      %21 = vector.broadcast %19 : vector<128x1xf32> to vector<128x64xf32>
      %22 = arith.mulf %20, %21 : vector<128x64xf32>
      %23 = tpu.concatenate %16, %22 in 1 : vector<128x64xf32>, vector<128x64xf32> -> vector<128x128xf32>
      %24 = arith.truncf %23 : vector<128x128xf32> to vector<128x128xbf16>
      %c0_11 = arith.constant 0 : index
      %c0_12 = arith.constant 0 : index
      %c0_13 = arith.constant 0 : index
      %25 = vector.load %arg10[%c0_11, %c0_12, %c0_13] : memref<1x128x128xbf16, #tpu.memory_space<vmem>>, vector<1x128x128xbf16>
      %26 = vector.shape_cast %25 : vector<1x128x128xbf16> to vector<128x128xbf16>
      %27 = vector.shape_cast %24 : vector<128x128xbf16> to vector<1x128x128xbf16>
      tpu.vector_store %arg10[%c0_11, %c0_12, %c0_13], %27 {strides = array<i32>} : memref<1x128x128xbf16, #tpu.memory_space<vmem>>, vector<1x128x128xbf16>,
    } else {
    }
    return
  }
  func.func @transform_0(%arg0: i32, %arg1: i32, %arg2: i32, %arg3: i32, %arg4: memref<1xi32, #tpu.memory_space<smem>>) -> (i32, i32, i32) {
    %c0_i32 = arith.constant 0 : i32
    return %arg0, %arg2, %arg1 : i32, i32, i32
  }
  func.func @transform_1(%arg0: i32, %arg1: i32, %arg2: i32, %arg3: i32, %arg4: memref<1xi32, #tpu.memory_space<smem>>) -> (i32, i32, i32) {
    %0 = arith.index_cast %arg2 : i32 to index
    %1 = memref.load %arg4[%0] : memref<1xi32, #tpu.memory_space<smem>>
    %2 = arith.minsi %arg3, %1 : i32
    %c1_i32 = arith.constant 1 : i32
    %3 = arith.addi %c1_i32, %arg1 : i32
    %c0_i32 = arith.constant 0 : i32
    return %arg0, %2, %3 : i32, i32, i32
  }
  func.func @transform_2(%arg0: i32, %arg1: i32, %arg2: i32, %arg3: i32, %arg4: memref<1xi32, #tpu.memory_space<smem>>) -> (i32, i32, i32) {
    %0 = arith.index_cast %arg2 : i32 to index
    %1 = memref.load %arg4[%0] : memref<1xi32, #tpu.memory_space<smem>>
    %2 = arith.minsi %arg3, %1 : i32
    %c2_i32 = arith.constant 2 : i32
    %3 = arith.addi %c2_i32, %arg1 : i32
    %c0_i32 = arith.constant 0 : i32
    return %arg0, %2, %3 : i32, i32, i32
  }
  func.func @transform_3(%arg0: i32, %arg1: i32, %arg2: i32, %arg3: i32, %arg4: memref<1xi32, #tpu.memory_space<smem>>) -> (i32, i32) {
    %c0_i32 = arith.constant 0 : i32
    %c0_i32_0 = arith.constant 0 : i32
    return %arg2, %c0_i32 : i32, i32
  }
  func.func @transform_4(%arg0: i32, %arg1: i32, %arg2: i32, %arg3: i32, %arg4: memref<1xi32, #tpu.memory_space<smem>>) -> (i32, i32) {
    %0 = arith.index_cast %arg2 : i32 to index
    %1 = memref.load %arg4[%0] : memref<1xi32, #tpu.memory_space<smem>>
    %2 = arith.minsi %arg3, %1 : i32
    %c0_i32 = arith.constant 0 : i32
    %c0_i32_0 = arith.constant 0 : i32
    return %c0_i32, %2 : i32, i32
  }
  func.func @transform_5(%arg0: i32, %arg1: i32, %arg2: i32, %arg3: i32, %arg4: memref<1xi32, #tpu.memory_space<smem>>) -> (i32, i32, i32) {
    %c0_i32 = arith.constant 0 : i32
    return %arg0, %arg2, %arg1 : i32, i32, i32
  }
}

module attributes {stable_mosaic.version = 11 : i64} {
  func.func @_silu_linear_kernel(%arg0: i32, %arg1: memref<2x128xf32, #tpu.memory_space<vmem>>, %arg2: memref<1x128x256xbf16, #tpu.memory_space<vmem>>, %arg3: memref<1x1x256xf32, #tpu.memory_space<vmem>>, %arg4: memref<1x2x256xf32, #tpu.memory_space<vmem>>) attributes {dimension_semantics = [#tpu.dimension_semantics<parallel>], iteration_bounds = array<i64: 1>, scalar_prefetch = 0 : i64, scratch_operands = 0 : i64, tpu.core_type = #tpu.core_type<tc>, window_params = [{pipeline_mode = #tpu.pipeline_mode<synchronous>, transform_indices = @transform_0, window_bounds = array<i64: 2, 128>}, {transform_indices = @transform_1, window_bounds = array<i64: 1, 128, 256>}, {transform_indices = @transform_2, window_bounds = array<i64: 1, 1, 256>}, {transform_indices = @transform_3, window_bounds = array<i64: 1, 2, 256>}]} {
    %c0 = arith.constant 0 : index
    %c0_0 = arith.constant 0 : index
    %0 = vector.load %arg1[%c0, %c0_0] : memref<2x128xf32, #tpu.memory_space<vmem>>, vector<2x128xf32>
    %1 = arith.negf %0 : vector<2x128xf32>
    %2 = math.exp %1 : vector<2x128xf32>
    %cst = arith.constant 1.000000e+00 : f32
    %3 = vector.broadcast %cst : f32 to vector<2x128xf32>
    %4 = arith.addf %3, %2 : vector<2x128xf32>
    %5 = arith.divf %3, %4 : vector<2x128xf32>
    %6 = arith.mulf %0, %5 : vector<2x128xf32>
    %7 = arith.truncf %6 : vector<2x128xf32> to vector<2x128xbf16>
    %c0_1 = arith.constant 0 : index
    %c0_2 = arith.constant 0 : index
    %c0_3 = arith.constant 0 : index
    %8 = vector.load %arg2[%c0_1, %c0_2, %c0_3] : memref<1x128x256xbf16, #tpu.memory_space<vmem>>, vector<1x128x256xbf16>
    %9 = vector.shape_cast %8 : vector<1x128x256xbf16> to vector<128x256xbf16>
    %cst_4 = arith.constant dense<0.000000e+00> : vector<2x256xf32>
    %10 = tpu.matmul %7, %9, %cst_4 {dimension_numbers = #tpu.dot_dimension_numbers<[1], [0], [0], [1], [0, 0, 1, 1], [], []>} : vector<2x128xbf16>, vector<128x256xbf16>, vector<2x256xf32> -> vector<2x256xf32>
    %c0_5 = arith.constant 0 : index
    %c0_6 = arith.constant 0 : index
    %c0_7 = arith.constant 0 : index
    %11 = vector.load %arg3[%c0_5, %c0_6, %c0_7] : memref<1x1x256xf32, #tpu.memory_space<vmem>>, vector<1x1x256xf32>
    %12 = vector.shape_cast %11 : vector<1x1x256xf32> to vector<1x256xf32>
    %13 = vector.broadcast %12 : vector<1x256xf32> to vector<2x256xf32>
    %14 = arith.addf %10, %13 : vector<2x256xf32>
    %c0_8 = arith.constant 0 : index
    %c0_9 = arith.constant 0 : index
    %c0_10 = arith.constant 0 : index
    %15 = vector.load %arg4[%c0_8, %c0_9, %c0_10] : memref<1x2x256xf32, #tpu.memory_space<vmem>>, vector<1x2x256xf32>
    %16 = vector.shape_cast %15 : vector<1x2x256xf32> to vector<2x256xf32>
    %17 = vector.shape_cast %14 : vector<2x256xf32> to vector<1x2x256xf32>
    tpu.vector_store %arg4[%c0_8, %c0_9, %c0_10], %17 {strides = array<i32>} : memref<1x2x256xf32, #tpu.memory_space<vmem>>, vector<1x2x256xf32>,
    return
  }
  func.func @transform_0(%arg0: i32) -> (i32, i32) {
    %c0_i32 = arith.constant 0 : i32
    %c0_i32_0 = arith.constant 0 : i32
    %c0_i32_1 = arith.constant 0 : i32
    return %c0_i32, %c0_i32_0 : i32, i32
  }
  func.func @transform_1(%arg0: i32) -> (i32, i32, i32) {
    %c0_i32 = arith.constant 0 : i32
    %c0_i32_0 = arith.constant 0 : i32
    %c0_i32_1 = arith.constant 0 : i32
    return %arg0, %c0_i32, %c0_i32_0 : i32, i32, i32
  }
  func.func @transform_2(%arg0: i32) -> (i32, i32, i32) {
    %c0_i32 = arith.constant 0 : i32
    %c0_i32_0 = arith.constant 0 : i32
    %c0_i32_1 = arith.constant 0 : i32
    return %arg0, %c0_i32, %c0_i32_0 : i32, i32, i32
  }
  func.func @transform_3(%arg0: i32) -> (i32, i32, i32) {
    %c0_i32 = arith.constant 0 : i32
    %c0_i32_0 = arith.constant 0 : i32
    %c0_i32_1 = arith.constant 0 : i32
    return %arg0, %c0_i32, %c0_i32_0 : i32, i32, i32
  }
}

module attributes {stable_mosaic.version = 11 : i64} {
  func.func @_post_kernel(%arg0: i32, %arg1: i32, %arg2: memref<1x128x128xf32, #tpu.memory_space<vmem>>, %arg3: memref<1x128x128xbf16, #tpu.memory_space<vmem>>, %arg4: memref<1x1x128xf32, #tpu.memory_space<vmem>>, %arg5: memref<1x1x128xf32, #tpu.memory_space<vmem>>, %arg6: memref<1x1x128xf32, #tpu.memory_space<vmem>>, %arg7: memref<1x1x128xf32, #tpu.memory_space<vmem>>, %arg8: memref<128x128xbf16, #tpu.memory_space<vmem>>, %arg9: memref<1x128xf32, #tpu.memory_space<vmem>>, %arg10: memref<128x512xbf16, #tpu.memory_space<vmem>>, %arg11: memref<1x512xf32, #tpu.memory_space<vmem>>, %arg12: memref<512x128xbf16, #tpu.memory_space<vmem>>, %arg13: memref<1x128xf32, #tpu.memory_space<vmem>>, %arg14: memref<1x128x128xf32, #tpu.memory_space<vmem>>) attributes {dimension_semantics = [#tpu.dimension_semantics<parallel>, #tpu.dimension_semantics<parallel>], iteration_bounds = array<i64: 2, 1>, scalar_prefetch = 0 : i64, scratch_operands = 0 : i64, tpu.core_type = #tpu.core_type<tc>, window_params = [{transform_indices = @transform_0, window_bounds = array<i64: 1, 128, 128>}, {transform_indices = @transform_1, window_bounds = array<i64: 1, 128, 128>}, {transform_indices = @transform_2, window_bounds = array<i64: 1, 1, 128>}, {transform_indices = @transform_3, window_bounds = array<i64: 1, 1, 128>}, {transform_indices = @transform_4, window_bounds = array<i64: 1, 1, 128>}, {transform_indices = @transform_5, window_bounds = array<i64: 1, 1, 128>}, {pipeline_mode = #tpu.pipeline_mode<synchronous>, transform_indices = @transform_6, window_bounds = array<i64: 128, 128>}, {pipeline_mode = #tpu.pipeline_mode<synchronous>, transform_indices = @transform_7, window_bounds = array<i64: 1, 128>}, {pipeline_mode = #tpu.pipeline_mode<synchronous>, transform_indices = @transform_8, window_bounds = array<i64: 128, 512>}, {pipeline_mode = #tpu.pipeline_mode<synchronous>, transform_indices = @transform_9, window_bounds = array<i64: 1, 512>}, {pipeline_mode = #tpu.pipeline_mode<synchronous>, transform_indices = @transform_10, window_bounds = array<i64: 512, 128>}, {pipeline_mode = #tpu.pipeline_mode<synchronous>, transform_indices = @transform_11, window_bounds = array<i64: 1, 128>}, {transform_indices = @transform_12, window_bounds = array<i64: 1, 128, 128>}]} {
    %c0 = arith.constant 0 : index
    %c0_0 = arith.constant 0 : index
    %c0_1 = arith.constant 0 : index
    %0 = vector.load %arg2[%c0, %c0_0, %c0_1] : memref<1x128x128xf32, #tpu.memory_space<vmem>>, vector<1x128x128xf32>
    %1 = vector.shape_cast %0 : vector<1x128x128xf32> to vector<128x128xf32>
    %c0_2 = arith.constant 0 : index
    %c0_3 = arith.constant 0 : index
    %c0_4 = arith.constant 0 : index
    %2 = vector.load %arg3[%c0_2, %c0_3, %c0_4] : memref<1x128x128xbf16, #tpu.memory_space<vmem>>, vector<1x128x128xbf16>
    %3 = vector.shape_cast %2 : vector<1x128x128xbf16> to vector<128x128xbf16>
    %c0_5 = arith.constant 0 : index
    %c0_6 = arith.constant 0 : index
    %4 = vector.load %arg8[%c0_5, %c0_6] : memref<128x128xbf16, #tpu.memory_space<vmem>>, vector<128x128xbf16>
    %cst = arith.constant dense<0.000000e+00> : vector<128x128xf32>
    %5 = tpu.matmul %3, %4, %cst {dimension_numbers = #tpu.dot_dimension_numbers<[1], [0], [0], [1], [0, 0, 1, 1], [], []>} : vector<128x128xbf16>, vector<128x128xbf16>, vector<128x128xf32> -> vector<128x128xf32>
    %c0_7 = arith.constant 0 : index
    %c0_8 = arith.constant 0 : index
    %6 = vector.load %arg9[%c0_7, %c0_8] : memref<1x128xf32, #tpu.memory_space<vmem>>, vector<1x128xf32>
    %7 = vector.broadcast %6 : vector<1x128xf32> to vector<128x128xf32>
    %8 = arith.addf %5, %7 : vector<128x128xf32>
    %c0_9 = arith.constant 0 : index
    %c0_10 = arith.constant 0 : index
    %c0_11 = arith.constant 0 : index
    %9 = vector.load %arg4[%c0_9, %c0_10, %c0_11] : memref<1x1x128xf32, #tpu.memory_space<vmem>>, vector<1x1x128xf32>
    %10 = vector.shape_cast %9 : vector<1x1x128xf32> to vector<1x128xf32>
    %11 = vector.broadcast %10 : vector<1x128xf32> to vector<128x128xf32>
    %12 = arith.mulf %11, %8 : vector<128x128xf32>
    %13 = arith.addf %1, %12 : vector<128x128xf32>
    %cst_12 = arith.constant dense<0.000000e+00> : vector<128xf32>
    %14 = vector.multi_reduction <add>, %13, %cst_12 [1] : vector<128x128xf32> to vector<128xf32>
    %15 = vector.shape_cast %14 : vector<128xf32> to vector<128x1xf32>
    %cst_13 = arith.constant 1.280000e+02 : f32
    %16 = vector.broadcast %cst_13 : f32 to vector<128x1xf32>
    %17 = arith.divf %15, %16 : vector<128x1xf32>
    %18 = vector.broadcast %17 : vector<128x1xf32> to vector<128x128xf32>
    %19 = arith.subf %13, %18 : vector<128x128xf32>
    %20 = arith.mulf %19, %19 : vector<128x128xf32>
    %cst_14 = arith.constant dense<0.000000e+00> : vector<128xf32>
    %21 = vector.multi_reduction <add>, %20, %cst_14 [1] : vector<128x128xf32> to vector<128xf32>
    %22 = vector.shape_cast %21 : vector<128xf32> to vector<128x1xf32>
    %cst_15 = arith.constant 1.280000e+02 : f32
    %23 = vector.broadcast %cst_15 : f32 to vector<128x1xf32>
    %24 = arith.divf %22, %23 : vector<128x1xf32>
    %25 = vector.broadcast %17 : vector<128x1xf32> to vector<128x128xf32>
    %26 = arith.subf %13, %25 : vector<128x128xf32>
    %cst_16 = arith.constant 9.99999997E-7 : f32
    %27 = vector.broadcast %cst_16 : f32 to vector<128x1xf32>
    %28 = arith.addf %24, %27 : vector<128x1xf32>
    %29 = math.rsqrt %28 : vector<128x1xf32>
    %30 = vector.broadcast %29 : vector<128x1xf32> to vector<128x128xf32>
    %31 = arith.mulf %26, %30 : vector<128x128xf32>
    %c0_17 = arith.constant 0 : index
    %c0_18 = arith.constant 0 : index
    %c0_19 = arith.constant 0 : index
    %32 = vector.load %arg5[%c0_17, %c0_18, %c0_19] : memref<1x1x128xf32, #tpu.memory_space<vmem>>, vector<1x1x128xf32>
    %33 = vector.shape_cast %32 : vector<1x1x128xf32> to vector<1x128xf32>
    %cst_20 = arith.constant 1.000000e+00 : f32
    %34 = vector.broadcast %cst_20 : f32 to vector<1x128xf32>
    %35 = arith.addf %34, %33 : vector<1x128xf32>
    %36 = vector.broadcast %35 : vector<1x128xf32> to vector<128x128xf32>
    %37 = arith.mulf %31, %36 : vector<128x128xf32>
    %c0_21 = arith.constant 0 : index
    %c0_22 = arith.constant 0 : index
    %c0_23 = arith.constant 0 : index
    %38 = vector.load %arg6[%c0_21, %c0_22, %c0_23] : memref<1x1x128xf32, #tpu.memory_space<vmem>>, vector<1x1x128xf32>
    %39 = vector.shape_cast %38 : vector<1x1x128xf32> to vector<1x128xf32>
    %40 = vector.broadcast %39 : vector<1x128xf32> to vector<128x128xf32>
    %41 = arith.addf %37, %40 : vector<128x128xf32>
    %42 = arith.truncf %41 : vector<128x128xf32> to vector<128x128xbf16>
    %c0_24 = arith.constant 0 : index
    %c0_25 = arith.constant 0 : index
    %43 = vector.load %arg10[%c0_24, %c0_25] : memref<128x512xbf16, #tpu.memory_space<vmem>>, vector<128x512xbf16>
    %cst_26 = arith.constant dense<0.000000e+00> : vector<128x512xf32>
    %44 = tpu.matmul %42, %43, %cst_26 {dimension_numbers = #tpu.dot_dimension_numbers<[1], [0], [0], [1], [0, 0, 1, 1], [], []>} : vector<128x128xbf16>, vector<128x512xbf16>, vector<128x512xf32> -> vector<128x512xf32>
    %c0_27 = arith.constant 0 : index
    %c0_28 = arith.constant 0 : index
    %45 = vector.load %arg11[%c0_27, %c0_28] : memref<1x512xf32, #tpu.memory_space<vmem>>, vector<1x512xf32>
    %46 = vector.broadcast %45 : vector<1x512xf32> to vector<128x512xf32>
    %47 = arith.addf %44, %46 : vector<128x512xf32>
    %48 = arith.mulf %47, %47 : vector<128x512xf32>
    %49 = arith.mulf %47, %48 : vector<128x512xf32>
    %cst_29 = arith.constant 4.471500e-02 : f32
    %50 = vector.broadcast %cst_29 : f32 to vector<128x512xf32>
    %51 = arith.mulf %50, %49 : vector<128x512xf32>
    %52 = arith.addf %47, %51 : vector<128x512xf32>
    %cst_30 = arith.constant 0.797884583 : f32
    %53 = vector.broadcast %cst_30 : f32 to vector<128x512xf32>
    %54 = arith.mulf %53, %52 : vector<128x512xf32>
    %55 = math.tanh %54 : vector<128x512xf32>
    %cst_31 = arith.constant 1.000000e+00 : f32
    %56 = vector.broadcast %cst_31 : f32 to vector<128x512xf32>
    %57 = arith.addf %56, %55 : vector<128x512xf32>
    %cst_32 = arith.constant 5.000000e-01 : f32
    %58 = vector.broadcast %cst_32 : f32 to vector<128x512xf32>
    %59 = arith.mulf %58, %57 : vector<128x512xf32>
    %60 = arith.mulf %47, %59 : vector<128x512xf32>
    %61 = arith.truncf %60 : vector<128x512xf32> to vector<128x512xbf16>
    %c0_33 = arith.constant 0 : index
    %c0_34 = arith.constant 0 : index
    %62 = vector.load %arg12[%c0_33, %c0_34] : memref<512x128xbf16, #tpu.memory_space<vmem>>, vector<512x128xbf16>
    %cst_35 = arith.constant dense<0.000000e+00> : vector<128x128xf32>
    %63 = tpu.matmul %61, %62, %cst_35 {dimension_numbers = #tpu.dot_dimension_numbers<[1], [0], [0], [1], [0, 0, 1, 1], [], []>} : vector<128x512xbf16>, vector<512x128xbf16>, vector<128x128xf32> -> vector<128x128xf32>
    %c0_36 = arith.constant 0 : index
    %c0_37 = arith.constant 0 : index
    %64 = vector.load %arg13[%c0_36, %c0_37] : memref<1x128xf32, #tpu.memory_space<vmem>>, vector<1x128xf32>
    %65 = vector.broadcast %64 : vector<1x128xf32> to vector<128x128xf32>
    %66 = arith.addf %63, %65 : vector<128x128xf32>
    %c0_38 = arith.constant 0 : index
    %c0_39 = arith.constant 0 : index
    %c0_40 = arith.constant 0 : index
    %67 = vector.load %arg7[%c0_38, %c0_39, %c0_40] : memref<1x1x128xf32, #tpu.memory_space<vmem>>, vector<1x1x128xf32>
    %68 = vector.shape_cast %67 : vector<1x1x128xf32> to vector<1x128xf32>
    %69 = vector.broadcast %68 : vector<1x128xf32> to vector<128x128xf32>
    %70 = arith.mulf %69, %66 : vector<128x128xf32>
    %71 = arith.addf %13, %70 : vector<128x128xf32>
    %c0_41 = arith.constant 0 : index
    %c0_42 = arith.constant 0 : index
    %c0_43 = arith.constant 0 : index
    %72 = vector.load %arg14[%c0_41, %c0_42, %c0_43] : memref<1x128x128xf32, #tpu.memory_space<vmem>>, vector<1x128x128xf32>
    %73 = vector.shape_cast %72 : vector<1x128x128xf32> to vector<128x128xf32>
    %74 = vector.shape_cast %71 : vector<128x128xf32> to vector<1x128x128xf32>
    tpu.vector_store %arg14[%c0_41, %c0_42, %c0_43], %74 {strides = array<i32>} : memref<1x128x128xf32, #tpu.memory_space<vmem>>, vector<1x128x128xf32>,
    return
  }
  func.func @transform_0(%arg0: i32, %arg1: i32) -> (i32, i32, i32) {
    %c0_i32 = arith.constant 0 : i32
    %c0_i32_0 = arith.constant 0 : i32
    return %arg0, %arg1, %c0_i32 : i32, i32, i32
  }
  func.func @transform_1(%arg0: i32, %arg1: i32) -> (i32, i32, i32) {
    %c0_i32 = arith.constant 0 : i32
    %c0_i32_0 = arith.constant 0 : i32
    return %arg0, %arg1, %c0_i32 : i32, i32, i32
  }
  func.func @transform_2(%arg0: i32, %arg1: i32) -> (i32, i32, i32) {
    %c0_i32 = arith.constant 0 : i32
    %c0_i32_0 = arith.constant 0 : i32
    %c0_i32_1 = arith.constant 0 : i32
    return %arg0, %c0_i32, %c0_i32_0 : i32, i32, i32
  }
  func.func @transform_3(%arg0: i32, %arg1: i32) -> (i32, i32, i32) {
    %c0_i32 = arith.constant 0 : i32
    %c0_i32_0 = arith.constant 0 : i32
    %c0_i32_1 = arith.constant 0 : i32
    return %arg0, %c0_i32, %c0_i32_0 : i32, i32, i32
  }
  func.func @transform_4(%arg0: i32, %arg1: i32) -> (i32, i32, i32) {
    %c0_i32 = arith.constant 0 : i32
    %c0_i32_0 = arith.constant 0 : i32
    %c0_i32_1 = arith.constant 0 : i32
    return %arg0, %c0_i32, %c0_i32_0 : i32, i32, i32
  }
  func.func @transform_5(%arg0: i32, %arg1: i32) -> (i32, i32, i32) {
    %c0_i32 = arith.constant 0 : i32
    %c0_i32_0 = arith.constant 0 : i32
    %c0_i32_1 = arith.constant 0 : i32
    return %arg0, %c0_i32, %c0_i32_0 : i32, i32, i32
  }
  func.func @transform_6(%arg0: i32, %arg1: i32) -> (i32, i32) {
    %c0_i32 = arith.constant 0 : i32
    %c0_i32_0 = arith.constant 0 : i32
    %c0_i32_1 = arith.constant 0 : i32
    return %c0_i32, %c0_i32_0 : i32, i32
  }
  func.func @transform_7(%arg0: i32, %arg1: i32) -> (i32, i32) {
    %c0_i32 = arith.constant 0 : i32
    %c0_i32_0 = arith.constant 0 : i32
    %c0_i32_1 = arith.constant 0 : i32
    return %c0_i32, %c0_i32_0 : i32, i32
  }
  func.func @transform_8(%arg0: i32, %arg1: i32) -> (i32, i32) {
    %c0_i32 = arith.constant 0 : i32
    %c0_i32_0 = arith.constant 0 : i32
    %c0_i32_1 = arith.constant 0 : i32
    return %c0_i32, %c0_i32_0 : i32, i32
  }
  func.func @transform_9(%arg0: i32, %arg1: i32) -> (i32, i32) {
    %c0_i32 = arith.constant 0 : i32
    %c0_i32_0 = arith.constant 0 : i32
    %c0_i32_1 = arith.constant 0 : i32
    return %c0_i32, %c0_i32_0 : i32, i32
  }
  func.func @transform_10(%arg0: i32, %arg1: i32) -> (i32, i32) {
    %c0_i32 = arith.constant 0 : i32
    %c0_i32_0 = arith.constant 0 : i32
    %c0_i32_1 = arith.constant 0 : i32
    return %c0_i32, %c0_i32_0 : i32, i32
  }
  func.func @transform_11(%arg0: i32, %arg1: i32) -> (i32, i32) {
    %c0_i32 = arith.constant 0 : i32
    %c0_i32_0 = arith.constant 0 : i32
    %c0_i32_1 = arith.constant 0 : i32
    return %c0_i32, %c0_i32_0 : i32, i32
  }
  func.func @transform_12(%arg0: i32, %arg1: i32) -> (i32, i32, i32) {
    %c0_i32 = arith.constant 0 : i32
    %c0_i32_0 = arith.constant 0 : i32
    return %arg0, %arg1, %c0_i32 : i32, i32, i32
  }
}

module attributes {stable_mosaic.version = 11 : i64} {
  func.func @_head_kernel(%arg0: i32, %arg1: i32, %arg2: i32, %arg3: memref<1x128x128xf32, #tpu.memory_space<vmem>>, %arg4: memref<1x1x128xf32, #tpu.memory_space<vmem>>, %arg5: memref<1x1x128xf32, #tpu.memory_space<vmem>>, %arg6: memref<128x256xbf16, #tpu.memory_space<vmem>>, %arg7: memref<1x256xf32, #tpu.memory_space<vmem>>, %arg8: memref<1x128x256xf32, #tpu.memory_space<vmem>>, %arg9: memref<128x128xbf16, #tpu.memory_space<vmem>>) attributes {dimension_semantics = [#tpu.dimension_semantics<parallel>, #tpu.dimension_semantics<parallel>, #tpu.dimension_semantics<arbitrary>], iteration_bounds = array<i64: 2, 1, 1>, scalar_prefetch = 0 : i64, scratch_operands = 1 : i64, tpu.core_type = #tpu.core_type<tc>, window_params = [{transform_indices = @transform_0, window_bounds = array<i64: 1, 128, 128>}, {transform_indices = @transform_1, window_bounds = array<i64: 1, 1, 128>}, {transform_indices = @transform_2, window_bounds = array<i64: 1, 1, 128>}, {transform_indices = @transform_3, window_bounds = array<i64: 128, 256>}, {transform_indices = @transform_4, window_bounds = array<i64: 1, 256>}, {transform_indices = @transform_5, window_bounds = array<i64: 1, 128, 256>}]} {
    %c0_i32 = arith.constant 0 : i32
    %0 = arith.cmpi eq, %arg2, %c0_i32 : i32
    %1 = arith.extui %0 : i1 to i32
    %c0_i32_0 = arith.constant 0 : i32
    %2 = arith.cmpi ne, %1, %c0_i32_0 : i32
    scf.if %2 {
      %c0_9 = arith.constant 0 : index
      %c0_10 = arith.constant 0 : index
      %c0_11 = arith.constant 0 : index
      %12 = vector.load %arg3[%c0_9, %c0_10, %c0_11] : memref<1x128x128xf32, #tpu.memory_space<vmem>>, vector<1x128x128xf32>
      %13 = vector.shape_cast %12 : vector<1x128x128xf32> to vector<128x128xf32>
      %cst_12 = arith.constant dense<0.000000e+00> : vector<128xf32>
      %14 = vector.multi_reduction <add>, %13, %cst_12 [1] : vector<128x128xf32> to vector<128xf32>
      %15 = vector.shape_cast %14 : vector<128xf32> to vector<128x1xf32>
      %cst_13 = arith.constant 1.280000e+02 : f32
      %16 = vector.broadcast %cst_13 : f32 to vector<128x1xf32>
      %17 = arith.divf %15, %16 : vector<128x1xf32>
      %18 = vector.broadcast %17 : vector<128x1xf32> to vector<128x128xf32>
      %19 = arith.subf %13, %18 : vector<128x128xf32>
      %20 = arith.mulf %19, %19 : vector<128x128xf32>
      %cst_14 = arith.constant dense<0.000000e+00> : vector<128xf32>
      %21 = vector.multi_reduction <add>, %20, %cst_14 [1] : vector<128x128xf32> to vector<128xf32>
      %22 = vector.shape_cast %21 : vector<128xf32> to vector<128x1xf32>
      %cst_15 = arith.constant 1.280000e+02 : f32
      %23 = vector.broadcast %cst_15 : f32 to vector<128x1xf32>
      %24 = arith.divf %22, %23 : vector<128x1xf32>
      %25 = vector.broadcast %17 : vector<128x1xf32> to vector<128x128xf32>
      %26 = arith.subf %13, %25 : vector<128x128xf32>
      %cst_16 = arith.constant 9.99999997E-7 : f32
      %27 = vector.broadcast %cst_16 : f32 to vector<128x1xf32>
      %28 = arith.addf %24, %27 : vector<128x1xf32>
      %29 = math.rsqrt %28 : vector<128x1xf32>
      %30 = vector.broadcast %29 : vector<128x1xf32> to vector<128x128xf32>
      %31 = arith.mulf %26, %30 : vector<128x128xf32>
      %c0_17 = arith.constant 0 : index
      %c0_18 = arith.constant 0 : index
      %c0_19 = arith.constant 0 : index
      %32 = vector.load %arg4[%c0_17, %c0_18, %c0_19] : memref<1x1x128xf32, #tpu.memory_space<vmem>>, vector<1x1x128xf32>
      %33 = vector.shape_cast %32 : vector<1x1x128xf32> to vector<1x128xf32>
      %cst_20 = arith.constant 1.000000e+00 : f32
      %34 = vector.broadcast %cst_20 : f32 to vector<1x128xf32>
      %35 = arith.addf %34, %33 : vector<1x128xf32>
      %36 = vector.broadcast %35 : vector<1x128xf32> to vector<128x128xf32>
      %37 = arith.mulf %31, %36 : vector<128x128xf32>
      %c0_21 = arith.constant 0 : index
      %c0_22 = arith.constant 0 : index
      %c0_23 = arith.constant 0 : index
      %38 = vector.load %arg5[%c0_21, %c0_22, %c0_23] : memref<1x1x128xf32, #tpu.memory_space<vmem>>, vector<1x1x128xf32>
      %39 = vector.shape_cast %38 : vector<1x1x128xf32> to vector<1x128xf32>
      %40 = vector.broadcast %39 : vector<1x128xf32> to vector<128x128xf32>
      %41 = arith.addf %37, %40 : vector<128x128xf32>
      %42 = arith.truncf %41 : vector<128x128xf32> to vector<128x128xbf16>
      %c0_24 = arith.constant 0 : index
      %c0_25 = arith.constant 0 : index
      %43 = vector.load %arg9[%c0_24, %c0_25] : memref<128x128xbf16, #tpu.memory_space<vmem>>, vector<128x128xbf16>
      tpu.vector_store %arg9[%c0_24, %c0_25], %42 {strides = array<i32>} : memref<128x128xbf16, #tpu.memory_space<vmem>>, vector<128x128xbf16>,
    } else {
    }
    %c0 = arith.constant 0 : index
    %c0_1 = arith.constant 0 : index
    %3 = vector.load %arg9[%c0, %c0_1] : memref<128x128xbf16, #tpu.memory_space<vmem>>, vector<128x128xbf16>
    %c0_2 = arith.constant 0 : index
    %c0_3 = arith.constant 0 : index
    %4 = vector.load %arg6[%c0_2, %c0_3] : memref<128x256xbf16, #tpu.memory_space<vmem>>, vector<128x256xbf16>
    %cst = arith.constant dense<0.000000e+00> : vector<128x256xf32>
    %5 = tpu.matmul %3, %4, %cst {dimension_numbers = #tpu.dot_dimension_numbers<[1], [0], [0], [1], [0, 0, 1, 1], [], []>} : vector<128x128xbf16>, vector<128x256xbf16>, vector<128x256xf32> -> vector<128x256xf32>
    %c0_4 = arith.constant 0 : index
    %c0_5 = arith.constant 0 : index
    %6 = vector.load %arg7[%c0_4, %c0_5] : memref<1x256xf32, #tpu.memory_space<vmem>>, vector<1x256xf32>
    %7 = vector.broadcast %6 : vector<1x256xf32> to vector<128x256xf32>
    %8 = arith.addf %5, %7 : vector<128x256xf32>
    %c0_6 = arith.constant 0 : index
    %c0_7 = arith.constant 0 : index
    %c0_8 = arith.constant 0 : index
    %9 = vector.load %arg8[%c0_6, %c0_7, %c0_8] : memref<1x128x256xf32, #tpu.memory_space<vmem>>, vector<1x128x256xf32>
    %10 = vector.shape_cast %9 : vector<1x128x256xf32> to vector<128x256xf32>
    %11 = vector.shape_cast %8 : vector<128x256xf32> to vector<1x128x256xf32>
    tpu.vector_store %arg8[%c0_6, %c0_7, %c0_8], %11 {strides = array<i32>} : memref<1x128x256xf32, #tpu.memory_space<vmem>>, vector<1x128x256xf32>,
    return
  }
  func.func @transform_0(%arg0: i32, %arg1: i32, %arg2: i32) -> (i32, i32, i32) {
    %c0_i32 = arith.constant 0 : i32
    %c0_i32_0 = arith.constant 0 : i32
    return %arg0, %arg1, %c0_i32 : i32, i32, i32
  }
  func.func @transform_1(%arg0: i32, %arg1: i32, %arg2: i32) -> (i32, i32, i32) {
    %c0_i32 = arith.constant 0 : i32
    %c0_i32_0 = arith.constant 0 : i32
    %c0_i32_1 = arith.constant 0 : i32
    return %arg0, %c0_i32, %c0_i32_0 : i32, i32, i32
  }
  func.func @transform_2(%arg0: i32, %arg1: i32, %arg2: i32) -> (i32, i32, i32) {
    %c0_i32 = arith.constant 0 : i32
    %c0_i32_0 = arith.constant 0 : i32
    %c0_i32_1 = arith.constant 0 : i32
    return %arg0, %c0_i32, %c0_i32_0 : i32, i32, i32
  }
  func.func @transform_3(%arg0: i32, %arg1: i32, %arg2: i32) -> (i32, i32) {
    %c0_i32 = arith.constant 0 : i32
    %c0_i32_0 = arith.constant 0 : i32
    return %c0_i32, %arg2 : i32, i32
  }
  func.func @transform_4(%arg0: i32, %arg1: i32, %arg2: i32) -> (i32, i32) {
    %c0_i32 = arith.constant 0 : i32
    %c0_i32_0 = arith.constant 0 : i32
    return %c0_i32, %arg2 : i32, i32
  }
  func.func @transform_5(%arg0: i32, %arg1: i32, %arg2: i32) -> (i32, i32, i32) {
    %c0_i32 = arith.constant 0 : i32
    return %arg0, %arg1, %arg2 : i32, i32, i32
  }
}

</mosaic_0001>

<llo_original>
// kernel: tpu_custom_call.1
$region0: #{tpu_custom_call.1}
  #allocation0 [shape = 'u32[]', space=smem, size = 0x4, offset = 0x4, fixed_abs, tag = 'smem constant byte address 0x4 - core index']
  #allocation1 [shape = 'u32[144,128]{1,0:T(1,128)}', space=vmem, size = 0x12000, scoped, tag = 'internal scratch']
  %s0 = inlined_call_operand.hbm [shape: f32[8,128], index: 0, kind: input, shape index: {}]
  %s1 = inlined_call_operand.hbm [shape: f32[8,128], index: 1, kind: output, shape index: {}]
  %s2 = sld [smem:[#allocation0]]
  $region41: #{tpu_custom_call.1} parent=0
    _
  %s4 = ssub.s32 1, %s2
  %s5 = scalar_select 0, %s4, %s2
  $region1: #{tpu_custom_call.1} parent=0
    #allocation2 [shape = 'u8[4096]{0}', space=vmem, size = 0x1000, scoped, tag = 'input window, operand 0, single buffered']
    #allocation3 [shape = 's32[2]{0}', space=sflag, size = 0x8, scoped, tag = 'scoped memory for tpu_custom_call.1']
    #allocation4 [shape = 's32[2]{0}', space=sflag, size = 0x8, scoped, tag = 'scoped memory for tpu_custom_call.1']
    #allocation5 [shape = 'u8[4096]{0}', space=vmem, size = 0x1000, scoped, tag = 'output window, operand 0, single buffered']
    %6 = vsyncpa [#allocation3], 0
    %7 = vsyncpa [#allocation4], 0
    loop: start=0, step=1, limit=4
    $region2: #{tpu_custom_call.1} parent=1 // loop_pre_header
      _
    $region3: #{tpu_custom_call.1} parent=1 // loop_header
      %s9 = sphi 0, %s13
      %p10 = scmp.ge.s32.totalorder %s9, 4
      %s17 = sphi 0, %s17
      %s19 = sphi 0, %s17
      %s20 = sphi 0, %s19
      %s34 = sphi 0, %s20
      %s38 = sphi 0, %s38
      %s40 = sphi 0, %s38
      %s41 = sphi 0, %s40
      %s55 = sphi 0, %s41
    $region4: #{tpu_custom_call.1} parent=1 // loop_header_branch
      %12 = sbr.rel (%p10) target = $region8
    $region5: #{tpu_custom_call.1} parent=1 // loop_body
      %s14 = ssub.s32 %s9, 1
      %s15 = ssub.s32 %s9, 2
      %s16 = sadd.s32 %s9, 1
      %s18 = sadd.s32 %s17, 1
      %p21 = scmp.eq.s32.totalorder %s9, 1
      %p22 = scmp.ne.s32.totalorder %s17, %s19
      %p23 = scmp.eq.s32.totalorder %s9, 0
      %p24 = por %p22, %p23
      %p25 = scmp.ne.s32.totalorder %s17, %s19
      %p26 = scmp.eq.s32.totalorder %s14, 1
      %p27 = por %p25, %p26
      %p28 = scmp.ne.s32.totalorder %s19, %s20
      %p29 = scmp.eq.s32.totalorder %s14, 0
      %p30 = por %p28, %p29
      %p31 = scmp.ne.s32.totalorder %s19, %s20
      %p32 = scmp.eq.s32.totalorder %s15, 1
      %p33 = por %p31, %p32
      %p35 = scmp.ne.s32.totalorder %s20, %s34
      %p36 = scmp.eq.s32.totalorder %s15, 0
      %p37 = por %p35, %p36
      %s39 = sadd.s32 %s38, 1
      %p42 = scmp.eq.s32.totalorder %s9, 1
      %p43 = scmp.ne.s32.totalorder %s38, %s40
      %p44 = scmp.eq.s32.totalorder %s9, 0
      %p45 = por %p43, %p44
      %p46 = scmp.ne.s32.totalorder %s38, %s40
      %p47 = scmp.eq.s32.totalorder %s14, 1
      %p48 = por %p46, %p47
      %p49 = scmp.ne.s32.totalorder %s40, %s41
      %p50 = scmp.eq.s32.totalorder %s14, 0
      %p51 = por %p49, %p50
      %p52 = scmp.ne.s32.totalorder %s40, %s41
      %p53 = scmp.eq.s32.totalorder %s15, 1
      %p54 = por %p52, %p53
      %p56 = scmp.ne.s32.totalorder %s41, %s55
      %p57 = scmp.eq.s32.totalorder %s15, 0
      %p58 = por %p56, %p57
      %p59 = scmp.le.s32.totalorder 1, %s9
      %p60 = scmp.lt.s32.totalorder %s9, 3
      %p61 = pnand %p59, %p60
      %p62 = pneg %p61
      // Predicated region
      $region9: #{tpu_custom_call.1} parent=5 // pred_check
        _
      $region10: #{tpu_custom_call.1} parent=5 // pred_check_branch
        %64 = sbr.rel (%p61) target = $region12
      $region11: #{tpu_custom_call.1} parent=5 // pred_region
        %s65 = ssub.s32 %s9, 1
        // Predicated region
        $region13: #{tpu_custom_call.1} parent=11 // pred_check
          %p66 = pneg %p30
        $region14: #{tpu_custom_call.1} parent=11 // pred_check_branch
          %68 = sbr.rel (%p66) target = $region16
        $region15: #{tpu_custom_call.1} parent=11 // pred_region
          %s70 = ssub.s32 128, 128
          %71 = vsyncadd [#allocation3], %s70
          %s73 = sshll.u32 [#allocation2], 4
          %s74 = int_to_ptr.vmem [resolvable:$true] %s73
          %76 = dma.hbm_to_vmem [thread:$0]  %s0, 128, %s74, [#allocation3]
        $region16: #{tpu_custom_call.1} parent=11 // pred_fallthru
          _
      $region12: #{tpu_custom_call.1} parent=5 // pred_fallthru
        _
      %p77 = scmp.lt.s32.totalorder %s9, 2
      // Predicated region
      $region17: #{tpu_custom_call.1} parent=5 // pred_check
        %p78 = pneg %p77
      $region18: #{tpu_custom_call.1} parent=5 // pred_check_branch
        %80 = sbr.rel (%p78) target = $region20
      $region19: #{tpu_custom_call.1} parent=5 // pred_region
        _
      $region20: #{tpu_custom_call.1} parent=5 // pred_fallthru
        _
      %p81 = scmp.le.s32.totalorder 1, %s9
      %p82 = scmp.lt.s32.totalorder %s9, 3
      %p83 = pnand %p81, %p82
      %p84 = pneg %p83
      // Predicated region
      $region21: #{tpu_custom_call.1} parent=5 // pred_check
        _
      $region22: #{tpu_custom_call.1} parent=5 // pred_check_branch
        %86 = sbr.rel (%p83) target = $region24
      $region23: #{tpu_custom_call.1} parent=5 // pred_region
        %s87 = ssub.s32 %s9, 1
        // Predicated region
        $region25: #{tpu_custom_call.1} parent=23 // pred_check
          %p88 = pneg %p30
        $region26: #{tpu_custom_call.1} parent=23 // pred_check_branch
          %90 = sbr.rel (%p88) target = $region28
        $region27: #{tpu_custom_call.1} parent=23 // pred_region
          %91 = dma.done [#allocation3], 128
        $region28: #{tpu_custom_call.1} parent=23 // pred_fallthru
          _
        %p92 = pneg %p30
        %p93 = pneg %p27
        %p94 = pneg %p51
        %p95 = pneg %p48
        %v96 = vld [vmem:[#allocation2] sm:$0xff]
        %v97 = vadd.f32 %v96, 1.0
        %98 = vst [vmem:[#allocation5] sm:$0xff] %v97
        // Predicated region
        $region29: #{tpu_custom_call.1} parent=23 // pred_check
          %p99 = pneg %p48
        $region30: #{tpu_custom_call.1} parent=23 // pred_check_branch
          %101 = sbr.rel (%p99) target = $region32
        $region31: #{tpu_custom_call.1} parent=23 // pred_region
          %s103 = ssub.s32 128, 128
          %104 = vsyncadd [#allocation4], %s103
          %s106 = sshll.u32 [#allocation5], 4
          %s107 = int_to_ptr.vmem [resolvable:$true] %s106
          %109 = dma.vmem_to_hbm [thread:$0]  %s107, 128, %s1, [#allocation4]
        $region32: #{tpu_custom_call.1} parent=23 // pred_fallthru
          _
        // Predicated region
        $region33: #{tpu_custom_call.1} parent=23 // pred_check
          %p110 = pneg %p48
        $region34: #{tpu_custom_call.1} parent=23 // pred_check_branch
          %112 = sbr.rel (%p110) target = $region36
        $region35: #{tpu_custom_call.1} parent=23 // pred_region
          %113 = dma.done [#allocation4], 128
        $region36: #{tpu_custom_call.1} parent=23 // pred_fallthru
          _
      $region24: #{tpu_custom_call.1} parent=5 // pred_fallthru
        _
      %p114 = scmp.le.s32.totalorder 2, %s9
      // Predicated region
      $region37: #{tpu_custom_call.1} parent=5 // pred_check
        %p115 = pneg %p114
      $region38: #{tpu_custom_call.1} parent=5 // pred_check_branch
        %117 = sbr.rel (%p115) target = $region40
      $region39: #{tpu_custom_call.1} parent=5 // pred_region
        %s118 = ssub.s32 %s9, 2
      $region40: #{tpu_custom_call.1} parent=5 // pred_fallthru
        _
    $region6: #{tpu_custom_call.1} parent=1 // loop_footer
      %s13 = sadd.s32 1, %s9
    $region7: #{tpu_custom_call.1} parent=1 // loop_footer_branch
      %8 = sbr.rel target = $region3
    $region8: #{tpu_custom_call.1} parent=1 // loop_exit
      _
    %119 = vsyncpa [#allocation3], 1
    %s120 = scalar_lea.sflag [#allocation3], 1
    %121 = vsyncpa %s120, 1
    %122 = vsyncpa [#allocation4], 1
    %s123 = scalar_lea.sflag [#allocation4], 1
    %124 = vsyncpa %s123, 1

// kernel: var_forward.11
$region0: #{var_forward.11}
  #allocation0 [shape = 'u32[]', space=smem, size = 0x4, offset = 0x4, fixed_abs, tag = 'smem constant byte address 0x4 - core index']
  #allocation1 [shape = 'u32[144,128]{1,0:T(1,128)}', space=vmem, size = 0x12000, scoped, tag = 'internal scratch']
  %s0 = inlined_call_operand.hbm [shape: f32[2,128], index: 0, kind: input, shape index: {}]
  %s1 = inlined_call_operand.hbm [shape: bf16[2,128,768], index: 1, kind: input, shape index: {}]
  %s2 = inlined_call_operand.hbm [shape: f32[2,1,768], index: 2, kind: input, shape index: {}]
  %s3 = inlined_call_operand.hbm [shape: f32[2,2,768], index: 3, kind: output, shape index: {}]
  %s4 = sld [smem:[#allocation0]]
  $region57: #{var_forward.11} parent=0
    _
  %s6 = ssub.s32 1, %s4
  %s7 = scalar_select 0, %s6, %s4
  $region1: #{var_forward.11} parent=0
    #allocation2 [shape = 'u8[1024]{0}', space=vmem, size = 0x400, scoped, tag = 'input window, operand 0, single buffered']
    #allocation3 [shape = 's32[2]{0}', space=sflag, size = 0x8, scoped, tag = 'scoped memory for var_forward.11']
    #allocation4 [shape = 's32[2]{0}', space=sflag, size = 0x8, scoped, tag = 'scoped memory for var_forward.11']
    #allocation5 [shape = 'u8[393216]{0}', space=vmem, size = 0x60000, scoped, tag = 'input window, operand 1']
    #allocation6 [shape = 's32[2]{0}', space=sflag, size = 0x8, scoped, tag = 'scoped memory for var_forward.11']
    #allocation7 [shape = 'u8[6144]{0}', space=vmem, size = 0x1800, scoped, tag = 'input window, operand 2']
    #allocation8 [shape = 'u8[12288]{0}', space=vmem, size = 0x3000, scoped, tag = 'output window, operand 0']
    %8 = vsyncpa [#allocation3], 0
    %9 = vsyncpa [#allocation6], 0
    %s10 = scalar_lea.sflag [#allocation6], 1
    %11 = vsyncpa %s10, 0
    %12 = vsyncpa [#allocation4], 0
    %s13 = scalar_lea.sflag [#allocation4], 1
    %14 = vsyncpa %s13, 0
    loop: start=0, step=1, limit=4
    $region2: #{var_forward.11} parent=1 // loop_pre_header
      _
    $region3: #{var_forward.11} parent=1 // loop_header
      %s16 = sphi 0, %s20
      %p17 = scmp.ge.s32.totalorder %s16, 4
      %s24 = sphi 0, %s24
      %s26 = sphi 0, %s24
      %s27 = sphi 0, %s26
      %s41 = sphi 0, %s27
      %s47 = sphi 0, %s49
      %s50 = sphi 0, %s47
      %s51 = sphi 0, %s50
      %s67 = sphi 0, %s51
      %s73 = sphi 0, %s75
      %s76 = sphi 0, %s73
      %s77 = sphi 0, %s76
      %s93 = sphi 0, %s77
      %s99 = sphi 0, %s101
      %s102 = sphi 0, %s99
      %s103 = sphi 0, %s102
      %s119 = sphi 0, %s103
    $region4: #{var_forward.11} parent=1 // loop_header_branch
      %19 = sbr.rel (%p17) target = $region8
    $region5: #{var_forward.11} parent=1 // loop_body
      %s21 = ssub.s32 %s16, 1
      %s22 = ssub.s32 %s16, 2
      %s23 = sadd.s32 %s16, 1
      %s25 = sadd.s32 %s24, 1
      %p28 = scmp.eq.s32.totalorder %s16, 1
      %p29 = scmp.ne.s32.totalorder %s24, %s26
      %p30 = scmp.eq.s32.totalorder %s16, 0
      %p31 = por %p29, %p30
      %p32 = scmp.ne.s32.totalorder %s24, %s26
      %p33 = scmp.eq.s32.totalorder %s21, 1
      %p34 = por %p32, %p33
      %p35 = scmp.ne.s32.totalorder %s26, %s27
      %p36 = scmp.eq.s32.totalorder %s21, 0
      %p37 = por %p35, %p36
      %p38 = scmp.ne.s32.totalorder %s26, %s27
      %p39 = scmp.eq.s32.totalorder %s22, 1
      %p40 = por %p38, %p39
      %p42 = scmp.ne.s32.totalorder %s27, %s41
      %p43 = scmp.eq.s32.totalorder %s22, 0
      %p44 = por %p42, %p43
      %s45 = ssub.s32 %s16, %s23
      %p46 = scmp.eq.s32.totalorder %s45, 0
      %s48 = sadd.s32 %s47, 1
      %s49 = scalar_select %p46, %s47, %s48
      %p52 = pneg %p46
      %p53 = scmp.eq.s32.totalorder %s16, 1
      %p54 = por %p52, %p53
      %p55 = scmp.ne.s32.totalorder %s47, %s50
      %p56 = scmp.eq.s32.totalorder %s16, 0
      %p57 = por %p55, %p56
      %p58 = scmp.ne.s32.totalorder %s47, %s50
      %p59 = scmp.eq.s32.totalorder %s21, 1
      %p60 = por %p58, %p59
      %p61 = scmp.ne.s32.totalorder %s50, %s51
      %p62 = scmp.eq.s32.totalorder %s21, 0
      %p63 = por %p61, %p62
      %p64 = scmp.ne.s32.totalorder %s50, %s51
      %p65 = scmp.eq.s32.totalorder %s22, 1
      %p66 = por %p64, %p65
      %p68 = scmp.ne.s32.totalorder %s51, %s67
      %p69 = scmp.eq.s32.totalorder %s22, 0
      %p70 = por %p68, %p69
      %s71 = ssub.s32 %s16, %s23
      %p72 = scmp.eq.s32.totalorder %s71, 0
      %s74 = sadd.s32 %s73, 1
      %s75 = scalar_select %p72, %s73, %s74
      %p78 = pneg %p72
      %p79 = scmp.eq.s32.totalorder %s16, 1
      %p80 = por %p78, %p79
      %p81 = scmp.ne.s32.totalorder %s73, %s76
      %p82 = scmp.eq.s32.totalorder %s16, 0
      %p83 = por %p81, %p82
      %p84 = scmp.ne.s32.totalorder %s73, %s76
      %p85 = scmp.eq.s32.totalorder %s21, 1
      %p86 = por %p84, %p85
      %p87 = scmp.ne.s32.totalorder %s76, %s77
      %p88 = scmp.eq.s32.totalorder %s21, 0
      %p89 = por %p87, %p88
      %p90 = scmp.ne.s32.totalorder %s76, %s77
      %p91 = scmp.eq.s32.totalorder %s22, 1
      %p92 = por %p90, %p91
      %p94 = scmp.ne.s32.totalorder %s77, %s93
      %p95 = scmp.eq.s32.totalorder %s22, 0
      %p96 = por %p94, %p95
      %s97 = ssub.s32 %s16, %s23
      %p98 = scmp.eq.s32.totalorder %s97, 0
      %s100 = sadd.s32 %s99, 1
      %s101 = scalar_select %p98, %s99, %s100
      %p104 = pneg %p98
      %p105 = scmp.eq.s32.totalorder %s16, 1
      %p106 = por %p104, %p105
      %p107 = scmp.ne.s32.totalorder %s99, %s102
      %p108 = scmp.eq.s32.totalorder %s16, 0
      %p109 = por %p107, %p108
      %p110 = scmp.ne.s32.totalorder %s99, %s102
      %p111 = scmp.eq.s32.totalorder %s21, 1
      %p112 = por %p110, %p111
      %p113 = scmp.ne.s32.totalorder %s102, %s103
      %p114 = scmp.eq.s32.totalorder %s21, 0
      %p115 = por %p113, %p114
      %p116 = scmp.ne.s32.totalorder %s102, %s103
      %p117 = scmp.eq.s32.totalorder %s22, 1
      %p118 = por %p116, %p117
      %p120 = scmp.ne.s32.totalorder %s103, %s119
      %p121 = scmp.eq.s32.totalorder %s22, 0
      %p122 = por %p120, %p121
      %p123 = scmp.le.s32.totalorder 1, %s16
      %p124 = scmp.lt.s32.totalorder %s16, 3
      %p125 = pnand %p123, %p124
      %p126 = pneg %p125
      // Predicated region
      $region9: #{var_forward.11} parent=5 // pred_check
        _
      $region10: #{var_forward.11} parent=5 // pred_check_branch
        %128 = sbr.rel (%p125) target = $region12
      $region11: #{var_forward.11} parent=5 // pred_region
        %s129 = ssub.s32 %s16, 1
        // Predicated region
        $region13: #{var_forward.11} parent=11 // pred_check
          %p130 = pneg %p37
        $region14: #{var_forward.11} parent=11 // pred_check_branch
          %132 = sbr.rel (%p130) target = $region16
        $region15: #{var_forward.11} parent=11 // pred_region
          %s134 = ssub.s32 32, 32
          %135 = vsyncadd [#allocation3], %s134
          %s137 = sshll.u32 [#allocation2], 4
          %s138 = int_to_ptr.vmem [resolvable:$true] %s137
          %140 = dma.hbm_to_vmem [thread:$0]  %s0, 32, %s138, [#allocation3]
        $region16: #{var_forward.11} parent=11 // pred_fallthru
          _
      $region12: #{var_forward.11} parent=5 // pred_fallthru
        _
      %p141 = scmp.lt.s32.totalorder %s16, 2
      // Predicated region
      $region17: #{var_forward.11} parent=5 // pred_check
        %p142 = pneg %p141
      $region18: #{var_forward.11} parent=5 // pred_check_branch
        %144 = sbr.rel (%p142) target = $region20
      $region19: #{var_forward.11} parent=5 // pred_region
        // Predicated region
        $region21: #{var_forward.11} parent=19 // pred_check
          %p145 = pneg %p57
        $region22: #{var_forward.11} parent=19 // pred_check_branch
          %147 = sbr.rel (%p145) target = $region24
        $region23: #{var_forward.11} parent=19 // pred_region
          %s148 = sand.u32 %s16, 1
          %s149 = scalar_lea.sflag [#allocation6], %s148
          %s150 = sand.u32 %s47, 1
          %s151 = smul.addr %s150, 384
          %s152 = scalar_lea.vmem [#allocation5], %s151
          %s154 = ssub.s32 6144, 6144
          %155 = vsyncadd %s149, %s154
          %s156 = smul.addr %s16, 96
          %s157 = smul.addr %s156, 64
          %s158 = scalar_lea.hbm %s1, %s157
          %s159 = sshll.u32 %s152, 4
          %s160 = int_to_ptr.vmem [resolvable:$true] %s159
          %165 = dma.hbm_to_vmem [thread:$0]  %s158, 6144, %s160, %s149, 384, 384, 24
        $region24: #{var_forward.11} parent=19 // pred_fallthru
          _
        // Predicated region
        $region25: #{var_forward.11} parent=19 // pred_check
          %p166 = pneg %p83
        $region26: #{var_forward.11} parent=19 // pred_check_branch
          %168 = sbr.rel (%p166) target = $region28
        $region27: #{var_forward.11} parent=19 // pred_region
          %s169 = sand.u32 %s16, 1
          %s170 = scalar_lea.sflag [#allocation6], %s169
          %s171 = sand.u32 %s73, 1
          %s172 = smul.addr %s171, 6
          %s173 = scalar_lea.vmem [#allocation7], %s172
          %s175 = ssub.s32 96, 96
          %176 = vsyncadd %s170, %s175
          %s177 = smul.addr %s16, 6
          %s178 = smul.addr %s177, 16
          %s179 = scalar_lea.hbm %s2, %s178
          %s181 = sshll.u32 %s173, 4
          %s182 = int_to_ptr.vmem [resolvable:$true] %s181
          %184 = dma.hbm_to_vmem [thread:$0]  %s179, 96, %s182, %s170
        $region28: #{var_forward.11} parent=19 // pred_fallthru
          _
      $region20: #{var_forward.11} parent=5 // pred_fallthru
        _
      %p185 = scmp.le.s32.totalorder 1, %s16
      %p186 = scmp.lt.s32.totalorder %s16, 3
      %p187 = pnand %p185, %p186
      %p188 = pneg %p187
      // Predicated region
      $region29: #{var_forward.11} parent=5 // pred_check
        _
      $region30: #{var_forward.11} parent=5 // pred_check_branch
        %190 = sbr.rel (%p187) target = $region32
      $region31: #{var_forward.11} parent=5 // pred_region
        %s191 = ssub.s32 %s16, 1
        // Predicated region
        $region33: #{var_forward.11} parent=31 // pred_check
          %p192 = pneg %p37
        $region34: #{var_forward.11} parent=31 // pred_check_branch
          %194 = sbr.rel (%p192) target = $region36
        $region35: #{var_forward.11} parent=31 // pred_region
          %195 = dma.done [#allocation3], 32
        $region36: #{var_forward.11} parent=31 // pred_fallthru
          _
        %s196 = sand.u32 %s21, 1
        %s197 = scalar_lea.sflag [#allocation6], %s196
        %s198 = sand.u32 %s50, 1
        %s199 = smul.addr %s198, 384
        %s200 = scalar_lea.vmem [#allocation5], %s199
        // Predicated region
        $region37: #{var_forward.11} parent=31 // pred_check
          %p201 = pneg %p63
        $region38: #{var_forward.11} parent=31 // pred_check_branch
          %203 = sbr.rel (%p201) target = $region40
        $region39: #{var_forward.11} parent=31 // pred_region
          %204 = dma.done %s197, 6144
        $region40: #{var_forward.11} parent=31 // pred_fallthru
          _
        %s205 = sand.u32 %s21, 1
        %s206 = scalar_lea.sflag [#allocation6], %s205
        %s207 = sand.u32 %s76, 1
        %s208 = smul.addr %s207, 6
        %s209 = scalar_lea.vmem [#allocation7], %s208
        // Predicated region
        $region41: #{var_forward.11} parent=31 // pred_check
          %p210 = pneg %p89
        $region42: #{var_forward.11} parent=31 // pred_check_branch
          %212 = sbr.rel (%p210) target = $region44
        $region43: #{var_forward.11} parent=31 // pred_region
          %213 = dma.done %s206, 96
        $region44: #{var_forward.11} parent=31 // pred_fallthru
          _
        %p214 = pneg %p37
        %p215 = pneg %p34
        %s216 = sand.u32 %s21, 1
        %s217 = scalar_lea.sflag [#allocation6], %s216
        %s218 = sand.u32 %s50, 1
        %s219 = smul.addr %s218, 384
        %s220 = scalar_lea.vmem [#allocation5], %s219
        %p221 = pneg %p63
        %p222 = pneg %p60
        %s223 = sand.u32 %s21, 1
        %s224 = scalar_lea.sflag [#allocation6], %s223
        %s225 = sand.u32 %s76, 1
        %s226 = smul.addr %s225, 6
        %s227 = scalar_lea.vmem [#allocation7], %s226
        %p228 = pneg %p89
        %p229 = pneg %p86
        %p230 = pneg %p115
        %p231 = pneg %p112
        %s232 = sand.u32 %s102, 1
        %s233 = scalar_lea.sflag [#allocation4], %s232
        %s234 = sand.u32 %s102, 1
        %s235 = smul.addr %s234, 12
        %s236 = scalar_lea.vmem [#allocation8], %s235
        %v238 = vld [vmem:[#allocation2] sm:$0x3]
        %v239 = vxor.u32 %v238, 2147483648
        %v240 = vmul.f32 %v239, 1.442695
        %v241 = vpow.pop %v240
        %v242 = vadd.f32 %v241, 1.0
        %v243 = vrcp.pop %v242
        %v244 = vmul.f32 1.0, %v243
        %v245 = vmul.f32 %v238, %v244
        %v246 = vpack.c.bf16 %v245, %v245
        %v247 = vld [vmem:[%s200] sm:$0xff]
        %v248 = vld [vmem:[%s200 + $0x8] sm:$0xff]
        %v249 = vld [vmem:[%s200 + $0x10] sm:$0xff]
        %v250 = vld [vmem:[%s200 + $0x18] sm:$0xff]
        %v251 = vld [vmem:[%s200 + $0x20] sm:$0xff]
        %v252 = vld [vmem:[%s200 + $0x28] sm:$0xff]
        %v253 = vld [vmem:[%s200 + $0x30] sm:$0xff]
        %v254 = vld [vmem:[%s200 + $0x38] sm:$0xff]
        %v255 = vld [vmem:[%s200 + $0x40] sm:$0xff]
        %v256 = vld [vmem:[%s200 + $0x48] sm:$0xff]
        %v257 = vld [vmem:[%s200 + $0x50] sm:$0xff]
        %v258 = vld [vmem:[%s200 + $0x58] sm:$0xff]
        %v259 = vld [vmem:[%s200 + $0x60] sm:$0xff]
        %v260 = vld [vmem:[%s200 + $0x68] sm:$0xff]
        %v261 = vld [vmem:[%s200 + $0x70] sm:$0xff]
        %v262 = vld [vmem:[%s200 + $0x78] sm:$0xff]
        %v263 = vld [vmem:[%s200 + $0x80] sm:$0xff]
        %v264 = vld [vmem:[%s200 + $0x88] sm:$0xff]
        %v265 = vld [vmem:[%s200 + $0x90] sm:$0xff]
        %v266 = vld [vmem:[%s200 + $0x98] sm:$0xff]
        %v267 = vld [vmem:[%s200 + $0xa0] sm:$0xff]
        %v268 = vld [vmem:[%s200 + $0xa8] sm:$0xff]
        %v269 = vld [vmem:[%s200 + $0xb0] sm:$0xff]
        %v270 = vld [vmem:[%s200 + $0xb8] sm:$0xff]
        %v271 = vld [vmem:[%s200 + $0xc0] sm:$0xff]
        %v272 = vld [vmem:[%s200 + $0xc8] sm:$0xff]
        %v273 = vld [vmem:[%s200 + $0xd0] sm:$0xff]
        %v274 = vld [vmem:[%s200 + $0xd8] sm:$0xff]
        %v275 = vld [vmem:[%s200 + $0xe0] sm:$0xff]
        %v276 = vld [vmem:[%s200 + $0xe8] sm:$0xff]
        %v277 = vld [vmem:[%s200 + $0xf0] sm:$0xff]
        %v278 = vld [vmem:[%s200 + $0xf8] sm:$0xff]
        %v279 = vld [vmem:[%s200 + $0x100] sm:$0xff]
        %v280 = vld [vmem:[%s200 + $0x108] sm:$0xff]
        %v281 = vld [vmem:[%s200 + $0x110] sm:$0xff]
        %v282 = vld [vmem:[%s200 + $0x118] sm:$0xff]
        %v283 = vld [vmem:[%s200 + $0x120] sm:$0xff]
        %v284 = vld [vmem:[%s200 + $0x128] sm:$0xff]
        %v285 = vld [vmem:[%s200 + $0x130] sm:$0xff]
        %v286 = vld [vmem:[%s200 + $0x138] sm:$0xff]
        %v287 = vld [vmem:[%s200 + $0x140] sm:$0xff]
        %v288 = vld [vmem:[%s200 + $0x148] sm:$0xff]
        %v289 = vld [vmem:[%s200 + $0x150] sm:$0xff]
        %v290 = vld [vmem:[%s200 + $0x158] sm:$0xff]
        %v291 = vld [vmem:[%s200 + $0x160] sm:$0xff]
        %v292 = vld [vmem:[%s200 + $0x168] sm:$0xff]
        %v293 = vld [vmem:[%s200 + $0x170] sm:$0xff]
        %v294 = vld [vmem:[%s200 + $0x178] sm:$0xff]
        %v295 = vld [vmem:[%s209] sm:$0x3f]
        %v297 = vlaneseq
        %v298 = vshrl.u32 %v297, 7
        %v299 = vsub.s32 0, %v298
        %v300 = vrot.slane %v295, %v299
        %v301 = vlaneseq
        %v302 = vshrl.u32 %v301, 7
        %v303 = vsub.s32 1, %v302
        %v304 = vrot.slane %v295, %v303
        %v305 = vlaneseq
        %v306 = vshrl.u32 %v305, 7
        %v307 = vsub.s32 2, %v306
        %v308 = vrot.slane %v295, %v307
        %v309 = vlaneseq
        %v310 = vshrl.u32 %v309, 7
        %v311 = vsub.s32 3, %v310
        %v312 = vrot.slane %v295, %v311
        %v313 = vlaneseq
        %v314 = vshrl.u32 %v313, 7
        %v315 = vsub.s32 4, %v314
        %v316 = vrot.slane %v295, %v315
        %v317 = vlaneseq
        %v318 = vshrl.u32 %v317, 7
        %v319 = vsub.s32 5, %v318
        %v320 = vrot.slane %v295, %v319
        %v375 = vunpack.c.l.b16 %v247
        %v376 = vunpack.c.h.b16 %v247
        %v377 = vunpack.c.l.b16 %v248
        %v378 = vunpack.c.h.b16 %v248
        %v379 = vunpack.c.l.b16 %v249
        %v380 = vunpack.c.h.b16 %v249
        %v381 = vunpack.c.l.b16 %v250
        %v382 = vunpack.c.h.b16 %v250
        %v383 = vunpack.c.l.b16 %v251
        %v384 = vunpack.c.h.b16 %v251
        %v385 = vunpack.c.l.b16 %v252
        %v386 = vunpack.c.h.b16 %v252
        %v387 = vunpack.c.l.b16 %v253
        %v388 = vunpack.c.h.b16 %v253
        %v389 = vunpack.c.l.b16 %v254
        %v390 = vunpack.c.h.b16 %v254
        %v391 = vunpack.c.l.b16 %v255
        %v392 = vunpack.c.h.b16 %v255
        %v393 = vunpack.c.l.b16 %v256
        %v394 = vunpack.c.h.b16 %v256
        %v395 = vunpack.c.l.b16 %v257
        %v396 = vunpack.c.h.b16 %v257
        %v397 = vunpack.c.l.b16 %v258
        %v398 = vunpack.c.h.b16 %v258
        %v399 = vunpack.c.l.b16 %v259
        %v400 = vunpack.c.h.b16 %v259
        %v401 = vunpack.c.l.b16 %v260
        %v402 = vunpack.c.h.b16 %v260
        %v403 = vunpack.c.l.b16 %v261
        %v404 = vunpack.c.h.b16 %v261
        %v405 = vunpack.c.l.b16 %v262
        %v406 = vunpack.c.h.b16 %v262
        %v407 = vunpack.c.l.b16 %v263
        %v408 = vunpack.c.h.b16 %v263
        %v409 = vunpack.c.l.b16 %v264
        %v410 = vunpack.c.h.b16 %v264
        %v411 = vunpack.c.l.b16 %v265
        %v412 = vunpack.c.h.b16 %v265
        %v413 = vunpack.c.l.b16 %v266
        %v414 = vunpack.c.h.b16 %v266
        %v415 = vunpack.c.l.b16 %v267
        %v416 = vunpack.c.h.b16 %v267
        %v417 = vunpack.c.l.b16 %v268
        %v418 = vunpack.c.h.b16 %v268
        %v419 = vunpack.c.l.b16 %v269
        %v420 = vunpack.c.h.b16 %v269
        %v421 = vunpack.c.l.b16 %v270
        %v422 = vunpack.c.h.b16 %v270
        %v423 = vunpack.c.l.b16 %v271
        %v424 = vunpack.c.h.b16 %v271
        %v425 = vunpack.c.l.b16 %v272
        %v426 = vunpack.c.h.b16 %v272
        %v427 = vunpack.c.l.b16 %v273
        %v428 = vunpack.c.h.b16 %v273
        %v429 = vunpack.c.l.b16 %v274
        %v430 = vunpack.c.h.b16 %v274
        %v431 = vunpack.c.l.b16 %v275
        %v432 = vunpack.c.h.b16 %v275
        %v433 = vunpack.c.l.b16 %v276
        %v434 = vunpack.c.h.b16 %v276
        %v435 = vunpack.c.l.b16 %v277
        %v436 = vunpack.c.h.b16 %v277
        %v437 = vunpack.c.l.b16 %v278
        %v438 = vunpack.c.h.b16 %v278
        %v439 = vunpack.c.l.b16 %v279
        %v440 = vunpack.c.h.b16 %v279
        %v441 = vunpack.c.l.b16 %v280
        %v442 = vunpack.c.h.b16 %v280
        %v443 = vunpack.c.l.b16 %v281
        %v444 = vunpack.c.h.b16 %v281
        %v445 = vunpack.c.l.b16 %v282
        %v446 = vunpack.c.h.b16 %v282
        %v447 = vunpack.c.l.b16 %v283
        %v448 = vunpack.c.h.b16 %v283
        %v449 = vunpack.c.l.b16 %v284
        %v450 = vunpack.c.h.b16 %v284
        %v451 = vunpack.c.l.b16 %v285
        %v452 = vunpack.c.h.b16 %v285
        %v453 = vunpack.c.l.b16 %v286
        %v454 = vunpack.c.h.b16 %v286
        %v455 = vunpack.c.l.b16 %v287
        %v456 = vunpack.c.h.b16 %v287
        %v457 = vunpack.c.l.b16 %v288
        %v458 = vunpack.c.h.b16 %v288
        %v459 = vunpack.c.l.b16 %v289
        %v460 = vunpack.c.h.b16 %v289
        %v461 = vunpack.c.l.b16 %v290
        %v462 = vunpack.c.h.b16 %v290
        %v463 = vunpack.c.l.b16 %v291
        %v464 = vunpack.c.h.b16 %v291
        %v465 = vunpack.c.l.b16 %v292
        %v466 = vunpack.c.h.b16 %v292
        %v467 = vunpack.c.l.b16 %v293
        %v468 = vunpack.c.h.b16 %v293
        %v469 = vunpack.c.l.b16 %v294
        %v470 = vunpack.c.h.b16 %v294
        %v471 = vpack.c.b16 %v381, %v375
        %v472 = vpack.c.b16 %v382, %v376
        %v473 = vpack.c.b16 %v383, %v377
        %v474 = vpack.c.b16 %v384, %v378
        %v475 = vpack.c.b16 %v385, %v379
        %v476 = vpack.c.b16 %v386, %v380
        %v477 = vpack.c.b16 %v393, %v387
        %v478 = vpack.c.b16 %v394, %v388
        %v479 = vpack.c.b16 %v395, %v389
        %v480 = vpack.c.b16 %v396, %v390
        %v481 = vpack.c.b16 %v397, %v391
        %v482 = vpack.c.b16 %v398, %v392
        %v483 = vpack.c.b16 %v405, %v399
        %v484 = vpack.c.b16 %v406, %v400
        %v485 = vpack.c.b16 %v407, %v401
        %v486 = vpack.c.b16 %v408, %v402
        %v487 = vpack.c.b16 %v409, %v403
        %v488 = vpack.c.b16 %v410, %v404
        %v489 = vpack.c.b16 %v417, %v411
        %v490 = vpack.c.b16 %v418, %v412
        %v491 = vpack.c.b16 %v419, %v413
        %v492 = vpack.c.b16 %v420, %v414
        %v493 = vpack.c.b16 %v421, %v415
        %v494 = vpack.c.b16 %v422, %v416
        %v495 = vpack.c.b16 %v429, %v423
        %v496 = vpack.c.b16 %v430, %v424
        %v497 = vpack.c.b16 %v431, %v425
        %v498 = vpack.c.b16 %v432, %v426
        %v499 = vpack.c.b16 %v433, %v427
        %v500 = vpack.c.b16 %v434, %v428
        %v501 = vpack.c.b16 %v441, %v435
        %v502 = vpack.c.b16 %v442, %v436
        %v503 = vpack.c.b16 %v443, %v437
        %v504 = vpack.c.b16 %v444, %v438
        %v505 = vpack.c.b16 %v445, %v439
        %v506 = vpack.c.b16 %v446, %v440
        %v507 = vpack.c.b16 %v453, %v447
        %v508 = vpack.c.b16 %v454, %v448
        %v509 = vpack.c.b16 %v455, %v449
        %v510 = vpack.c.b16 %v456, %v450
        %v511 = vpack.c.b16 %v457, %v451
        %v512 = vpack.c.b16 %v458, %v452
        %v513 = vpack.c.b16 %v465, %v459
        %v514 = vpack.c.b16 %v466, %v460
        %v515 = vpack.c.b16 %v467, %v461
        %v516 = vpack.c.b16 %v468, %v462
        %v517 = vpack.c.b16 %v469, %v463
        %v518 = vpack.c.b16 %v470, %v464
        %567 = vmatprep.subr.bf16.mxu0 %v472
        %568 = vmatpush1.bf16.msra.mxu0 %v471
        %569 = vmatprep.subr.bf16.mxu0 %v478
        %570 = vmatpush1.bf16.msra.mxu0 %v477
        %571 = vmatprep.subr.bf16.mxu0 %v484
        %572 = vmatpush1.bf16.msra.mxu0 %v483
        %573 = vmatprep.subr.bf16.mxu0 %v490
        %574 = vmatpush1.bf16.msra.mxu0 %v489
        %575 = vmatprep.subr.bf16.mxu0 %v496
        %576 = vmatpush1.bf16.msra.mxu0 %v495
        %577 = vmatprep.subr.bf16.mxu0 %v502
        %578 = vmatpush1.bf16.msra.mxu0 %v501
        %579 = vmatprep.subr.bf16.mxu0 %v508
        %580 = vmatpush1.bf16.msra.mxu0 %v507
        %581 = vmatprep.subr.bf16.mxu0 %v514
        %582 = vmatpush1.bf16.msra.mxu0 %v513
        %583 = vmatprep.subr.bf16.mxu0 0
        %584 = vmatpush1.bf16.msra.mxu0 0
        %585 = vmatprep.subr.bf16.mxu0 0
        %586 = vmatpush1.bf16.msra.mxu0 0
        %587 = vmatprep.subr.bf16.mxu0 0
        %588 = vmatpush1.bf16.msra.mxu0 0
        %589 = vmatprep.subr.bf16.mxu0 0
        %590 = vmatpush1.bf16.msra.mxu0 0
        %591 = vmatprep.subr.bf16.mxu0 0
        %592 = vmatpush1.bf16.msra.mxu0 0
        %593 = vmatprep.subr.bf16.mxu0 0
        %594 = vmatpush1.bf16.msra.mxu0 0
        %595 = vmatprep.subr.bf16.mxu0 0
        %596 = vmatpush1.bf16.msra.mxu0 0
        %597 = vmatprep.subr.bf16.mxu0 0
        %598 = vmatpush1.bf16.msra.mxu0 0
        %599 = vmatprep.mubr.bf16.mxu0 0
        %600 = vmatmul.mubr.bf16.gmra.mrb[0].mxu0 %v246
        %v601 = vpop.f32.mrb[0].mxu0
        %v602 = vadd.f32 %v300, %v601
        %v603 = vpop.f32.mrb[0].mxu0
        %v604 = vadd.f32 %v304, %v603
        %v605 = vpop.f32.mrb[0].mxu0
        %v606 = vpop.f32.mrb[0].mxu0
        %607 = vdwg.mxu0
        %608 = vmatprep.subr.bf16.mxu0 %v474
        %609 = vmatpush1.bf16.msra.mxu0 %v473
        %610 = vmatprep.subr.bf16.mxu0 %v480
        %611 = vmatpush1.bf16.msra.mxu0 %v479
        %612 = vmatprep.subr.bf16.mxu0 %v486
        %613 = vmatpush1.bf16.msra.mxu0 %v485
        %614 = vmatprep.subr.bf16.mxu0 %v492
        %615 = vmatpush1.bf16.msra.mxu0 %v491
        %616 = vmatprep.subr.bf16.mxu0 %v498
        %617 = vmatpush1.bf16.msra.mxu0 %v497
        %618 = vmatprep.subr.bf16.mxu0 %v504
        %619 = vmatpush1.bf16.msra.mxu0 %v503
        %620 = vmatprep.subr.bf16.mxu0 %v510
        %621 = vmatpush1.bf16.msra.mxu0 %v509
        %622 = vmatprep.subr.bf16.mxu0 %v516
        %623 = vmatpush1.bf16.msra.mxu0 %v515
        %624 = vmatprep.subr.bf16.mxu0 0
        %625 = vmatpush1.bf16.msra.mxu0 0
        %626 = vmatprep.subr.bf16.mxu0 0
        %627 = vmatpush1.bf16.msra.mxu0 0
        %628 = vmatprep.subr.bf16.mxu0 0
        %629 = vmatpush1.bf16.msra.mxu0 0
        %630 = vmatprep.subr.bf16.mxu0 0
        %631 = vmatpush1.bf16.msra.mxu0 0
        %632 = vmatprep.subr.bf16.mxu0 0
        %633 = vmatpush1.bf16.msra.mxu0 0
        %634 = vmatprep.subr.bf16.mxu0 0
        %635 = vmatpush1.bf16.msra.mxu0 0
        %636 = vmatprep.subr.bf16.mxu0 0
        %637 = vmatpush1.bf16.msra.mxu0 0
        %638 = vmatprep.subr.bf16.mxu0 0
        %639 = vmatpush1.bf16.msra.mxu0 0
        %640 = vmatprep.mubr.bf16.mxu0 0
        %641 = vmatmul.mubr.bf16.gmra.mrb[0].mxu0 %v246
        %v642 = vpop.f32.mrb[0].mxu0
        %v643 = vadd.f32 %v308, %v642
        %v644 = vpop.f32.mrb[0].mxu0
        %v645 = vadd.f32 %v312, %v644
        %v646 = vpop.f32.mrb[0].mxu0
        %v647 = vpop.f32.mrb[0].mxu0
        %648 = vdwg.mxu0
        %649 = vmatprep.subr.bf16.mxu0 %v476
        %650 = vmatpush1.bf16.msra.mxu0 %v475
        %651 = vmatprep.subr.bf16.mxu0 %v482
        %652 = vmatpush1.bf16.msra.mxu0 %v481
        %653 = vmatprep.subr.bf16.mxu0 %v488
        %654 = vmatpush1.bf16.msra.mxu0 %v487
        %655 = vmatprep.subr.bf16.mxu0 %v494
        %656 = vmatpush1.bf16.msra.mxu0 %v493
        %657 = vmatprep.subr.bf16.mxu0 %v500
        %658 = vmatpush1.bf16.msra.mxu0 %v499
        %659 = vmatprep.subr.bf16.mxu0 %v506
        %660 = vmatpush1.bf16.msra.mxu0 %v505
        %661 = vmatprep.subr.bf16.mxu0 %v512
        %662 = vmatpush1.bf16.msra.mxu0 %v511
        %663 = vmatprep.subr.bf16.mxu0 %v518
        %664 = vmatpush1.bf16.msra.mxu0 %v517
        %665 = vmatprep.subr.bf16.mxu0 0
        %666 = vmatpush1.bf16.msra.mxu0 0
        %667 = vmatprep.subr.bf16.mxu0 0
        %668 = vmatpush1.bf16.msra.mxu0 0
        %669 = vmatprep.subr.bf16.mxu0 0
        %670 = vmatpush1.bf16.msra.mxu0 0
        %671 = vmatprep.subr.bf16.mxu0 0
        %672 = vmatpush1.bf16.msra.mxu0 0
        %673 = vmatprep.subr.bf16.mxu0 0
        %674 = vmatpush1.bf16.msra.mxu0 0
        %675 = vmatprep.subr.bf16.mxu0 0
        %676 = vmatpush1.bf16.msra.mxu0 0
        %677 = vmatprep.subr.bf16.mxu0 0
        %678 = vmatpush1.bf16.msra.mxu0 0
        %679 = vmatprep.subr.bf16.mxu0 0
        %680 = vmatpush1.bf16.msra.mxu0 0
        %681 = vmatprep.mubr.bf16.mxu0 0
        %682 = vmatmul.mubr.bf16.gmra.mrb[0].mxu0 %v246
        %v683 = vpop.f32.mrb[0].mxu0
        %v684 = vadd.f32 %v316, %v683
        %v685 = vpop.f32.mrb[0].mxu0
        %v686 = vadd.f32 %v320, %v685
        %v687 = vpop.f32.mrb[0].mxu0
        %v688 = vpop.f32.mrb[0].mxu0
        %689 = vdwg.mxu0
        %v696 = vcombine.low %v602, %v604
        %v697 = vcombine.low %v643, %v645
        %v699 = vunpack.c.l.s4 1983009808
        %v700 = vunpack.c.0.s8 %v699
        %v701 = vlaneseq
        %v702 = vshrl.u32 %v701, 7
        %v703 = vsub.s32 %v700, %v702
        %v704 = vrot.slane %v696, %v703
        %v706 = vunpack.c.l.s4 1983009808
        %v707 = vunpack.c.0.s8 %v706
        %v708 = vlaneseq
        %v709 = vshrl.u32 %v708, 7
        %v710 = vsub.s32 %v707, %v709
        %v711 = vrot.slane %v697, %v710
        %v712 = vcombine.low %v704, %v711
        %v713 = vcombine.low %v684, %v686
        %v715 = vunpack.c.l.s4 1983009808
        %v716 = vunpack.c.0.s8 %v715
        %v717 = vlaneseq
        %v718 = vshrl.u32 %v717, 7
        %v719 = vsub.s32 %v716, %v718
        %v720 = vrot.slane %v713, %v719
        %723 = vst [vmem:[%s236] sm:$0xff] %v712
        %724 = vst [vmem:[%s236 + $0x8] sm:$0xf] %v720
        %s725 = sand.u32 %s102, 1
        %s726 = scalar_lea.sflag [#allocation4], %s725
        %s727 = sand.u32 %s102, 1
        %s728 = smul.addr %s727, 12
        %s729 = scalar_lea.vmem [#allocation8], %s728
        // Predicated region
        $region45: #{var_forward.11} parent=31 // pred_check
          %p730 = pneg %p112
        $region46: #{var_forward.11} parent=31 // pred_check_branch
          %732 = sbr.rel (%p730) target = $region48
        $region47: #{var_forward.11} parent=31 // pred_region
          %s734 = ssub.s32 192, 192
          %735 = vsyncadd %s726, %s734
          %s736 = smul.addr %s21, 6
          %s737 = smul.addr %s736, 32
          %s738 = scalar_lea.hbm %s3, %s737
          %s740 = sshll.u32 %s729, 4
          %s741 = int_to_ptr.vmem [resolvable:$true] %s740
          %743 = dma.vmem_to_hbm [thread:$0]  %s741, 192, %s738, %s726
        $region48: #{var_forward.11} parent=31 // pred_fallthru
          _
      $region32: #{var_forward.11} parent=5 // pred_fallthru
        _
      %p744 = scmp.le.s32.totalorder 2, %s16
      // Predicated region
      $region49: #{var_forward.11} parent=5 // pred_check
        %p745 = pneg %p744
      $region50: #{var_forward.11} parent=5 // pred_check_branch
        %747 = sbr.rel (%p745) target = $region52
      $region51: #{var_forward.11} parent=5 // pred_region
        %s748 = ssub.s32 %s16, 2
        // Predicated region
        $region53: #{var_forward.11} parent=51 // pred_check
          %p749 = pneg %p118
        $region54: #{var_forward.11} parent=51 // pred_check_branch
          %751 = sbr.rel (%p749) target = $region56
        $region55: #{var_forward.11} parent=51 // pred_region
          %s752 = sand.u32 %s103, 1
          %s753 = scalar_lea.sflag [#allocation4], %s752
          %s754 = sand.u32 %s103, 1
          %s755 = smul.addr %s754, 12
          %s756 = scalar_lea.vmem [#allocation8], %s755
          %757 = dma.done %s753, 192
        $region56: #{var_forward.11} parent=51 // pred_fallthru
          _
      $region52: #{var_forward.11} parent=5 // pred_fallthru
        _
    $region6: #{var_forward.11} parent=1 // loop_footer
      %s20 = sadd.s32 1, %s16
    $region7: #{var_forward.11} parent=1 // loop_footer_branch
      %15 = sbr.rel target = $region3
    $region8: #{var_forward.11} parent=1 // loop_exit
      _
    %758 = vsyncpa [#allocation3], 1
    %s759 = scalar_lea.sflag [#allocation3], 1
    %760 = vsyncpa %s759, 1
    %761 = vsyncpa [#allocation6], 1
    %s762 = scalar_lea.sflag [#allocation6], 1
    %763 = vsyncpa %s762, 1
    %764 = vsyncpa [#allocation4], 1
    %s765 = scalar_lea.sflag [#allocation4], 1
    %766 = vsyncpa %s765, 1

// kernel: var_forward.10
$region0: #{var_forward.10}
  #allocation0 [shape = 'u32[]', space=smem, size = 0x4, offset = 0x4, fixed_abs, tag = 'smem constant byte address 0x4 - core index']
  #allocation1 [shape = 'u32[144,128]{1,0:T(1,128)}', space=vmem, size = 0x12000, scoped, tag = 'internal scratch']
  %s0 = inlined_call_operand.hbm [shape: f32[128,16], index: 0, kind: input, shape index: {}]
  %s1 = inlined_call_operand.hbm [shape: bf16[16,128], index: 1, kind: input, shape index: {}]
  %s2 = inlined_call_operand.hbm [shape: f32[1,128], index: 2, kind: input, shape index: {}]
  %s3 = inlined_call_operand.hbm [shape: f32[128,128], index: 3, kind: output, shape index: {}]
  %s4 = sld [smem:[#allocation0]]
  $region34: #{var_forward.10} parent=0
    _
  %s6 = ssub.s32 1, %s4
  %s7 = scalar_select 0, %s6, %s4
  $region1: #{var_forward.10} parent=0
    #allocation2 [shape = 'u8[65536]{0}', space=vmem, size = 0x10000, scoped, tag = 'input window, operand 0, single buffered']
    #allocation3 [shape = 's32[1]{0}', space=sflag, size = 0x4, scoped, tag = 'scoped memory for var_forward.10']
    #allocation4 [shape = 's32[1]{0}', space=sflag, size = 0x4, scoped, tag = 'scoped memory for var_forward.10']
    #allocation5 [shape = 'u8[4096]{0}', space=vmem, size = 0x1000, scoped, tag = 'input window, operand 1, single buffered']
    #allocation6 [shape = 's32[1]{0}', space=sflag, size = 0x4, scoped, tag = 'scoped memory for var_forward.10']
    #allocation7 [shape = 'u8[512]{0}', space=vmem, size = 0x400, scoped, tag = 'input window, operand 2, single buffered']
    #allocation8 [shape = 'u8[65536]{0}', space=vmem, size = 0x10000, scoped, tag = 'output window, operand 0, single buffered']
    %8 = vsyncpa [#allocation3], 0
    %9 = vsyncpa [#allocation6], 0
    %10 = vsyncpa [#allocation4], 0
    // Predicated region
    $region2: #{var_forward.10} parent=1 // pred_check
      _
    $region3: #{var_forward.10} parent=1 // pred_check_branch
      %12 = sbr.rel (0) target = $region5
    $region4: #{var_forward.10} parent=1 // pred_region
      %s14 = ssub.s32 2048, 2048
      %15 = vsyncadd [#allocation3], %s14
      %s16 = sshll.u32 [#allocation2], 4
      %s17 = int_to_ptr.vmem [resolvable:$true] %s16
      %22 = dma.hbm_to_vmem [thread:$0]  %s0, 2048, %s17, [#allocation3], 128, 128, 8
    $region5: #{var_forward.10} parent=1 // pred_fallthru
      _
    // Predicated region
    $region6: #{var_forward.10} parent=1 // pred_check
      _
    $region7: #{var_forward.10} parent=1 // pred_check_branch
      %24 = sbr.rel (0) target = $region9
    $region8: #{var_forward.10} parent=1 // pred_region
      %s26 = ssub.s32 128, 128
      %27 = vsyncadd [#allocation6], %s26
      %s28 = sshll.u32 [#allocation5], 4
      %s29 = int_to_ptr.vmem [resolvable:$true] %s28
      %34 = dma.hbm_to_vmem [thread:$0]  %s1, 128, %s29, [#allocation6], 64, 64, 4
    $region9: #{var_forward.10} parent=1 // pred_fallthru
      _
    // Predicated region
    $region10: #{var_forward.10} parent=1 // pred_check
      _
    $region11: #{var_forward.10} parent=1 // pred_check_branch
      %36 = sbr.rel (0) target = $region13
    $region12: #{var_forward.10} parent=1 // pred_region
      %s38 = ssub.s32 16, 16
      %39 = vsyncadd [#allocation6], %s38
      %s41 = sshll.u32 [#allocation7], 4
      %s42 = int_to_ptr.vmem [resolvable:$true] %s41
      %44 = dma.hbm_to_vmem [thread:$0]  %s2, 16, %s42, [#allocation6]
    $region13: #{var_forward.10} parent=1 // pred_fallthru
      _
    // Predicated region
    $region14: #{var_forward.10} parent=1 // pred_check
      _
    $region15: #{var_forward.10} parent=1 // pred_check_branch
      %46 = sbr.rel (0) target = $region17
    $region16: #{var_forward.10} parent=1 // pred_region
      %47 = dma.done [#allocation3], 2048
    $region17: #{var_forward.10} parent=1 // pred_fallthru
      _
    // Predicated region
    $region18: #{var_forward.10} parent=1 // pred_check
      _
    $region19: #{var_forward.10} parent=1 // pred_check_branch
      %49 = sbr.rel (0) target = $region21
    $region20: #{var_forward.10} parent=1 // pred_region
      %50 = dma.done [#allocation6], 128
    $region21: #{var_forward.10} parent=1 // pred_fallthru
      _
    // Predicated region
    $region22: #{var_forward.10} parent=1 // pred_check
      _
    $region23: #{var_forward.10} parent=1 // pred_check_branch
      %52 = sbr.rel (0) target = $region25
    $region24: #{var_forward.10} parent=1 // pred_region
      %53 = dma.done [#allocation6], 16
    $region25: #{var_forward.10} parent=1 // pred_fallthru
      _
    %v55 = vld [vmem:[#allocation2] sm:$0xff]
    %v56 = vld [vmem:[#allocation2 + $0x8] sm:$0xff]
    %v57 = vld [vmem:[#allocation2 + $0x10] sm:$0xff]
    %v58 = vld [vmem:[#allocation2 + $0x18] sm:$0xff]
    %v59 = vld [vmem:[#allocation2 + $0x20] sm:$0xff]
    %v60 = vld [vmem:[#allocation2 + $0x28] sm:$0xff]
    %v61 = vld [vmem:[#allocation2 + $0x30] sm:$0xff]
    %v62 = vld [vmem:[#allocation2 + $0x38] sm:$0xff]
    %v63 = vld [vmem:[#allocation2 + $0x40] sm:$0xff]
    %v64 = vld [vmem:[#allocation2 + $0x48] sm:$0xff]
    %v65 = vld [vmem:[#allocation2 + $0x50] sm:$0xff]
    %v66 = vld [vmem:[#allocation2 + $0x58] sm:$0xff]
    %v67 = vld [vmem:[#allocation2 + $0x60] sm:$0xff]
    %v68 = vld [vmem:[#allocation2 + $0x68] sm:$0xff]
    %v69 = vld [vmem:[#allocation2 + $0x70] sm:$0xff]
    %v70 = vld [vmem:[#allocation2 + $0x78] sm:$0xff]
    %v71 = vpack.c.bf16 %v56, %v55
    %v72 = vpack.c.bf16 %v58, %v57
    %v73 = vpack.c.bf16 %v60, %v59
    %v74 = vpack.c.bf16 %v62, %v61
    %v75 = vpack.c.bf16 %v64, %v63
    %v76 = vpack.c.bf16 %v66, %v65
    %v77 = vpack.c.bf16 %v68, %v67
    %v78 = vpack.c.bf16 %v70, %v69
    %v79 = vld [vmem:[#allocation5] sm:$0xf]
    %v80 = vld [vmem:[#allocation5 + $0x4] sm:$0xf]
    %v81 = vld [vmem:[#allocation7] sm:$0x1]
    %v83 = vlaneseq
    %v84 = vshrl.u32 %v83, 7
    %v85 = vsub.s32 0, %v84
    %v86 = vrot.slane %v81, %v85
    %v90 = vunpack.c.l.b16 %v79
    %v91 = vunpack.c.l.b16 %v80
    %v92 = vpack.c.b16 %v91, %v90
    %vm94 = vcmask 130048
    %v96 = vsel %vm94, %v71, 0
    %v99 = vsel %vm94, %v72, 0
    %v102 = vsel %vm94, %v73, 0
    %v105 = vsel %vm94, %v74, 0
    %v108 = vsel %vm94, %v75, 0
    %v111 = vsel %vm94, %v76, 0
    %v114 = vsel %vm94, %v77, 0
    %v117 = vsel %vm94, %v78, 0
    %119 = vmatprep.subr.bf16.mxu0 0
    %120 = vmatpush1.bf16.msra.mxu0 %v92
    %121 = vmatprep.subr.bf16.mxu0 0
    %122 = vmatpush1.bf16.msra.mxu0 0
    %123 = vmatprep.subr.bf16.mxu0 0
    %124 = vmatpush1.bf16.msra.mxu0 0
    %125 = vmatprep.subr.bf16.mxu0 0
    %126 = vmatpush1.bf16.msra.mxu0 0
    %127 = vmatprep.subr.bf16.mxu0 0
    %128 = vmatpush1.bf16.msra.mxu0 0
    %129 = vmatprep.subr.bf16.mxu0 0
    %130 = vmatpush1.bf16.msra.mxu0 0
    %131 = vmatprep.subr.bf16.mxu0 0
    %132 = vmatpush1.bf16.msra.mxu0 0
    %133 = vmatprep.subr.bf16.mxu0 0
    %134 = vmatpush1.bf16.msra.mxu0 0
    %135 = vmatprep.subr.bf16.mxu0 0
    %136 = vmatpush1.bf16.msra.mxu0 0
    %137 = vmatprep.subr.bf16.mxu0 0
    %138 = vmatpush1.bf16.msra.mxu0 0
    %139 = vmatprep.subr.bf16.mxu0 0
    %140 = vmatpush1.bf16.msra.mxu0 0
    %141 = vmatprep.subr.bf16.mxu0 0
    %142 = vmatpush1.bf16.msra.mxu0 0
    %143 = vmatprep.subr.bf16.mxu0 0
    %144 = vmatpush1.bf16.msra.mxu0 0
    %145 = vmatprep.subr.bf16.mxu0 0
    %146 = vmatpush1.bf16.msra.mxu0 0
    %147 = vmatprep.subr.bf16.mxu0 0
    %148 = vmatpush1.bf16.msra.mxu0 0
    %149 = vmatprep.subr.bf16.mxu0 0
    %150 = vmatpush1.bf16.msra.mxu0 0
    %151 = vmatprep.mubr.bf16.mxu0 0
    %152 = vmatmul.mubr.bf16.gmra.mrb[0].mxu0 %v96
    %v153 = vpop.f32.mrb[0].mxu0
    %v154 = vadd.f32 %v86, %v153
    %v155 = vpop.f32.mrb[0].mxu0
    %v156 = vpop.f32.mrb[0].mxu0
    %v157 = vadd.f32 %v86, %v156
    %v158 = vpop.f32.mrb[0].mxu0
    %159 = vmatprep.mubr.bf16.mxu0 0
    %160 = vmatmul.mubr.bf16.gmra.mrb[0].mxu0 %v99
    %v161 = vpop.f32.mrb[0].mxu0
    %v162 = vadd.f32 %v86, %v161
    %v163 = vpop.f32.mrb[0].mxu0
    %v164 = vpop.f32.mrb[0].mxu0
    %v165 = vadd.f32 %v86, %v164
    %v166 = vpop.f32.mrb[0].mxu0
    %167 = vmatprep.mubr.bf16.mxu0 0
    %168 = vmatmul.mubr.bf16.gmra.mrb[0].mxu0 %v102
    %v169 = vpop.f32.mrb[0].mxu0
    %v170 = vadd.f32 %v86, %v169
    %v171 = vpop.f32.mrb[0].mxu0
    %v172 = vpop.f32.mrb[0].mxu0
    %v173 = vadd.f32 %v86, %v172
    %v174 = vpop.f32.mrb[0].mxu0
    %175 = vmatprep.mubr.bf16.mxu0 0
    %176 = vmatmul.mubr.bf16.gmra.mrb[0].mxu0 %v105
    %v177 = vpop.f32.mrb[0].mxu0
    %v178 = vadd.f32 %v86, %v177
    %v179 = vpop.f32.mrb[0].mxu0
    %v180 = vpop.f32.mrb[0].mxu0
    %v181 = vadd.f32 %v86, %v180
    %v182 = vpop.f32.mrb[0].mxu0
    %183 = vmatprep.mubr.bf16.mxu0 0
    %184 = vmatmul.mubr.bf16.gmra.mrb[0].mxu0 %v108
    %v185 = vpop.f32.mrb[0].mxu0
    %v186 = vadd.f32 %v86, %v185
    %v187 = vpop.f32.mrb[0].mxu0
    %v188 = vpop.f32.mrb[0].mxu0
    %v189 = vadd.f32 %v86, %v188
    %v190 = vpop.f32.mrb[0].mxu0
    %191 = vmatprep.mubr.bf16.mxu0 0
    %192 = vmatmul.mubr.bf16.gmra.mrb[0].mxu0 %v111
    %v193 = vpop.f32.mrb[0].mxu0
    %v194 = vadd.f32 %v86, %v193
    %v195 = vpop.f32.mrb[0].mxu0
    %v196 = vpop.f32.mrb[0].mxu0
    %v197 = vadd.f32 %v86, %v196
    %v198 = vpop.f32.mrb[0].mxu0
    %199 = vmatprep.mubr.bf16.mxu0 0
    %200 = vmatmul.mubr.bf16.gmra.mrb[0].mxu0 %v114
    %v201 = vpop.f32.mrb[0].mxu0
    %v202 = vadd.f32 %v86, %v201
    %v203 = vpop.f32.mrb[0].mxu0
    %v204 = vpop.f32.mrb[0].mxu0
    %v205 = vadd.f32 %v86, %v204
    %v206 = vpop.f32.mrb[0].mxu0
    %207 = vmatprep.mubr.bf16.mxu0 0
    %208 = vmatmul.mubr.bf16.gmra.mrb[0].mxu0 %v117
    %v209 = vpop.f32.mrb[0].mxu0
    %v210 = vadd.f32 %v86, %v209
    %v211 = vpop.f32.mrb[0].mxu0
    %v212 = vpop.f32.mrb[0].mxu0
    %v213 = vadd.f32 %v86, %v212
    %v214 = vpop.f32.mrb[0].mxu0
    %215 = vdwg.mxu0
    %216 = vst [vmem:[#allocation8] sm:$0xff] %v154
    %217 = vst [vmem:[#allocation8 + $0x8] sm:$0xff] %v157
    %218 = vst [vmem:[#allocation8 + $0x10] sm:$0xff] %v162
    %219 = vst [vmem:[#allocation8 + $0x18] sm:$0xff] %v165
    %220 = vst [vmem:[#allocation8 + $0x20] sm:$0xff] %v170
    %221 = vst [vmem:[#allocation8 + $0x28] sm:$0xff] %v173
    %222 = vst [vmem:[#allocation8 + $0x30] sm:$0xff] %v178
    %223 = vst [vmem:[#allocation8 + $0x38] sm:$0xff] %v181
    %224 = vst [vmem:[#allocation8 + $0x40] sm:$0xff] %v186
    %225 = vst [vmem:[#allocation8 + $0x48] sm:$0xff] %v189
    %226 = vst [vmem:[#allocation8 + $0x50] sm:$0xff] %v194
    %227 = vst [vmem:[#allocation8 + $0x58] sm:$0xff] %v197
    %228 = vst [vmem:[#allocation8 + $0x60] sm:$0xff] %v202
    %229 = vst [vmem:[#allocation8 + $0x68] sm:$0xff] %v205
    %230 = vst [vmem:[#allocation8 + $0x70] sm:$0xff] %v210
    %231 = vst [vmem:[#allocation8 + $0x78] sm:$0xff] %v213
    // Predicated region
    $region26: #{var_forward.10} parent=1 // pred_check
      _
    $region27: #{var_forward.10} parent=1 // pred_check_branch
      %233 = sbr.rel (0) target = $region29
    $region28: #{var_forward.10} parent=1 // pred_region
      %s235 = ssub.s32 2048, 2048
      %236 = vsyncadd [#allocation4], %s235
      %s237 = sshll.u32 [#allocation8], 4
      %s238 = int_to_ptr.vmem [resolvable:$true] %s237
      %243 = dma.vmem_to_hbm [thread:$0]  %s238, 2048, %s3, [#allocation4], 128, 128, 8
    $region29: #{var_forward.10} parent=1 // pred_fallthru
      _
    // Predicated region
    $region30: #{var_forward.10} parent=1 // pred_check
      _
    $region31: #{var_forward.10} parent=1 // pred_check_branch
      %245 = sbr.rel (0) target = $region33
    $region32: #{var_forward.10} parent=1 // pred_region
      %246 = dma.done [#allocation4], 2048
    $region33: #{var_forward.10} parent=1 // pred_fallthru
      _
    %247 = vsyncpa [#allocation3], 1
    %248 = vsyncpa [#allocation6], 1
    %249 = vsyncpa [#allocation4], 1

// kernel: var_forward.18
$region0: #{var_forward.18}
  #allocation0 [shape = 'u32[]', space=smem, size = 0x4, offset = 0x4, fixed_abs, tag = 'smem constant byte address 0x4 - core index']
  #allocation1 [shape = 'u32[144,128]{1,0:T(1,128)}', space=vmem, size = 0x12000, scoped, tag = 'internal scratch']
  %s0 = inlined_call_operand.hbm [shape: f32[2,128], index: 0, kind: input, shape index: {}]
  %s1 = inlined_call_operand.hbm [shape: bf16[1,128,256], index: 1, kind: input, shape index: {}]
  %s2 = inlined_call_operand.hbm [shape: f32[1,1,256], index: 2, kind: input, shape index: {}]
  %s3 = inlined_call_operand.hbm [shape: f32[1,2,256], index: 3, kind: output, shape index: {}]
  %s4 = sld [smem:[#allocation0]]
  $region34: #{var_forward.18} parent=0
    _
  %s6 = ssub.s32 1, %s4
  %s7 = scalar_select 0, %s6, %s4
  $region1: #{var_forward.18} parent=0
    #allocation2 [shape = 'u8[1024]{0}', space=vmem, size = 0x400, scoped, tag = 'input window, operand 0, single buffered']
    #allocation3 [shape = 's32[1]{0}', space=sflag, size = 0x4, scoped, tag = 'scoped memory for var_forward.18']
    #allocation4 [shape = 's32[1]{0}', space=sflag, size = 0x4, scoped, tag = 'scoped memory for var_forward.18']
    #allocation5 [shape = 'u8[65536]{0}', space=vmem, size = 0x10000, scoped, tag = 'input window, operand 1, single buffered']
    #allocation6 [shape = 's32[1]{0}', space=sflag, size = 0x4, scoped, tag = 'scoped memory for var_forward.18']
    #allocation7 [shape = 'u8[1024]{0}', space=vmem, size = 0x400, scoped, tag = 'input window, operand 2, single buffered']
    #allocation8 [shape = 'u8[2048]{0}', space=vmem, size = 0x800, scoped, tag = 'output window, operand 0, single buffered']
    %8 = vsyncpa [#allocation3], 0
    %9 = vsyncpa [#allocation6], 0
    %10 = vsyncpa [#allocation4], 0
    // Predicated region
    $region2: #{var_forward.18} parent=1 // pred_check
      _
    $region3: #{var_forward.18} parent=1 // pred_check_branch
      %12 = sbr.rel (0) target = $region5
    $region4: #{var_forward.18} parent=1 // pred_region
      %s14 = ssub.s32 32, 32
      %15 = vsyncadd [#allocation3], %s14
      %s17 = sshll.u32 [#allocation2], 4
      %s18 = int_to_ptr.vmem [resolvable:$true] %s17
      %20 = dma.hbm_to_vmem [thread:$0]  %s0, 32, %s18, [#allocation3]
    $region5: #{var_forward.18} parent=1 // pred_fallthru
      _
    // Predicated region
    $region6: #{var_forward.18} parent=1 // pred_check
      _
    $region7: #{var_forward.18} parent=1 // pred_check_branch
      %22 = sbr.rel (0) target = $region9
    $region8: #{var_forward.18} parent=1 // pred_region
      %s24 = ssub.s32 2048, 2048
      %25 = vsyncadd [#allocation6], %s24
      %s26 = sshll.u32 [#allocation5], 4
      %s27 = int_to_ptr.vmem [resolvable:$true] %s26
      %32 = dma.hbm_to_vmem [thread:$0]  %s1, 2048, %s27, [#allocation6], 128, 128, 8
    $region9: #{var_forward.18} parent=1 // pred_fallthru
      _
    // Predicated region
    $region10: #{var_forward.18} parent=1 // pred_check
      _
    $region11: #{var_forward.18} parent=1 // pred_check_branch
      %34 = sbr.rel (0) target = $region13
    $region12: #{var_forward.18} parent=1 // pred_region
      %s36 = ssub.s32 32, 32
      %37 = vsyncadd [#allocation6], %s36
      %s39 = sshll.u32 [#allocation7], 4
      %s40 = int_to_ptr.vmem [resolvable:$true] %s39
      %42 = dma.hbm_to_vmem [thread:$0]  %s2, 32, %s40, [#allocation6]
    $region13: #{var_forward.18} parent=1 // pred_fallthru
      _
    // Predicated region
    $region14: #{var_forward.18} parent=1 // pred_check
      _
    $region15: #{var_forward.18} parent=1 // pred_check_branch
      %44 = sbr.rel (0) target = $region17
    $region16: #{var_forward.18} parent=1 // pred_region
      %45 = dma.done [#allocation3], 32
    $region17: #{var_forward.18} parent=1 // pred_fallthru
      _
    // Predicated region
    $region18: #{var_forward.18} parent=1 // pred_check
      _
    $region19: #{var_forward.18} parent=1 // pred_check_branch
      %47 = sbr.rel (0) target = $region21
    $region20: #{var_forward.18} parent=1 // pred_region
      %48 = dma.done [#allocation6], 2048
    $region21: #{var_forward.18} parent=1 // pred_fallthru
      _
    // Predicated region
    $region22: #{var_forward.18} parent=1 // pred_check
      _
    $region23: #{var_forward.18} parent=1 // pred_check_branch
      %50 = sbr.rel (0) target = $region25
    $region24: #{var_forward.18} parent=1 // pred_region
      %51 = dma.done [#allocation6], 32
    $region25: #{var_forward.18} parent=1 // pred_fallthru
      _
    %v53 = vld [vmem:[#allocation2] sm:$0x3]
    %v54 = vxor.u32 %v53, 2147483648
    %v55 = vmul.f32 %v54, 1.442695
    %v56 = vpow.pop %v55
    %v57 = vadd.f32 %v56, 1.0
    %v58 = vrcp.pop %v57
    %v59 = vmul.f32 1.0, %v58
    %v60 = vmul.f32 %v53, %v59
    %v61 = vpack.c.bf16 %v60, %v60
    %v62 = vld [vmem:[#allocation5] sm:$0xff]
    %v63 = vld [vmem:[#allocation5 + $0x8] sm:$0xff]
    %v64 = vld [vmem:[#allocation5 + $0x10] sm:$0xff]
    %v65 = vld [vmem:[#allocation5 + $0x18] sm:$0xff]
    %v66 = vld [vmem:[#allocation5 + $0x20] sm:$0xff]
    %v67 = vld [vmem:[#allocation5 + $0x28] sm:$0xff]
    %v68 = vld [vmem:[#allocation5 + $0x30] sm:$0xff]
    %v69 = vld [vmem:[#allocation5 + $0x38] sm:$0xff]
    %v70 = vld [vmem:[#allocation5 + $0x40] sm:$0xff]
    %v71 = vld [vmem:[#allocation5 + $0x48] sm:$0xff]
    %v72 = vld [vmem:[#allocation5 + $0x50] sm:$0xff]
    %v73 = vld [vmem:[#allocation5 + $0x58] sm:$0xff]
    %v74 = vld [vmem:[#allocation5 + $0x60] sm:$0xff]
    %v75 = vld [vmem:[#allocation5 + $0x68] sm:$0xff]
    %v76 = vld [vmem:[#allocation5 + $0x70] sm:$0xff]
    %v77 = vld [vmem:[#allocation5 + $0x78] sm:$0xff]
    %v78 = vld [vmem:[#allocation7] sm:$0x3]
    %v80 = vlaneseq
    %v81 = vshrl.u32 %v80, 7
    %v82 = vsub.s32 0, %v81
    %v83 = vrot.slane %v78, %v82
    %v84 = vlaneseq
    %v85 = vshrl.u32 %v84, 7
    %v86 = vsub.s32 1, %v85
    %v87 = vrot.slane %v78, %v86
    %v106 = vunpack.c.l.b16 %v62
    %v107 = vunpack.c.h.b16 %v62
    %v108 = vunpack.c.l.b16 %v63
    %v109 = vunpack.c.h.b16 %v63
    %v110 = vunpack.c.l.b16 %v64
    %v111 = vunpack.c.h.b16 %v64
    %v112 = vunpack.c.l.b16 %v65
    %v113 = vunpack.c.h.b16 %v65
    %v114 = vunpack.c.l.b16 %v66
    %v115 = vunpack.c.h.b16 %v66
    %v116 = vunpack.c.l.b16 %v67
    %v117 = vunpack.c.h.b16 %v67
    %v118 = vunpack.c.l.b16 %v68
    %v119 = vunpack.c.h.b16 %v68
    %v120 = vunpack.c.l.b16 %v69
    %v121 = vunpack.c.h.b16 %v69
    %v122 = vunpack.c.l.b16 %v70
    %v123 = vunpack.c.h.b16 %v70
    %v124 = vunpack.c.l.b16 %v71
    %v125 = vunpack.c.h.b16 %v71
    %v126 = vunpack.c.l.b16 %v72
    %v127 = vunpack.c.h.b16 %v72
    %v128 = vunpack.c.l.b16 %v73
    %v129 = vunpack.c.h.b16 %v73
    %v130 = vunpack.c.l.b16 %v74
    %v131 = vunpack.c.h.b16 %v74
    %v132 = vunpack.c.l.b16 %v75
    %v133 = vunpack.c.h.b16 %v75
    %v134 = vunpack.c.l.b16 %v76
    %v135 = vunpack.c.h.b16 %v76
    %v136 = vunpack.c.l.b16 %v77
    %v137 = vunpack.c.h.b16 %v77
    %v138 = vpack.c.b16 %v108, %v106
    %v139 = vpack.c.b16 %v109, %v107
    %v140 = vpack.c.b16 %v112, %v110
    %v141 = vpack.c.b16 %v113, %v111
    %v142 = vpack.c.b16 %v116, %v114
    %v143 = vpack.c.b16 %v117, %v115
    %v144 = vpack.c.b16 %v120, %v118
    %v145 = vpack.c.b16 %v121, %v119
    %v146 = vpack.c.b16 %v124, %v122
    %v147 = vpack.c.b16 %v125, %v123
    %v148 = vpack.c.b16 %v128, %v126
    %v149 = vpack.c.b16 %v129, %v127
    %v150 = vpack.c.b16 %v132, %v130
    %v151 = vpack.c.b16 %v133, %v131
    %v152 = vpack.c.b16 %v136, %v134
    %v153 = vpack.c.b16 %v137, %v135
    %170 = vmatprep.subr.bf16.mxu0 %v139
    %171 = vmatpush1.bf16.msra.mxu0 %v138
    %172 = vmatprep.subr.bf16.mxu0 %v141
    %173 = vmatpush1.bf16.msra.mxu0 %v140
    %174 = vmatprep.subr.bf16.mxu0 %v143
    %175 = vmatpush1.bf16.msra.mxu0 %v142
    %176 = vmatprep.subr.bf16.mxu0 %v145
    %177 = vmatpush1.bf16.msra.mxu0 %v144
    %178 = vmatprep.subr.bf16.mxu0 %v147
    %179 = vmatpush1.bf16.msra.mxu0 %v146
    %180 = vmatprep.subr.bf16.mxu0 %v149
    %181 = vmatpush1.bf16.msra.mxu0 %v148
    %182 = vmatprep.subr.bf16.mxu0 %v151
    %183 = vmatpush1.bf16.msra.mxu0 %v150
    %184 = vmatprep.subr.bf16.mxu0 %v153
    %185 = vmatpush1.bf16.msra.mxu0 %v152
    %186 = vmatprep.subr.bf16.mxu0 0
    %187 = vmatpush1.bf16.msra.mxu0 0
    %188 = vmatprep.subr.bf16.mxu0 0
    %189 = vmatpush1.bf16.msra.mxu0 0
    %190 = vmatprep.subr.bf16.mxu0 0
    %191 = vmatpush1.bf16.msra.mxu0 0
    %192 = vmatprep.subr.bf16.mxu0 0
    %193 = vmatpush1.bf16.msra.mxu0 0
    %194 = vmatprep.subr.bf16.mxu0 0
    %195 = vmatpush1.bf16.msra.mxu0 0
    %196 = vmatprep.subr.bf16.mxu0 0
    %197 = vmatpush1.bf16.msra.mxu0 0
    %198 = vmatprep.subr.bf16.mxu0 0
    %199 = vmatpush1.bf16.msra.mxu0 0
    %200 = vmatprep.subr.bf16.mxu0 0
    %201 = vmatpush1.bf16.msra.mxu0 0
    %202 = vmatprep.mubr.bf16.mxu0 0
    %203 = vmatmul.mubr.bf16.gmra.mrb[0].mxu0 %v61
    %v204 = vpop.f32.mrb[0].mxu0
    %v205 = vadd.f32 %v83, %v204
    %v206 = vpop.f32.mrb[0].mxu0
    %v207 = vadd.f32 %v87, %v206
    %v208 = vpop.f32.mrb[0].mxu0
    %v209 = vpop.f32.mrb[0].mxu0
    %210 = vdwg.mxu0
    %v213 = vcombine.low %v205, %v207
    %v215 = vunpack.c.l.s4 1983009808
    %v216 = vunpack.c.0.s8 %v215
    %v217 = vlaneseq
    %v218 = vshrl.u32 %v217, 7
    %v219 = vsub.s32 %v216, %v218
    %v220 = vrot.slane %v213, %v219
    %222 = vst [vmem:[#allocation8] sm:$0xf] %v220
    // Predicated region
    $region26: #{var_forward.18} parent=1 // pred_check
      _
    $region27: #{var_forward.18} parent=1 // pred_check_branch
      %224 = sbr.rel (0) target = $region29
    $region28: #{var_forward.18} parent=1 // pred_region
      %s226 = ssub.s32 64, 64
      %227 = vsyncadd [#allocation4], %s226
      %s229 = sshll.u32 [#allocation8], 4
      %s230 = int_to_ptr.vmem [resolvable:$true] %s229
      %232 = dma.vmem_to_hbm [thread:$0]  %s230, 64, %s3, [#allocation4]
    $region29: #{var_forward.18} parent=1 // pred_fallthru
      _
    // Predicated region
    $region30: #{var_forward.18} parent=1 // pred_check
      _
    $region31: #{var_forward.18} parent=1 // pred_check_branch
      %234 = sbr.rel (0) target = $region33
    $region32: #{var_forward.18} parent=1 // pred_region
      %235 = dma.done [#allocation4], 64
    $region33: #{var_forward.18} parent=1 // pred_fallthru
      _
    %236 = vsyncpa [#allocation3], 1
    %237 = vsyncpa [#allocation6], 1
    %238 = vsyncpa [#allocation4], 1

// kernel: var_forward.12
$region0: #{var_forward.12}
  #allocation0 [shape = 'u32[]', space=smem, size = 0x4, offset = 0x4, fixed_abs, tag = 'smem constant byte address 0x4 - core index']
  #allocation1 [shape = 'u32[144,128]{1,0:T(1,128)}', space=vmem, size = 0x12000, scoped, tag = 'internal scratch']
  %s0 = inlined_call_operand.hbm [shape: f32[2,128,128], index: 0, kind: input, shape index: {}]
  %s1 = inlined_call_operand.hbm [shape: f32[2,1,128], index: 1, kind: input, shape index: {}]
  %s2 = inlined_call_operand.hbm [shape: f32[2,1,128], index: 2, kind: input, shape index: {}]
  %s3 = inlined_call_operand.hbm [shape: bf16[128,384], index: 3, kind: input, shape index: {}]
  %s4 = inlined_call_operand.hbm [shape: f32[1,384], index: 4, kind: input, shape index: {}]
  %s5 = inlined_call_operand.hbm [shape: bf16[2,128,384], index: 5, kind: output, shape index: {}]
  %s6 = sld [smem:[#allocation0]]
  $region73: #{var_forward.12} parent=0
    _
  %s8 = ssub.s32 1, %s6
  %s9 = scalar_select 0, %s8, %s6
  $region1: #{var_forward.12} parent=0
    #allocation2 [shape = 'u8[131072]{0}', space=vmem, size = 0x20000, scoped, tag = 'input window, operand 0']
    #allocation3 [shape = 's32[2]{0}', space=sflag, size = 0x8, scoped, tag = 'scoped memory for var_forward.12']
    #allocation4 [shape = 's32[2]{0}', space=sflag, size = 0x8, scoped, tag = 'scoped memory for var_forward.12']
    #allocation5 [shape = 'u8[1024]{0}', space=vmem, size = 0x400, scoped, tag = 'input window, operand 1']
    #allocation6 [shape = 's32[2]{0}', space=sflag, size = 0x8, scoped, tag = 'scoped memory for var_forward.12']
    #allocation7 [shape = 'u8[1024]{0}', space=vmem, size = 0x400, scoped, tag = 'input window, operand 2']
    #allocation8 [shape = 'u8[98304]{0}', space=vmem, size = 0x18000, scoped, tag = 'input window, operand 3, single buffered']
    #allocation9 [shape = 's32[1]{0}', space=sflag, size = 0x4, scoped, tag = 'scoped memory for var_forward.12']
    #allocation10 [shape = 'u8[1536]{0}', space=vmem, size = 0x800, scoped, tag = 'input window, operand 4, single buffered']
    #allocation11 [shape = 'u8[196608]{0}', space=vmem, size = 0x30000, scoped, tag = 'output window, operand 0']
    %10 = vsyncpa [#allocation3], 0
    %s11 = scalar_lea.sflag [#allocation3], 1
    %12 = vsyncpa %s11, 0
    %13 = vsyncpa [#allocation6], 0
    %s14 = scalar_lea.sflag [#allocation6], 1
    %15 = vsyncpa %s14, 0
    %16 = vsyncpa [#allocation9], 0
    %17 = vsyncpa [#allocation4], 0
    %s18 = scalar_lea.sflag [#allocation4], 1
    %19 = vsyncpa %s18, 0
    loop: start=0, step=1, limit=4
    $region2: #{var_forward.12} parent=1 // loop_pre_header
      _
    $region3: #{var_forward.12} parent=1 // loop_header
      %s21 = sphi 0, %s25
      %p22 = scmp.ge.s32.totalorder %s21, 4
      %s28 = sphi 0, %s40
      %s29 = sphi 0, %s36
      %s30 = sphi 0, %s28
      %s31 = sphi 0, %s29
      %s32 = sphi 0, %s30
      %s33 = sphi 0, %s31
      %s45 = sphi 0, %s47
      %s48 = sphi 0, %s45
      %s49 = sphi 0, %s48
      %s65 = sphi 0, %s49
      %s71 = sphi 0, %s73
      %s74 = sphi 0, %s71
      %s75 = sphi 0, %s74
      %s91 = sphi 0, %s75
      %s97 = sphi 0, %s99
      %s100 = sphi 0, %s97
      %s101 = sphi 0, %s100
      %s117 = sphi 0, %s101
      %s121 = sphi 0, %s121
      %s123 = sphi 0, %s121
      %s124 = sphi 0, %s123
      %s138 = sphi 0, %s124
      %s142 = sphi 0, %s142
      %s144 = sphi 0, %s142
      %s145 = sphi 0, %s144
      %s159 = sphi 0, %s145
      %s167 = sphi 0, %s169
      %s170 = sphi 0, %s167
      %s171 = sphi 0, %s170
      %s187 = sphi 0, %s171
    $region4: #{var_forward.12} parent=1 // loop_header_branch
      %24 = sbr.rel (%p22) target = $region8
    $region5: #{var_forward.12} parent=1 // loop_body
      %s26 = ssub.s32 %s21, 1
      %s27 = ssub.s32 %s21, 2
      %s34 = sadd.s32 1, %s29
      %p35 = scmp.ge.s32.totalorder %s34, 1
      %s36 = scalar_select %p35, 0, %s34
      %s37 = sadd.s32 1, %s28
      %s38 = scalar_select %p35, %s37, %s28
      %p39 = scmp.ge.s32.totalorder %s38, 2
      %s40 = scalar_select %p39, 0, %s38
      %s41 = ssub.s32 %s28, %s40
      %s42 = ssub.s32 %s29, %s36
      %s43 = sor.u32 %s41, %s42
      %p44 = scmp.eq.s32.totalorder %s43, 0
      %s46 = sadd.s32 %s45, 1
      %s47 = scalar_select %p44, %s45, %s46
      %p50 = pneg %p44
      %p51 = scmp.eq.s32.totalorder %s21, 1
      %p52 = por %p50, %p51
      %p53 = scmp.ne.s32.totalorder %s45, %s48
      %p54 = scmp.eq.s32.totalorder %s21, 0
      %p55 = por %p53, %p54
      %p56 = scmp.ne.s32.totalorder %s45, %s48
      %p57 = scmp.eq.s32.totalorder %s26, 1
      %p58 = por %p56, %p57
      %p59 = scmp.ne.s32.totalorder %s48, %s49
      %p60 = scmp.eq.s32.totalorder %s26, 0
      %p61 = por %p59, %p60
      %p62 = scmp.ne.s32.totalorder %s48, %s49
      %p63 = scmp.eq.s32.totalorder %s27, 1
      %p64 = por %p62, %p63
      %p66 = scmp.ne.s32.totalorder %s49, %s65
      %p67 = scmp.eq.s32.totalorder %s27, 0
      %p68 = por %p66, %p67
      %s69 = ssub.s32 %s28, %s40
      %p70 = scmp.eq.s32.totalorder %s69, 0
      %s72 = sadd.s32 %s71, 1
      %s73 = scalar_select %p70, %s71, %s72
      %p76 = pneg %p70
      %p77 = scmp.eq.s32.totalorder %s21, 1
      %p78 = por %p76, %p77
      %p79 = scmp.ne.s32.totalorder %s71, %s74
      %p80 = scmp.eq.s32.totalorder %s21, 0
      %p81 = por %p79, %p80
      %p82 = scmp.ne.s32.totalorder %s71, %s74
      %p83 = scmp.eq.s32.totalorder %s26, 1
      %p84 = por %p82, %p83
      %p85 = scmp.ne.s32.totalorder %s74, %s75
      %p86 = scmp.eq.s32.totalorder %s26, 0
      %p87 = por %p85, %p86
      %p88 = scmp.ne.s32.totalorder %s74, %s75
      %p89 = scmp.eq.s32.totalorder %s27, 1
      %p90 = por %p88, %p89
      %p92 = scmp.ne.s32.totalorder %s75, %s91
      %p93 = scmp.eq.s32.totalorder %s27, 0
      %p94 = por %p92, %p93
      %s95 = ssub.s32 %s28, %s40
      %p96 = scmp.eq.s32.totalorder %s95, 0
      %s98 = sadd.s32 %s97, 1
      %s99 = scalar_select %p96, %s97, %s98
      %p102 = pneg %p96
      %p103 = scmp.eq.s32.totalorder %s21, 1
      %p104 = por %p102, %p103
      %p105 = scmp.ne.s32.totalorder %s97, %s100
      %p106 = scmp.eq.s32.totalorder %s21, 0
      %p107 = por %p105, %p106
      %p108 = scmp.ne.s32.totalorder %s97, %s100
      %p109 = scmp.eq.s32.totalorder %s26, 1
      %p110 = por %p108, %p109
      %p111 = scmp.ne.s32.totalorder %s100, %s101
      %p112 = scmp.eq.s32.totalorder %s26, 0
      %p113 = por %p111, %p112
      %p114 = scmp.ne.s32.totalorder %s100, %s101
      %p115 = scmp.eq.s32.totalorder %s27, 1
      %p116 = por %p114, %p115
      %p118 = scmp.ne.s32.totalorder %s101, %s117
      %p119 = scmp.eq.s32.totalorder %s27, 0
      %p120 = por %p118, %p119
      %s122 = sadd.s32 %s121, 1
      %p125 = scmp.eq.s32.totalorder %s21, 1
      %p126 = scmp.ne.s32.totalorder %s121, %s123
      %p127 = scmp.eq.s32.totalorder %s21, 0
      %p128 = por %p126, %p127
      %p129 = scmp.ne.s32.totalorder %s121, %s123
      %p130 = scmp.eq.s32.totalorder %s26, 1
      %p131 = por %p129, %p130
      %p132 = scmp.ne.s32.totalorder %s123, %s124
      %p133 = scmp.eq.s32.totalorder %s26, 0
      %p134 = por %p132, %p133
      %p135 = scmp.ne.s32.totalorder %s123, %s124
      %p136 = scmp.eq.s32.totalorder %s27, 1
      %p137 = por %p135, %p136
      %p139 = scmp.ne.s32.totalorder %s124, %s138
      %p140 = scmp.eq.s32.totalorder %s27, 0
      %p141 = por %p139, %p140
      %s143 = sadd.s32 %s142, 1
      %p146 = scmp.eq.s32.totalorder %s21, 1
      %p147 = scmp.ne.s32.totalorder %s142, %s144
      %p148 = scmp.eq.s32.totalorder %s21, 0
      %p149 = por %p147, %p148
      %p150 = scmp.ne.s32.totalorder %s142, %s144
      %p151 = scmp.eq.s32.totalorder %s26, 1
      %p152 = por %p150, %p151
      %p153 = scmp.ne.s32.totalorder %s144, %s145
      %p154 = scmp.eq.s32.totalorder %s26, 0
      %p155 = por %p153, %p154
      %p156 = scmp.ne.s32.totalorder %s144, %s145
      %p157 = scmp.eq.s32.totalorder %s27, 1
      %p158 = por %p156, %p157
      %p160 = scmp.ne.s32.totalorder %s145, %s159
      %p161 = scmp.eq.s32.totalorder %s27, 0
      %p162 = por %p160, %p161
      %s163 = ssub.s32 %s28, %s40
      %s164 = ssub.s32 %s29, %s36
      %s165 = sor.u32 %s163, %s164
      %p166 = scmp.eq.s32.totalorder %s165, 0
      %s168 = sadd.s32 %s167, 1
      %s169 = scalar_select %p166, %s167, %s168
      %p172 = pneg %p166
      %p173 = scmp.eq.s32.totalorder %s21, 1
      %p174 = por %p172, %p173
      %p175 = scmp.ne.s32.totalorder %s167, %s170
      %p176 = scmp.eq.s32.totalorder %s21, 0
      %p177 = por %p175, %p176
      %p178 = scmp.ne.s32.totalorder %s167, %s170
      %p179 = scmp.eq.s32.totalorder %s26, 1
      %p180 = por %p178, %p179
      %p181 = scmp.ne.s32.totalorder %s170, %s171
      %p182 = scmp.eq.s32.totalorder %s26, 0
      %p183 = por %p181, %p182
      %p184 = scmp.ne.s32.totalorder %s170, %s171
      %p185 = scmp.eq.s32.totalorder %s27, 1
      %p186 = por %p184, %p185
      %p188 = scmp.ne.s32.totalorder %s171, %s187
      %p189 = scmp.eq.s32.totalorder %s27, 0
      %p190 = por %p188, %p189
      %p191 = scmp.le.s32.totalorder 1, %s21
      %p192 = scmp.lt.s32.totalorder %s21, 3
      %p193 = pnand %p191, %p192
      %p194 = pneg %p193
      // Predicated region
      $region9: #{var_forward.12} parent=5 // pred_check
        _
      $region10: #{var_forward.12} parent=5 // pred_check_branch
        %196 = sbr.rel (%p193) target = $region12
      $region11: #{var_forward.12} parent=5 // pred_region
        %s197 = ssub.s32 %s21, 1
        // Predicated region
        $region13: #{var_forward.12} parent=11 // pred_check
          %p198 = pneg %p134
        $region14: #{var_forward.12} parent=11 // pred_check_branch
          %200 = sbr.rel (%p198) target = $region16
        $region15: #{var_forward.12} parent=11 // pred_region
          %s202 = ssub.s32 3072, 3072
          %203 = vsyncadd [#allocation9], %s202
          %s204 = sshll.u32 [#allocation8], 4
          %s205 = int_to_ptr.vmem [resolvable:$true] %s204
          %210 = dma.hbm_to_vmem [thread:$0]  %s3, 3072, %s205, [#allocation9], 192, 192, 12
        $region16: #{var_forward.12} parent=11 // pred_fallthru
          _
        // Predicated region
        $region17: #{var_forward.12} parent=11 // pred_check
          %p211 = pneg %p155
        $region18: #{var_forward.12} parent=11 // pred_check_branch
          %213 = sbr.rel (%p211) target = $region20
        $region19: #{var_forward.12} parent=11 // pred_region
          %s215 = ssub.s32 48, 48
          %216 = vsyncadd [#allocation9], %s215
          %s218 = sshll.u32 [#allocation10], 4
          %s219 = int_to_ptr.vmem [resolvable:$true] %s218
          %221 = dma.hbm_to_vmem [thread:$0]  %s4, 48, %s219, [#allocation9]
        $region20: #{var_forward.12} parent=11 // pred_fallthru
          _
      $region12: #{var_forward.12} parent=5 // pred_fallthru
        _
      %p222 = scmp.lt.s32.totalorder %s21, 2
      // Predicated region
      $region21: #{var_forward.12} parent=5 // pred_check
        %p223 = pneg %p222
      $region22: #{var_forward.12} parent=5 // pred_check_branch
        %225 = sbr.rel (%p223) target = $region24
      $region23: #{var_forward.12} parent=5 // pred_region
        // Predicated region
        $region25: #{var_forward.12} parent=23 // pred_check
          %p226 = pneg %p55
        $region26: #{var_forward.12} parent=23 // pred_check_branch
          %228 = sbr.rel (%p226) target = $region28
        $region27: #{var_forward.12} parent=23 // pred_region
          %s229 = sand.u32 %s45, 1
          %s230 = scalar_lea.sflag [#allocation3], %s229
          %s231 = sand.u32 %s45, 1
          %s232 = smul.addr %s231, 128
          %s233 = scalar_lea.vmem [#allocation2], %s232
          %s234 = smul.u32 16, %s29
          %s236 = ssub.s32 2048, 2048
          %237 = vsyncadd %s230, %s236
          %s238 = smul.addr %s28, 16
          %s239 = sadd.s32 %s234, %s238
          %s240 = smul.addr %s239, 128
          %s241 = scalar_lea.hbm %s0, %s240
          %s242 = sshll.u32 %s233, 4
          %s243 = int_to_ptr.vmem [resolvable:$true] %s242
          %248 = dma.hbm_to_vmem [thread:$0]  %s241, 2048, %s243, %s230, 128, 128, 8
        $region28: #{var_forward.12} parent=23 // pred_fallthru
          _
        // Predicated region
        $region29: #{var_forward.12} parent=23 // pred_check
          %p249 = pneg %p81
        $region30: #{var_forward.12} parent=23 // pred_check_branch
          %251 = sbr.rel (%p249) target = $region32
        $region31: #{var_forward.12} parent=23 // pred_region
          %s252 = sand.u32 %s21, 1
          %s253 = scalar_lea.sflag [#allocation6], %s252
          %s254 = sand.u32 %s71, 1
          %s255 = scalar_lea.vmem [#allocation5], %s254
          %s257 = ssub.s32 16, 16
          %258 = vsyncadd %s253, %s257
          %s259 = smul.addr %s28, 16
          %s260 = scalar_lea.hbm %s1, %s259
          %s262 = sshll.u32 %s255, 4
          %s263 = int_to_ptr.vmem [resolvable:$true] %s262
          %265 = dma.hbm_to_vmem [thread:$0]  %s260, 16, %s263, %s253
        $region32: #{var_forward.12} parent=23 // pred_fallthru
          _
        // Predicated region
        $region33: #{var_forward.12} parent=23 // pred_check
          %p266 = pneg %p107
        $region34: #{var_forward.12} parent=23 // pred_check_branch
          %268 = sbr.rel (%p266) target = $region36
        $region35: #{var_forward.12} parent=23 // pred_region
          %s269 = sand.u32 %s21, 1
          %s270 = scalar_lea.sflag [#allocation6], %s269
          %s271 = sand.u32 %s97, 1
          %s272 = scalar_lea.vmem [#allocation7], %s271
          %s274 = ssub.s32 16, 16
          %275 = vsyncadd %s270, %s274
          %s276 = smul.addr %s28, 16
          %s277 = scalar_lea.hbm %s2, %s276
          %s279 = sshll.u32 %s272, 4
          %s280 = int_to_ptr.vmem [resolvable:$true] %s279
          %282 = dma.hbm_to_vmem [thread:$0]  %s277, 16, %s280, %s270
        $region36: #{var_forward.12} parent=23 // pred_fallthru
          _
      $region24: #{var_forward.12} parent=5 // pred_fallthru
        _
      %p283 = scmp.le.s32.totalorder 1, %s21
      %p284 = scmp.lt.s32.totalorder %s21, 3
      %p285 = pnand %p283, %p284
      %p286 = pneg %p285
      // Predicated region
      $region37: #{var_forward.12} parent=5 // pred_check
        _
      $region38: #{var_forward.12} parent=5 // pred_check_branch
        %288 = sbr.rel (%p285) target = $region40
      $region39: #{var_forward.12} parent=5 // pred_region
        %s289 = ssub.s32 %s21, 1
        %s290 = sand.u32 %s48, 1
        %s291 = scalar_lea.sflag [#allocation3], %s290
        %s292 = sand.u32 %s48, 1
        %s293 = smul.addr %s292, 128
        %s294 = scalar_lea.vmem [#allocation2], %s293
        // Predicated region
        $region41: #{var_forward.12} parent=39 // pred_check
          %p295 = pneg %p61
        $region42: #{var_forward.12} parent=39 // pred_check_branch
          %297 = sbr.rel (%p295) target = $region44
        $region43: #{var_forward.12} parent=39 // pred_region
          %298 = dma.done %s291, 2048
        $region44: #{var_forward.12} parent=39 // pred_fallthru
          _
        %s299 = sand.u32 %s26, 1
        %s300 = scalar_lea.sflag [#allocation6], %s299
        %s301 = sand.u32 %s74, 1
        %s302 = scalar_lea.vmem [#allocation5], %s301
        // Predicated region
        $region45: #{var_forward.12} parent=39 // pred_check
          %p303 = pneg %p87
        $region46: #{var_forward.12} parent=39 // pred_check_branch
          %305 = sbr.rel (%p303) target = $region48
        $region47: #{var_forward.12} parent=39 // pred_region
          %306 = dma.done %s300, 16
        $region48: #{var_forward.12} parent=39 // pred_fallthru
          _
        %s307 = sand.u32 %s26, 1
        %s308 = scalar_lea.sflag [#allocation6], %s307
        %s309 = sand.u32 %s100, 1
        %s310 = scalar_lea.vmem [#allocation7], %s309
        // Predicated region
        $region49: #{var_forward.12} parent=39 // pred_check
          %p311 = pneg %p113
        $region50: #{var_forward.12} parent=39 // pred_check_branch
          %313 = sbr.rel (%p311) target = $region52
        $region51: #{var_forward.12} parent=39 // pred_region
          %314 = dma.done %s308, 16
        $region52: #{var_forward.12} parent=39 // pred_fallthru
          _
        // Predicated region
        $region53: #{var_forward.12} parent=39 // pred_check
          %p315 = pneg %p134
        $region54: #{var_forward.12} parent=39 // pred_check_branch
          %317 = sbr.rel (%p315) target = $region56
        $region55: #{var_forward.12} parent=39 // pred_region
          %318 = dma.done [#allocation9], 3072
        $region56: #{var_forward.12} parent=39 // pred_fallthru
          _
        // Predicated region
        $region57: #{var_forward.12} parent=39 // pred_check
          %p319 = pneg %p155
        $region58: #{var_forward.12} parent=39 // pred_check_branch
          %321 = sbr.rel (%p319) target = $region60
        $region59: #{var_forward.12} parent=39 // pred_region
          %322 = dma.done [#allocation9], 48
        $region60: #{var_forward.12} parent=39 // pred_fallthru
          _
        %s323 = sand.u32 %s48, 1
        %s324 = scalar_lea.sflag [#allocation3], %s323
        %s325 = sand.u32 %s48, 1
        %s326 = smul.addr %s325, 128
        %s327 = scalar_lea.vmem [#allocation2], %s326
        %p328 = pneg %p61
        %p329 = pneg %p58
        %s330 = sand.u32 %s26, 1
        %s331 = scalar_lea.sflag [#allocation6], %s330
        %s332 = sand.u32 %s74, 1
        %s333 = scalar_lea.vmem [#allocation5], %s332
        %p334 = pneg %p87
        %p335 = pneg %p84
        %s336 = sand.u32 %s26, 1
        %s337 = scalar_lea.sflag [#allocation6], %s336
        %s338 = sand.u32 %s100, 1
        %s339 = scalar_lea.vmem [#allocation7], %s338
        %p340 = pneg %p113
        %p341 = pneg %p110
        %p342 = pneg %p134
        %p343 = pneg %p131
        %p344 = pneg %p155
        %p345 = pneg %p152
        %p346 = pneg %p183
        %p347 = pneg %p180
        %s348 = sand.u32 %s170, 1
        %s349 = scalar_lea.sflag [#allocation4], %s348
        %s350 = sand.u32 %s170, 1
        %s351 = smul.addr %s350, 192
        %s352 = scalar_lea.vmem [#allocation11], %s351
        %s353 = smul.u32 16, %s31
        %s354 = smul.u32 16, %s31
        %v356 = vld [vmem:[%s294] sm:$0xff]
        %v357 = vld [vmem:[%s294 + $0x8] sm:$0xff]
        %v358 = vld [vmem:[%s294 + $0x10] sm:$0xff]
        %v359 = vld [vmem:[%s294 + $0x18] sm:$0xff]
        %v360 = vld [vmem:[%s294 + $0x20] sm:$0xff]
        %v361 = vld [vmem:[%s294 + $0x28] sm:$0xff]
        %v362 = vld [vmem:[%s294 + $0x30] sm:$0xff]
        %v363 = vld [vmem:[%s294 + $0x38] sm:$0xff]
        %v364 = vld [vmem:[%s294 + $0x40] sm:$0xff]
        %v365 = vld [vmem:[%s294 + $0x48] sm:$0xff]
        %v366 = vld [vmem:[%s294 + $0x50] sm:$0xff]
        %v367 = vld [vmem:[%s294 + $0x58] sm:$0xff]
        %v368 = vld [vmem:[%s294 + $0x60] sm:$0xff]
        %v369 = vld [vmem:[%s294 + $0x68] sm:$0xff]
        %v370 = vld [vmem:[%s294 + $0x70] sm:$0xff]
        %v371 = vld [vmem:[%s294 + $0x78] sm:$0xff]
        %372 = vadd.xlane.f32.xlu0 %v356
        %v373 = vpop.xlane.xlu0 %372
        %374 = vadd.xlane.f32.xlu0 %v357
        %v375 = vpop.xlane.xlu0 %374
        %376 = vadd.xlane.f32.xlu0 %v358
        %v377 = vpop.xlane.xlu0 %376
        %378 = vadd.xlane.f32.xlu0 %v359
        %v379 = vpop.xlane.xlu0 %378
        %380 = vadd.xlane.f32.xlu0 %v360
        %v381 = vpop.xlane.xlu0 %380
        %382 = vadd.xlane.f32.xlu0 %v361
        %v383 = vpop.xlane.xlu0 %382
        %384 = vadd.xlane.f32.xlu0 %v362
        %v385 = vpop.xlane.xlu0 %384
        %386 = vadd.xlane.f32.xlu0 %v363
        %v387 = vpop.xlane.xlu0 %386
        %388 = vadd.xlane.f32.xlu0 %v364
        %v389 = vpop.xlane.xlu0 %388
        %390 = vadd.xlane.f32.xlu0 %v365
        %v391 = vpop.xlane.xlu0 %390
        %392 = vadd.xlane.f32.xlu0 %v366
        %v393 = vpop.xlane.xlu0 %392
        %394 = vadd.xlane.f32.xlu0 %v367
        %v395 = vpop.xlane.xlu0 %394
        %396 = vadd.xlane.f32.xlu0 %v368
        %v397 = vpop.xlane.xlu0 %396
        %398 = vadd.xlane.f32.xlu0 %v369
        %v399 = vpop.xlane.xlu0 %398
        %400 = vadd.xlane.f32.xlu0 %v370
        %v401 = vpop.xlane.xlu0 %400
        %402 = vadd.xlane.f32.xlu0 %v371
        %v403 = vpop.xlane.xlu0 %402
        %v404 = vrcp.pop 128.0
        %v405 = vmul.f32 %v373, %v404
        %v406 = vmul.f32 %v375, %v404
        %v407 = vmul.f32 %v377, %v404
        %v408 = vmul.f32 %v379, %v404
        %v409 = vmul.f32 %v381, %v404
        %v410 = vmul.f32 %v383, %v404
        %v411 = vmul.f32 %v385, %v404
        %v412 = vmul.f32 %v387, %v404
        %v413 = vmul.f32 %v389, %v404
        %v414 = vmul.f32 %v391, %v404
        %v415 = vmul.f32 %v393, %v404
        %v416 = vmul.f32 %v395, %v404
        %v417 = vmul.f32 %v397, %v404
        %v418 = vmul.f32 %v399, %v404
        %v419 = vmul.f32 %v401, %v404
        %v420 = vmul.f32 %v403, %v404
        %v421 = vsub.f32 %v356, %v405
        %v422 = vsub.f32 %v357, %v406
        %v423 = vsub.f32 %v358, %v407
        %v424 = vsub.f32 %v359, %v408
        %v425 = vsub.f32 %v360, %v409
        %v426 = vsub.f32 %v361, %v410
        %v427 = vsub.f32 %v362, %v411
        %v428 = vsub.f32 %v363, %v412
        %v429 = vsub.f32 %v364, %v413
        %v430 = vsub.f32 %v365, %v414
        %v431 = vsub.f32 %v366, %v415
        %v432 = vsub.f32 %v367, %v416
        %v433 = vsub.f32 %v368, %v417
        %v434 = vsub.f32 %v369, %v418
        %v435 = vsub.f32 %v370, %v419
        %v436 = vsub.f32 %v371, %v420
        %v437 = vmul.f32 %v421, %v421
        %v438 = vmul.f32 %v422, %v422
        %v439 = vmul.f32 %v423, %v423
        %v440 = vmul.f32 %v424, %v424
        %v441 = vmul.f32 %v425, %v425
        %v442 = vmul.f32 %v426, %v426
        %v443 = vmul.f32 %v427, %v427
        %v444 = vmul.f32 %v428, %v428
        %v445 = vmul.f32 %v429, %v429
        %v446 = vmul.f32 %v430, %v430
        %v447 = vmul.f32 %v431, %v431
        %v448 = vmul.f32 %v432, %v432
        %v449 = vmul.f32 %v433, %v433
        %v450 = vmul.f32 %v434, %v434
        %v451 = vmul.f32 %v435, %v435
        %v452 = vmul.f32 %v436, %v436
        %453 = vadd.xlane.f32.xlu0 %v437
        %v454 = vpop.xlane.xlu0 %453
        %455 = vadd.xlane.f32.xlu0 %v438
        %v456 = vpop.xlane.xlu0 %455
        %457 = vadd.xlane.f32.xlu0 %v439
        %v458 = vpop.xlane.xlu0 %457
        %459 = vadd.xlane.f32.xlu0 %v440
        %v460 = vpop.xlane.xlu0 %459
        %461 = vadd.xlane.f32.xlu0 %v441
        %v462 = vpop.xlane.xlu0 %461
        %463 = vadd.xlane.f32.xlu0 %v442
        %v464 = vpop.xlane.xlu0 %463
        %465 = vadd.xlane.f32.xlu0 %v443
        %v466 = vpop.xlane.xlu0 %465
        %467 = vadd.xlane.f32.xlu0 %v444
        %v468 = vpop.xlane.xlu0 %467
        %469 = vadd.xlane.f32.xlu0 %v445
        %v470 = vpop.xlane.xlu0 %469
        %471 = vadd.xlane.f32.xlu0 %v446
        %v472 = vpop.xlane.xlu0 %471
        %473 = vadd.xlane.f32.xlu0 %v447
        %v474 = vpop.xlane.xlu0 %473
        %475 = vadd.xlane.f32.xlu0 %v448
        %v476 = vpop.xlane.xlu0 %475
        %477 = vadd.xlane.f32.xlu0 %v449
        %v478 = vpop.xlane.xlu0 %477
        %479 = vadd.xlane.f32.xlu0 %v450
        %v480 = vpop.xlane.xlu0 %479
        %481 = vadd.xlane.f32.xlu0 %v451
        %v482 = vpop.xlane.xlu0 %481
        %483 = vadd.xlane.f32.xlu0 %v452
        %v484 = vpop.xlane.xlu0 %483
        %v485 = vmul.f32 %v454, %v404
        %v486 = vmul.f32 %v456, %v404
        %v487 = vmul.f32 %v458, %v404
        %v488 = vmul.f32 %v460, %v404
        %v489 = vmul.f32 %v462, %v404
        %v490 = vmul.f32 %v464, %v404
        %v491 = vmul.f32 %v466, %v404
        %v492 = vmul.f32 %v468, %v404
        %v493 = vmul.f32 %v470, %v404
        %v494 = vmul.f32 %v472, %v404
        %v495 = vmul.f32 %v474, %v404
        %v496 = vmul.f32 %v476, %v404
        %v497 = vmul.f32 %v478, %v404
        %v498 = vmul.f32 %v480, %v404
        %v499 = vmul.f32 %v482, %v404
        %v500 = vmul.f32 %v484, %v404
        %v501 = vadd.f32 %v485, 1e-06
        %v502 = vadd.f32 %v486, 1e-06
        %v503 = vadd.f32 %v487, 1e-06
        %v504 = vadd.f32 %v488, 1e-06
        %v505 = vadd.f32 %v489, 1e-06
        %v506 = vadd.f32 %v490, 1e-06
        %v507 = vadd.f32 %v491, 1e-06
        %v508 = vadd.f32 %v492, 1e-06
        %v509 = vadd.f32 %v493, 1e-06
        %v510 = vadd.f32 %v494, 1e-06
        %v511 = vadd.f32 %v495, 1e-06
        %v512 = vadd.f32 %v496, 1e-06
        %v513 = vadd.f32 %v497, 1e-06
        %v514 = vadd.f32 %v498, 1e-06
        %v515 = vadd.f32 %v499, 1e-06
        %v516 = vadd.f32 %v500, 1e-06
        %v517 = vrsqrt.pop %v501
        %v518 = vrsqrt.pop %v502
        %v519 = vrsqrt.pop %v503
        %v520 = vrsqrt.pop %v504
        %v521 = vrsqrt.pop %v505
        %v522 = vrsqrt.pop %v506
        %v523 = vrsqrt.pop %v507
        %v524 = vrsqrt.pop %v508
        %v525 = vrsqrt.pop %v509
        %v526 = vrsqrt.pop %v510
        %v527 = vrsqrt.pop %v511
        %v528 = vrsqrt.pop %v512
        %v529 = vrsqrt.pop %v513
        %v530 = vrsqrt.pop %v514
        %v531 = vrsqrt.pop %v515
        %v532 = vrsqrt.pop %v516
        %v533 = vmul.f32 %v421, %v517
        %v534 = vmul.f32 %v422, %v518
        %v535 = vmul.f32 %v423, %v519
        %v536 = vmul.f32 %v424, %v520
        %v537 = vmul.f32 %v425, %v521
        %v538 = vmul.f32 %v426, %v522
        %v539 = vmul.f32 %v427, %v523
        %v540 = vmul.f32 %v428, %v524
        %v541 = vmul.f32 %v429, %v525
        %v542 = vmul.f32 %v430, %v526
        %v543 = vmul.f32 %v431, %v527
        %v544 = vmul.f32 %v432, %v528
        %v545 = vmul.f32 %v433, %v529
        %v546 = vmul.f32 %v434, %v530
        %v547 = vmul.f32 %v435, %v531
        %v548 = vmul.f32 %v436, %v532
        %v549 = vld [vmem:[%s302] sm:$0x1]
        %v550 = vadd.f32 %v549, 1.0
        %v552 = vlaneseq
        %v553 = vshrl.u32 %v552, 7
        %v554 = vsub.s32 0, %v553
        %v555 = vrot.slane %v550, %v554
        %v557 = vmul.f32 %v533, %v555
        %v558 = vmul.f32 %v534, %v555
        %v559 = vmul.f32 %v535, %v555
        %v560 = vmul.f32 %v536, %v555
        %v561 = vmul.f32 %v537, %v555
        %v562 = vmul.f32 %v538, %v555
        %v563 = vmul.f32 %v539, %v555
        %v564 = vmul.f32 %v540, %v555
        %v565 = vmul.f32 %v541, %v555
        %v566 = vmul.f32 %v542, %v555
        %v567 = vmul.f32 %v543, %v555
        %v568 = vmul.f32 %v544, %v555
        %v569 = vmul.f32 %v545, %v555
        %v570 = vmul.f32 %v546, %v555
        %v571 = vmul.f32 %v547, %v555
        %v572 = vmul.f32 %v548, %v555
        %v573 = vld [vmem:[%s310] sm:$0x1]
        %v575 = vlaneseq
        %v576 = vshrl.u32 %v575, 7
        %v577 = vsub.s32 0, %v576
        %v578 = vrot.slane %v573, %v577
        %v580 = vadd.f32 %v557, %v578
        %v581 = vadd.f32 %v558, %v578
        %v582 = vadd.f32 %v559, %v578
        %v583 = vadd.f32 %v560, %v578
        %v584 = vadd.f32 %v561, %v578
        %v585 = vadd.f32 %v562, %v578
        %v586 = vadd.f32 %v563, %v578
        %v587 = vadd.f32 %v564, %v578
        %v588 = vadd.f32 %v565, %v578
        %v589 = vadd.f32 %v566, %v578
        %v590 = vadd.f32 %v567, %v578
        %v591 = vadd.f32 %v568, %v578
        %v592 = vadd.f32 %v569, %v578
        %v593 = vadd.f32 %v570, %v578
        %v594 = vadd.f32 %v571, %v578
        %v595 = vadd.f32 %v572, %v578
        %v596 = vpack.c.bf16 %v581, %v580
        %v597 = vpack.c.bf16 %v583, %v582
        %v598 = vpack.c.bf16 %v585, %v584
        %v599 = vpack.c.bf16 %v587, %v586
        %v600 = vpack.c.bf16 %v589, %v588
        %v601 = vpack.c.bf16 %v591, %v590
        %v602 = vpack.c.bf16 %v593, %v592
        %v603 = vpack.c.bf16 %v595, %v594
        %v604 = vld [vmem:[#allocation8] sm:$0xff]
        %v605 = vld [vmem:[#allocation8 + $0x8] sm:$0xf]
        %v606 = vld [vmem:[#allocation8 + $0xc] sm:$0xff]
        %v607 = vld [vmem:[#allocation8 + $0x14] sm:$0xf]
        %v608 = vld [vmem:[#allocation8 + $0x18] sm:$0xff]
        %v609 = vld [vmem:[#allocation8 + $0x20] sm:$0xf]
        %v610 = vld [vmem:[#allocation8 + $0x24] sm:$0xff]
        %v611 = vld [vmem:[#allocation8 + $0x2c] sm:$0xf]
        %v612 = vld [vmem:[#allocation8 + $0x30] sm:$0xff]
        %v613 = vld [vmem:[#allocation8 + $0x38] sm:$0xf]
        %v614 = vld [vmem:[#allocation8 + $0x3c] sm:$0xff]
        %v615 = vld [vmem:[#allocation8 + $0x44] sm:$0xf]
        %v616 = vld [vmem:[#allocation8 + $0x48] sm:$0xff]
        %v617 = vld [vmem:[#allocation8 + $0x50] sm:$0xf]
        %v618 = vld [vmem:[#allocation8 + $0x54] sm:$0xff]
        %v619 = vld [vmem:[#allocation8 + $0x5c] sm:$0xf]
        %v620 = vld [vmem:[#allocation8 + $0x60] sm:$0xff]
        %v621 = vld [vmem:[#allocation8 + $0x68] sm:$0xf]
        %v622 = vld [vmem:[#allocation8 + $0x6c] sm:$0xff]
        %v623 = vld [vmem:[#allocation8 + $0x74] sm:$0xf]
        %v624 = vld [vmem:[#allocation8 + $0x78] sm:$0xff]
        %v625 = vld [vmem:[#allocation8 + $0x80] sm:$0xf]
        %v626 = vld [vmem:[#allocation8 + $0x84] sm:$0xff]
        %v627 = vld [vmem:[#allocation8 + $0x8c] sm:$0xf]
        %v628 = vld [vmem:[#allocation8 + $0x90] sm:$0xff]
        %v629 = vld [vmem:[#allocation8 + $0x98] sm:$0xf]
        %v630 = vld [vmem:[#allocation8 + $0x9c] sm:$0xff]
        %v631 = vld [vmem:[#allocation8 + $0xa4] sm:$0xf]
        %v632 = vld [vmem:[#allocation8 + $0xa8] sm:$0xff]
        %v633 = vld [vmem:[#allocation8 + $0xb0] sm:$0xf]
        %v634 = vld [vmem:[#allocation8 + $0xb4] sm:$0xff]
        %v635 = vld [vmem:[#allocation8 + $0xbc] sm:$0xf]
        %v636 = vld [vmem:[#allocation10] sm:$0x7]
        %v638 = vlaneseq
        %v639 = vshrl.u32 %v638, 7
        %v640 = vsub.s32 0, %v639
        %v641 = vrot.slane %v636, %v640
        %v642 = vlaneseq
        %v643 = vshrl.u32 %v642, 7
        %v644 = vsub.s32 1, %v643
        %v645 = vrot.slane %v636, %v644
        %v646 = vlaneseq
        %v647 = vshrl.u32 %v646, 7
        %v648 = vsub.s32 2, %v647
        %v649 = vrot.slane %v636, %v648
        %v685 = vunpack.c.l.b16 %v604
        %v686 = vunpack.c.h.b16 %v604
        %v687 = vunpack.c.l.b16 %v605
        %v688 = vunpack.c.l.b16 %v606
        %v689 = vunpack.c.h.b16 %v606
        %v690 = vunpack.c.l.b16 %v607
        %v691 = vunpack.c.l.b16 %v608
        %v692 = vunpack.c.h.b16 %v608
        %v693 = vunpack.c.l.b16 %v609
        %v694 = vunpack.c.l.b16 %v610
        %v695 = vunpack.c.h.b16 %v610
        %v696 = vunpack.c.l.b16 %v611
        %v697 = vunpack.c.l.b16 %v612
        %v698 = vunpack.c.h.b16 %v612
        %v699 = vunpack.c.l.b16 %v613
        %v700 = vunpack.c.l.b16 %v614
        %v701 = vunpack.c.h.b16 %v614
        %v702 = vunpack.c.l.b16 %v615
        %v703 = vunpack.c.l.b16 %v616
        %v704 = vunpack.c.h.b16 %v616
        %v705 = vunpack.c.l.b16 %v617
        %v706 = vunpack.c.l.b16 %v618
        %v707 = vunpack.c.h.b16 %v618
        %v708 = vunpack.c.l.b16 %v619
        %v709 = vunpack.c.l.b16 %v620
        %v710 = vunpack.c.h.b16 %v620
        %v711 = vunpack.c.l.b16 %v621
        %v712 = vunpack.c.l.b16 %v622
        %v713 = vunpack.c.h.b16 %v622
        %v714 = vunpack.c.l.b16 %v623
        %v715 = vunpack.c.l.b16 %v624
        %v716 = vunpack.c.h.b16 %v624
        %v717 = vunpack.c.l.b16 %v625
        %v718 = vunpack.c.l.b16 %v626
        %v719 = vunpack.c.h.b16 %v626
        %v720 = vunpack.c.l.b16 %v627
        %v721 = vunpack.c.l.b16 %v628
        %v722 = vunpack.c.h.b16 %v628
        %v723 = vunpack.c.l.b16 %v629
        %v724 = vunpack.c.l.b16 %v630
        %v725 = vunpack.c.h.b16 %v630
        %v726 = vunpack.c.l.b16 %v631
        %v727 = vunpack.c.l.b16 %v632
        %v728 = vunpack.c.h.b16 %v632
        %v729 = vunpack.c.l.b16 %v633
        %v730 = vunpack.c.l.b16 %v634
        %v731 = vunpack.c.h.b16 %v634
        %v732 = vunpack.c.l.b16 %v635
        %v733 = vpack.c.b16 %v688, %v685
        %v734 = vpack.c.b16 %v689, %v686
        %v735 = vpack.c.b16 %v690, %v687
        %v736 = vpack.c.b16 %v694, %v691
        %v737 = vpack.c.b16 %v695, %v692
        %v738 = vpack.c.b16 %v696, %v693
        %v739 = vpack.c.b16 %v700, %v697
        %v740 = vpack.c.b16 %v701, %v698
        %v741 = vpack.c.b16 %v702, %v699
        %v742 = vpack.c.b16 %v706, %v703
        %v743 = vpack.c.b16 %v707, %v704
        %v744 = vpack.c.b16 %v708, %v705
        %v745 = vpack.c.b16 %v712, %v709
        %v746 = vpack.c.b16 %v713, %v710
        %v747 = vpack.c.b16 %v714, %v711
        %v748 = vpack.c.b16 %v718, %v715
        %v749 = vpack.c.b16 %v719, %v716
        %v750 = vpack.c.b16 %v720, %v717
        %v751 = vpack.c.b16 %v724, %v721
        %v752 = vpack.c.b16 %v725, %v722
        %v753 = vpack.c.b16 %v726, %v723
        %v754 = vpack.c.b16 %v730, %v727
        %v755 = vpack.c.b16 %v731, %v728
        %v756 = vpack.c.b16 %v732, %v729
        %781 = vmatprep.subr.bf16.mxu0 %v734
        %782 = vmatpush1.bf16.msra.mxu0 %v733
        %783 = vmatprep.subr.bf16.mxu0 %v737
        %784 = vmatpush1.bf16.msra.mxu0 %v736
        %785 = vmatprep.subr.bf16.mxu0 %v740
        %786 = vmatpush1.bf16.msra.mxu0 %v739
        %787 = vmatprep.subr.bf16.mxu0 %v743
        %788 = vmatpush1.bf16.msra.mxu0 %v742
        %789 = vmatprep.subr.bf16.mxu0 %v746
        %790 = vmatpush1.bf16.msra.mxu0 %v745
        %791 = vmatprep.subr.bf16.mxu0 %v749
        %792 = vmatpush1.bf16.msra.mxu0 %v748
        %793 = vmatprep.subr.bf16.mxu0 %v752
        %794 = vmatpush1.bf16.msra.mxu0 %v751
        %795 = vmatprep.subr.bf16.mxu0 %v755
        %796 = vmatpush1.bf16.msra.mxu0 %v754
        %797 = vmatprep.subr.bf16.mxu0 0
        %798 = vmatpush1.bf16.msra.mxu0 0
        %799 = vmatprep.subr.bf16.mxu0 0
        %800 = vmatpush1.bf16.msra.mxu0 0
        %801 = vmatprep.subr.bf16.mxu0 0
        %802 = vmatpush1.bf16.msra.mxu0 0
        %803 = vmatprep.subr.bf16.mxu0 0
        %804 = vmatpush1.bf16.msra.mxu0 0
        %805 = vmatprep.subr.bf16.mxu0 0
        %806 = vmatpush1.bf16.msra.mxu0 0
        %807 = vmatprep.subr.bf16.mxu0 0
        %808 = vmatpush1.bf16.msra.mxu0 0
        %809 = vmatprep.subr.bf16.mxu0 0
        %810 = vmatpush1.bf16.msra.mxu0 0
        %811 = vmatprep.subr.bf16.mxu0 0
        %812 = vmatpush1.bf16.msra.mxu0 0
        %813 = vmatprep.mubr.bf16.mxu0 0
        %814 = vmatmul.mubr.bf16.gmra.mrb[0].mxu0 %v596
        %v815 = vpop.f32.mrb[0].mxu0
        %v816 = vadd.f32 %v641, %v815
        %v817 = vpop.f32.mrb[0].mxu0
        %v818 = vadd.f32 %v645, %v817
        %v819 = vpop.f32.mrb[0].mxu0
        %v820 = vadd.f32 %v641, %v819
        %v821 = vpop.f32.mrb[0].mxu0
        %v822 = vadd.f32 %v645, %v821
        %823 = vmatprep.mubr.bf16.mxu0 0
        %824 = vmatmul.mubr.bf16.gmra.mrb[0].mxu0 %v597
        %v825 = vpop.f32.mrb[0].mxu0
        %v826 = vadd.f32 %v641, %v825
        %v827 = vpop.f32.mrb[0].mxu0
        %v828 = vadd.f32 %v645, %v827
        %v829 = vpop.f32.mrb[0].mxu0
        %v830 = vadd.f32 %v641, %v829
        %v831 = vpop.f32.mrb[0].mxu0
        %v832 = vadd.f32 %v645, %v831
        %833 = vmatprep.mubr.bf16.mxu0 0
        %834 = vmatmul.mubr.bf16.gmra.mrb[0].mxu0 %v598
        %v835 = vpop.f32.mrb[0].mxu0
        %v836 = vadd.f32 %v641, %v835
        %v837 = vpop.f32.mrb[0].mxu0
        %v838 = vadd.f32 %v645, %v837
        %v839 = vpop.f32.mrb[0].mxu0
        %v840 = vadd.f32 %v641, %v839
        %v841 = vpop.f32.mrb[0].mxu0
        %v842 = vadd.f32 %v645, %v841
        %843 = vmatprep.mubr.bf16.mxu0 0
        %844 = vmatmul.mubr.bf16.gmra.mrb[0].mxu0 %v599
        %v845 = vpop.f32.mrb[0].mxu0
        %v846 = vadd.f32 %v641, %v845
        %v847 = vpop.f32.mrb[0].mxu0
        %v848 = vadd.f32 %v645, %v847
        %v849 = vpop.f32.mrb[0].mxu0
        %v850 = vadd.f32 %v641, %v849
        %v851 = vpop.f32.mrb[0].mxu0
        %v852 = vadd.f32 %v645, %v851
        %853 = vmatprep.mubr.bf16.mxu0 0
        %854 = vmatmul.mubr.bf16.gmra.mrb[0].mxu0 %v600
        %v855 = vpop.f32.mrb[0].mxu0
        %v856 = vadd.f32 %v641, %v855
        %v857 = vpop.f32.mrb[0].mxu0
        %v858 = vadd.f32 %v645, %v857
        %v859 = vpop.f32.mrb[0].mxu0
        %v860 = vadd.f32 %v641, %v859
        %v861 = vpop.f32.mrb[0].mxu0
        %v862 = vadd.f32 %v645, %v861
        %863 = vmatprep.mubr.bf16.mxu0 0
        %864 = vmatmul.mubr.bf16.gmra.mrb[0].mxu0 %v601
        %v865 = vpop.f32.mrb[0].mxu0
        %v866 = vadd.f32 %v641, %v865
        %v867 = vpop.f32.mrb[0].mxu0
        %v868 = vadd.f32 %v645, %v867
        %v869 = vpop.f32.mrb[0].mxu0
        %v870 = vadd.f32 %v641, %v869
        %v871 = vpop.f32.mrb[0].mxu0
        %v872 = vadd.f32 %v645, %v871
        %873 = vmatprep.mubr.bf16.mxu0 0
        %874 = vmatmul.mubr.bf16.gmra.mrb[0].mxu0 %v602
        %v875 = vpop.f32.mrb[0].mxu0
        %v876 = vadd.f32 %v641, %v875
        %v877 = vpop.f32.mrb[0].mxu0
        %v878 = vadd.f32 %v645, %v877
        %v879 = vpop.f32.mrb[0].mxu0
        %v880 = vadd.f32 %v641, %v879
        %v881 = vpop.f32.mrb[0].mxu0
        %v882 = vadd.f32 %v645, %v881
        %883 = vmatprep.mubr.bf16.mxu0 0
        %884 = vmatmul.mubr.bf16.gmra.mrb[0].mxu0 %v603
        %v885 = vpop.f32.mrb[0].mxu0
        %v886 = vadd.f32 %v641, %v885
        %v887 = vpop.f32.mrb[0].mxu0
        %v888 = vadd.f32 %v645, %v887
        %v889 = vpop.f32.mrb[0].mxu0
        %v890 = vadd.f32 %v641, %v889
        %v891 = vpop.f32.mrb[0].mxu0
        %v892 = vadd.f32 %v645, %v891
        %893 = vdwg.mxu0
        %894 = vmatprep.subr.bf16.mxu0 0
        %895 = vmatpush1.bf16.msra.mxu0 %v735
        %896 = vmatprep.subr.bf16.mxu0 0
        %897 = vmatpush1.bf16.msra.mxu0 %v738
        %898 = vmatprep.subr.bf16.mxu0 0
        %899 = vmatpush1.bf16.msra.mxu0 %v741
        %900 = vmatprep.subr.bf16.mxu0 0
        %901 = vmatpush1.bf16.msra.mxu0 %v744
        %902 = vmatprep.subr.bf16.mxu0 0
        %903 = vmatpush1.bf16.msra.mxu0 %v747
        %904 = vmatprep.subr.bf16.mxu0 0
        %905 = vmatpush1.bf16.msra.mxu0 %v750
        %906 = vmatprep.subr.bf16.mxu0 0
        %907 = vmatpush1.bf16.msra.mxu0 %v753
        %908 = vmatprep.subr.bf16.mxu0 0
        %909 = vmatpush1.bf16.msra.mxu0 %v756
        %910 = vmatprep.subr.bf16.mxu0 0
        %911 = vmatpush1.bf16.msra.mxu0 0
        %912 = vmatprep.subr.bf16.mxu0 0
        %913 = vmatpush1.bf16.msra.mxu0 0
        %914 = vmatprep.subr.bf16.mxu0 0
        %915 = vmatpush1.bf16.msra.mxu0 0
        %916 = vmatprep.subr.bf16.mxu0 0
        %917 = vmatpush1.bf16.msra.mxu0 0
        %918 = vmatprep.subr.bf16.mxu0 0
        %919 = vmatpush1.bf16.msra.mxu0 0
        %920 = vmatprep.subr.bf16.mxu0 0
        %921 = vmatpush1.bf16.msra.mxu0 0
        %922 = vmatprep.subr.bf16.mxu0 0
        %923 = vmatpush1.bf16.msra.mxu0 0
        %924 = vmatprep.subr.bf16.mxu0 0
        %925 = vmatpush1.bf16.msra.mxu0 0
        %926 = vmatprep.mubr.bf16.mxu0 0
        %927 = vmatmul.mubr.bf16.gmra.mrb[0].mxu0 %v596
        %v928 = vpop.f32.mrb[0].mxu0
        %v929 = vadd.f32 %v649, %v928
        %v930 = vpop.f32.mrb[0].mxu0
        %v931 = vpop.f32.mrb[0].mxu0
        %v932 = vadd.f32 %v649, %v931
        %v933 = vpop.f32.mrb[0].mxu0
        %934 = vmatprep.mubr.bf16.mxu0 0
        %935 = vmatmul.mubr.bf16.gmra.mrb[0].mxu0 %v597
        %v936 = vpop.f32.mrb[0].mxu0
        %v937 = vadd.f32 %v649, %v936
        %v938 = vpop.f32.mrb[0].mxu0
        %v939 = vpop.f32.mrb[0].mxu0
        %v940 = vadd.f32 %v649, %v939
        %v941 = vpop.f32.mrb[0].mxu0
        %942 = vmatprep.mubr.bf16.mxu0 0
        %943 = vmatmul.mubr.bf16.gmra.mrb[0].mxu0 %v598
        %v944 = vpop.f32.mrb[0].mxu0
        %v945 = vadd.f32 %v649, %v944
        %v946 = vpop.f32.mrb[0].mxu0
        %v947 = vpop.f32.mrb[0].mxu0
        %v948 = vadd.f32 %v649, %v947
        %v949 = vpop.f32.mrb[0].mxu0
        %950 = vmatprep.mubr.bf16.mxu0 0
        %951 = vmatmul.mubr.bf16.gmra.mrb[0].mxu0 %v599
        %v952 = vpop.f32.mrb[0].mxu0
        %v953 = vadd.f32 %v649, %v952
        %v954 = vpop.f32.mrb[0].mxu0
        %v955 = vpop.f32.mrb[0].mxu0
        %v956 = vadd.f32 %v649, %v955
        %v957 = vpop.f32.mrb[0].mxu0
        %958 = vmatprep.mubr.bf16.mxu0 0
        %959 = vmatmul.mubr.bf16.gmra.mrb[0].mxu0 %v600
        %v960 = vpop.f32.mrb[0].mxu0
        %v961 = vadd.f32 %v649, %v960
        %v962 = vpop.f32.mrb[0].mxu0
        %v963 = vpop.f32.mrb[0].mxu0
        %v964 = vadd.f32 %v649, %v963
        %v965 = vpop.f32.mrb[0].mxu0
        %966 = vmatprep.mubr.bf16.mxu0 0
        %967 = vmatmul.mubr.bf16.gmra.mrb[0].mxu0 %v601
        %v968 = vpop.f32.mrb[0].mxu0
        %v969 = vadd.f32 %v649, %v968
        %v970 = vpop.f32.mrb[0].mxu0
        %v971 = vpop.f32.mrb[0].mxu0
        %v972 = vadd.f32 %v649, %v971
        %v973 = vpop.f32.mrb[0].mxu0
        %974 = vmatprep.mubr.bf16.mxu0 0
        %975 = vmatmul.mubr.bf16.gmra.mrb[0].mxu0 %v602
        %v976 = vpop.f32.mrb[0].mxu0
        %v977 = vadd.f32 %v649, %v976
        %v978 = vpop.f32.mrb[0].mxu0
        %v979 = vpop.f32.mrb[0].mxu0
        %v980 = vadd.f32 %v649, %v979
        %v981 = vpop.f32.mrb[0].mxu0
        %982 = vmatprep.mubr.bf16.mxu0 0
        %983 = vmatmul.mubr.bf16.gmra.mrb[0].mxu0 %v603
        %v984 = vpop.f32.mrb[0].mxu0
        %v985 = vadd.f32 %v649, %v984
        %v986 = vpop.f32.mrb[0].mxu0
        %v987 = vpop.f32.mrb[0].mxu0
        %v988 = vadd.f32 %v649, %v987
        %v989 = vpop.f32.mrb[0].mxu0
        %990 = vdwg.mxu0
        %v991 = vpack.c.bf16 %v820, %v816
        %v992 = vpack.c.bf16 %v822, %v818
        %v993 = vpack.c.bf16 %v932, %v929
        %v994 = vpack.c.bf16 %v830, %v826
        %v995 = vpack.c.bf16 %v832, %v828
        %v996 = vpack.c.bf16 %v940, %v937
        %v997 = vpack.c.bf16 %v840, %v836
        %v998 = vpack.c.bf16 %v842, %v838
        %v999 = vpack.c.bf16 %v948, %v945
        %v1000 = vpack.c.bf16 %v850, %v846
        %v1001 = vpack.c.bf16 %v852, %v848
        %v1002 = vpack.c.bf16 %v956, %v953
        %v1003 = vpack.c.bf16 %v860, %v856
        %v1004 = vpack.c.bf16 %v862, %v858
        %v1005 = vpack.c.bf16 %v964, %v961
        %v1006 = vpack.c.bf16 %v870, %v866
        %v1007 = vpack.c.bf16 %v872, %v868
        %v1008 = vpack.c.bf16 %v972, %v969
        %v1009 = vpack.c.bf16 %v880, %v876
        %v1010 = vpack.c.bf16 %v882, %v878
        %v1011 = vpack.c.bf16 %v980, %v977
        %v1012 = vpack.c.bf16 %v890, %v886
        %v1013 = vpack.c.bf16 %v892, %v888
        %v1014 = vpack.c.bf16 %v988, %v985
        %v1039 = vunpack.c.l.b16 %v991
        %v1040 = vunpack.c.l.b16 %v992
        %v1041 = vunpack.c.l.b16 %v993
        %v1042 = vunpack.c.h.b16 %v991
        %v1043 = vunpack.c.h.b16 %v992
        %v1044 = vunpack.c.h.b16 %v993
        %v1045 = vunpack.c.l.b16 %v994
        %v1046 = vunpack.c.l.b16 %v995
        %v1047 = vunpack.c.l.b16 %v996
        %v1048 = vunpack.c.h.b16 %v994
        %v1049 = vunpack.c.h.b16 %v995
        %v1050 = vunpack.c.h.b16 %v996
        %v1051 = vunpack.c.l.b16 %v997
        %v1052 = vunpack.c.l.b16 %v998
        %v1053 = vunpack.c.l.b16 %v999
        %v1054 = vunpack.c.h.b16 %v997
        %v1055 = vunpack.c.h.b16 %v998
        %v1056 = vunpack.c.h.b16 %v999
        %v1057 = vunpack.c.l.b16 %v1000
        %v1058 = vunpack.c.l.b16 %v1001
        %v1059 = vunpack.c.l.b16 %v1002
        %v1060 = vunpack.c.h.b16 %v1000
        %v1061 = vunpack.c.h.b16 %v1001
        %v1062 = vunpack.c.h.b16 %v1002
        %v1063 = vunpack.c.l.b16 %v1003
        %v1064 = vunpack.c.l.b16 %v1004
        %v1065 = vunpack.c.l.b16 %v1005
        %v1066 = vunpack.c.h.b16 %v1003
        %v1067 = vunpack.c.h.b16 %v1004
        %v1068 = vunpack.c.h.b16 %v1005
        %v1069 = vunpack.c.l.b16 %v1006
        %v1070 = vunpack.c.l.b16 %v1007
        %v1071 = vunpack.c.l.b16 %v1008
        %v1072 = vunpack.c.h.b16 %v1006
        %v1073 = vunpack.c.h.b16 %v1007
        %v1074 = vunpack.c.h.b16 %v1008
        %v1075 = vunpack.c.l.b16 %v1009
        %v1076 = vunpack.c.l.b16 %v1010
        %v1077 = vunpack.c.l.b16 %v1011
        %v1078 = vunpack.c.h.b16 %v1009
        %v1079 = vunpack.c.h.b16 %v1010
        %v1080 = vunpack.c.h.b16 %v1011
        %v1081 = vunpack.c.l.b16 %v1012
        %v1082 = vunpack.c.l.b16 %v1013
        %v1083 = vunpack.c.l.b16 %v1014
        %v1084 = vunpack.c.h.b16 %v1012
        %v1085 = vunpack.c.h.b16 %v1013
        %v1086 = vunpack.c.h.b16 %v1014
        %v1087 = vpack.c.b16 %v1040, %v1039
        %v1088 = vpack.c.b16 %v1041, %v1041
        %v1089 = vpack.c.b16 %v1043, %v1042
        %v1090 = vpack.c.b16 %v1044, %v1044
        %v1091 = vpack.c.b16 %v1046, %v1045
        %v1092 = vpack.c.b16 %v1047, %v1047
        %v1093 = vpack.c.b16 %v1049, %v1048
        %v1094 = vpack.c.b16 %v1050, %v1050
        %v1095 = vpack.c.b16 %v1052, %v1051
        %v1096 = vpack.c.b16 %v1053, %v1053
        %v1097 = vpack.c.b16 %v1055, %v1054
        %v1098 = vpack.c.b16 %v1056, %v1056
        %v1099 = vpack.c.b16 %v1058, %v1057
        %v1100 = vpack.c.b16 %v1059, %v1059
        %v1101 = vpack.c.b16 %v1061, %v1060
        %v1102 = vpack.c.b16 %v1062, %v1062
        %v1103 = vpack.c.b16 %v1064, %v1063
        %v1104 = vpack.c.b16 %v1065, %v1065
        %v1105 = vpack.c.b16 %v1067, %v1066
        %v1106 = vpack.c.b16 %v1068, %v1068
        %v1107 = vpack.c.b16 %v1070, %v1069
        %v1108 = vpack.c.b16 %v1071, %v1071
        %v1109 = vpack.c.b16 %v1073, %v1072
        %v1110 = vpack.c.b16 %v1074, %v1074
        %v1111 = vpack.c.b16 %v1076, %v1075
        %v1112 = vpack.c.b16 %v1077, %v1077
        %v1113 = vpack.c.b16 %v1079, %v1078
        %v1114 = vpack.c.b16 %v1080, %v1080
        %v1115 = vpack.c.b16 %v1082, %v1081
        %v1116 = vpack.c.b16 %v1083, %v1083
        %v1117 = vpack.c.b16 %v1085, %v1084
        %v1118 = vpack.c.b16 %v1086, %v1086
        %1151 = vst [vmem:[%s352] sm:$0xff] %v1087
        %1152 = vst [vmem:[%s352 + $0x8] sm:$0xf] %v1088
        %1153 = vst [vmem:[%s352 + $0xc] sm:$0xff] %v1089
        %1154 = vst [vmem:[%s352 + $0x14] sm:$0xf] %v1090
        %1155 = vst [vmem:[%s352 + $0x18] sm:$0xff] %v1091
        %1156 = vst [vmem:[%s352 + $0x20] sm:$0xf] %v1092
        %1157 = vst [vmem:[%s352 + $0x24] sm:$0xff] %v1093
        %1158 = vst [vmem:[%s352 + $0x2c] sm:$0xf] %v1094
        %1159 = vst [vmem:[%s352 + $0x30] sm:$0xff] %v1095
        %1160 = vst [vmem:[%s352 + $0x38] sm:$0xf] %v1096
        %1161 = vst [vmem:[%s352 + $0x3c] sm:$0xff] %v1097
        %1162 = vst [vmem:[%s352 + $0x44] sm:$0xf] %v1098
        %1163 = vst [vmem:[%s352 + $0x48] sm:$0xff] %v1099
        %1164 = vst [vmem:[%s352 + $0x50] sm:$0xf] %v1100
        %1165 = vst [vmem:[%s352 + $0x54] sm:$0xff] %v1101
        %1166 = vst [vmem:[%s352 + $0x5c] sm:$0xf] %v1102
        %1167 = vst [vmem:[%s352 + $0x60] sm:$0xff] %v1103
        %1168 = vst [vmem:[%s352 + $0x68] sm:$0xf] %v1104
        %1169 = vst [vmem:[%s352 + $0x6c] sm:$0xff] %v1105
        %1170 = vst [vmem:[%s352 + $0x74] sm:$0xf] %v1106
        %1171 = vst [vmem:[%s352 + $0x78] sm:$0xff] %v1107
        %1172 = vst [vmem:[%s352 + $0x80] sm:$0xf] %v1108
        %1173 = vst [vmem:[%s352 + $0x84] sm:$0xff] %v1109
        %1174 = vst [vmem:[%s352 + $0x8c] sm:$0xf] %v1110
        %1175 = vst [vmem:[%s352 + $0x90] sm:$0xff] %v1111
        %1176 = vst [vmem:[%s352 + $0x98] sm:$0xf] %v1112
        %1177 = vst [vmem:[%s352 + $0x9c] sm:$0xff] %v1113
        %1178 = vst [vmem:[%s352 + $0xa4] sm:$0xf] %v1114
        %1179 = vst [vmem:[%s352 + $0xa8] sm:$0xff] %v1115
        %1180 = vst [vmem:[%s352 + $0xb0] sm:$0xf] %v1116
        %1181 = vst [vmem:[%s352 + $0xb4] sm:$0xff] %v1117
        %1182 = vst [vmem:[%s352 + $0xbc] sm:$0xf] %v1118
        %s1183 = sand.u32 %s170, 1
        %s1184 = scalar_lea.sflag [#allocation4], %s1183
        %s1185 = sand.u32 %s170, 1
        %s1186 = smul.addr %s1185, 192
        %s1187 = scalar_lea.vmem [#allocation11], %s1186
        // Predicated region
        $region61: #{var_forward.12} parent=39 // pred_check
          %p1188 = pneg %p180
        $region62: #{var_forward.12} parent=39 // pred_check_branch
          %1190 = sbr.rel (%p1188) target = $region64
        $region63: #{var_forward.12} parent=39 // pred_region
          %s1191 = smul.u32 16, %s31
          %s1193 = ssub.s32 3072, 3072
          %1194 = vsyncadd %s1184, %s1193
          %s1195 = smul.addr %s1191, 3
          %s1196 = smul.addr %s30, 48
          %s1197 = sadd.s32 %s1195, %s1196
          %s1198 = smul.addr %s1197, 64
          %s1199 = scalar_lea.hbm %s5, %s1198
          %s1200 = sshll.u32 %s1187, 4
          %s1201 = int_to_ptr.vmem [resolvable:$true] %s1200
          %1206 = dma.vmem_to_hbm [thread:$0]  %s1201, 3072, %s1199, %s1184, 192, 192, 12
        $region64: #{var_forward.12} parent=39 // pred_fallthru
          _
      $region40: #{var_forward.12} parent=5 // pred_fallthru
        _
      %p1207 = scmp.le.s32.totalorder 2, %s21
      // Predicated region
      $region65: #{var_forward.12} parent=5 // pred_check
        %p1208 = pneg %p1207
      $region66: #{var_forward.12} parent=5 // pred_check_branch
        %1210 = sbr.rel (%p1208) target = $region68
      $region67: #{var_forward.12} parent=5 // pred_region
        %s1211 = ssub.s32 %s21, 2
        // Predicated region
        $region69: #{var_forward.12} parent=67 // pred_check
          %p1212 = pneg %p186
        $region70: #{var_forward.12} parent=67 // pred_check_branch
          %1214 = sbr.rel (%p1212) target = $region72
        $region71: #{var_forward.12} parent=67 // pred_region
          %s1215 = sand.u32 %s171, 1
          %s1216 = scalar_lea.sflag [#allocation4], %s1215
          %s1217 = sand.u32 %s171, 1
          %s1218 = smul.addr %s1217, 192
          %s1219 = scalar_lea.vmem [#allocation11], %s1218
          %1220 = dma.done %s1216, 3072
        $region72: #{var_forward.12} parent=67 // pred_fallthru
          _
      $region68: #{var_forward.12} parent=5 // pred_fallthru
        _
    $region6: #{var_forward.12} parent=1 // loop_footer
      %s25 = sadd.s32 1, %s21
    $region7: #{var_forward.12} parent=1 // loop_footer_branch
      %20 = sbr.rel target = $region3
    $region8: #{var_forward.12} parent=1 // loop_exit
      _
    %1221 = vsyncpa [#allocation3], 1
    %s1222 = scalar_lea.sflag [#allocation3], 1
    %1223 = vsyncpa %s1222, 1
    %1224 = vsyncpa [#allocation6], 1
    %s1225 = scalar_lea.sflag [#allocation6], 1
    %1226 = vsyncpa %s1225, 1
    %1227 = vsyncpa [#allocation9], 1
    %1228 = vsyncpa [#allocation4], 1
    %s1229 = scalar_lea.sflag [#allocation4], 1
    %1230 = vsyncpa %s1229, 1

// kernel: var_forward.13
$region0: #{var_forward.13}
  #allocation0 [shape = 'u32[]', space=smem, size = 0x4, offset = 0x4, fixed_abs, tag = 'smem constant byte address 0x4 - core index']
  #allocation1 [shape = 'u32[144,128]{1,0:T(1,128)}', space=vmem, size = 0x12000, scoped, tag = 'internal scratch']
  #allocation2 [shape = 'f32[2,128,1]{2,1,0:T(8,128)}', space=vmem, size = 0x20000, scoped, tag = 'scratch operand']
  #allocation3 [shape = 'f32[2,128,1]{2,1,0:T(8,128)}', space=vmem, size = 0x20000, scoped, tag = 'scratch operand']
  #allocation4 [shape = 'f32[128,128]{1,0:T(8,128)}', space=vmem, size = 0x10000, scoped, tag = 'scratch operand']
  #allocation5 [shape = 's32[1]{0}', space=sflag, size = 0x4, scoped, tag = 'scoped memory for var_forward.13']
  #allocation6 [shape = 's32[1]{0:T(128)S(6)}', space=smem, size = 0x200, scoped, tag = 'prefetched SMEM operand 0']
  %s0 = inlined_call_operand.<no memory space> [shape: s32[1], index: 0, kind: input, shape index: {}]
  %s1 = inlined_call_operand.hbm [shape: bf16[2,128,384], index: 1, kind: input, shape index: {}, may-alias: {1,2,3}]
  %s2 = inlined_call_operand.hbm [shape: bf16[2,128,384], index: 2, kind: input, shape index: {}, may-alias: {1,2,3}]
  %s3 = inlined_call_operand.hbm [shape: bf16[2,128,384], index: 3, kind: input, shape index: {}, may-alias: {1,2,3}]
  %s4 = inlined_call_operand.hbm [shape: s32[128,1], index: 4, kind: input, shape index: {}]
  %s5 = inlined_call_operand.hbm [shape: s32[1,128], index: 5, kind: input, shape index: {}]
  %s6 = inlined_call_operand.hbm [shape: bf16[2,128,128], index: 6, kind: output, shape index: {}]
  %s7 = sld [smem:[#allocation0]]
  $region85: #{var_forward.13} parent=0
    _
  %s9 = ssub.s32 1, %s7
  %s10 = scalar_select 0, %s9, %s7
  %11 = sst [smem:[#allocation6]] %s0
  $region1: #{var_forward.13} parent=0
    #allocation7 [shape = 'u8[65536]{0}', space=vmem, size = 0x10000, scoped, tag = 'input window, operand 1']
    #allocation8 [shape = 's32[2]{0}', space=sflag, size = 0x8, scoped, tag = 'scoped memory for var_forward.13']
    #allocation9 [shape = 's32[2]{0}', space=sflag, size = 0x8, scoped, tag = 'scoped memory for var_forward.13']
    #allocation10 [shape = 'u8[65536]{0}', space=vmem, size = 0x10000, scoped, tag = 'input window, operand 2']
    #allocation11 [shape = 's32[2]{0}', space=sflag, size = 0x8, scoped, tag = 'scoped memory for var_forward.13']
    #allocation12 [shape = 'u8[65536]{0}', space=vmem, size = 0x10000, scoped, tag = 'input window, operand 3']
    #allocation13 [shape = 'u8[65536]{0}', space=vmem, size = 0x10000, scoped, tag = 'input window, operand 4, single buffered']
    #allocation14 [shape = 's32[1]{0}', space=sflag, size = 0x4, scoped, tag = 'scoped memory for var_forward.13']
    #allocation15 [shape = 'u8[512]{0}', space=vmem, size = 0x400, scoped, tag = 'input window, operand 5, single buffered']
    #allocation16 [shape = 'u8[65536]{0}', space=vmem, size = 0x10000, scoped, tag = 'output window, operand 0']
    %12 = vsyncpa [#allocation8], 0
    %s13 = scalar_lea.sflag [#allocation8], 1
    %14 = vsyncpa %s13, 0
    %15 = vsyncpa [#allocation11], 0
    %s16 = scalar_lea.sflag [#allocation11], 1
    %17 = vsyncpa %s16, 0
    %18 = vsyncpa [#allocation14], 0
    %19 = vsyncpa [#allocation9], 0
    %s20 = scalar_lea.sflag [#allocation9], 1
    %21 = vsyncpa %s20, 0
    loop: start=0, step=1, limit=4
    $region2: #{var_forward.13} parent=1 // loop_pre_header
      _
    $region3: #{var_forward.13} parent=1 // loop_header
      %s23 = sphi 0, %s27
      %p24 = scmp.ge.s32.totalorder %s23, 4
      %s30 = sphi 0, %s56
      %s31 = sphi 0, %s52
      %s32 = sphi 0, %s48
      %s33 = sphi 0, %s44
      %s34 = sphi 0, %s30
      %s35 = sphi 0, %s31
      %s36 = sphi 0, %s32
      %s37 = sphi 0, %s33
      %s38 = sphi 0, %s34
      %s39 = sphi 0, %s35
      %s40 = sphi 0, %s36
      %s41 = sphi 0, %s37
      %s63 = sphi 0, %s65
      %s66 = sphi 0, %s63
      %s67 = sphi 0, %s66
      %s83 = sphi 0, %s67
      %s101 = sphi 0, %s103
      %s104 = sphi 0, %s101
      %s105 = sphi 0, %s104
      %s121 = sphi 0, %s105
      %s139 = sphi 0, %s141
      %s142 = sphi 0, %s139
      %s143 = sphi 0, %s142
      %s159 = sphi 0, %s143
      %s165 = sphi 0, %s167
      %s168 = sphi 0, %s165
      %s169 = sphi 0, %s168
      %s185 = sphi 0, %s169
      %s197 = sphi 0, %s199
      %s200 = sphi 0, %s197
      %s201 = sphi 0, %s200
      %s217 = sphi 0, %s201
      %s227 = sphi 0, %s229
      %s230 = sphi 0, %s227
      %s231 = sphi 0, %s230
      %s247 = sphi 0, %s231
    $region4: #{var_forward.13} parent=1 // loop_header_branch
      %26 = sbr.rel (%p24) target = $region8
    $region5: #{var_forward.13} parent=1 // loop_body
      %s28 = ssub.s32 %s23, 1
      %s29 = ssub.s32 %s23, 2
      %s42 = sadd.s32 1, %s33
      %p43 = scmp.ge.s32.totalorder %s42, 1
      %s44 = scalar_select %p43, 0, %s42
      %s45 = sadd.s32 1, %s32
      %s46 = scalar_select %p43, %s45, %s32
      %p47 = scmp.ge.s32.totalorder %s46, 1
      %s48 = scalar_select %p47, 0, %s46
      %s49 = sadd.s32 1, %s31
      %s50 = scalar_select %p47, %s49, %s31
      %p51 = scmp.ge.s32.totalorder %s50, 1
      %s52 = scalar_select %p51, 0, %s50
      %s53 = sadd.s32 1, %s30
      %s54 = scalar_select %p51, %s53, %s30
      %p55 = scmp.ge.s32.totalorder %s54, 2
      %s56 = scalar_select %p55, 0, %s54
      %s57 = ssub.s32 %s30, %s56
      %s58 = ssub.s32 %s32, %s48
      %s59 = sor.u32 %s57, %s58
      %s60 = ssub.s32 %s31, %s52
      %s61 = sor.u32 %s59, %s60
      %p62 = scmp.eq.s32.totalorder %s61, 0
      %s64 = sadd.s32 %s63, 1
      %s65 = scalar_select %p62, %s63, %s64
      %p68 = pneg %p62
      %p69 = scmp.eq.s32.totalorder %s23, 1
      %p70 = por %p68, %p69
      %p71 = scmp.ne.s32.totalorder %s63, %s66
      %p72 = scmp.eq.s32.totalorder %s23, 0
      %p73 = por %p71, %p72
      %p74 = scmp.ne.s32.totalorder %s63, %s66
      %p75 = scmp.eq.s32.totalorder %s28, 1
      %p76 = por %p74, %p75
      %p77 = scmp.ne.s32.totalorder %s66, %s67
      %p78 = scmp.eq.s32.totalorder %s28, 0
      %p79 = por %p77, %p78
      %p80 = scmp.ne.s32.totalorder %s66, %s67
      %p81 = scmp.eq.s32.totalorder %s29, 1
      %p82 = por %p80, %p81
      %p84 = scmp.ne.s32.totalorder %s67, %s83
      %p85 = scmp.eq.s32.totalorder %s29, 0
      %p86 = por %p84, %p85
      %s87 = sld [smem:[#allocation6 + %s32]]
      %p88 = scmp.lt.s32.totalorder %s33, %s87
      %s89 = scalar_select %p88, %s33, %s87
      %s90 = sadd.s32 %s31, 1
      %s91 = sld [smem:[#allocation6 + %s48]]
      %p92 = scmp.lt.s32.totalorder %s44, %s91
      %s93 = scalar_select %p92, %s44, %s91
      %s94 = sadd.s32 %s52, 1
      %s95 = ssub.s32 %s30, %s56
      %s96 = ssub.s32 %s89, %s93
      %s97 = sor.u32 %s95, %s96
      %s98 = ssub.s32 %s90, %s94
      %s99 = sor.u32 %s97, %s98
      %p100 = scmp.eq.s32.totalorder %s99, 0
      %s102 = sadd.s32 %s101, 1
      %s103 = scalar_select %p100, %s101, %s102
      %p106 = pneg %p100
      %p107 = scmp.eq.s32.totalorder %s23, 1
      %p108 = por %p106, %p107
      %p109 = scmp.ne.s32.totalorder %s101, %s104
      %p110 = scmp.eq.s32.totalorder %s23, 0
      %p111 = por %p109, %p110
      %p112 = scmp.ne.s32.totalorder %s101, %s104
      %p113 = scmp.eq.s32.totalorder %s28, 1
      %p114 = por %p112, %p113
      %p115 = scmp.ne.s32.totalorder %s104, %s105
      %p116 = scmp.eq.s32.totalorder %s28, 0
      %p117 = por %p115, %p116
      %p118 = scmp.ne.s32.totalorder %s104, %s105
      %p119 = scmp.eq.s32.totalorder %s29, 1
      %p120 = por %p118, %p119
      %p122 = scmp.ne.s32.totalorder %s105, %s121
      %p123 = scmp.eq.s32.totalorder %s29, 0
      %p124 = por %p122, %p123
      %s125 = sld [smem:[#allocation6 + %s32]]
      %p126 = scmp.lt.s32.totalorder %s33, %s125
      %s127 = scalar_select %p126, %s33, %s125
      %s128 = sadd.s32 %s31, 2
      %s129 = sld [smem:[#allocation6 + %s48]]
      %p130 = scmp.lt.s32.totalorder %s44, %s129
      %s131 = scalar_select %p130, %s44, %s129
      %s132 = sadd.s32 %s52, 2
      %s133 = ssub.s32 %s30, %s56
      %s134 = ssub.s32 %s127, %s131
      %s135 = sor.u32 %s133, %s134
      %s136 = ssub.s32 %s128, %s132
      %s137 = sor.u32 %s135, %s136
      %p138 = scmp.eq.s32.totalorder %s137, 0
      %s140 = sadd.s32 %s139, 1
      %s141 = scalar_select %p138, %s139, %s140
      %p144 = pneg %p138
      %p145 = scmp.eq.s32.totalorder %s23, 1
      %p146 = por %p144, %p145
      %p147 = scmp.ne.s32.totalorder %s139, %s142
      %p148 = scmp.eq.s32.totalorder %s23, 0
      %p149 = por %p147, %p148
      %p150 = scmp.ne.s32.totalorder %s139, %s142
      %p151 = scmp.eq.s32.totalorder %s28, 1
      %p152 = por %p150, %p151
      %p153 = scmp.ne.s32.totalorder %s142, %s143
      %p154 = scmp.eq.s32.totalorder %s28, 0
      %p155 = por %p153, %p154
      %p156 = scmp.ne.s32.totalorder %s142, %s143
      %p157 = scmp.eq.s32.totalorder %s29, 1
      %p158 = por %p156, %p157
      %p160 = scmp.ne.s32.totalorder %s143, %s159
      %p161 = scmp.eq.s32.totalorder %s29, 0
      %p162 = por %p160, %p161
      %s163 = ssub.s32 %s32, %s48
      %p164 = scmp.eq.s32.totalorder %s163, 0
      %s166 = sadd.s32 %s165, 1
      %s167 = scalar_select %p164, %s165, %s166
      %p170 = pneg %p164
      %p171 = scmp.eq.s32.totalorder %s23, 1
      %p172 = por %p170, %p171
      %p173 = scmp.ne.s32.totalorder %s165, %s168
      %p174 = scmp.eq.s32.totalorder %s23, 0
      %p175 = por %p173, %p174
      %p176 = scmp.ne.s32.totalorder %s165, %s168
      %p177 = scmp.eq.s32.totalorder %s28, 1
      %p178 = por %p176, %p177
      %p179 = scmp.ne.s32.totalorder %s168, %s169
      %p180 = scmp.eq.s32.totalorder %s28, 0
      %p181 = por %p179, %p180
      %p182 = scmp.ne.s32.totalorder %s168, %s169
      %p183 = scmp.eq.s32.totalorder %s29, 1
      %p184 = por %p182, %p183
      %p186 = scmp.ne.s32.totalorder %s169, %s185
      %p187 = scmp.eq.s32.totalorder %s29, 0
      %p188 = por %p186, %p187
      %s189 = sld [smem:[#allocation6 + %s32]]
      %p190 = scmp.lt.s32.totalorder %s33, %s189
      %s191 = scalar_select %p190, %s33, %s189
      %s192 = sld [smem:[#allocation6 + %s48]]
      %p193 = scmp.lt.s32.totalorder %s44, %s192
      %s194 = scalar_select %p193, %s44, %s192
      %s195 = ssub.s32 %s191, %s194
      %p196 = scmp.eq.s32.totalorder %s195, 0
      %s198 = sadd.s32 %s197, 1
      %s199 = scalar_select %p196, %s197, %s198
      %p202 = pneg %p196
      %p203 = scmp.eq.s32.totalorder %s23, 1
      %p204 = por %p202, %p203
      %p205 = scmp.ne.s32.totalorder %s197, %s200
      %p206 = scmp.eq.s32.totalorder %s23, 0
      %p207 = por %p205, %p206
      %p208 = scmp.ne.s32.totalorder %s197, %s200
      %p209 = scmp.eq.s32.totalorder %s28, 1
      %p210 = por %p208, %p209
      %p211 = scmp.ne.s32.totalorder %s200, %s201
      %p212 = scmp.eq.s32.totalorder %s28, 0
      %p213 = por %p211, %p212
      %p214 = scmp.ne.s32.totalorder %s200, %s201
      %p215 = scmp.eq.s32.totalorder %s29, 1
      %p216 = por %p214, %p215
      %p218 = scmp.ne.s32.totalorder %s201, %s217
      %p219 = scmp.eq.s32.totalorder %s29, 0
      %p220 = por %p218, %p219
      %s221 = ssub.s32 %s30, %s56
      %s222 = ssub.s32 %s32, %s48
      %s223 = sor.u32 %s221, %s222
      %s224 = ssub.s32 %s31, %s52
      %s225 = sor.u32 %s223, %s224
      %p226 = scmp.eq.s32.totalorder %s225, 0
      %s228 = sadd.s32 %s227, 1
      %s229 = scalar_select %p226, %s227, %s228
      %p232 = pneg %p226
      %p233 = scmp.eq.s32.totalorder %s23, 1
      %p234 = por %p232, %p233
      %p235 = scmp.ne.s32.totalorder %s227, %s230
      %p236 = scmp.eq.s32.totalorder %s23, 0
      %p237 = por %p235, %p236
      %p238 = scmp.ne.s32.totalorder %s227, %s230
      %p239 = scmp.eq.s32.totalorder %s28, 1
      %p240 = por %p238, %p239
      %p241 = scmp.ne.s32.totalorder %s230, %s231
      %p242 = scmp.eq.s32.totalorder %s28, 0
      %p243 = por %p241, %p242
      %p244 = scmp.ne.s32.totalorder %s230, %s231
      %p245 = scmp.eq.s32.totalorder %s29, 1
      %p246 = por %p244, %p245
      %p248 = scmp.ne.s32.totalorder %s231, %s247
      %p249 = scmp.eq.s32.totalorder %s29, 0
      %p250 = por %p248, %p249
      %p251 = scmp.le.s32.totalorder 1, %s23
      %p252 = scmp.lt.s32.totalorder %s23, 3
      %p253 = pnand %p251, %p252
      %p254 = pneg %p253
      // Predicated region
      $region9: #{var_forward.13} parent=5 // pred_check
        _
      $region10: #{var_forward.13} parent=5 // pred_check_branch
        %256 = sbr.rel (%p253) target = $region12
      $region11: #{var_forward.13} parent=5 // pred_region
        %s257 = ssub.s32 %s23, 1
        // Predicated region
        $region13: #{var_forward.13} parent=11 // pred_check
          %p258 = pneg %p181
        $region14: #{var_forward.13} parent=11 // pred_check_branch
          %260 = sbr.rel (%p258) target = $region16
        $region15: #{var_forward.13} parent=11 // pred_region
          %s261 = smul.u32 16, %s36
          %s263 = ssub.s32 2048, 2048
          %264 = vsyncadd [#allocation14], %s263
          %s265 = smul.addr %s261, 128
          %s266 = scalar_lea.hbm %s4, %s265
          %s267 = sshll.u32 [#allocation13], 4
          %s268 = int_to_ptr.vmem [resolvable:$true] %s267
          %273 = dma.hbm_to_vmem [thread:$0]  %s266, 2048, %s268, [#allocation14], 128, 128, 8
        $region16: #{var_forward.13} parent=11 // pred_fallthru
          _
        // Predicated region
        $region17: #{var_forward.13} parent=11 // pred_check
          %p274 = pneg %p213
        $region18: #{var_forward.13} parent=11 // pred_check_branch
          %276 = sbr.rel (%p274) target = $region20
        $region19: #{var_forward.13} parent=11 // pred_region
          %s277 = sld [smem:[#allocation6 + %s36]]
          %p278 = scmp.lt.s32.totalorder %s37, %s277
          %s279 = scalar_select %p278, %s37, %s277
          %s281 = ssub.s32 16, 16
          %282 = vsyncadd [#allocation14], %s281
          %s283 = smul.addr %s279, 16
          %s284 = scalar_lea.hbm %s5, %s283
          %s286 = sshll.u32 [#allocation15], 4
          %s287 = int_to_ptr.vmem [resolvable:$true] %s286
          %289 = dma.hbm_to_vmem [thread:$0]  %s284, 16, %s287, [#allocation14]
        $region20: #{var_forward.13} parent=11 // pred_fallthru
          _
      $region12: #{var_forward.13} parent=5 // pred_fallthru
        _
      %p290 = scmp.lt.s32.totalorder %s23, 2
      // Predicated region
      $region21: #{var_forward.13} parent=5 // pred_check
        %p291 = pneg %p290
      $region22: #{var_forward.13} parent=5 // pred_check_branch
        %293 = sbr.rel (%p291) target = $region24
      $region23: #{var_forward.13} parent=5 // pred_region
        // Predicated region
        $region25: #{var_forward.13} parent=23 // pred_check
          %p294 = pneg %p73
        $region26: #{var_forward.13} parent=23 // pred_check_branch
          %296 = sbr.rel (%p294) target = $region28
        $region27: #{var_forward.13} parent=23 // pred_region
          %s297 = sand.u32 %s63, 1
          %s298 = scalar_lea.sflag [#allocation8], %s297
          %s299 = sand.u32 %s63, 1
          %s300 = smul.addr %s299, 64
          %s301 = scalar_lea.vmem [#allocation7], %s300
          %s302 = smul.u32 16, %s32
          %s304 = ssub.s32 1024, 1024
          %305 = vsyncadd %s298, %s304
          %s306 = smul.addr %s302, 3
          %s307 = sadd.s32 %s31, %s306
          %s308 = smul.addr %s30, 48
          %s309 = sadd.s32 %s307, %s308
          %s310 = smul.addr %s309, 64
          %s311 = scalar_lea.hbm %s1, %s310
          %s312 = sshll.u32 %s301, 4
          %s313 = int_to_ptr.vmem [resolvable:$true] %s312
          %318 = dma.hbm_to_vmem [thread:$0]  %s311, 1024, %s313, %s298, 192, 64, 4
        $region28: #{var_forward.13} parent=23 // pred_fallthru
          _
        // Predicated region
        $region29: #{var_forward.13} parent=23 // pred_check
          %p319 = pneg %p111
        $region30: #{var_forward.13} parent=23 // pred_check_branch
          %321 = sbr.rel (%p319) target = $region32
        $region31: #{var_forward.13} parent=23 // pred_region
          %s322 = sand.u32 %s23, 1
          %s323 = scalar_lea.sflag [#allocation11], %s322
          %s324 = sand.u32 %s101, 1
          %s325 = smul.addr %s324, 64
          %s326 = scalar_lea.vmem [#allocation10], %s325
          %s327 = sld [smem:[#allocation6 + %s32]]
          %p328 = scmp.lt.s32.totalorder %s33, %s327
          %s329 = scalar_select %p328, %s33, %s327
          %s330 = sadd.s32 %s31, 1
          %s331 = smul.u32 16, %s329
          %s333 = ssub.s32 1024, 1024
          %334 = vsyncadd %s323, %s333
          %s335 = smul.addr %s331, 3
          %s336 = sadd.s32 %s330, %s335
          %s337 = smul.addr %s30, 48
          %s338 = sadd.s32 %s336, %s337
          %s339 = smul.addr %s338, 64
          %s340 = scalar_lea.hbm %s2, %s339
          %s341 = sshll.u32 %s326, 4
          %s342 = int_to_ptr.vmem [resolvable:$true] %s341
          %347 = dma.hbm_to_vmem [thread:$0]  %s340, 1024, %s342, %s323, 192, 64, 4
        $region32: #{var_forward.13} parent=23 // pred_fallthru
          _
        // Predicated region
        $region33: #{var_forward.13} parent=23 // pred_check
          %p348 = pneg %p149
        $region34: #{var_forward.13} parent=23 // pred_check_branch
          %350 = sbr.rel (%p348) target = $region36
        $region35: #{var_forward.13} parent=23 // pred_region
          %s351 = sand.u32 %s23, 1
          %s352 = scalar_lea.sflag [#allocation11], %s351
          %s353 = sand.u32 %s139, 1
          %s354 = smul.addr %s353, 64
          %s355 = scalar_lea.vmem [#allocation12], %s354
          %s356 = sld [smem:[#allocation6 + %s32]]
          %p357 = scmp.lt.s32.totalorder %s33, %s356
          %s358 = scalar_select %p357, %s33, %s356
          %s359 = sadd.s32 %s31, 2
          %s360 = smul.u32 16, %s358
          %s362 = ssub.s32 1024, 1024
          %363 = vsyncadd %s352, %s362
          %s364 = smul.addr %s360, 3
          %s365 = sadd.s32 %s359, %s364
          %s366 = smul.addr %s30, 48
          %s367 = sadd.s32 %s365, %s366
          %s368 = smul.addr %s367, 64
          %s369 = scalar_lea.hbm %s3, %s368
          %s370 = sshll.u32 %s355, 4
          %s371 = int_to_ptr.vmem [resolvable:$true] %s370
          %376 = dma.hbm_to_vmem [thread:$0]  %s369, 1024, %s371, %s352, 192, 64, 4
        $region36: #{var_forward.13} parent=23 // pred_fallthru
          _
      $region24: #{var_forward.13} parent=5 // pred_fallthru
        _
      %p377 = scmp.le.s32.totalorder 1, %s23
      %p378 = scmp.lt.s32.totalorder %s23, 3
      %p379 = pnand %p377, %p378
      %p380 = pneg %p379
      // Predicated region
      $region37: #{var_forward.13} parent=5 // pred_check
        _
      $region38: #{var_forward.13} parent=5 // pred_check_branch
        %382 = sbr.rel (%p379) target = $region40
      $region39: #{var_forward.13} parent=5 // pred_region
        %s383 = ssub.s32 %s23, 1
        %s384 = sand.u32 %s66, 1
        %s385 = scalar_lea.sflag [#allocation8], %s384
        %s386 = sand.u32 %s66, 1
        %s387 = smul.addr %s386, 64
        %s388 = scalar_lea.vmem [#allocation7], %s387
        // Predicated region
        $region41: #{var_forward.13} parent=39 // pred_check
          %p389 = pneg %p79
        $region42: #{var_forward.13} parent=39 // pred_check_branch
          %391 = sbr.rel (%p389) target = $region44
        $region43: #{var_forward.13} parent=39 // pred_region
          %392 = dma.done %s385, 1024
        $region44: #{var_forward.13} parent=39 // pred_fallthru
          _
        %s393 = sand.u32 %s28, 1
        %s394 = scalar_lea.sflag [#allocation11], %s393
        %s395 = sand.u32 %s104, 1
        %s396 = smul.addr %s395, 64
        %s397 = scalar_lea.vmem [#allocation10], %s396
        // Predicated region
        $region45: #{var_forward.13} parent=39 // pred_check
          %p398 = pneg %p117
        $region46: #{var_forward.13} parent=39 // pred_check_branch
          %400 = sbr.rel (%p398) target = $region48
        $region47: #{var_forward.13} parent=39 // pred_region
          %401 = dma.done %s394, 1024
        $region48: #{var_forward.13} parent=39 // pred_fallthru
          _
        %s402 = sand.u32 %s28, 1
        %s403 = scalar_lea.sflag [#allocation11], %s402
        %s404 = sand.u32 %s142, 1
        %s405 = smul.addr %s404, 64
        %s406 = scalar_lea.vmem [#allocation12], %s405
        // Predicated region
        $region49: #{var_forward.13} parent=39 // pred_check
          %p407 = pneg %p155
        $region50: #{var_forward.13} parent=39 // pred_check_branch
          %409 = sbr.rel (%p407) target = $region52
        $region51: #{var_forward.13} parent=39 // pred_region
          %410 = dma.done %s403, 1024
        $region52: #{var_forward.13} parent=39 // pred_fallthru
          _
        // Predicated region
        $region53: #{var_forward.13} parent=39 // pred_check
          %p411 = pneg %p181
        $region54: #{var_forward.13} parent=39 // pred_check_branch
          %413 = sbr.rel (%p411) target = $region56
        $region55: #{var_forward.13} parent=39 // pred_region
          %414 = dma.done [#allocation14], 2048
        $region56: #{var_forward.13} parent=39 // pred_fallthru
          _
        // Predicated region
        $region57: #{var_forward.13} parent=39 // pred_check
          %p415 = pneg %p213
        $region58: #{var_forward.13} parent=39 // pred_check_branch
          %417 = sbr.rel (%p415) target = $region60
        $region59: #{var_forward.13} parent=39 // pred_region
          %418 = dma.done [#allocation14], 16
        $region60: #{var_forward.13} parent=39 // pred_fallthru
          _
        %s419 = sand.u32 %s66, 1
        %s420 = scalar_lea.sflag [#allocation8], %s419
        %s421 = sand.u32 %s66, 1
        %s422 = smul.addr %s421, 64
        %s423 = scalar_lea.vmem [#allocation7], %s422
        %p424 = pneg %p79
        %p425 = pneg %p76
        %s426 = sand.u32 %s28, 1
        %s427 = scalar_lea.sflag [#allocation11], %s426
        %s428 = sand.u32 %s104, 1
        %s429 = smul.addr %s428, 64
        %s430 = scalar_lea.vmem [#allocation10], %s429
        %p431 = pneg %p117
        %p432 = pneg %p114
        %s433 = sand.u32 %s28, 1
        %s434 = scalar_lea.sflag [#allocation11], %s433
        %s435 = sand.u32 %s142, 1
        %s436 = smul.addr %s435, 64
        %s437 = scalar_lea.vmem [#allocation12], %s436
        %p438 = pneg %p155
        %p439 = pneg %p152
        %p440 = pneg %p181
        %p441 = pneg %p178
        %p442 = pneg %p213
        %p443 = pneg %p210
        %p444 = pneg %p243
        %p445 = pneg %p240
        %s446 = sand.u32 %s230, 1
        %s447 = scalar_lea.sflag [#allocation9], %s446
        %s448 = sand.u32 %s230, 1
        %s449 = smul.addr %s448, 64
        %s450 = scalar_lea.vmem [#allocation16], %s449
        %s451 = smul.u32 16, %s36
        %s452 = sld [smem:[#allocation6 + %s36]]
        %p453 = scmp.lt.s32.totalorder %s37, %s452
        %s454 = scalar_select %p453, %s37, %s452
        %s455 = sadd.s32 %s35, 1
        %s456 = smul.u32 16, %s454
        %s457 = sld [smem:[#allocation6 + %s36]]
        %p458 = scmp.lt.s32.totalorder %s37, %s457
        %s459 = scalar_select %p458, %s37, %s457
        %s460 = sadd.s32 %s35, 2
        %s461 = smul.u32 16, %s459
        %s462 = smul.u32 16, %s36
        %s463 = sld [smem:[#allocation6 + %s36]]
        %p464 = scmp.lt.s32.totalorder %s37, %s463
        %s465 = scalar_select %p464, %s37, %s463
        %s466 = smul.u32 16, %s36
        %p468 = scmp.eq.s32.totalorder %s37, 0
        // Predicated region
        $region61: #{var_forward.13} parent=39 // pred_check
          %p469 = pneg %p468
        $region62: #{var_forward.13} parent=39 // pred_check_branch
          %471 = sbr.rel (%p469) target = $region64
        $region63: #{var_forward.13} parent=39 // pred_region
          %vm472 = vcmask 7168
          %473 = vst.msk [vmem:[#allocation2] sm:$0xff] %vm472, -1e+30
          %474 = vst.msk [vmem:[#allocation2 + $0x8] sm:$0xff] %vm472, -1e+30
          %475 = vst.msk [vmem:[#allocation2 + $0x10] sm:$0xff] %vm472, -1e+30
          %476 = vst.msk [vmem:[#allocation2 + $0x18] sm:$0xff] %vm472, -1e+30
          %477 = vst.msk [vmem:[#allocation2 + $0x20] sm:$0xff] %vm472, -1e+30
          %478 = vst.msk [vmem:[#allocation2 + $0x28] sm:$0xff] %vm472, -1e+30
          %479 = vst.msk [vmem:[#allocation2 + $0x30] sm:$0xff] %vm472, -1e+30
          %480 = vst.msk [vmem:[#allocation2 + $0x38] sm:$0xff] %vm472, -1e+30
          %481 = vst.msk [vmem:[#allocation2 + $0x40] sm:$0xff] %vm472, -1e+30
          %482 = vst.msk [vmem:[#allocation2 + $0x48] sm:$0xff] %vm472, -1e+30
          %483 = vst.msk [vmem:[#allocation2 + $0x50] sm:$0xff] %vm472, -1e+30
          %484 = vst.msk [vmem:[#allocation2 + $0x58] sm:$0xff] %vm472, -1e+30
          %485 = vst.msk [vmem:[#allocation2 + $0x60] sm:$0xff] %vm472, -1e+30
          %486 = vst.msk [vmem:[#allocation2 + $0x68] sm:$0xff] %vm472, -1e+30
          %487 = vst.msk [vmem:[#allocation2 + $0x70] sm:$0xff] %vm472, -1e+30
          %488 = vst.msk [vmem:[#allocation2 + $0x78] sm:$0xff] %vm472, -1e+30
          %489 = vst.msk [vmem:[#allocation2 + $0x80] sm:$0xff] %vm472, -1e+30
          %490 = vst.msk [vmem:[#allocation2 + $0x88] sm:$0xff] %vm472, -1e+30
          %491 = vst.msk [vmem:[#allocation2 + $0x90] sm:$0xff] %vm472, -1e+30
          %492 = vst.msk [vmem:[#allocation2 + $0x98] sm:$0xff] %vm472, -1e+30
          %493 = vst.msk [vmem:[#allocation2 + $0xa0] sm:$0xff] %vm472, -1e+30
          %494 = vst.msk [vmem:[#allocation2 + $0xa8] sm:$0xff] %vm472, -1e+30
          %495 = vst.msk [vmem:[#allocation2 + $0xb0] sm:$0xff] %vm472, -1e+30
          %496 = vst.msk [vmem:[#allocation2 + $0xb8] sm:$0xff] %vm472, -1e+30
          %497 = vst.msk [vmem:[#allocation2 + $0xc0] sm:$0xff] %vm472, -1e+30
          %498 = vst.msk [vmem:[#allocation2 + $0xc8] sm:$0xff] %vm472, -1e+30
          %499 = vst.msk [vmem:[#allocation2 + $0xd0] sm:$0xff] %vm472, -1e+30
          %500 = vst.msk [vmem:[#allocation2 + $0xd8] sm:$0xff] %vm472, -1e+30
          %501 = vst.msk [vmem:[#allocation2 + $0xe0] sm:$0xff] %vm472, -1e+30
          %502 = vst.msk [vmem:[#allocation2 + $0xe8] sm:$0xff] %vm472, -1e+30
          %503 = vst.msk [vmem:[#allocation2 + $0xf0] sm:$0xff] %vm472, -1e+30
          %504 = vst.msk [vmem:[#allocation2 + $0xf8] sm:$0xff] %vm472, -1e+30
          %505 = vst.msk [vmem:[#allocation3] sm:$0xff] %vm472, 0.0
          %506 = vst.msk [vmem:[#allocation3 + $0x8] sm:$0xff] %vm472, 0.0
          %507 = vst.msk [vmem:[#allocation3 + $0x10] sm:$0xff] %vm472, 0.0
          %508 = vst.msk [vmem:[#allocation3 + $0x18] sm:$0xff] %vm472, 0.0
          %509 = vst.msk [vmem:[#allocation3 + $0x20] sm:$0xff] %vm472, 0.0
          %510 = vst.msk [vmem:[#allocation3 + $0x28] sm:$0xff] %vm472, 0.0
          %511 = vst.msk [vmem:[#allocation3 + $0x30] sm:$0xff] %vm472, 0.0
          %512 = vst.msk [vmem:[#allocation3 + $0x38] sm:$0xff] %vm472, 0.0
          %513 = vst.msk [vmem:[#allocation3 + $0x40] sm:$0xff] %vm472, 0.0
          %514 = vst.msk [vmem:[#allocation3 + $0x48] sm:$0xff] %vm472, 0.0
          %515 = vst.msk [vmem:[#allocation3 + $0x50] sm:$0xff] %vm472, 0.0
          %516 = vst.msk [vmem:[#allocation3 + $0x58] sm:$0xff] %vm472, 0.0
          %517 = vst.msk [vmem:[#allocation3 + $0x60] sm:$0xff] %vm472, 0.0
          %518 = vst.msk [vmem:[#allocation3 + $0x68] sm:$0xff] %vm472, 0.0
          %519 = vst.msk [vmem:[#allocation3 + $0x70] sm:$0xff] %vm472, 0.0
          %520 = vst.msk [vmem:[#allocation3 + $0x78] sm:$0xff] %vm472, 0.0
          %521 = vst.msk [vmem:[#allocation3 + $0x80] sm:$0xff] %vm472, 0.0
          %522 = vst.msk [vmem:[#allocation3 + $0x88] sm:$0xff] %vm472, 0.0
          %523 = vst.msk [vmem:[#allocation3 + $0x90] sm:$0xff] %vm472, 0.0
          %524 = vst.msk [vmem:[#allocation3 + $0x98] sm:$0xff] %vm472, 0.0
          %525 = vst.msk [vmem:[#allocation3 + $0xa0] sm:$0xff] %vm472, 0.0
          %526 = vst.msk [vmem:[#allocation3 + $0xa8] sm:$0xff] %vm472, 0.0
          %527 = vst.msk [vmem:[#allocation3 + $0xb0] sm:$0xff] %vm472, 0.0
          %528 = vst.msk [vmem:[#allocation3 + $0xb8] sm:$0xff] %vm472, 0.0
          %529 = vst.msk [vmem:[#allocation3 + $0xc0] sm:$0xff] %vm472, 0.0
          %530 = vst.msk [vmem:[#allocation3 + $0xc8] sm:$0xff] %vm472, 0.0
          %531 = vst.msk [vmem:[#allocation3 + $0xd0] sm:$0xff] %vm472, 0.0
          %532 = vst.msk [vmem:[#allocation3 + $0xd8] sm:$0xff] %vm472, 0.0
          %533 = vst.msk [vmem:[#allocation3 + $0xe0] sm:$0xff] %vm472, 0.0
          %534 = vst.msk [vmem:[#allocation3 + $0xe8] sm:$0xff] %vm472, 0.0
          %535 = vst.msk [vmem:[#allocation3 + $0xf0] sm:$0xff] %vm472, 0.0
          %536 = vst.msk [vmem:[#allocation3 + $0xf8] sm:$0xff] %vm472, 0.0
          %537 = vst [vmem:[#allocation4] sm:$0xff] 0.0
          %538 = vst [vmem:[#allocation4 + $0x8] sm:$0xff] 0.0
          %539 = vst [vmem:[#allocation4 + $0x10] sm:$0xff] 0.0
          %540 = vst [vmem:[#allocation4 + $0x18] sm:$0xff] 0.0
          %541 = vst [vmem:[#allocation4 + $0x20] sm:$0xff] 0.0
          %542 = vst [vmem:[#allocation4 + $0x28] sm:$0xff] 0.0
          %543 = vst [vmem:[#allocation4 + $0x30] sm:$0xff] 0.0
          %544 = vst [vmem:[#allocation4 + $0x38] sm:$0xff] 0.0
          %545 = vst [vmem:[#allocation4 + $0x40] sm:$0xff] 0.0
          %546 = vst [vmem:[#allocation4 + $0x48] sm:$0xff] 0.0
          %547 = vst [vmem:[#allocation4 + $0x50] sm:$0xff] 0.0
          %548 = vst [vmem:[#allocation4 + $0x58] sm:$0xff] 0.0
          %549 = vst [vmem:[#allocation4 + $0x60] sm:$0xff] 0.0
          %550 = vst [vmem:[#allocation4 + $0x68] sm:$0xff] 0.0
          %551 = vst [vmem:[#allocation4 + $0x70] sm:$0xff] 0.0
          %552 = vst [vmem:[#allocation4 + $0x78] sm:$0xff] 0.0
        $region64: #{var_forward.13} parent=39 // pred_fallthru
          _
        %s553 = sld [smem:[#allocation6 + %s36]]
        %p554 = scmp.le.s32.totalorder %s37, %s553
        // Predicated region
        $region65: #{var_forward.13} parent=39 // pred_check
          %p555 = pneg %p554
        $region66: #{var_forward.13} parent=39 // pred_check_branch
          %557 = sbr.rel (%p555) target = $region68
        $region67: #{var_forward.13} parent=39 // pred_region
          %v558 = vld [vmem:[#allocation13] sm:$0xff]
          %v559 = vld [vmem:[#allocation13 + $0x8] sm:$0xff]
          %v560 = vld [vmem:[#allocation13 + $0x10] sm:$0xff]
          %v561 = vld [vmem:[#allocation13 + $0x18] sm:$0xff]
          %v562 = vld [vmem:[#allocation13 + $0x20] sm:$0xff]
          %v563 = vld [vmem:[#allocation13 + $0x28] sm:$0xff]
          %v564 = vld [vmem:[#allocation13 + $0x30] sm:$0xff]
          %v565 = vld [vmem:[#allocation13 + $0x38] sm:$0xff]
          %v566 = vld [vmem:[#allocation13 + $0x40] sm:$0xff]
          %v567 = vld [vmem:[#allocation13 + $0x48] sm:$0xff]
          %v568 = vld [vmem:[#allocation13 + $0x50] sm:$0xff]
          %v569 = vld [vmem:[#allocation13 + $0x58] sm:$0xff]
          %v570 = vld [vmem:[#allocation13 + $0x60] sm:$0xff]
          %v571 = vld [vmem:[#allocation13 + $0x68] sm:$0xff]
          %v572 = vld [vmem:[#allocation13 + $0x70] sm:$0xff]
          %v573 = vld [vmem:[#allocation13 + $0x78] sm:$0xff]
          %v574 = vld [vmem:[#allocation15] sm:$0x1]
          %575 = vset.pattern.permute.xlu0 0
          %576 = vperm.xlu0 %575, %v558
          %v577 = vpop.permute.xlu0 %576
          %578 = vset.pattern.permute.xlu0 0
          %579 = vperm.xlu0 %578, %v559
          %v580 = vpop.permute.xlu0 %579
          %581 = vset.pattern.permute.xlu0 0
          %582 = vperm.xlu0 %581, %v560
          %v583 = vpop.permute.xlu0 %582
          %584 = vset.pattern.permute.xlu0 0
          %585 = vperm.xlu0 %584, %v561
          %v586 = vpop.permute.xlu0 %585
          %587 = vset.pattern.permute.xlu0 0
          %588 = vperm.xlu0 %587, %v562
          %v589 = vpop.permute.xlu0 %588
          %590 = vset.pattern.permute.xlu0 0
          %591 = vperm.xlu0 %590, %v563
          %v592 = vpop.permute.xlu0 %591
          %593 = vset.pattern.permute.xlu0 0
          %594 = vperm.xlu0 %593, %v564
          %v595 = vpop.permute.xlu0 %594
          %596 = vset.pattern.permute.xlu0 0
          %597 = vperm.xlu0 %596, %v565
          %v598 = vpop.permute.xlu0 %597
          %599 = vset.pattern.permute.xlu0 0
          %600 = vperm.xlu0 %599, %v566
          %v601 = vpop.permute.xlu0 %600
          %602 = vset.pattern.permute.xlu0 0
          %603 = vperm.xlu0 %602, %v567
          %v604 = vpop.permute.xlu0 %603
          %605 = vset.pattern.permute.xlu0 0
          %606 = vperm.xlu0 %605, %v568
          %v607 = vpop.permute.xlu0 %606
          %608 = vset.pattern.permute.xlu0 0
          %609 = vperm.xlu0 %608, %v569
          %v610 = vpop.permute.xlu0 %609
          %611 = vset.pattern.permute.xlu0 0
          %612 = vperm.xlu0 %611, %v570
          %v613 = vpop.permute.xlu0 %612
          %614 = vset.pattern.permute.xlu0 0
          %615 = vperm.xlu0 %614, %v571
          %v616 = vpop.permute.xlu0 %615
          %617 = vset.pattern.permute.xlu0 0
          %618 = vperm.xlu0 %617, %v572
          %v619 = vpop.permute.xlu0 %618
          %620 = vset.pattern.permute.xlu0 0
          %621 = vperm.xlu0 %620, %v573
          %v622 = vpop.permute.xlu0 %621
          %v623 = vlaneseq
          %v624 = vshrl.u32 %v623, 7
          %v625 = vsub.s32 0, %v624
          %v626 = vrot.slane %v574, %v625
          %vm627 = vcmp.ge.s32.totalorder %v577, %v626
          %vm628 = vcmp.ge.s32.totalorder %v580, %v626
          %vm629 = vcmp.ge.s32.totalorder %v583, %v626
          %vm630 = vcmp.ge.s32.totalorder %v586, %v626
          %vm631 = vcmp.ge.s32.totalorder %v589, %v626
          %vm632 = vcmp.ge.s32.totalorder %v592, %v626
          %vm633 = vcmp.ge.s32.totalorder %v595, %v626
          %vm634 = vcmp.ge.s32.totalorder %v598, %v626
          %vm635 = vcmp.ge.s32.totalorder %v601, %v626
          %vm636 = vcmp.ge.s32.totalorder %v604, %v626
          %vm637 = vcmp.ge.s32.totalorder %v607, %v626
          %vm638 = vcmp.ge.s32.totalorder %v610, %v626
          %vm639 = vcmp.ge.s32.totalorder %v613, %v626
          %vm640 = vcmp.ge.s32.totalorder %v616, %v626
          %vm641 = vcmp.ge.s32.totalorder %v619, %v626
          %vm642 = vcmp.ge.s32.totalorder %v622, %v626
          %v643 = vld [vmem:[%s388] sm:$0xf]
          %v644 = vld [vmem:[%s388 + $0x4] sm:$0xf]
          %v645 = vld [vmem:[%s388 + $0x8] sm:$0xf]
          %v646 = vld [vmem:[%s388 + $0xc] sm:$0xf]
          %v647 = vld [vmem:[%s388 + $0x10] sm:$0xf]
          %v648 = vld [vmem:[%s388 + $0x14] sm:$0xf]
          %v649 = vld [vmem:[%s388 + $0x18] sm:$0xf]
          %v650 = vld [vmem:[%s388 + $0x1c] sm:$0xf]
          %v651 = vld [vmem:[%s388 + $0x20] sm:$0xf]
          %v652 = vld [vmem:[%s388 + $0x24] sm:$0xf]
          %v653 = vld [vmem:[%s388 + $0x28] sm:$0xf]
          %v654 = vld [vmem:[%s388 + $0x2c] sm:$0xf]
          %v655 = vld [vmem:[%s388 + $0x30] sm:$0xf]
          %v656 = vld [vmem:[%s388 + $0x34] sm:$0xf]
          %v657 = vld [vmem:[%s388 + $0x38] sm:$0xf]
          %v658 = vld [vmem:[%s388 + $0x3c] sm:$0xf]
          %v659 = vld [vmem:[%s397] sm:$0xf]
          %v660 = vld [vmem:[%s397 + $0x4] sm:$0xf]
          %v661 = vld [vmem:[%s397 + $0x8] sm:$0xf]
          %v662 = vld [vmem:[%s397 + $0xc] sm:$0xf]
          %v663 = vld [vmem:[%s397 + $0x10] sm:$0xf]
          %v664 = vld [vmem:[%s397 + $0x14] sm:$0xf]
          %v665 = vld [vmem:[%s397 + $0x18] sm:$0xf]
          %v666 = vld [vmem:[%s397 + $0x1c] sm:$0xf]
          %v667 = vld [vmem:[%s397 + $0x20] sm:$0xf]
          %v668 = vld [vmem:[%s397 + $0x24] sm:$0xf]
          %v669 = vld [vmem:[%s397 + $0x28] sm:$0xf]
          %v670 = vld [vmem:[%s397 + $0x2c] sm:$0xf]
          %v671 = vld [vmem:[%s397 + $0x30] sm:$0xf]
          %v672 = vld [vmem:[%s397 + $0x34] sm:$0xf]
          %v673 = vld [vmem:[%s397 + $0x38] sm:$0xf]
          %v674 = vld [vmem:[%s397 + $0x3c] sm:$0xf]
          %v675 = vld [vmem:[%s406] sm:$0xf]
          %v676 = vld [vmem:[%s406 + $0x4] sm:$0xf]
          %v677 = vld [vmem:[%s406 + $0x8] sm:$0xf]
          %v678 = vld [vmem:[%s406 + $0xc] sm:$0xf]
          %v679 = vld [vmem:[%s406 + $0x10] sm:$0xf]
          %v680 = vld [vmem:[%s406 + $0x14] sm:$0xf]
          %v681 = vld [vmem:[%s406 + $0x18] sm:$0xf]
          %v682 = vld [vmem:[%s406 + $0x1c] sm:$0xf]
          %v683 = vld [vmem:[%s406 + $0x20] sm:$0xf]
          %v684 = vld [vmem:[%s406 + $0x24] sm:$0xf]
          %v685 = vld [vmem:[%s406 + $0x28] sm:$0xf]
          %v686 = vld [vmem:[%s406 + $0x2c] sm:$0xf]
          %v687 = vld [vmem:[%s406 + $0x30] sm:$0xf]
          %v688 = vld [vmem:[%s406 + $0x34] sm:$0xf]
          %v689 = vld [vmem:[%s406 + $0x38] sm:$0xf]
          %v690 = vld [vmem:[%s406 + $0x3c] sm:$0xf]
          %v707 = vunpack.c.l.b16 %v643
          %v708 = vunpack.c.l.b16 %v644
          %v709 = vunpack.c.l.b16 %v645
          %v710 = vunpack.c.l.b16 %v646
          %v711 = vunpack.c.l.b16 %v647
          %v712 = vunpack.c.l.b16 %v648
          %v713 = vunpack.c.l.b16 %v649
          %v714 = vunpack.c.l.b16 %v650
          %v715 = vunpack.c.l.b16 %v651
          %v716 = vunpack.c.l.b16 %v652
          %v717 = vunpack.c.l.b16 %v653
          %v718 = vunpack.c.l.b16 %v654
          %v719 = vunpack.c.l.b16 %v655
          %v720 = vunpack.c.l.b16 %v656
          %v721 = vunpack.c.l.b16 %v657
          %v722 = vunpack.c.l.b16 %v658
          %v723 = vpack.c.b16 %v708, %v707
          %v724 = vpack.c.b16 %v710, %v709
          %v725 = vpack.c.b16 %v712, %v711
          %v726 = vpack.c.b16 %v714, %v713
          %v727 = vpack.c.b16 %v716, %v715
          %v728 = vpack.c.b16 %v718, %v717
          %v729 = vpack.c.b16 %v720, %v719
          %v730 = vpack.c.b16 %v722, %v721
          %v747 = vunpack.c.l.b16 %v659
          %v748 = vunpack.c.l.b16 %v660
          %v749 = vunpack.c.l.b16 %v661
          %v750 = vunpack.c.l.b16 %v662
          %v751 = vunpack.c.l.b16 %v663
          %v752 = vunpack.c.l.b16 %v664
          %v753 = vunpack.c.l.b16 %v665
          %v754 = vunpack.c.l.b16 %v666
          %v755 = vunpack.c.l.b16 %v667
          %v756 = vunpack.c.l.b16 %v668
          %v757 = vunpack.c.l.b16 %v669
          %v758 = vunpack.c.l.b16 %v670
          %v759 = vunpack.c.l.b16 %v671
          %v760 = vunpack.c.l.b16 %v672
          %v761 = vunpack.c.l.b16 %v673
          %v762 = vunpack.c.l.b16 %v674
          %v763 = vpack.c.b16 %v748, %v747
          %v764 = vpack.c.b16 %v750, %v749
          %v765 = vpack.c.b16 %v752, %v751
          %v766 = vpack.c.b16 %v754, %v753
          %v767 = vpack.c.b16 %v756, %v755
          %v768 = vpack.c.b16 %v758, %v757
          %v769 = vpack.c.b16 %v760, %v759
          %v770 = vpack.c.b16 %v762, %v761
          %vm771 = vcmask 523264
          %v773 = vsel %vm771, %v723, 0
          %v776 = vsel %vm771, %v724, 0
          %v779 = vsel %vm771, %v725, 0
          %v782 = vsel %vm771, %v726, 0
          %v785 = vsel %vm771, %v727, 0
          %v788 = vsel %vm771, %v728, 0
          %v791 = vsel %vm771, %v729, 0
          %v794 = vsel %vm771, %v730, 0
          %v797 = vsel %vm771, %v763, 0
          %v800 = vsel %vm771, %v764, 0
          %v803 = vsel %vm771, %v765, 0
          %v806 = vsel %vm771, %v766, 0
          %v809 = vsel %vm771, %v767, 0
          %v812 = vsel %vm771, %v768, 0
          %v815 = vsel %vm771, %v769, 0
          %v818 = vsel %vm771, %v770, 0
          %820 = vmatprep.subr.bf16.mxu0 0
          %821 = vmatpush1.bf16.xpose.msra.mxu0 %v797
          %822 = vmatprep.subr.bf16.mxu0 0
          %823 = vmatpush1.bf16.xpose.msra.mxu0 %v800
          %824 = vmatprep.subr.bf16.mxu0 0
          %825 = vmatpush1.bf16.xpose.msra.mxu0 %v803
          %826 = vmatprep.subr.bf16.mxu0 0
          %827 = vmatpush1.bf16.xpose.msra.mxu0 %v806
          %828 = vmatprep.subr.bf16.mxu0 0
          %829 = vmatpush1.bf16.xpose.msra.mxu0 %v809
          %830 = vmatprep.subr.bf16.mxu0 0
          %831 = vmatpush1.bf16.xpose.msra.mxu0 %v812
          %832 = vmatprep.subr.bf16.mxu0 0
          %833 = vmatpush1.bf16.xpose.msra.mxu0 %v815
          %834 = vmatprep.subr.bf16.mxu0 0
          %835 = vmatpush1.bf16.xpose.msra.mxu0 %v818
          %836 = vmatprep.subr.bf16.mxu0 0
          %837 = vmatpush1.bf16.xpose.msra.mxu0 0
          %838 = vmatprep.subr.bf16.mxu0 0
          %839 = vmatpush1.bf16.xpose.msra.mxu0 0
          %840 = vmatprep.subr.bf16.mxu0 0
          %841 = vmatpush1.bf16.xpose.msra.mxu0 0
          %842 = vmatprep.subr.bf16.mxu0 0
          %843 = vmatpush1.bf16.xpose.msra.mxu0 0
          %844 = vmatprep.subr.bf16.mxu0 0
          %845 = vmatpush1.bf16.xpose.msra.mxu0 0
          %846 = vmatprep.subr.bf16.mxu0 0
          %847 = vmatpush1.bf16.xpose.msra.mxu0 0
          %848 = vmatprep.subr.bf16.mxu0 0
          %849 = vmatpush1.bf16.xpose.msra.mxu0 0
          %850 = vmatprep.subr.bf16.mxu0 0
          %851 = vmatpush1.bf16.xpose.msra.mxu0 0
          %852 = vmatprep.mubr.bf16.mxu0 0
          %853 = vmatmul.mubr.bf16.gmra.mrb[0].mxu0 %v773
          %v854 = vpop.f32.mrb[0].mxu0
          %v855 = vadd.f32 0.0, %v854
          %v856 = vpop.f32.mrb[0].mxu0
          %v857 = vpop.f32.mrb[0].mxu0
          %v858 = vadd.f32 0.0, %v857
          %v859 = vpop.f32.mrb[0].mxu0
          %860 = vmatprep.mubr.bf16.mxu0 0
          %861 = vmatmul.mubr.bf16.gmra.mrb[0].mxu0 %v776
          %v862 = vpop.f32.mrb[0].mxu0
          %v863 = vadd.f32 0.0, %v862
          %v864 = vpop.f32.mrb[0].mxu0
          %v865 = vpop.f32.mrb[0].mxu0
          %v866 = vadd.f32 0.0, %v865
          %v867 = vpop.f32.mrb[0].mxu0
          %868 = vmatprep.mubr.bf16.mxu0 0
          %869 = vmatmul.mubr.bf16.gmra.mrb[0].mxu0 %v779
          %v870 = vpop.f32.mrb[0].mxu0
          %v871 = vadd.f32 0.0, %v870
          %v872 = vpop.f32.mrb[0].mxu0
          %v873 = vpop.f32.mrb[0].mxu0
          %v874 = vadd.f32 0.0, %v873
          %v875 = vpop.f32.mrb[0].mxu0
          %876 = vmatprep.mubr.bf16.mxu0 0
          %877 = vmatmul.mubr.bf16.gmra.mrb[0].mxu0 %v782
          %v878 = vpop.f32.mrb[0].mxu0
          %v879 = vadd.f32 0.0, %v878
          %v880 = vpop.f32.mrb[0].mxu0
          %v881 = vpop.f32.mrb[0].mxu0
          %v882 = vadd.f32 0.0, %v881
          %v883 = vpop.f32.mrb[0].mxu0
          %884 = vmatprep.mubr.bf16.mxu0 0
          %885 = vmatmul.mubr.bf16.gmra.mrb[0].mxu0 %v785
          %v886 = vpop.f32.mrb[0].mxu0
          %v887 = vadd.f32 0.0, %v886
          %v888 = vpop.f32.mrb[0].mxu0
          %v889 = vpop.f32.mrb[0].mxu0
          %v890 = vadd.f32 0.0, %v889
          %v891 = vpop.f32.mrb[0].mxu0
          %892 = vmatprep.mubr.bf16.mxu0 0
          %893 = vmatmul.mubr.bf16.gmra.mrb[0].mxu0 %v788
          %v894 = vpop.f32.mrb[0].mxu0
          %v895 = vadd.f32 0.0, %v894
          %v896 = vpop.f32.mrb[0].mxu0
          %v897 = vpop.f32.mrb[0].mxu0
          %v898 = vadd.f32 0.0, %v897
          %v899 = vpop.f32.mrb[0].mxu0
          %900 = vmatprep.mubr.bf16.mxu0 0
          %901 = vmatmul.mubr.bf16.gmra.mrb[0].mxu0 %v791
          %v902 = vpop.f32.mrb[0].mxu0
          %v903 = vadd.f32 0.0, %v902
          %v904 = vpop.f32.mrb[0].mxu0
          %v905 = vpop.f32.mrb[0].mxu0
          %v906 = vadd.f32 0.0, %v905
          %v907 = vpop.f32.mrb[0].mxu0
          %908 = vmatprep.mubr.bf16.mxu0 0
          %909 = vmatmul.mubr.bf16.gmra.mrb[0].mxu0 %v794
          %v910 = vpop.f32.mrb[0].mxu0
          %v911 = vadd.f32 0.0, %v910
          %v912 = vpop.f32.mrb[0].mxu0
          %v913 = vpop.f32.mrb[0].mxu0
          %v914 = vadd.f32 0.0, %v913
          %v915 = vpop.f32.mrb[0].mxu0
          %916 = vdwg.mxu0
          %v917 = vsel %vm627, %v855, -1e+30
          %v918 = vsel %vm628, %v858, -1e+30
          %v919 = vsel %vm629, %v863, -1e+30
          %v920 = vsel %vm630, %v866, -1e+30
          %v921 = vsel %vm631, %v871, -1e+30
          %v922 = vsel %vm632, %v874, -1e+30
          %v923 = vsel %vm633, %v879, -1e+30
          %v924 = vsel %vm634, %v882, -1e+30
          %v925 = vsel %vm635, %v887, -1e+30
          %v926 = vsel %vm636, %v890, -1e+30
          %v927 = vsel %vm637, %v895, -1e+30
          %v928 = vsel %vm638, %v898, -1e+30
          %v929 = vsel %vm639, %v903, -1e+30
          %v930 = vsel %vm640, %v906, -1e+30
          %v931 = vsel %vm641, %v911, -1e+30
          %v932 = vsel %vm642, %v914, -1e+30
          %v933 = vld [vmem:[#allocation2] sm:$0xff]
          %v934 = vld [vmem:[#allocation2 + $0x8] sm:$0xff]
          %v935 = vld [vmem:[#allocation2 + $0x10] sm:$0xff]
          %v936 = vld [vmem:[#allocation2 + $0x18] sm:$0xff]
          %v937 = vld [vmem:[#allocation2 + $0x20] sm:$0xff]
          %v938 = vld [vmem:[#allocation2 + $0x28] sm:$0xff]
          %v939 = vld [vmem:[#allocation2 + $0x30] sm:$0xff]
          %v940 = vld [vmem:[#allocation2 + $0x38] sm:$0xff]
          %v941 = vld [vmem:[#allocation2 + $0x40] sm:$0xff]
          %v942 = vld [vmem:[#allocation2 + $0x48] sm:$0xff]
          %v943 = vld [vmem:[#allocation2 + $0x50] sm:$0xff]
          %v944 = vld [vmem:[#allocation2 + $0x58] sm:$0xff]
          %v945 = vld [vmem:[#allocation2 + $0x60] sm:$0xff]
          %v946 = vld [vmem:[#allocation2 + $0x68] sm:$0xff]
          %v947 = vld [vmem:[#allocation2 + $0x70] sm:$0xff]
          %v948 = vld [vmem:[#allocation2 + $0x78] sm:$0xff]
          %949 = vmax.xlane.f32.xlu0 %v917
          %v950 = vpop.xlane.xlu0 %949
          %951 = vmax.xlane.f32.xlu0 %v918
          %v952 = vpop.xlane.xlu0 %951
          %953 = vmax.xlane.f32.xlu0 %v919
          %v954 = vpop.xlane.xlu0 %953
          %955 = vmax.xlane.f32.xlu0 %v920
          %v956 = vpop.xlane.xlu0 %955
          %957 = vmax.xlane.f32.xlu0 %v921
          %v958 = vpop.xlane.xlu0 %957
          %959 = vmax.xlane.f32.xlu0 %v922
          %v960 = vpop.xlane.xlu0 %959
          %961 = vmax.xlane.f32.xlu0 %v923
          %v962 = vpop.xlane.xlu0 %961
          %963 = vmax.xlane.f32.xlu0 %v924
          %v964 = vpop.xlane.xlu0 %963
          %965 = vmax.xlane.f32.xlu0 %v925
          %v966 = vpop.xlane.xlu0 %965
          %967 = vmax.xlane.f32.xlu0 %v926
          %v968 = vpop.xlane.xlu0 %967
          %969 = vmax.xlane.f32.xlu0 %v927
          %v970 = vpop.xlane.xlu0 %969
          %971 = vmax.xlane.f32.xlu0 %v928
          %v972 = vpop.xlane.xlu0 %971
          %973 = vmax.xlane.f32.xlu0 %v929
          %v974 = vpop.xlane.xlu0 %973
          %975 = vmax.xlane.f32.xlu0 %v930
          %v976 = vpop.xlane.xlu0 %975
          %977 = vmax.xlane.f32.xlu0 %v931
          %v978 = vpop.xlane.xlu0 %977
          %979 = vmax.xlane.f32.xlu0 %v932
          %v980 = vpop.xlane.xlu0 %979
          %v981 = vmax.f32 %v933, %v950
          %v982 = vmax.f32 %v934, %v952
          %v983 = vmax.f32 %v935, %v954
          %v984 = vmax.f32 %v936, %v956
          %v985 = vmax.f32 %v937, %v958
          %v986 = vmax.f32 %v938, %v960
          %v987 = vmax.f32 %v939, %v962
          %v988 = vmax.f32 %v940, %v964
          %v989 = vmax.f32 %v941, %v966
          %v990 = vmax.f32 %v942, %v968
          %v991 = vmax.f32 %v943, %v970
          %v992 = vmax.f32 %v944, %v972
          %v993 = vmax.f32 %v945, %v974
          %v994 = vmax.f32 %v946, %v976
          %v995 = vmax.f32 %v947, %v978
          %v996 = vmax.f32 %v948, %v980
          %v997 = vsub.f32 %v933, %v981
          %v998 = vsub.f32 %v934, %v982
          %v999 = vsub.f32 %v935, %v983
          %v1000 = vsub.f32 %v936, %v984
          %v1001 = vsub.f32 %v937, %v985
          %v1002 = vsub.f32 %v938, %v986
          %v1003 = vsub.f32 %v939, %v987
          %v1004 = vsub.f32 %v940, %v988
          %v1005 = vsub.f32 %v941, %v989
          %v1006 = vsub.f32 %v942, %v990
          %v1007 = vsub.f32 %v943, %v991
          %v1008 = vsub.f32 %v944, %v992
          %v1009 = vsub.f32 %v945, %v993
          %v1010 = vsub.f32 %v946, %v994
          %v1011 = vsub.f32 %v947, %v995
          %v1012 = vsub.f32 %v948, %v996
          %v1013 = vmul.f32 %v997, 1.442695
          %v1014 = vpow.pop %v1013
          %v1015 = vmul.f32 %v998, 1.442695
          %v1016 = vpow.pop %v1015
          %v1017 = vmul.f32 %v999, 1.442695
          %v1018 = vpow.pop %v1017
          %v1019 = vmul.f32 %v1000, 1.442695
          %v1020 = vpow.pop %v1019
          %v1021 = vmul.f32 %v1001, 1.442695
          %v1022 = vpow.pop %v1021
          %v1023 = vmul.f32 %v1002, 1.442695
          %v1024 = vpow.pop %v1023
          %v1025 = vmul.f32 %v1003, 1.442695
          %v1026 = vpow.pop %v1025
          %v1027 = vmul.f32 %v1004, 1.442695
          %v1028 = vpow.pop %v1027
          %v1029 = vmul.f32 %v1005, 1.442695
          %v1030 = vpow.pop %v1029
          %v1031 = vmul.f32 %v1006, 1.442695
          %v1032 = vpow.pop %v1031
          %v1033 = vmul.f32 %v1007, 1.442695
          %v1034 = vpow.pop %v1033
          %v1035 = vmul.f32 %v1008, 1.442695
          %v1036 = vpow.pop %v1035
          %v1037 = vmul.f32 %v1009, 1.442695
          %v1038 = vpow.pop %v1037
          %v1039 = vmul.f32 %v1010, 1.442695
          %v1040 = vpow.pop %v1039
          %v1041 = vmul.f32 %v1011, 1.442695
          %v1042 = vpow.pop %v1041
          %v1043 = vmul.f32 %v1012, 1.442695
          %v1044 = vpow.pop %v1043
          %1046 = vset.pattern.permute.xlu0 0
          %1047 = vperm.xlu0 %1046, %v981
          %v1048 = vpop.permute.xlu0 %1047
          %1051 = vset.pattern.permute.xlu0 0
          %1052 = vperm.xlu0 %1051, %v982
          %v1053 = vpop.permute.xlu0 %1052
          %1056 = vset.pattern.permute.xlu0 0
          %1057 = vperm.xlu0 %1056, %v983
          %v1058 = vpop.permute.xlu0 %1057
          %1061 = vset.pattern.permute.xlu0 0
          %1062 = vperm.xlu0 %1061, %v984
          %v1063 = vpop.permute.xlu0 %1062
          %1066 = vset.pattern.permute.xlu0 0
          %1067 = vperm.xlu0 %1066, %v985
          %v1068 = vpop.permute.xlu0 %1067
          %1071 = vset.pattern.permute.xlu0 0
          %1072 = vperm.xlu0 %1071, %v986
          %v1073 = vpop.permute.xlu0 %1072
          %1076 = vset.pattern.permute.xlu0 0
          %1077 = vperm.xlu0 %1076, %v987
          %v1078 = vpop.permute.xlu0 %1077
          %1081 = vset.pattern.permute.xlu0 0
          %1082 = vperm.xlu0 %1081, %v988
          %v1083 = vpop.permute.xlu0 %1082
          %1086 = vset.pattern.permute.xlu0 0
          %1087 = vperm.xlu0 %1086, %v989
          %v1088 = vpop.permute.xlu0 %1087
          %1091 = vset.pattern.permute.xlu0 0
          %1092 = vperm.xlu0 %1091, %v990
          %v1093 = vpop.permute.xlu0 %1092
          %1096 = vset.pattern.permute.xlu0 0
          %1097 = vperm.xlu0 %1096, %v991
          %v1098 = vpop.permute.xlu0 %1097
          %1101 = vset.pattern.permute.xlu0 0
          %1102 = vperm.xlu0 %1101, %v992
          %v1103 = vpop.permute.xlu0 %1102
          %1106 = vset.pattern.permute.xlu0 0
          %1107 = vperm.xlu0 %1106, %v993
          %v1108 = vpop.permute.xlu0 %1107
          %1111 = vset.pattern.permute.xlu0 0
          %1112 = vperm.xlu0 %1111, %v994
          %v1113 = vpop.permute.xlu0 %1112
          %1116 = vset.pattern.permute.xlu0 0
          %1117 = vperm.xlu0 %1116, %v995
          %v1118 = vpop.permute.xlu0 %1117
          %1121 = vset.pattern.permute.xlu0 0
          %1122 = vperm.xlu0 %1121, %v996
          %v1123 = vpop.permute.xlu0 %1122
          %v1125 = vsub.f32 %v917, %v1048
          %v1126 = vsub.f32 %v918, %v1053
          %v1127 = vsub.f32 %v919, %v1058
          %v1128 = vsub.f32 %v920, %v1063
          %v1129 = vsub.f32 %v921, %v1068
          %v1130 = vsub.f32 %v922, %v1073
          %v1131 = vsub.f32 %v923, %v1078
          %v1132 = vsub.f32 %v924, %v1083
          %v1133 = vsub.f32 %v925, %v1088
          %v1134 = vsub.f32 %v926, %v1093
          %v1135 = vsub.f32 %v927, %v1098
          %v1136 = vsub.f32 %v928, %v1103
          %v1137 = vsub.f32 %v929, %v1108
          %v1138 = vsub.f32 %v930, %v1113
          %v1139 = vsub.f32 %v931, %v1118
          %v1140 = vsub.f32 %v932, %v1123
          %v1141 = vmul.f32 %v1125, 1.442695
          %v1142 = vpow.pop %v1141
          %v1143 = vmul.f32 %v1126, 1.442695
          %v1144 = vpow.pop %v1143
          %v1145 = vmul.f32 %v1127, 1.442695
          %v1146 = vpow.pop %v1145
          %v1147 = vmul.f32 %v1128, 1.442695
          %v1148 = vpow.pop %v1147
          %v1149 = vmul.f32 %v1129, 1.442695
          %v1150 = vpow.pop %v1149
          %v1151 = vmul.f32 %v1130, 1.442695
          %v1152 = vpow.pop %v1151
          %v1153 = vmul.f32 %v1131, 1.442695
          %v1154 = vpow.pop %v1153
          %v1155 = vmul.f32 %v1132, 1.442695
          %v1156 = vpow.pop %v1155
          %v1157 = vmul.f32 %v1133, 1.442695
          %v1158 = vpow.pop %v1157
          %v1159 = vmul.f32 %v1134, 1.442695
          %v1160 = vpow.pop %v1159
          %v1161 = vmul.f32 %v1135, 1.442695
          %v1162 = vpow.pop %v1161
          %v1163 = vmul.f32 %v1136, 1.442695
          %v1164 = vpow.pop %v1163
          %v1165 = vmul.f32 %v1137, 1.442695
          %v1166 = vpow.pop %v1165
          %v1167 = vmul.f32 %v1138, 1.442695
          %v1168 = vpow.pop %v1167
          %v1169 = vmul.f32 %v1139, 1.442695
          %v1170 = vpow.pop %v1169
          %v1171 = vmul.f32 %v1140, 1.442695
          %v1172 = vpow.pop %v1171
          %v1173 = vld [vmem:[#allocation3] sm:$0xff]
          %v1174 = vld [vmem:[#allocation3 + $0x8] sm:$0xff]
          %v1175 = vld [vmem:[#allocation3 + $0x10] sm:$0xff]
          %v1176 = vld [vmem:[#allocation3 + $0x18] sm:$0xff]
          %v1177 = vld [vmem:[#allocation3 + $0x20] sm:$0xff]
          %v1178 = vld [vmem:[#allocation3 + $0x28] sm:$0xff]
          %v1179 = vld [vmem:[#allocation3 + $0x30] sm:$0xff]
          %v1180 = vld [vmem:[#allocation3 + $0x38] sm:$0xff]
          %v1181 = vld [vmem:[#allocation3 + $0x40] sm:$0xff]
          %v1182 = vld [vmem:[#allocation3 + $0x48] sm:$0xff]
          %v1183 = vld [vmem:[#allocation3 + $0x50] sm:$0xff]
          %v1184 = vld [vmem:[#allocation3 + $0x58] sm:$0xff]
          %v1185 = vld [vmem:[#allocation3 + $0x60] sm:$0xff]
          %v1186 = vld [vmem:[#allocation3 + $0x68] sm:$0xff]
          %v1187 = vld [vmem:[#allocation3 + $0x70] sm:$0xff]
          %v1188 = vld [vmem:[#allocation3 + $0x78] sm:$0xff]
          %v1189 = vmul.f32 %v1014, %v1173
          %v1190 = vmul.f32 %v1016, %v1174
          %v1191 = vmul.f32 %v1018, %v1175
          %v1192 = vmul.f32 %v1020, %v1176
          %v1193 = vmul.f32 %v1022, %v1177
          %v1194 = vmul.f32 %v1024, %v1178
          %v1195 = vmul.f32 %v1026, %v1179
          %v1196 = vmul.f32 %v1028, %v1180
          %v1197 = vmul.f32 %v1030, %v1181
          %v1198 = vmul.f32 %v1032, %v1182
          %v1199 = vmul.f32 %v1034, %v1183
          %v1200 = vmul.f32 %v1036, %v1184
          %v1201 = vmul.f32 %v1038, %v1185
          %v1202 = vmul.f32 %v1040, %v1186
          %v1203 = vmul.f32 %v1042, %v1187
          %v1204 = vmul.f32 %v1044, %v1188
          %1205 = vadd.xlane.f32.xlu0 %v1142
          %v1206 = vpop.xlane.xlu0 %1205
          %1207 = vadd.xlane.f32.xlu0 %v1144
          %v1208 = vpop.xlane.xlu0 %1207
          %1209 = vadd.xlane.f32.xlu0 %v1146
          %v1210 = vpop.xlane.xlu0 %1209
          %1211 = vadd.xlane.f32.xlu0 %v1148
          %v1212 = vpop.xlane.xlu0 %1211
          %1213 = vadd.xlane.f32.xlu0 %v1150
          %v1214 = vpop.xlane.xlu0 %1213
          %1215 = vadd.xlane.f32.xlu0 %v1152
          %v1216 = vpop.xlane.xlu0 %1215
          %1217 = vadd.xlane.f32.xlu0 %v1154
          %v1218 = vpop.xlane.xlu0 %1217
          %1219 = vadd.xlane.f32.xlu0 %v1156
          %v1220 = vpop.xlane.xlu0 %1219
          %1221 = vadd.xlane.f32.xlu0 %v1158
          %v1222 = vpop.xlane.xlu0 %1221
          %1223 = vadd.xlane.f32.xlu0 %v1160
          %v1224 = vpop.xlane.xlu0 %1223
          %1225 = vadd.xlane.f32.xlu0 %v1162
          %v1226 = vpop.xlane.xlu0 %1225
          %1227 = vadd.xlane.f32.xlu0 %v1164
          %v1228 = vpop.xlane.xlu0 %1227
          %1229 = vadd.xlane.f32.xlu0 %v1166
          %v1230 = vpop.xlane.xlu0 %1229
          %1231 = vadd.xlane.f32.xlu0 %v1168
          %v1232 = vpop.xlane.xlu0 %1231
          %1233 = vadd.xlane.f32.xlu0 %v1170
          %v1234 = vpop.xlane.xlu0 %1233
          %1235 = vadd.xlane.f32.xlu0 %v1172
          %v1236 = vpop.xlane.xlu0 %1235
          %v1237 = vadd.f32 %v1189, %v1206
          %v1238 = vadd.f32 %v1190, %v1208
          %v1239 = vadd.f32 %v1191, %v1210
          %v1240 = vadd.f32 %v1192, %v1212
          %v1241 = vadd.f32 %v1193, %v1214
          %v1242 = vadd.f32 %v1194, %v1216
          %v1243 = vadd.f32 %v1195, %v1218
          %v1244 = vadd.f32 %v1196, %v1220
          %v1245 = vadd.f32 %v1197, %v1222
          %v1246 = vadd.f32 %v1198, %v1224
          %v1247 = vadd.f32 %v1199, %v1226
          %v1248 = vadd.f32 %v1200, %v1228
          %v1249 = vadd.f32 %v1201, %v1230
          %v1250 = vadd.f32 %v1202, %v1232
          %v1251 = vadd.f32 %v1203, %v1234
          %v1252 = vadd.f32 %v1204, %v1236
          %vm1253 = vcmask 7168
          %1254 = vst.msk [vmem:[#allocation3] sm:$0xff] %vm1253, %v1237
          %1255 = vst.msk [vmem:[#allocation3 + $0x8] sm:$0xff] %vm1253, %v1238
          %1256 = vst.msk [vmem:[#allocation3 + $0x10] sm:$0xff] %vm1253, %v1239
          %1257 = vst.msk [vmem:[#allocation3 + $0x18] sm:$0xff] %vm1253, %v1240
          %1258 = vst.msk [vmem:[#allocation3 + $0x20] sm:$0xff] %vm1253, %v1241
          %1259 = vst.msk [vmem:[#allocation3 + $0x28] sm:$0xff] %vm1253, %v1242
          %1260 = vst.msk [vmem:[#allocation3 + $0x30] sm:$0xff] %vm1253, %v1243
          %1261 = vst.msk [vmem:[#allocation3 + $0x38] sm:$0xff] %vm1253, %v1244
          %1262 = vst.msk [vmem:[#allocation3 + $0x40] sm:$0xff] %vm1253, %v1245
          %1263 = vst.msk [vmem:[#allocation3 + $0x48] sm:$0xff] %vm1253, %v1246
          %1264 = vst.msk [vmem:[#allocation3 + $0x50] sm:$0xff] %vm1253, %v1247
          %1265 = vst.msk [vmem:[#allocation3 + $0x58] sm:$0xff] %vm1253, %v1248
          %1266 = vst.msk [vmem:[#allocation3 + $0x60] sm:$0xff] %vm1253, %v1249
          %1267 = vst.msk [vmem:[#allocation3 + $0x68] sm:$0xff] %vm1253, %v1250
          %1268 = vst.msk [vmem:[#allocation3 + $0x70] sm:$0xff] %vm1253, %v1251
          %1269 = vst.msk [vmem:[#allocation3 + $0x78] sm:$0xff] %vm1253, %v1252
          %v1270 = vld [vmem:[#allocation4] sm:$0xff]
          %v1271 = vld [vmem:[#allocation4 + $0x8] sm:$0xff]
          %v1272 = vld [vmem:[#allocation4 + $0x10] sm:$0xff]
          %v1273 = vld [vmem:[#allocation4 + $0x18] sm:$0xff]
          %v1274 = vld [vmem:[#allocation4 + $0x20] sm:$0xff]
          %v1275 = vld [vmem:[#allocation4 + $0x28] sm:$0xff]
          %v1276 = vld [vmem:[#allocation4 + $0x30] sm:$0xff]
          %v1277 = vld [vmem:[#allocation4 + $0x38] sm:$0xff]
          %v1278 = vld [vmem:[#allocation4 + $0x40] sm:$0xff]
          %v1279 = vld [vmem:[#allocation4 + $0x48] sm:$0xff]
          %v1280 = vld [vmem:[#allocation4 + $0x50] sm:$0xff]
          %v1281 = vld [vmem:[#allocation4 + $0x58] sm:$0xff]
          %v1282 = vld [vmem:[#allocation4 + $0x60] sm:$0xff]
          %v1283 = vld [vmem:[#allocation4 + $0x68] sm:$0xff]
          %v1284 = vld [vmem:[#allocation4 + $0x70] sm:$0xff]
          %v1285 = vld [vmem:[#allocation4 + $0x78] sm:$0xff]
          %1287 = vset.pattern.permute.xlu0 0
          %1288 = vperm.xlu0 %1287, %v1014
          %v1289 = vpop.permute.xlu0 %1288
          %1292 = vset.pattern.permute.xlu0 0
          %1293 = vperm.xlu0 %1292, %v1016
          %v1294 = vpop.permute.xlu0 %1293
          %1297 = vset.pattern.permute.xlu0 0
          %1298 = vperm.xlu0 %1297, %v1018
          %v1299 = vpop.permute.xlu0 %1298
          %1302 = vset.pattern.permute.xlu0 0
          %1303 = vperm.xlu0 %1302, %v1020
          %v1304 = vpop.permute.xlu0 %1303
          %1307 = vset.pattern.permute.xlu0 0
          %1308 = vperm.xlu0 %1307, %v1022
          %v1309 = vpop.permute.xlu0 %1308
          %1312 = vset.pattern.permute.xlu0 0
          %1313 = vperm.xlu0 %1312, %v1024
          %v1314 = vpop.permute.xlu0 %1313
          %1317 = vset.pattern.permute.xlu0 0
          %1318 = vperm.xlu0 %1317, %v1026
          %v1319 = vpop.permute.xlu0 %1318
          %1322 = vset.pattern.permute.xlu0 0
          %1323 = vperm.xlu0 %1322, %v1028
          %v1324 = vpop.permute.xlu0 %1323
          %1327 = vset.pattern.permute.xlu0 0
          %1328 = vperm.xlu0 %1327, %v1030
          %v1329 = vpop.permute.xlu0 %1328
          %1332 = vset.pattern.permute.xlu0 0
          %1333 = vperm.xlu0 %1332, %v1032
          %v1334 = vpop.permute.xlu0 %1333
          %1337 = vset.pattern.permute.xlu0 0
          %1338 = vperm.xlu0 %1337, %v1034
          %v1339 = vpop.permute.xlu0 %1338
          %1342 = vset.pattern.permute.xlu0 0
          %1343 = vperm.xlu0 %1342, %v1036
          %v1344 = vpop.permute.xlu0 %1343
          %1347 = vset.pattern.permute.xlu0 0
          %1348 = vperm.xlu0 %1347, %v1038
          %v1349 = vpop.permute.xlu0 %1348
          %1352 = vset.pattern.permute.xlu0 0
          %1353 = vperm.xlu0 %1352, %v1040
          %v1354 = vpop.permute.xlu0 %1353
          %1357 = vset.pattern.permute.xlu0 0
          %1358 = vperm.xlu0 %1357, %v1042
          %v1359 = vpop.permute.xlu0 %1358
          %1362 = vset.pattern.permute.xlu0 0
          %1363 = vperm.xlu0 %1362, %v1044
          %v1364 = vpop.permute.xlu0 %1363
          %v1366 = vmul.f32 %v1289, %v1270
          %v1367 = vmul.f32 %v1294, %v1271
          %v1368 = vmul.f32 %v1299, %v1272
          %v1369 = vmul.f32 %v1304, %v1273
          %v1370 = vmul.f32 %v1309, %v1274
          %v1371 = vmul.f32 %v1314, %v1275
          %v1372 = vmul.f32 %v1319, %v1276
          %v1373 = vmul.f32 %v1324, %v1277
          %v1374 = vmul.f32 %v1329, %v1278
          %v1375 = vmul.f32 %v1334, %v1279
          %v1376 = vmul.f32 %v1339, %v1280
          %v1377 = vmul.f32 %v1344, %v1281
          %v1378 = vmul.f32 %v1349, %v1282
          %v1379 = vmul.f32 %v1354, %v1283
          %v1380 = vmul.f32 %v1359, %v1284
          %v1381 = vmul.f32 %v1364, %v1285
          %v1382 = vpack.c.bf16 %v1144, %v1142
          %v1383 = vpack.c.bf16 %v1148, %v1146
          %v1384 = vpack.c.bf16 %v1152, %v1150
          %v1385 = vpack.c.bf16 %v1156, %v1154
          %v1386 = vpack.c.bf16 %v1160, %v1158
          %v1387 = vpack.c.bf16 %v1164, %v1162
          %v1388 = vpack.c.bf16 %v1168, %v1166
          %v1389 = vpack.c.bf16 %v1172, %v1170
          %v1406 = vunpack.c.l.b16 %v675
          %v1407 = vunpack.c.l.b16 %v676
          %v1408 = vunpack.c.l.b16 %v677
          %v1409 = vunpack.c.l.b16 %v678
          %v1410 = vunpack.c.l.b16 %v679
          %v1411 = vunpack.c.l.b16 %v680
          %v1412 = vunpack.c.l.b16 %v681
          %v1413 = vunpack.c.l.b16 %v682
          %v1414 = vunpack.c.l.b16 %v683
          %v1415 = vunpack.c.l.b16 %v684
          %v1416 = vunpack.c.l.b16 %v685
          %v1417 = vunpack.c.l.b16 %v686
          %v1418 = vunpack.c.l.b16 %v687
          %v1419 = vunpack.c.l.b16 %v688
          %v1420 = vunpack.c.l.b16 %v689
          %v1421 = vunpack.c.l.b16 %v690
          %v1422 = vpack.c.b16 %v1407, %v1406
          %v1423 = vpack.c.b16 %v1409, %v1408
          %v1424 = vpack.c.b16 %v1411, %v1410
          %v1425 = vpack.c.b16 %v1413, %v1412
          %v1426 = vpack.c.b16 %v1415, %v1414
          %v1427 = vpack.c.b16 %v1417, %v1416
          %v1428 = vpack.c.b16 %v1419, %v1418
          %v1429 = vpack.c.b16 %v1421, %v1420
          %1438 = vmatprep.subr.bf16.mxu0 0
          %1439 = vmatpush1.bf16.msra.mxu0 %v1422
          %1440 = vmatprep.subr.bf16.mxu0 0
          %1441 = vmatpush1.bf16.msra.mxu0 %v1423
          %1442 = vmatprep.subr.bf16.mxu0 0
          %1443 = vmatpush1.bf16.msra.mxu0 %v1424
          %1444 = vmatprep.subr.bf16.mxu0 0
          %1445 = vmatpush1.bf16.msra.mxu0 %v1425
          %1446 = vmatprep.subr.bf16.mxu0 0
          %1447 = vmatpush1.bf16.msra.mxu0 %v1426
          %1448 = vmatprep.subr.bf16.mxu0 0
          %1449 = vmatpush1.bf16.msra.mxu0 %v1427
          %1450 = vmatprep.subr.bf16.mxu0 0
          %1451 = vmatpush1.bf16.msra.mxu0 %v1428
          %1452 = vmatprep.subr.bf16.mxu0 0
          %1453 = vmatpush1.bf16.msra.mxu0 %v1429
          %1454 = vmatprep.subr.bf16.mxu0 0
          %1455 = vmatpush1.bf16.msra.mxu0 0
          %1456 = vmatprep.subr.bf16.mxu0 0
          %1457 = vmatpush1.bf16.msra.mxu0 0
          %1458 = vmatprep.subr.bf16.mxu0 0
          %1459 = vmatpush1.bf16.msra.mxu0 0
          %1460 = vmatprep.subr.bf16.mxu0 0
          %1461 = vmatpush1.bf16.msra.mxu0 0
          %1462 = vmatprep.subr.bf16.mxu0 0
          %1463 = vmatpush1.bf16.msra.mxu0 0
          %1464 = vmatprep.subr.bf16.mxu0 0
          %1465 = vmatpush1.bf16.msra.mxu0 0
          %1466 = vmatprep.subr.bf16.mxu0 0
          %1467 = vmatpush1.bf16.msra.mxu0 0
          %1468 = vmatprep.subr.bf16.mxu0 0
          %1469 = vmatpush1.bf16.msra.mxu0 0
          %1470 = vmatprep.mubr.bf16.mxu0 0
          %1471 = vmatmul.mubr.bf16.gmra.mrb[0].mxu0 %v1382
          %v1472 = vpop.f32.mrb[0].mxu0
          %v1473 = vadd.f32 0.0, %v1472
          %v1474 = vpop.f32.mrb[0].mxu0
          %v1475 = vpop.f32.mrb[0].mxu0
          %v1476 = vadd.f32 0.0, %v1475
          %v1477 = vpop.f32.mrb[0].mxu0
          %1478 = vmatprep.mubr.bf16.mxu0 0
          %1479 = vmatmul.mubr.bf16.gmra.mrb[0].mxu0 %v1383
          %v1480 = vpop.f32.mrb[0].mxu0
          %v1481 = vadd.f32 0.0, %v1480
          %v1482 = vpop.f32.mrb[0].mxu0
          %v1483 = vpop.f32.mrb[0].mxu0
          %v1484 = vadd.f32 0.0, %v1483
          %v1485 = vpop.f32.mrb[0].mxu0
          %1486 = vmatprep.mubr.bf16.mxu0 0
          %1487 = vmatmul.mubr.bf16.gmra.mrb[0].mxu0 %v1384
          %v1488 = vpop.f32.mrb[0].mxu0
          %v1489 = vadd.f32 0.0, %v1488
          %v1490 = vpop.f32.mrb[0].mxu0
          %v1491 = vpop.f32.mrb[0].mxu0
          %v1492 = vadd.f32 0.0, %v1491
          %v1493 = vpop.f32.mrb[0].mxu0
          %1494 = vmatprep.mubr.bf16.mxu0 0
          %1495 = vmatmul.mubr.bf16.gmra.mrb[0].mxu0 %v1385
          %v1496 = vpop.f32.mrb[0].mxu0
          %v1497 = vadd.f32 0.0, %v1496
          %v1498 = vpop.f32.mrb[0].mxu0
          %v1499 = vpop.f32.mrb[0].mxu0
          %v1500 = vadd.f32 0.0, %v1499
          %v1501 = vpop.f32.mrb[0].mxu0
          %1502 = vmatprep.mubr.bf16.mxu0 0
          %1503 = vmatmul.mubr.bf16.gmra.mrb[0].mxu0 %v1386
          %v1504 = vpop.f32.mrb[0].mxu0
          %v1505 = vadd.f32 0.0, %v1504
          %v1506 = vpop.f32.mrb[0].mxu0
          %v1507 = vpop.f32.mrb[0].mxu0
          %v1508 = vadd.f32 0.0, %v1507
          %v1509 = vpop.f32.mrb[0].mxu0
          %1510 = vmatprep.mubr.bf16.mxu0 0
          %1511 = vmatmul.mubr.bf16.gmra.mrb[0].mxu0 %v1387
          %v1512 = vpop.f32.mrb[0].mxu0
          %v1513 = vadd.f32 0.0, %v1512
          %v1514 = vpop.f32.mrb[0].mxu0
          %v1515 = vpop.f32.mrb[0].mxu0
          %v1516 = vadd.f32 0.0, %v1515
          %v1517 = vpop.f32.mrb[0].mxu0
          %1518 = vmatprep.mubr.bf16.mxu0 0
          %1519 = vmatmul.mubr.bf16.gmra.mrb[0].mxu0 %v1388
          %v1520 = vpop.f32.mrb[0].mxu0
          %v1521 = vadd.f32 0.0, %v1520
          %v1522 = vpop.f32.mrb[0].mxu0
          %v1523 = vpop.f32.mrb[0].mxu0
          %v1524 = vadd.f32 0.0, %v1523
          %v1525 = vpop.f32.mrb[0].mxu0
          %1526 = vmatprep.mubr.bf16.mxu0 0
          %1527 = vmatmul.mubr.bf16.gmra.mrb[0].mxu0 %v1389
          %v1528 = vpop.f32.mrb[0].mxu0
          %v1529 = vadd.f32 0.0, %v1528
          %v1530 = vpop.f32.mrb[0].mxu0
          %v1531 = vpop.f32.mrb[0].mxu0
          %v1532 = vadd.f32 0.0, %v1531
          %v1533 = vpop.f32.mrb[0].mxu0
          %1534 = vdwg.mxu0
          %v1535 = vadd.f32 %v1366, %v1473
          %v1536 = vadd.f32 %v1367, %v1476
          %v1537 = vadd.f32 %v1368, %v1481
          %v1538 = vadd.f32 %v1369, %v1484
          %v1539 = vadd.f32 %v1370, %v1489
          %v1540 = vadd.f32 %v1371, %v1492
          %v1541 = vadd.f32 %v1372, %v1497
          %v1542 = vadd.f32 %v1373, %v1500
          %v1543 = vadd.f32 %v1374, %v1505
          %v1544 = vadd.f32 %v1375, %v1508
          %v1545 = vadd.f32 %v1376, %v1513
          %v1546 = vadd.f32 %v1377, %v1516
          %v1547 = vadd.f32 %v1378, %v1521
          %v1548 = vadd.f32 %v1379, %v1524
          %v1549 = vadd.f32 %v1380, %v1529
          %v1550 = vadd.f32 %v1381, %v1532
          %1551 = vst.msk [vmem:[#allocation4] sm:$0xff] %vm771, %v1535
          %1552 = vst.msk [vmem:[#allocation4 + $0x8] sm:$0xff] %vm771, %v1536
          %1553 = vst.msk [vmem:[#allocation4 + $0x10] sm:$0xff] %vm771, %v1537
          %1554 = vst.msk [vmem:[#allocation4 + $0x18] sm:$0xff] %vm771, %v1538
          %1555 = vst.msk [vmem:[#allocation4 + $0x20] sm:$0xff] %vm771, %v1539
          %1556 = vst.msk [vmem:[#allocation4 + $0x28] sm:$0xff] %vm771, %v1540
          %1557 = vst.msk [vmem:[#allocation4 + $0x30] sm:$0xff] %vm771, %v1541
          %1558 = vst.msk [vmem:[#allocation4 + $0x38] sm:$0xff] %vm771, %v1542
          %1559 = vst.msk [vmem:[#allocation4 + $0x40] sm:$0xff] %vm771, %v1543
          %1560 = vst.msk [vmem:[#allocation4 + $0x48] sm:$0xff] %vm771, %v1544
          %1561 = vst.msk [vmem:[#allocation4 + $0x50] sm:$0xff] %vm771, %v1545
          %1562 = vst.msk [vmem:[#allocation4 + $0x58] sm:$0xff] %vm771, %v1546
          %1563 = vst.msk [vmem:[#allocation4 + $0x60] sm:$0xff] %vm771, %v1547
          %1564 = vst.msk [vmem:[#allocation4 + $0x68] sm:$0xff] %vm771, %v1548
          %1565 = vst.msk [vmem:[#allocation4 + $0x70] sm:$0xff] %vm771, %v1549
          %1566 = vst.msk [vmem:[#allocation4 + $0x78] sm:$0xff] %vm771, %v1550
          %1567 = vst.msk [vmem:[#allocation2] sm:$0xff] %vm1253, %v981
          %1568 = vst.msk [vmem:[#allocation2 + $0x8] sm:$0xff] %vm1253, %v982
          %1569 = vst.msk [vmem:[#allocation2 + $0x10] sm:$0xff] %vm1253, %v983
          %1570 = vst.msk [vmem:[#allocation2 + $0x18] sm:$0xff] %vm1253, %v984
          %1571 = vst.msk [vmem:[#allocation2 + $0x20] sm:$0xff] %vm1253, %v985
          %1572 = vst.msk [vmem:[#allocation2 + $0x28] sm:$0xff] %vm1253, %v986
          %1573 = vst.msk [vmem:[#allocation2 + $0x30] sm:$0xff] %vm1253, %v987
          %1574 = vst.msk [vmem:[#allocation2 + $0x38] sm:$0xff] %vm1253, %v988
          %1575 = vst.msk [vmem:[#allocation2 + $0x40] sm:$0xff] %vm1253, %v989
          %1576 = vst.msk [vmem:[#allocation2 + $0x48] sm:$0xff] %vm1253, %v990
          %1577 = vst.msk [vmem:[#allocation2 + $0x50] sm:$0xff] %vm1253, %v991
          %1578 = vst.msk [vmem:[#allocation2 + $0x58] sm:$0xff] %vm1253, %v992
          %1579 = vst.msk [vmem:[#allocation2 + $0x60] sm:$0xff] %vm1253, %v993
          %1580 = vst.msk [vmem:[#allocation2 + $0x68] sm:$0xff] %vm1253, %v994
          %1581 = vst.msk [vmem:[#allocation2 + $0x70] sm:$0xff] %vm1253, %v995
          %1582 = vst.msk [vmem:[#allocation2 + $0x78] sm:$0xff] %vm1253, %v996
          %1583 = vrot.lane.b32.xlu0 %v723, 64
          %v1584 = vpop.permute.xlu0 %1583
          %1585 = vrot.lane.b32.xlu0 %v724, 64
          %v1586 = vpop.permute.xlu0 %1585
          %1587 = vrot.lane.b32.xlu0 %v725, 64
          %v1588 = vpop.permute.xlu0 %1587
          %1589 = vrot.lane.b32.xlu0 %v726, 64
          %v1590 = vpop.permute.xlu0 %1589
          %1591 = vrot.lane.b32.xlu0 %v727, 64
          %v1592 = vpop.permute.xlu0 %1591
          %1593 = vrot.lane.b32.xlu0 %v728, 64
          %v1594 = vpop.permute.xlu0 %1593
          %1595 = vrot.lane.b32.xlu0 %v729, 64
          %v1596 = vpop.permute.xlu0 %1595
          %1597 = vrot.lane.b32.xlu0 %v730, 64
          %v1598 = vpop.permute.xlu0 %1597
          %1599 = vrot.lane.b32.xlu0 %v763, 64
          %v1600 = vpop.permute.xlu0 %1599
          %1601 = vrot.lane.b32.xlu0 %v764, 64
          %v1602 = vpop.permute.xlu0 %1601
          %1603 = vrot.lane.b32.xlu0 %v765, 64
          %v1604 = vpop.permute.xlu0 %1603
          %1605 = vrot.lane.b32.xlu0 %v766, 64
          %v1606 = vpop.permute.xlu0 %1605
          %1607 = vrot.lane.b32.xlu0 %v767, 64
          %v1608 = vpop.permute.xlu0 %1607
          %1609 = vrot.lane.b32.xlu0 %v768, 64
          %v1610 = vpop.permute.xlu0 %1609
          %1611 = vrot.lane.b32.xlu0 %v769, 64
          %v1612 = vpop.permute.xlu0 %1611
          %1613 = vrot.lane.b32.xlu0 %v770, 64
          %v1614 = vpop.permute.xlu0 %1613
          %v1616 = vsel %vm771, %v1584, 0
          %v1619 = vsel %vm771, %v1586, 0
          %v1622 = vsel %vm771, %v1588, 0
          %v1625 = vsel %vm771, %v1590, 0
          %v1628 = vsel %vm771, %v1592, 0
          %v1631 = vsel %vm771, %v1594, 0
          %v1634 = vsel %vm771, %v1596, 0
          %v1637 = vsel %vm771, %v1598, 0
          %v1640 = vsel %vm771, %v1600, 0
          %v1643 = vsel %vm771, %v1602, 0
          %v1646 = vsel %vm771, %v1604, 0
          %v1649 = vsel %vm771, %v1606, 0
          %v1652 = vsel %vm771, %v1608, 0
          %v1655 = vsel %vm771, %v1610, 0
          %v1658 = vsel %vm771, %v1612, 0
          %v1661 = vsel %vm771, %v1614, 0
          %1663 = vmatprep.subr.bf16.mxu0 0
          %1664 = vmatpush1.bf16.xpose.msra.mxu0 %v1640
          %1665 = vmatprep.subr.bf16.mxu0 0
          %1666 = vmatpush1.bf16.xpose.msra.mxu0 %v1643
          %1667 = vmatprep.subr.bf16.mxu0 0
          %1668 = vmatpush1.bf16.xpose.msra.mxu0 %v1646
          %1669 = vmatprep.subr.bf16.mxu0 0
          %1670 = vmatpush1.bf16.xpose.msra.mxu0 %v1649
          %1671 = vmatprep.subr.bf16.mxu0 0
          %1672 = vmatpush1.bf16.xpose.msra.mxu0 %v1652
          %1673 = vmatprep.subr.bf16.mxu0 0
          %1674 = vmatpush1.bf16.xpose.msra.mxu0 %v1655
          %1675 = vmatprep.subr.bf16.mxu0 0
          %1676 = vmatpush1.bf16.xpose.msra.mxu0 %v1658
          %1677 = vmatprep.subr.bf16.mxu0 0
          %1678 = vmatpush1.bf16.xpose.msra.mxu0 %v1661
          %1679 = vmatprep.subr.bf16.mxu0 0
          %1680 = vmatpush1.bf16.xpose.msra.mxu0 0
          %1681 = vmatprep.subr.bf16.mxu0 0
          %1682 = vmatpush1.bf16.xpose.msra.mxu0 0
          %1683 = vmatprep.subr.bf16.mxu0 0
          %1684 = vmatpush1.bf16.xpose.msra.mxu0 0
          %1685 = vmatprep.subr.bf16.mxu0 0
          %1686 = vmatpush1.bf16.xpose.msra.mxu0 0
          %1687 = vmatprep.subr.bf16.mxu0 0
          %1688 = vmatpush1.bf16.xpose.msra.mxu0 0
          %1689 = vmatprep.subr.bf16.mxu0 0
          %1690 = vmatpush1.bf16.xpose.msra.mxu0 0
          %1691 = vmatprep.subr.bf16.mxu0 0
          %1692 = vmatpush1.bf16.xpose.msra.mxu0 0
          %1693 = vmatprep.subr.bf16.mxu0 0
          %1694 = vmatpush1.bf16.xpose.msra.mxu0 0
          %1695 = vmatprep.mubr.bf16.mxu0 0
          %1696 = vmatmul.mubr.bf16.gmra.mrb[0].mxu0 %v1616
          %v1697 = vpop.f32.mrb[0].mxu0
          %v1698 = vadd.f32 0.0, %v1697
          %v1699 = vpop.f32.mrb[0].mxu0
          %v1700 = vpop.f32.mrb[0].mxu0
          %v1701 = vadd.f32 0.0, %v1700
          %v1702 = vpop.f32.mrb[0].mxu0
          %1703 = vmatprep.mubr.bf16.mxu0 0
          %1704 = vmatmul.mubr.bf16.gmra.mrb[0].mxu0 %v1619
          %v1705 = vpop.f32.mrb[0].mxu0
          %v1706 = vadd.f32 0.0, %v1705
          %v1707 = vpop.f32.mrb[0].mxu0
          %v1708 = vpop.f32.mrb[0].mxu0
          %v1709 = vadd.f32 0.0, %v1708
          %v1710 = vpop.f32.mrb[0].mxu0
          %1711 = vmatprep.mubr.bf16.mxu0 0
          %1712 = vmatmul.mubr.bf16.gmra.mrb[0].mxu0 %v1622
          %v1713 = vpop.f32.mrb[0].mxu0
          %v1714 = vadd.f32 0.0, %v1713
          %v1715 = vpop.f32.mrb[0].mxu0
          %v1716 = vpop.f32.mrb[0].mxu0
          %v1717 = vadd.f32 0.0, %v1716
          %v1718 = vpop.f32.mrb[0].mxu0
          %1719 = vmatprep.mubr.bf16.mxu0 0
          %1720 = vmatmul.mubr.bf16.gmra.mrb[0].mxu0 %v1625
          %v1721 = vpop.f32.mrb[0].mxu0
          %v1722 = vadd.f32 0.0, %v1721
          %v1723 = vpop.f32.mrb[0].mxu0
          %v1724 = vpop.f32.mrb[0].mxu0
          %v1725 = vadd.f32 0.0, %v1724
          %v1726 = vpop.f32.mrb[0].mxu0
          %1727 = vmatprep.mubr.bf16.mxu0 0
          %1728 = vmatmul.mubr.bf16.gmra.mrb[0].mxu0 %v1628
          %v1729 = vpop.f32.mrb[0].mxu0
          %v1730 = vadd.f32 0.0, %v1729
          %v1731 = vpop.f32.mrb[0].mxu0
          %v1732 = vpop.f32.mrb[0].mxu0
          %v1733 = vadd.f32 0.0, %v1732
          %v1734 = vpop.f32.mrb[0].mxu0
          %1735 = vmatprep.mubr.bf16.mxu0 0
          %1736 = vmatmul.mubr.bf16.gmra.mrb[0].mxu0 %v1631
          %v1737 = vpop.f32.mrb[0].mxu0
          %v1738 = vadd.f32 0.0, %v1737
          %v1739 = vpop.f32.mrb[0].mxu0
          %v1740 = vpop.f32.mrb[0].mxu0
          %v1741 = vadd.f32 0.0, %v1740
          %v1742 = vpop.f32.mrb[0].mxu0
          %1743 = vmatprep.mubr.bf16.mxu0 0
          %1744 = vmatmul.mubr.bf16.gmra.mrb[0].mxu0 %v1634
          %v1745 = vpop.f32.mrb[0].mxu0
          %v1746 = vadd.f32 0.0, %v1745
          %v1747 = vpop.f32.mrb[0].mxu0
          %v1748 = vpop.f32.mrb[0].mxu0
          %v1749 = vadd.f32 0.0, %v1748
          %v1750 = vpop.f32.mrb[0].mxu0
          %1751 = vmatprep.mubr.bf16.mxu0 0
          %1752 = vmatmul.mubr.bf16.gmra.mrb[0].mxu0 %v1637
          %v1753 = vpop.f32.mrb[0].mxu0
          %v1754 = vadd.f32 0.0, %v1753
          %v1755 = vpop.f32.mrb[0].mxu0
          %v1756 = vpop.f32.mrb[0].mxu0
          %v1757 = vadd.f32 0.0, %v1756
          %v1758 = vpop.f32.mrb[0].mxu0
          %1759 = vdwg.mxu0
          %v1760 = vsel %vm627, %v1698, -1e+30
          %v1761 = vsel %vm628, %v1701, -1e+30
          %v1762 = vsel %vm629, %v1706, -1e+30
          %v1763 = vsel %vm630, %v1709, -1e+30
          %v1764 = vsel %vm631, %v1714, -1e+30
          %v1765 = vsel %vm632, %v1717, -1e+30
          %v1766 = vsel %vm633, %v1722, -1e+30
          %v1767 = vsel %vm634, %v1725, -1e+30
          %v1768 = vsel %vm635, %v1730, -1e+30
          %v1769 = vsel %vm636, %v1733, -1e+30
          %v1770 = vsel %vm637, %v1738, -1e+30
          %v1771 = vsel %vm638, %v1741, -1e+30
          %v1772 = vsel %vm639, %v1746, -1e+30
          %v1773 = vsel %vm640, %v1749, -1e+30
          %v1774 = vsel %vm641, %v1754, -1e+30
          %v1775 = vsel %vm642, %v1757, -1e+30
          %s1776 = scalar_lea.vmem [#allocation2], 128
          %v1777 = vld [vmem:[%s1776] sm:$0xff]
          %v1778 = vld [vmem:[%s1776 + $0x8] sm:$0xff]
          %v1779 = vld [vmem:[%s1776 + $0x10] sm:$0xff]
          %v1780 = vld [vmem:[%s1776 + $0x18] sm:$0xff]
          %v1781 = vld [vmem:[%s1776 + $0x20] sm:$0xff]
          %v1782 = vld [vmem:[%s1776 + $0x28] sm:$0xff]
          %v1783 = vld [vmem:[%s1776 + $0x30] sm:$0xff]
          %v1784 = vld [vmem:[%s1776 + $0x38] sm:$0xff]
          %v1785 = vld [vmem:[%s1776 + $0x40] sm:$0xff]
          %v1786 = vld [vmem:[%s1776 + $0x48] sm:$0xff]
          %v1787 = vld [vmem:[%s1776 + $0x50] sm:$0xff]
          %v1788 = vld [vmem:[%s1776 + $0x58] sm:$0xff]
          %v1789 = vld [vmem:[%s1776 + $0x60] sm:$0xff]
          %v1790 = vld [vmem:[%s1776 + $0x68] sm:$0xff]
          %v1791 = vld [vmem:[%s1776 + $0x70] sm:$0xff]
          %v1792 = vld [vmem:[%s1776 + $0x78] sm:$0xff]
          %1793 = vmax.xlane.f32.xlu0 %v1760
          %v1794 = vpop.xlane.xlu0 %1793
          %1795 = vmax.xlane.f32.xlu0 %v1761
          %v1796 = vpop.xlane.xlu0 %1795
          %1797 = vmax.xlane.f32.xlu0 %v1762
          %v1798 = vpop.xlane.xlu0 %1797
          %1799 = vmax.xlane.f32.xlu0 %v1763
          %v1800 = vpop.xlane.xlu0 %1799
          %1801 = vmax.xlane.f32.xlu0 %v1764
          %v1802 = vpop.xlane.xlu0 %1801
          %1803 = vmax.xlane.f32.xlu0 %v1765
          %v1804 = vpop.xlane.xlu0 %1803
          %1805 = vmax.xlane.f32.xlu0 %v1766
          %v1806 = vpop.xlane.xlu0 %1805
          %1807 = vmax.xlane.f32.xlu0 %v1767
          %v1808 = vpop.xlane.xlu0 %1807
          %1809 = vmax.xlane.f32.xlu0 %v1768
          %v1810 = vpop.xlane.xlu0 %1809
          %1811 = vmax.xlane.f32.xlu0 %v1769
          %v1812 = vpop.xlane.xlu0 %1811
          %1813 = vmax.xlane.f32.xlu0 %v1770
          %v1814 = vpop.xlane.xlu0 %1813
          %1815 = vmax.xlane.f32.xlu0 %v1771
          %v1816 = vpop.xlane.xlu0 %1815
          %1817 = vmax.xlane.f32.xlu0 %v1772
          %v1818 = vpop.xlane.xlu0 %1817
          %1819 = vmax.xlane.f32.xlu0 %v1773
          %v1820 = vpop.xlane.xlu0 %1819
          %1821 = vmax.xlane.f32.xlu0 %v1774
          %v1822 = vpop.xlane.xlu0 %1821
          %1823 = vmax.xlane.f32.xlu0 %v1775
          %v1824 = vpop.xlane.xlu0 %1823
          %v1825 = vmax.f32 %v1777, %v1794
          %v1826 = vmax.f32 %v1778, %v1796
          %v1827 = vmax.f32 %v1779, %v1798
          %v1828 = vmax.f32 %v1780, %v1800
          %v1829 = vmax.f32 %v1781, %v1802
          %v1830 = vmax.f32 %v1782, %v1804
          %v1831 = vmax.f32 %v1783, %v1806
          %v1832 = vmax.f32 %v1784, %v1808
          %v1833 = vmax.f32 %v1785, %v1810
          %v1834 = vmax.f32 %v1786, %v1812
          %v1835 = vmax.f32 %v1787, %v1814
          %v1836 = vmax.f32 %v1788, %v1816
          %v1837 = vmax.f32 %v1789, %v1818
          %v1838 = vmax.f32 %v1790, %v1820
          %v1839 = vmax.f32 %v1791, %v1822
          %v1840 = vmax.f32 %v1792, %v1824
          %v1841 = vsub.f32 %v1777, %v1825
          %v1842 = vsub.f32 %v1778, %v1826
          %v1843 = vsub.f32 %v1779, %v1827
          %v1844 = vsub.f32 %v1780, %v1828
          %v1845 = vsub.f32 %v1781, %v1829
          %v1846 = vsub.f32 %v1782, %v1830
          %v1847 = vsub.f32 %v1783, %v1831
          %v1848 = vsub.f32 %v1784, %v1832
          %v1849 = vsub.f32 %v1785, %v1833
          %v1850 = vsub.f32 %v1786, %v1834
          %v1851 = vsub.f32 %v1787, %v1835
          %v1852 = vsub.f32 %v1788, %v1836
          %v1853 = vsub.f32 %v1789, %v1837
          %v1854 = vsub.f32 %v1790, %v1838
          %v1855 = vsub.f32 %v1791, %v1839
          %v1856 = vsub.f32 %v1792, %v1840
          %v1857 = vmul.f32 %v1841, 1.442695
          %v1858 = vpow.pop %v1857
          %v1859 = vmul.f32 %v1842, 1.442695
          %v1860 = vpow.pop %v1859
          %v1861 = vmul.f32 %v1843, 1.442695
          %v1862 = vpow.pop %v1861
          %v1863 = vmul.f32 %v1844, 1.442695
          %v1864 = vpow.pop %v1863
          %v1865 = vmul.f32 %v1845, 1.442695
          %v1866 = vpow.pop %v1865
          %v1867 = vmul.f32 %v1846, 1.442695
          %v1868 = vpow.pop %v1867
          %v1869 = vmul.f32 %v1847, 1.442695
          %v1870 = vpow.pop %v1869
          %v1871 = vmul.f32 %v1848, 1.442695
          %v1872 = vpow.pop %v1871
          %v1873 = vmul.f32 %v1849, 1.442695
          %v1874 = vpow.pop %v1873
          %v1875 = vmul.f32 %v1850, 1.442695
          %v1876 = vpow.pop %v1875
          %v1877 = vmul.f32 %v1851, 1.442695
          %v1878 = vpow.pop %v1877
          %v1879 = vmul.f32 %v1852, 1.442695
          %v1880 = vpow.pop %v1879
          %v1881 = vmul.f32 %v1853, 1.442695
          %v1882 = vpow.pop %v1881
          %v1883 = vmul.f32 %v1854, 1.442695
          %v1884 = vpow.pop %v1883
          %v1885 = vmul.f32 %v1855, 1.442695
          %v1886 = vpow.pop %v1885
          %v1887 = vmul.f32 %v1856, 1.442695
          %v1888 = vpow.pop %v1887
          %1890 = vset.pattern.permute.xlu0 0
          %1891 = vperm.xlu0 %1890, %v1825
          %v1892 = vpop.permute.xlu0 %1891
          %1895 = vset.pattern.permute.xlu0 0
          %1896 = vperm.xlu0 %1895, %v1826
          %v1897 = vpop.permute.xlu0 %1896
          %1900 = vset.pattern.permute.xlu0 0
          %1901 = vperm.xlu0 %1900, %v1827
          %v1902 = vpop.permute.xlu0 %1901
          %1905 = vset.pattern.permute.xlu0 0
          %1906 = vperm.xlu0 %1905, %v1828
          %v1907 = vpop.permute.xlu0 %1906
          %1910 = vset.pattern.permute.xlu0 0
          %1911 = vperm.xlu0 %1910, %v1829
          %v1912 = vpop.permute.xlu0 %1911
          %1915 = vset.pattern.permute.xlu0 0
          %1916 = vperm.xlu0 %1915, %v1830
          %v1917 = vpop.permute.xlu0 %1916
          %1920 = vset.pattern.permute.xlu0 0
          %1921 = vperm.xlu0 %1920, %v1831
          %v1922 = vpop.permute.xlu0 %1921
          %1925 = vset.pattern.permute.xlu0 0
          %1926 = vperm.xlu0 %1925, %v1832
          %v1927 = vpop.permute.xlu0 %1926
          %1930 = vset.pattern.permute.xlu0 0
          %1931 = vperm.xlu0 %1930, %v1833
          %v1932 = vpop.permute.xlu0 %1931
          %1935 = vset.pattern.permute.xlu0 0
          %1936 = vperm.xlu0 %1935, %v1834
          %v1937 = vpop.permute.xlu0 %1936
          %1940 = vset.pattern.permute.xlu0 0
          %1941 = vperm.xlu0 %1940, %v1835
          %v1942 = vpop.permute.xlu0 %1941
          %1945 = vset.pattern.permute.xlu0 0
          %1946 = vperm.xlu0 %1945, %v1836
          %v1947 = vpop.permute.xlu0 %1946
          %1950 = vset.pattern.permute.xlu0 0
          %1951 = vperm.xlu0 %1950, %v1837
          %v1952 = vpop.permute.xlu0 %1951
          %1955 = vset.pattern.permute.xlu0 0
          %1956 = vperm.xlu0 %1955, %v1838
          %v1957 = vpop.permute.xlu0 %1956
          %1960 = vset.pattern.permute.xlu0 0
          %1961 = vperm.xlu0 %1960, %v1839
          %v1962 = vpop.permute.xlu0 %1961
          %1965 = vset.pattern.permute.xlu0 0
          %1966 = vperm.xlu0 %1965, %v1840
          %v1967 = vpop.permute.xlu0 %1966
          %v1969 = vsub.f32 %v1760, %v1892
          %v1970 = vsub.f32 %v1761, %v1897
          %v1971 = vsub.f32 %v1762, %v1902
          %v1972 = vsub.f32 %v1763, %v1907
          %v1973 = vsub.f32 %v1764, %v1912
          %v1974 = vsub.f32 %v1765, %v1917
          %v1975 = vsub.f32 %v1766, %v1922
          %v1976 = vsub.f32 %v1767, %v1927
          %v1977 = vsub.f32 %v1768, %v1932
          %v1978 = vsub.f32 %v1769, %v1937
          %v1979 = vsub.f32 %v1770, %v1942
          %v1980 = vsub.f32 %v1771, %v1947
          %v1981 = vsub.f32 %v1772, %v1952
          %v1982 = vsub.f32 %v1773, %v1957
          %v1983 = vsub.f32 %v1774, %v1962
          %v1984 = vsub.f32 %v1775, %v1967
          %v1985 = vmul.f32 %v1969, 1.442695
          %v1986 = vpow.pop %v1985
          %v1987 = vmul.f32 %v1970, 1.442695
          %v1988 = vpow.pop %v1987
          %v1989 = vmul.f32 %v1971, 1.442695
          %v1990 = vpow.pop %v1989
          %v1991 = vmul.f32 %v1972, 1.442695
          %v1992 = vpow.pop %v1991
          %v1993 = vmul.f32 %v1973, 1.442695
          %v1994 = vpow.pop %v1993
          %v1995 = vmul.f32 %v1974, 1.442695
          %v1996 = vpow.pop %v1995
          %v1997 = vmul.f32 %v1975, 1.442695
          %v1998 = vpow.pop %v1997
          %v1999 = vmul.f32 %v1976, 1.442695
          %v2000 = vpow.pop %v1999
          %v2001 = vmul.f32 %v1977, 1.442695
          %v2002 = vpow.pop %v2001
          %v2003 = vmul.f32 %v1978, 1.442695
          %v2004 = vpow.pop %v2003
          %v2005 = vmul.f32 %v1979, 1.442695
          %v2006 = vpow.pop %v2005
          %v2007 = vmul.f32 %v1980, 1.442695
          %v2008 = vpow.pop %v2007
          %v2009 = vmul.f32 %v1981, 1.442695
          %v2010 = vpow.pop %v2009
          %v2011 = vmul.f32 %v1982, 1.442695
          %v2012 = vpow.pop %v2011
          %v2013 = vmul.f32 %v1983, 1.442695
          %v2014 = vpow.pop %v2013
          %v2015 = vmul.f32 %v1984, 1.442695
          %v2016 = vpow.pop %v2015
          %s2017 = scalar_lea.vmem [#allocation3], 128
          %v2018 = vld [vmem:[%s2017] sm:$0xff]
          %v2019 = vld [vmem:[%s2017 + $0x8] sm:$0xff]
          %v2020 = vld [vmem:[%s2017 + $0x10] sm:$0xff]
          %v2021 = vld [vmem:[%s2017 + $0x18] sm:$0xff]
          %v2022 = vld [vmem:[%s2017 + $0x20] sm:$0xff]
          %v2023 = vld [vmem:[%s2017 + $0x28] sm:$0xff]
          %v2024 = vld [vmem:[%s2017 + $0x30] sm:$0xff]
          %v2025 = vld [vmem:[%s2017 + $0x38] sm:$0xff]
          %v2026 = vld [vmem:[%s2017 + $0x40] sm:$0xff]
          %v2027 = vld [vmem:[%s2017 + $0x48] sm:$0xff]
          %v2028 = vld [vmem:[%s2017 + $0x50] sm:$0xff]
          %v2029 = vld [vmem:[%s2017 + $0x58] sm:$0xff]
          %v2030 = vld [vmem:[%s2017 + $0x60] sm:$0xff]
          %v2031 = vld [vmem:[%s2017 + $0x68] sm:$0xff]
          %v2032 = vld [vmem:[%s2017 + $0x70] sm:$0xff]
          %v2033 = vld [vmem:[%s2017 + $0x78] sm:$0xff]
          %v2034 = vmul.f32 %v1858, %v2018
          %v2035 = vmul.f32 %v1860, %v2019
          %v2036 = vmul.f32 %v1862, %v2020
          %v2037 = vmul.f32 %v1864, %v2021
          %v2038 = vmul.f32 %v1866, %v2022
          %v2039 = vmul.f32 %v1868, %v2023
          %v2040 = vmul.f32 %v1870, %v2024
          %v2041 = vmul.f32 %v1872, %v2025
          %v2042 = vmul.f32 %v1874, %v2026
          %v2043 = vmul.f32 %v1876, %v2027
          %v2044 = vmul.f32 %v1878, %v2028
          %v2045 = vmul.f32 %v1880, %v2029
          %v2046 = vmul.f32 %v1882, %v2030
          %v2047 = vmul.f32 %v1884, %v2031
          %v2048 = vmul.f32 %v1886, %v2032
          %v2049 = vmul.f32 %v1888, %v2033
          %2050 = vadd.xlane.f32.xlu0 %v1986
          %v2051 = vpop.xlane.xlu0 %2050
          %2052 = vadd.xlane.f32.xlu0 %v1988
          %v2053 = vpop.xlane.xlu0 %2052
          %2054 = vadd.xlane.f32.xlu0 %v1990
          %v2055 = vpop.xlane.xlu0 %2054
          %2056 = vadd.xlane.f32.xlu0 %v1992
          %v2057 = vpop.xlane.xlu0 %2056
          %2058 = vadd.xlane.f32.xlu0 %v1994
          %v2059 = vpop.xlane.xlu0 %2058
          %2060 = vadd.xlane.f32.xlu0 %v1996
          %v2061 = vpop.xlane.xlu0 %2060
          %2062 = vadd.xlane.f32.xlu0 %v1998
          %v2063 = vpop.xlane.xlu0 %2062
          %2064 = vadd.xlane.f32.xlu0 %v2000
          %v2065 = vpop.xlane.xlu0 %2064
          %2066 = vadd.xlane.f32.xlu0 %v2002
          %v2067 = vpop.xlane.xlu0 %2066
          %2068 = vadd.xlane.f32.xlu0 %v2004
          %v2069 = vpop.xlane.xlu0 %2068
          %2070 = vadd.xlane.f32.xlu0 %v2006
          %v2071 = vpop.xlane.xlu0 %2070
          %2072 = vadd.xlane.f32.xlu0 %v2008
          %v2073 = vpop.xlane.xlu0 %2072
          %2074 = vadd.xlane.f32.xlu0 %v2010
          %v2075 = vpop.xlane.xlu0 %2074
          %2076 = vadd.xlane.f32.xlu0 %v2012
          %v2077 = vpop.xlane.xlu0 %2076
          %2078 = vadd.xlane.f32.xlu0 %v2014
          %v2079 = vpop.xlane.xlu0 %2078
          %2080 = vadd.xlane.f32.xlu0 %v2016
          %v2081 = vpop.xlane.xlu0 %2080
          %v2082 = vadd.f32 %v2034, %v2051
          %v2083 = vadd.f32 %v2035, %v2053
          %v2084 = vadd.f32 %v2036, %v2055
          %v2085 = vadd.f32 %v2037, %v2057
          %v2086 = vadd.f32 %v2038, %v2059
          %v2087 = vadd.f32 %v2039, %v2061
          %v2088 = vadd.f32 %v2040, %v2063
          %v2089 = vadd.f32 %v2041, %v2065
          %v2090 = vadd.f32 %v2042, %v2067
          %v2091 = vadd.f32 %v2043, %v2069
          %v2092 = vadd.f32 %v2044, %v2071
          %v2093 = vadd.f32 %v2045, %v2073
          %v2094 = vadd.f32 %v2046, %v2075
          %v2095 = vadd.f32 %v2047, %v2077
          %v2096 = vadd.f32 %v2048, %v2079
          %v2097 = vadd.f32 %v2049, %v2081
          %2098 = vst.msk [vmem:[%s2017] sm:$0xff] %vm1253, %v2082
          %2099 = vst.msk [vmem:[%s2017 + $0x8] sm:$0xff] %vm1253, %v2083
          %2100 = vst.msk [vmem:[%s2017 + $0x10] sm:$0xff] %vm1253, %v2084
          %2101 = vst.msk [vmem:[%s2017 + $0x18] sm:$0xff] %vm1253, %v2085
          %2102 = vst.msk [vmem:[%s2017 + $0x20] sm:$0xff] %vm1253, %v2086
          %2103 = vst.msk [vmem:[%s2017 + $0x28] sm:$0xff] %vm1253, %v2087
          %2104 = vst.msk [vmem:[%s2017 + $0x30] sm:$0xff] %vm1253, %v2088
          %2105 = vst.msk [vmem:[%s2017 + $0x38] sm:$0xff] %vm1253, %v2089
          %2106 = vst.msk [vmem:[%s2017 + $0x40] sm:$0xff] %vm1253, %v2090
          %2107 = vst.msk [vmem:[%s2017 + $0x48] sm:$0xff] %vm1253, %v2091
          %2108 = vst.msk [vmem:[%s2017 + $0x50] sm:$0xff] %vm1253, %v2092
          %2109 = vst.msk [vmem:[%s2017 + $0x58] sm:$0xff] %vm1253, %v2093
          %2110 = vst.msk [vmem:[%s2017 + $0x60] sm:$0xff] %vm1253, %v2094
          %2111 = vst.msk [vmem:[%s2017 + $0x68] sm:$0xff] %vm1253, %v2095
          %2112 = vst.msk [vmem:[%s2017 + $0x70] sm:$0xff] %vm1253, %v2096
          %2113 = vst.msk [vmem:[%s2017 + $0x78] sm:$0xff] %vm1253, %v2097
          %v2114 = vld [vmem:[#allocation4] sm:$0xff]
          %v2115 = vld [vmem:[#allocation4 + $0x8] sm:$0xff]
          %v2116 = vld [vmem:[#allocation4 + $0x10] sm:$0xff]
          %v2117 = vld [vmem:[#allocation4 + $0x18] sm:$0xff]
          %v2118 = vld [vmem:[#allocation4 + $0x20] sm:$0xff]
          %v2119 = vld [vmem:[#allocation4 + $0x28] sm:$0xff]
          %v2120 = vld [vmem:[#allocation4 + $0x30] sm:$0xff]
          %v2121 = vld [vmem:[#allocation4 + $0x38] sm:$0xff]
          %v2122 = vld [vmem:[#allocation4 + $0x40] sm:$0xff]
          %v2123 = vld [vmem:[#allocation4 + $0x48] sm:$0xff]
          %v2124 = vld [vmem:[#allocation4 + $0x50] sm:$0xff]
          %v2125 = vld [vmem:[#allocation4 + $0x58] sm:$0xff]
          %v2126 = vld [vmem:[#allocation4 + $0x60] sm:$0xff]
          %v2127 = vld [vmem:[#allocation4 + $0x68] sm:$0xff]
          %v2128 = vld [vmem:[#allocation4 + $0x70] sm:$0xff]
          %v2129 = vld [vmem:[#allocation4 + $0x78] sm:$0xff]
          %2131 = vset.pattern.permute.xlu0 0
          %2132 = vperm.xlu0 %2131, %v1858
          %v2133 = vpop.permute.xlu0 %2132
          %2136 = vset.pattern.permute.xlu0 0
          %2137 = vperm.xlu0 %2136, %v1860
          %v2138 = vpop.permute.xlu0 %2137
          %2141 = vset.pattern.permute.xlu0 0
          %2142 = vperm.xlu0 %2141, %v1862
          %v2143 = vpop.permute.xlu0 %2142
          %2146 = vset.pattern.permute.xlu0 0
          %2147 = vperm.xlu0 %2146, %v1864
          %v2148 = vpop.permute.xlu0 %2147
          %2151 = vset.pattern.permute.xlu0 0
          %2152 = vperm.xlu0 %2151, %v1866
          %v2153 = vpop.permute.xlu0 %2152
          %2156 = vset.pattern.permute.xlu0 0
          %2157 = vperm.xlu0 %2156, %v1868
          %v2158 = vpop.permute.xlu0 %2157
          %2161 = vset.pattern.permute.xlu0 0
          %2162 = vperm.xlu0 %2161, %v1870
          %v2163 = vpop.permute.xlu0 %2162
          %2166 = vset.pattern.permute.xlu0 0
          %2167 = vperm.xlu0 %2166, %v1872
          %v2168 = vpop.permute.xlu0 %2167
          %2171 = vset.pattern.permute.xlu0 0
          %2172 = vperm.xlu0 %2171, %v1874
          %v2173 = vpop.permute.xlu0 %2172
          %2176 = vset.pattern.permute.xlu0 0
          %2177 = vperm.xlu0 %2176, %v1876
          %v2178 = vpop.permute.xlu0 %2177
          %2181 = vset.pattern.permute.xlu0 0
          %2182 = vperm.xlu0 %2181, %v1878
          %v2183 = vpop.permute.xlu0 %2182
          %2186 = vset.pattern.permute.xlu0 0
          %2187 = vperm.xlu0 %2186, %v1880
          %v2188 = vpop.permute.xlu0 %2187
          %2191 = vset.pattern.permute.xlu0 0
          %2192 = vperm.xlu0 %2191, %v1882
          %v2193 = vpop.permute.xlu0 %2192
          %2196 = vset.pattern.permute.xlu0 0
          %2197 = vperm.xlu0 %2196, %v1884
          %v2198 = vpop.permute.xlu0 %2197
          %2201 = vset.pattern.permute.xlu0 0
          %2202 = vperm.xlu0 %2201, %v1886
          %v2203 = vpop.permute.xlu0 %2202
          %2206 = vset.pattern.permute.xlu0 0
          %2207 = vperm.xlu0 %2206, %v1888
          %v2208 = vpop.permute.xlu0 %2207
          %v2210 = vmul.f32 %v2133, %v2114
          %v2211 = vmul.f32 %v2138, %v2115
          %v2212 = vmul.f32 %v2143, %v2116
          %v2213 = vmul.f32 %v2148, %v2117
          %v2214 = vmul.f32 %v2153, %v2118
          %v2215 = vmul.f32 %v2158, %v2119
          %v2216 = vmul.f32 %v2163, %v2120
          %v2217 = vmul.f32 %v2168, %v2121
          %v2218 = vmul.f32 %v2173, %v2122
          %v2219 = vmul.f32 %v2178, %v2123
          %v2220 = vmul.f32 %v2183, %v2124
          %v2221 = vmul.f32 %v2188, %v2125
          %v2222 = vmul.f32 %v2193, %v2126
          %v2223 = vmul.f32 %v2198, %v2127
          %v2224 = vmul.f32 %v2203, %v2128
          %v2225 = vmul.f32 %v2208, %v2129
          %v2226 = vpack.c.bf16 %v1988, %v1986
          %v2227 = vpack.c.bf16 %v1992, %v1990
          %v2228 = vpack.c.bf16 %v1996, %v1994
          %v2229 = vpack.c.bf16 %v2000, %v1998
          %v2230 = vpack.c.bf16 %v2004, %v2002
          %v2231 = vpack.c.bf16 %v2008, %v2006
          %v2232 = vpack.c.bf16 %v2012, %v2010
          %v2233 = vpack.c.bf16 %v2016, %v2014
          %2234 = vrot.lane.b32.xlu0 %v1422, 64
          %v2235 = vpop.permute.xlu0 %2234
          %2236 = vrot.lane.b32.xlu0 %v1423, 64
          %v2237 = vpop.permute.xlu0 %2236
          %2238 = vrot.lane.b32.xlu0 %v1424, 64
          %v2239 = vpop.permute.xlu0 %2238
          %2240 = vrot.lane.b32.xlu0 %v1425, 64
          %v2241 = vpop.permute.xlu0 %2240
          %2242 = vrot.lane.b32.xlu0 %v1426, 64
          %v2243 = vpop.permute.xlu0 %2242
          %2244 = vrot.lane.b32.xlu0 %v1427, 64
          %v2245 = vpop.permute.xlu0 %2244
          %2246 = vrot.lane.b32.xlu0 %v1428, 64
          %v2247 = vpop.permute.xlu0 %2246
          %2248 = vrot.lane.b32.xlu0 %v1429, 64
          %v2249 = vpop.permute.xlu0 %2248
          %2258 = vmatprep.subr.bf16.mxu0 0
          %2259 = vmatpush1.bf16.msra.mxu0 %v2235
          %2260 = vmatprep.subr.bf16.mxu0 0
          %2261 = vmatpush1.bf16.msra.mxu0 %v2237
          %2262 = vmatprep.subr.bf16.mxu0 0
          %2263 = vmatpush1.bf16.msra.mxu0 %v2239
          %2264 = vmatprep.subr.bf16.mxu0 0
          %2265 = vmatpush1.bf16.msra.mxu0 %v2241
          %2266 = vmatprep.subr.bf16.mxu0 0
          %2267 = vmatpush1.bf16.msra.mxu0 %v2243
          %2268 = vmatprep.subr.bf16.mxu0 0
          %2269 = vmatpush1.bf16.msra.mxu0 %v2245
          %2270 = vmatprep.subr.bf16.mxu0 0
          %2271 = vmatpush1.bf16.msra.mxu0 %v2247
          %2272 = vmatprep.subr.bf16.mxu0 0
          %2273 = vmatpush1.bf16.msra.mxu0 %v2249
          %2274 = vmatprep.subr.bf16.mxu0 0
          %2275 = vmatpush1.bf16.msra.mxu0 0
          %2276 = vmatprep.subr.bf16.mxu0 0
          %2277 = vmatpush1.bf16.msra.mxu0 0
          %2278 = vmatprep.subr.bf16.mxu0 0
          %2279 = vmatpush1.bf16.msra.mxu0 0
          %2280 = vmatprep.subr.bf16.mxu0 0
          %2281 = vmatpush1.bf16.msra.mxu0 0
          %2282 = vmatprep.subr.bf16.mxu0 0
          %2283 = vmatpush1.bf16.msra.mxu0 0
          %2284 = vmatprep.subr.bf16.mxu0 0
          %2285 = vmatpush1.bf16.msra.mxu0 0
          %2286 = vmatprep.subr.bf16.mxu0 0
          %2287 = vmatpush1.bf16.msra.mxu0 0
          %2288 = vmatprep.subr.bf16.mxu0 0
          %2289 = vmatpush1.bf16.msra.mxu0 0
          %2290 = vmatprep.mubr.bf16.mxu0 0
          %2291 = vmatmul.mubr.bf16.gmra.mrb[0].mxu0 %v2226
          %v2292 = vpop.f32.mrb[0].mxu0
          %v2293 = vadd.f32 0.0, %v2292
          %v2294 = vpop.f32.mrb[0].mxu0
          %v2295 = vpop.f32.mrb[0].mxu0
          %v2296 = vadd.f32 0.0, %v2295
          %v2297 = vpop.f32.mrb[0].mxu0
          %2298 = vmatprep.mubr.bf16.mxu0 0
          %2299 = vmatmul.mubr.bf16.gmra.mrb[0].mxu0 %v2227
          %v2300 = vpop.f32.mrb[0].mxu0
          %v2301 = vadd.f32 0.0, %v2300
          %v2302 = vpop.f32.mrb[0].mxu0
          %v2303 = vpop.f32.mrb[0].mxu0
          %v2304 = vadd.f32 0.0, %v2303
          %v2305 = vpop.f32.mrb[0].mxu0
          %2306 = vmatprep.mubr.bf16.mxu0 0
          %2307 = vmatmul.mubr.bf16.gmra.mrb[0].mxu0 %v2228
          %v2308 = vpop.f32.mrb[0].mxu0
          %v2309 = vadd.f32 0.0, %v2308
          %v2310 = vpop.f32.mrb[0].mxu0
          %v2311 = vpop.f32.mrb[0].mxu0
          %v2312 = vadd.f32 0.0, %v2311
          %v2313 = vpop.f32.mrb[0].mxu0
          %2314 = vmatprep.mubr.bf16.mxu0 0
          %2315 = vmatmul.mubr.bf16.gmra.mrb[0].mxu0 %v2229
          %v2316 = vpop.f32.mrb[0].mxu0
          %v2317 = vadd.f32 0.0, %v2316
          %v2318 = vpop.f32.mrb[0].mxu0
          %v2319 = vpop.f32.mrb[0].mxu0
          %v2320 = vadd.f32 0.0, %v2319
          %v2321 = vpop.f32.mrb[0].mxu0
          %2322 = vmatprep.mubr.bf16.mxu0 0
          %2323 = vmatmul.mubr.bf16.gmra.mrb[0].mxu0 %v2230
          %v2324 = vpop.f32.mrb[0].mxu0
          %v2325 = vadd.f32 0.0, %v2324
          %v2326 = vpop.f32.mrb[0].mxu0
          %v2327 = vpop.f32.mrb[0].mxu0
          %v2328 = vadd.f32 0.0, %v2327
          %v2329 = vpop.f32.mrb[0].mxu0
          %2330 = vmatprep.mubr.bf16.mxu0 0
          %2331 = vmatmul.mubr.bf16.gmra.mrb[0].mxu0 %v2231
          %v2332 = vpop.f32.mrb[0].mxu0
          %v2333 = vadd.f32 0.0, %v2332
          %v2334 = vpop.f32.mrb[0].mxu0
          %v2335 = vpop.f32.mrb[0].mxu0
          %v2336 = vadd.f32 0.0, %v2335
          %v2337 = vpop.f32.mrb[0].mxu0
          %2338 = vmatprep.mubr.bf16.mxu0 0
          %2339 = vmatmul.mubr.bf16.gmra.mrb[0].mxu0 %v2232
          %v2340 = vpop.f32.mrb[0].mxu0
          %v2341 = vadd.f32 0.0, %v2340
          %v2342 = vpop.f32.mrb[0].mxu0
          %v2343 = vpop.f32.mrb[0].mxu0
          %v2344 = vadd.f32 0.0, %v2343
          %v2345 = vpop.f32.mrb[0].mxu0
          %2346 = vmatprep.mubr.bf16.mxu0 0
          %2347 = vmatmul.mubr.bf16.gmra.mrb[0].mxu0 %v2233
          %v2348 = vpop.f32.mrb[0].mxu0
          %v2349 = vadd.f32 0.0, %v2348
          %v2350 = vpop.f32.mrb[0].mxu0
          %v2351 = vpop.f32.mrb[0].mxu0
          %v2352 = vadd.f32 0.0, %v2351
          %v2353 = vpop.f32.mrb[0].mxu0
          %2354 = vdwg.mxu0
          %2371 = vrot.lane.b32.xlu0 %v2293, 64
          %v2372 = vpop.permute.xlu0 %2371
          %2373 = vrot.lane.b32.xlu0 %v2296, 64
          %v2374 = vpop.permute.xlu0 %2373
          %2375 = vrot.lane.b32.xlu0 %v2301, 64
          %v2376 = vpop.permute.xlu0 %2375
          %2377 = vrot.lane.b32.xlu0 %v2304, 64
          %v2378 = vpop.permute.xlu0 %2377
          %2379 = vrot.lane.b32.xlu0 %v2309, 64
          %v2380 = vpop.permute.xlu0 %2379
          %2381 = vrot.lane.b32.xlu0 %v2312, 64
          %v2382 = vpop.permute.xlu0 %2381
          %2383 = vrot.lane.b32.xlu0 %v2317, 64
          %v2384 = vpop.permute.xlu0 %2383
          %2385 = vrot.lane.b32.xlu0 %v2320, 64
          %v2386 = vpop.permute.xlu0 %2385
          %2387 = vrot.lane.b32.xlu0 %v2325, 64
          %v2388 = vpop.permute.xlu0 %2387
          %2389 = vrot.lane.b32.xlu0 %v2328, 64
          %v2390 = vpop.permute.xlu0 %2389
          %2391 = vrot.lane.b32.xlu0 %v2333, 64
          %v2392 = vpop.permute.xlu0 %2391
          %2393 = vrot.lane.b32.xlu0 %v2336, 64
          %v2394 = vpop.permute.xlu0 %2393
          %2395 = vrot.lane.b32.xlu0 %v2341, 64
          %v2396 = vpop.permute.xlu0 %2395
          %2397 = vrot.lane.b32.xlu0 %v2344, 64
          %v2398 = vpop.permute.xlu0 %2397
          %2399 = vrot.lane.b32.xlu0 %v2349, 64
          %v2400 = vpop.permute.xlu0 %2399
          %2401 = vrot.lane.b32.xlu0 %v2352, 64
          %v2402 = vpop.permute.xlu0 %2401
          %v2419 = vadd.f32 %v2210, %v2372
          %v2420 = vadd.f32 %v2211, %v2374
          %v2421 = vadd.f32 %v2212, %v2376
          %v2422 = vadd.f32 %v2213, %v2378
          %v2423 = vadd.f32 %v2214, %v2380
          %v2424 = vadd.f32 %v2215, %v2382
          %v2425 = vadd.f32 %v2216, %v2384
          %v2426 = vadd.f32 %v2217, %v2386
          %v2427 = vadd.f32 %v2218, %v2388
          %v2428 = vadd.f32 %v2219, %v2390
          %v2429 = vadd.f32 %v2220, %v2392
          %v2430 = vadd.f32 %v2221, %v2394
          %v2431 = vadd.f32 %v2222, %v2396
          %v2432 = vadd.f32 %v2223, %v2398
          %v2433 = vadd.f32 %v2224, %v2400
          %v2434 = vadd.f32 %v2225, %v2402
          %vm2435 = vcmask 1048064
          %2436 = vst.msk [vmem:[#allocation4] sm:$0xff] %vm2435, %v2419
          %2437 = vst.msk [vmem:[#allocation4 + $0x8] sm:$0xff] %vm2435, %v2420
          %2438 = vst.msk [vmem:[#allocation4 + $0x10] sm:$0xff] %vm2435, %v2421
          %2439 = vst.msk [vmem:[#allocation4 + $0x18] sm:$0xff] %vm2435, %v2422
          %2440 = vst.msk [vmem:[#allocation4 + $0x20] sm:$0xff] %vm2435, %v2423
          %2441 = vst.msk [vmem:[#allocation4 + $0x28] sm:$0xff] %vm2435, %v2424
          %2442 = vst.msk [vmem:[#allocation4 + $0x30] sm:$0xff] %vm2435, %v2425
          %2443 = vst.msk [vmem:[#allocation4 + $0x38] sm:$0xff] %vm2435, %v2426
          %2444 = vst.msk [vmem:[#allocation4 + $0x40] sm:$0xff] %vm2435, %v2427
          %2445 = vst.msk [vmem:[#allocation4 + $0x48] sm:$0xff] %vm2435, %v2428
          %2446 = vst.msk [vmem:[#allocation4 + $0x50] sm:$0xff] %vm2435, %v2429
          %2447 = vst.msk [vmem:[#allocation4 + $0x58] sm:$0xff] %vm2435, %v2430
          %2448 = vst.msk [vmem:[#allocation4 + $0x60] sm:$0xff] %vm2435, %v2431
          %2449 = vst.msk [vmem:[#allocation4 + $0x68] sm:$0xff] %vm2435, %v2432
          %2450 = vst.msk [vmem:[#allocation4 + $0x70] sm:$0xff] %vm2435, %v2433
          %2451 = vst.msk [vmem:[#allocation4 + $0x78] sm:$0xff] %vm2435, %v2434
          %2452 = vst.msk [vmem:[%s1776] sm:$0xff] %vm1253, %v1825
          %2453 = vst.msk [vmem:[%s1776 + $0x8] sm:$0xff] %vm1253, %v1826
          %2454 = vst.msk [vmem:[%s1776 + $0x10] sm:$0xff] %vm1253, %v1827
          %2455 = vst.msk [vmem:[%s1776 + $0x18] sm:$0xff] %vm1253, %v1828
          %2456 = vst.msk [vmem:[%s1776 + $0x20] sm:$0xff] %vm1253, %v1829
          %2457 = vst.msk [vmem:[%s1776 + $0x28] sm:$0xff] %vm1253, %v1830
          %2458 = vst.msk [vmem:[%s1776 + $0x30] sm:$0xff] %vm1253, %v1831
          %2459 = vst.msk [vmem:[%s1776 + $0x38] sm:$0xff] %vm1253, %v1832
          %2460 = vst.msk [vmem:[%s1776 + $0x40] sm:$0xff] %vm1253, %v1833
          %2461 = vst.msk [vmem:[%s1776 + $0x48] sm:$0xff] %vm1253, %v1834
          %2462 = vst.msk [vmem:[%s1776 + $0x50] sm:$0xff] %vm1253, %v1835
          %2463 = vst.msk [vmem:[%s1776 + $0x58] sm:$0xff] %vm1253, %v1836
          %2464 = vst.msk [vmem:[%s1776 + $0x60] sm:$0xff] %vm1253, %v1837
          %2465 = vst.msk [vmem:[%s1776 + $0x68] sm:$0xff] %vm1253, %v1838
          %2466 = vst.msk [vmem:[%s1776 + $0x70] sm:$0xff] %vm1253, %v1839
          %2467 = vst.msk [vmem:[%s1776 + $0x78] sm:$0xff] %vm1253, %v1840
        $region68: #{var_forward.13} parent=39 // pred_fallthru
          _
        // Predicated region
        $region69: #{var_forward.13} parent=39 // pred_check
          %p2468 = pneg %p468
        $region70: #{var_forward.13} parent=39 // pred_check_branch
          %2470 = sbr.rel (%p2468) target = $region72
        $region71: #{var_forward.13} parent=39 // pred_region
          %v2471 = vld [vmem:[#allocation3] sm:$0xff]
          %v2472 = vld [vmem:[#allocation3 + $0x8] sm:$0xff]
          %v2473 = vld [vmem:[#allocation3 + $0x10] sm:$0xff]
          %v2474 = vld [vmem:[#allocation3 + $0x18] sm:$0xff]
          %v2475 = vld [vmem:[#allocation3 + $0x20] sm:$0xff]
          %v2476 = vld [vmem:[#allocation3 + $0x28] sm:$0xff]
          %v2477 = vld [vmem:[#allocation3 + $0x30] sm:$0xff]
          %v2478 = vld [vmem:[#allocation3 + $0x38] sm:$0xff]
          %v2479 = vld [vmem:[#allocation3 + $0x40] sm:$0xff]
          %v2480 = vld [vmem:[#allocation3 + $0x48] sm:$0xff]
          %v2481 = vld [vmem:[#allocation3 + $0x50] sm:$0xff]
          %v2482 = vld [vmem:[#allocation3 + $0x58] sm:$0xff]
          %v2483 = vld [vmem:[#allocation3 + $0x60] sm:$0xff]
          %v2484 = vld [vmem:[#allocation3 + $0x68] sm:$0xff]
          %v2485 = vld [vmem:[#allocation3 + $0x70] sm:$0xff]
          %v2486 = vld [vmem:[#allocation3 + $0x78] sm:$0xff]
          %v2487 = vrcp.pop %v2471
          %v2488 = vrcp.pop %v2472
          %v2489 = vrcp.pop %v2473
          %v2490 = vrcp.pop %v2474
          %v2491 = vrcp.pop %v2475
          %v2492 = vrcp.pop %v2476
          %v2493 = vrcp.pop %v2477
          %v2494 = vrcp.pop %v2478
          %v2495 = vrcp.pop %v2479
          %v2496 = vrcp.pop %v2480
          %v2497 = vrcp.pop %v2481
          %v2498 = vrcp.pop %v2482
          %v2499 = vrcp.pop %v2483
          %v2500 = vrcp.pop %v2484
          %v2501 = vrcp.pop %v2485
          %v2502 = vrcp.pop %v2486
          %v2503 = vld [vmem:[#allocation4] sm:$0xff]
          %v2504 = vld [vmem:[#allocation4 + $0x8] sm:$0xff]
          %v2505 = vld [vmem:[#allocation4 + $0x10] sm:$0xff]
          %v2506 = vld [vmem:[#allocation4 + $0x18] sm:$0xff]
          %v2507 = vld [vmem:[#allocation4 + $0x20] sm:$0xff]
          %v2508 = vld [vmem:[#allocation4 + $0x28] sm:$0xff]
          %v2509 = vld [vmem:[#allocation4 + $0x30] sm:$0xff]
          %v2510 = vld [vmem:[#allocation4 + $0x38] sm:$0xff]
          %v2511 = vld [vmem:[#allocation4 + $0x40] sm:$0xff]
          %v2512 = vld [vmem:[#allocation4 + $0x48] sm:$0xff]
          %v2513 = vld [vmem:[#allocation4 + $0x50] sm:$0xff]
          %v2514 = vld [vmem:[#allocation4 + $0x58] sm:$0xff]
          %v2515 = vld [vmem:[#allocation4 + $0x60] sm:$0xff]
          %v2516 = vld [vmem:[#allocation4 + $0x68] sm:$0xff]
          %v2517 = vld [vmem:[#allocation4 + $0x70] sm:$0xff]
          %v2518 = vld [vmem:[#allocation4 + $0x78] sm:$0xff]
          %2520 = vset.pattern.permute.xlu0 0
          %2521 = vperm.xlu0 %2520, %v2487
          %v2522 = vpop.permute.xlu0 %2521
          %2525 = vset.pattern.permute.xlu0 0
          %2526 = vperm.xlu0 %2525, %v2488
          %v2527 = vpop.permute.xlu0 %2526
          %2530 = vset.pattern.permute.xlu0 0
          %2531 = vperm.xlu0 %2530, %v2489
          %v2532 = vpop.permute.xlu0 %2531
          %2535 = vset.pattern.permute.xlu0 0
          %2536 = vperm.xlu0 %2535, %v2490
          %v2537 = vpop.permute.xlu0 %2536
          %2540 = vset.pattern.permute.xlu0 0
          %2541 = vperm.xlu0 %2540, %v2491
          %v2542 = vpop.permute.xlu0 %2541
          %2545 = vset.pattern.permute.xlu0 0
          %2546 = vperm.xlu0 %2545, %v2492
          %v2547 = vpop.permute.xlu0 %2546
          %2550 = vset.pattern.permute.xlu0 0
          %2551 = vperm.xlu0 %2550, %v2493
          %v2552 = vpop.permute.xlu0 %2551
          %2555 = vset.pattern.permute.xlu0 0
          %2556 = vperm.xlu0 %2555, %v2494
          %v2557 = vpop.permute.xlu0 %2556
          %2560 = vset.pattern.permute.xlu0 0
          %2561 = vperm.xlu0 %2560, %v2495
          %v2562 = vpop.permute.xlu0 %2561
          %2565 = vset.pattern.permute.xlu0 0
          %2566 = vperm.xlu0 %2565, %v2496
          %v2567 = vpop.permute.xlu0 %2566
          %2570 = vset.pattern.permute.xlu0 0
          %2571 = vperm.xlu0 %2570, %v2497
          %v2572 = vpop.permute.xlu0 %2571
          %2575 = vset.pattern.permute.xlu0 0
          %2576 = vperm.xlu0 %2575, %v2498
          %v2577 = vpop.permute.xlu0 %2576
          %2580 = vset.pattern.permute.xlu0 0
          %2581 = vperm.xlu0 %2580, %v2499
          %v2582 = vpop.permute.xlu0 %2581
          %2585 = vset.pattern.permute.xlu0 0
          %2586 = vperm.xlu0 %2585, %v2500
          %v2587 = vpop.permute.xlu0 %2586
          %2590 = vset.pattern.permute.xlu0 0
          %2591 = vperm.xlu0 %2590, %v2501
          %v2592 = vpop.permute.xlu0 %2591
          %2595 = vset.pattern.permute.xlu0 0
          %2596 = vperm.xlu0 %2595, %v2502
          %v2597 = vpop.permute.xlu0 %2596
          %v2599 = vmul.f32 %v2503, %v2522
          %v2600 = vmul.f32 %v2504, %v2527
          %v2601 = vmul.f32 %v2505, %v2532
          %v2602 = vmul.f32 %v2506, %v2537
          %v2603 = vmul.f32 %v2507, %v2542
          %v2604 = vmul.f32 %v2508, %v2547
          %v2605 = vmul.f32 %v2509, %v2552
          %v2606 = vmul.f32 %v2510, %v2557
          %v2607 = vmul.f32 %v2511, %v2562
          %v2608 = vmul.f32 %v2512, %v2567
          %v2609 = vmul.f32 %v2513, %v2572
          %v2610 = vmul.f32 %v2514, %v2577
          %v2611 = vmul.f32 %v2515, %v2582
          %v2612 = vmul.f32 %v2516, %v2587
          %v2613 = vmul.f32 %v2517, %v2592
          %v2614 = vmul.f32 %v2518, %v2597
          %s2615 = scalar_lea.vmem [#allocation3], 128
          %v2616 = vld [vmem:[%s2615] sm:$0xff]
          %v2617 = vld [vmem:[%s2615 + $0x8] sm:$0xff]
          %v2618 = vld [vmem:[%s2615 + $0x10] sm:$0xff]
          %v2619 = vld [vmem:[%s2615 + $0x18] sm:$0xff]
          %v2620 = vld [vmem:[%s2615 + $0x20] sm:$0xff]
          %v2621 = vld [vmem:[%s2615 + $0x28] sm:$0xff]
          %v2622 = vld [vmem:[%s2615 + $0x30] sm:$0xff]
          %v2623 = vld [vmem:[%s2615 + $0x38] sm:$0xff]
          %v2624 = vld [vmem:[%s2615 + $0x40] sm:$0xff]
          %v2625 = vld [vmem:[%s2615 + $0x48] sm:$0xff]
          %v2626 = vld [vmem:[%s2615 + $0x50] sm:$0xff]
          %v2627 = vld [vmem:[%s2615 + $0x58] sm:$0xff]
          %v2628 = vld [vmem:[%s2615 + $0x60] sm:$0xff]
          %v2629 = vld [vmem:[%s2615 + $0x68] sm:$0xff]
          %v2630 = vld [vmem:[%s2615 + $0x70] sm:$0xff]
          %v2631 = vld [vmem:[%s2615 + $0x78] sm:$0xff]
          %v2632 = vrcp.pop %v2616
          %v2633 = vrcp.pop %v2617
          %v2634 = vrcp.pop %v2618
          %v2635 = vrcp.pop %v2619
          %v2636 = vrcp.pop %v2620
          %v2637 = vrcp.pop %v2621
          %v2638 = vrcp.pop %v2622
          %v2639 = vrcp.pop %v2623
          %v2640 = vrcp.pop %v2624
          %v2641 = vrcp.pop %v2625
          %v2642 = vrcp.pop %v2626
          %v2643 = vrcp.pop %v2627
          %v2644 = vrcp.pop %v2628
          %v2645 = vrcp.pop %v2629
          %v2646 = vrcp.pop %v2630
          %v2647 = vrcp.pop %v2631
          %2649 = vset.pattern.permute.xlu0 0
          %2650 = vperm.xlu0 %2649, %v2632
          %v2651 = vpop.permute.xlu0 %2650
          %2654 = vset.pattern.permute.xlu0 0
          %2655 = vperm.xlu0 %2654, %v2633
          %v2656 = vpop.permute.xlu0 %2655
          %2659 = vset.pattern.permute.xlu0 0
          %2660 = vperm.xlu0 %2659, %v2634
          %v2661 = vpop.permute.xlu0 %2660
          %2664 = vset.pattern.permute.xlu0 0
          %2665 = vperm.xlu0 %2664, %v2635
          %v2666 = vpop.permute.xlu0 %2665
          %2669 = vset.pattern.permute.xlu0 0
          %2670 = vperm.xlu0 %2669, %v2636
          %v2671 = vpop.permute.xlu0 %2670
          %2674 = vset.pattern.permute.xlu0 0
          %2675 = vperm.xlu0 %2674, %v2637
          %v2676 = vpop.permute.xlu0 %2675
          %2679 = vset.pattern.permute.xlu0 0
          %2680 = vperm.xlu0 %2679, %v2638
          %v2681 = vpop.permute.xlu0 %2680
          %2684 = vset.pattern.permute.xlu0 0
          %2685 = vperm.xlu0 %2684, %v2639
          %v2686 = vpop.permute.xlu0 %2685
          %2689 = vset.pattern.permute.xlu0 0
          %2690 = vperm.xlu0 %2689, %v2640
          %v2691 = vpop.permute.xlu0 %2690
          %2694 = vset.pattern.permute.xlu0 0
          %2695 = vperm.xlu0 %2694, %v2641
          %v2696 = vpop.permute.xlu0 %2695
          %2699 = vset.pattern.permute.xlu0 0
          %2700 = vperm.xlu0 %2699, %v2642
          %v2701 = vpop.permute.xlu0 %2700
          %2704 = vset.pattern.permute.xlu0 0
          %2705 = vperm.xlu0 %2704, %v2643
          %v2706 = vpop.permute.xlu0 %2705
          %2709 = vset.pattern.permute.xlu0 0
          %2710 = vperm.xlu0 %2709, %v2644
          %v2711 = vpop.permute.xlu0 %2710
          %2714 = vset.pattern.permute.xlu0 0
          %2715 = vperm.xlu0 %2714, %v2645
          %v2716 = vpop.permute.xlu0 %2715
          %2719 = vset.pattern.permute.xlu0 0
          %2720 = vperm.xlu0 %2719, %v2646
          %v2721 = vpop.permute.xlu0 %2720
          %2724 = vset.pattern.permute.xlu0 0
          %2725 = vperm.xlu0 %2724, %v2647
          %v2726 = vpop.permute.xlu0 %2725
          %v2728 = vmul.f32 %v2503, %v2651
          %v2729 = vmul.f32 %v2504, %v2656
          %v2730 = vmul.f32 %v2505, %v2661
          %v2731 = vmul.f32 %v2506, %v2666
          %v2732 = vmul.f32 %v2507, %v2671
          %v2733 = vmul.f32 %v2508, %v2676
          %v2734 = vmul.f32 %v2509, %v2681
          %v2735 = vmul.f32 %v2510, %v2686
          %v2736 = vmul.f32 %v2511, %v2691
          %v2737 = vmul.f32 %v2512, %v2696
          %v2738 = vmul.f32 %v2513, %v2701
          %v2739 = vmul.f32 %v2514, %v2706
          %v2740 = vmul.f32 %v2515, %v2711
          %v2741 = vmul.f32 %v2516, %v2716
          %v2742 = vmul.f32 %v2517, %v2721
          %v2743 = vmul.f32 %v2518, %v2726
          %vm2744 = vcmask 523264
          %v2745 = vsel %vm2744, %v2599, %v2728
          %v2746 = vsel %vm2744, %v2600, %v2729
          %v2747 = vsel %vm2744, %v2601, %v2730
          %v2748 = vsel %vm2744, %v2602, %v2731
          %v2749 = vsel %vm2744, %v2603, %v2732
          %v2750 = vsel %vm2744, %v2604, %v2733
          %v2751 = vsel %vm2744, %v2605, %v2734
          %v2752 = vsel %vm2744, %v2606, %v2735
          %v2753 = vsel %vm2744, %v2607, %v2736
          %v2754 = vsel %vm2744, %v2608, %v2737
          %v2755 = vsel %vm2744, %v2609, %v2738
          %v2756 = vsel %vm2744, %v2610, %v2739
          %v2757 = vsel %vm2744, %v2611, %v2740
          %v2758 = vsel %vm2744, %v2612, %v2741
          %v2759 = vsel %vm2744, %v2613, %v2742
          %v2760 = vsel %vm2744, %v2614, %v2743
          %v2761 = vpack.c.bf16 %v2746, %v2745
          %v2762 = vpack.c.bf16 %v2748, %v2747
          %v2763 = vpack.c.bf16 %v2750, %v2749
          %v2764 = vpack.c.bf16 %v2752, %v2751
          %v2765 = vpack.c.bf16 %v2754, %v2753
          %v2766 = vpack.c.bf16 %v2756, %v2755
          %v2767 = vpack.c.bf16 %v2758, %v2757
          %v2768 = vpack.c.bf16 %v2760, %v2759
          %v2777 = vunpack.c.l.b16 %v2761
          %v2778 = vunpack.c.h.b16 %v2761
          %v2779 = vunpack.c.l.b16 %v2762
          %v2780 = vunpack.c.h.b16 %v2762
          %v2781 = vunpack.c.l.b16 %v2763
          %v2782 = vunpack.c.h.b16 %v2763
          %v2783 = vunpack.c.l.b16 %v2764
          %v2784 = vunpack.c.h.b16 %v2764
          %v2785 = vunpack.c.l.b16 %v2765
          %v2786 = vunpack.c.h.b16 %v2765
          %v2787 = vunpack.c.l.b16 %v2766
          %v2788 = vunpack.c.h.b16 %v2766
          %v2789 = vunpack.c.l.b16 %v2767
          %v2790 = vunpack.c.h.b16 %v2767
          %v2791 = vunpack.c.l.b16 %v2768
          %v2792 = vunpack.c.h.b16 %v2768
          %v2793 = vpack.c.b16 %v2777, %v2777
          %v2794 = vpack.c.b16 %v2778, %v2778
          %v2795 = vpack.c.b16 %v2779, %v2779
          %v2796 = vpack.c.b16 %v2780, %v2780
          %v2797 = vpack.c.b16 %v2781, %v2781
          %v2798 = vpack.c.b16 %v2782, %v2782
          %v2799 = vpack.c.b16 %v2783, %v2783
          %v2800 = vpack.c.b16 %v2784, %v2784
          %v2801 = vpack.c.b16 %v2785, %v2785
          %v2802 = vpack.c.b16 %v2786, %v2786
          %v2803 = vpack.c.b16 %v2787, %v2787
          %v2804 = vpack.c.b16 %v2788, %v2788
          %v2805 = vpack.c.b16 %v2789, %v2789
          %v2806 = vpack.c.b16 %v2790, %v2790
          %v2807 = vpack.c.b16 %v2791, %v2791
          %v2808 = vpack.c.b16 %v2792, %v2792
          %2825 = vst [vmem:[%s450] sm:$0xf] %v2793
          %2826 = vst [vmem:[%s450 + $0x4] sm:$0xf] %v2794
          %2827 = vst [vmem:[%s450 + $0x8] sm:$0xf] %v2795
          %2828 = vst [vmem:[%s450 + $0xc] sm:$0xf] %v2796
          %2829 = vst [vmem:[%s450 + $0x10] sm:$0xf] %v2797
          %2830 = vst [vmem:[%s450 + $0x14] sm:$0xf] %v2798
          %2831 = vst [vmem:[%s450 + $0x18] sm:$0xf] %v2799
          %2832 = vst [vmem:[%s450 + $0x1c] sm:$0xf] %v2800
          %2833 = vst [vmem:[%s450 + $0x20] sm:$0xf] %v2801
          %2834 = vst [vmem:[%s450 + $0x24] sm:$0xf] %v2802
          %2835 = vst [vmem:[%s450 + $0x28] sm:$0xf] %v2803
          %2836 = vst [vmem:[%s450 + $0x2c] sm:$0xf] %v2804
          %2837 = vst [vmem:[%s450 + $0x30] sm:$0xf] %v2805
          %2838 = vst [vmem:[%s450 + $0x34] sm:$0xf] %v2806
          %2839 = vst [vmem:[%s450 + $0x38] sm:$0xf] %v2807
          %2840 = vst [vmem:[%s450 + $0x3c] sm:$0xf] %v2808
        $region72: #{var_forward.13} parent=39 // pred_fallthru
          _
        %s2841 = sand.u32 %s230, 1
        %s2842 = scalar_lea.sflag [#allocation9], %s2841
        %s2843 = sand.u32 %s230, 1
        %s2844 = smul.addr %s2843, 64
        %s2845 = scalar_lea.vmem [#allocation16], %s2844
        // Predicated region
        $region73: #{var_forward.13} parent=39 // pred_check
          %p2846 = pneg %p240
        $region74: #{var_forward.13} parent=39 // pred_check_branch
          %2848 = sbr.rel (%p2846) target = $region76
        $region75: #{var_forward.13} parent=39 // pred_region
          %s2849 = smul.u32 16, %s36
          %s2851 = ssub.s32 1024, 1024
          %2852 = vsyncadd %s2842, %s2851
          %s2853 = sadd.s32 %s35, %s2849
          %s2854 = smul.addr %s34, 16
          %s2855 = sadd.s32 %s2853, %s2854
          %s2856 = smul.addr %s2855, 64
          %s2857 = scalar_lea.hbm %s6, %s2856
          %s2858 = sshll.u32 %s2845, 4
          %s2859 = int_to_ptr.vmem [resolvable:$true] %s2858
          %2864 = dma.vmem_to_hbm [thread:$0]  %s2859, 1024, %s2857, %s2842, 64, 64, 4
        $region76: #{var_forward.13} parent=39 // pred_fallthru
          _
      $region40: #{var_forward.13} parent=5 // pred_fallthru
        _
      %p2865 = scmp.le.s32.totalorder 2, %s23
      // Predicated region
      $region77: #{var_forward.13} parent=5 // pred_check
        %p2866 = pneg %p2865
      $region78: #{var_forward.13} parent=5 // pred_check_branch
        %2868 = sbr.rel (%p2866) target = $region80
      $region79: #{var_forward.13} parent=5 // pred_region
        %s2869 = ssub.s32 %s23, 2
        // Predicated region
        $region81: #{var_forward.13} parent=79 // pred_check
          %p2870 = pneg %p246
        $region82: #{var_forward.13} parent=79 // pred_check_branch
          %2872 = sbr.rel (%p2870) target = $region84
        $region83: #{var_forward.13} parent=79 // pred_region
          %s2873 = sand.u32 %s231, 1
          %s2874 = scalar_lea.sflag [#allocation9], %s2873
          %s2875 = sand.u32 %s231, 1
          %s2876 = smul.addr %s2875, 64
          %s2877 = scalar_lea.vmem [#allocation16], %s2876
          %2878 = dma.done %s2874, 1024
        $region84: #{var_forward.13} parent=79 // pred_fallthru
          _
      $region80: #{var_forward.13} parent=5 // pred_fallthru
        _
    $region6: #{var_forward.13} parent=1 // loop_footer
      %s27 = sadd.s32 1, %s23
    $region7: #{var_forward.13} parent=1 // loop_footer_branch
      %22 = sbr.rel target = $region3
    $region8: #{var_forward.13} parent=1 // loop_exit
      _
    %2879 = vsyncpa [#allocation8], 1
    %s2880 = scalar_lea.sflag [#allocation8], 1
    %2881 = vsyncpa %s2880, 1
    %2882 = vsyncpa [#allocation11], 1
    %s2883 = scalar_lea.sflag [#allocation11], 1
    %2884 = vsyncpa %s2883, 1
    %2885 = vsyncpa [#allocation14], 1
    %2886 = vsyncpa [#allocation9], 1
    %s2887 = scalar_lea.sflag [#allocation9], 1
    %2888 = vsyncpa %s2887, 1

// kernel: var_forward.19
$region0: #{var_forward.19}
  #allocation0 [shape = 'u32[]', space=smem, size = 0x4, offset = 0x4, fixed_abs, tag = 'smem constant byte address 0x4 - core index']
  #allocation1 [shape = 'u32[144,128]{1,0:T(1,128)}', space=vmem, size = 0x12000, scoped, tag = 'internal scratch']
  #allocation2 [shape = 'bf16[128,128]{1,0:T(16,128)(2,1)}', space=vmem, size = 0x8000, scoped, tag = 'scratch operand']
  %s0 = inlined_call_operand.hbm [shape: f32[2,128,128], index: 0, kind: input, shape index: {}]
  %s1 = inlined_call_operand.hbm [shape: f32[2,1,128], index: 1, kind: input, shape index: {}]
  %s2 = inlined_call_operand.hbm [shape: f32[2,1,128], index: 2, kind: input, shape index: {}]
  %s3 = inlined_call_operand.hbm [shape: bf16[128,256], index: 3, kind: input, shape index: {}]
  %s4 = inlined_call_operand.hbm [shape: f32[1,256], index: 4, kind: input, shape index: {}]
  %s5 = inlined_call_operand.hbm [shape: f32[2,128,256], index: 5, kind: output, shape index: {}]
  %s6 = sld [smem:[#allocation0]]
  $region77: #{var_forward.19} parent=0
    _
  %s8 = ssub.s32 1, %s6
  %s9 = scalar_select 0, %s8, %s6
  $region1: #{var_forward.19} parent=0
    #allocation3 [shape = 'u8[131072]{0}', space=vmem, size = 0x20000, scoped, tag = 'input window, operand 0']
    #allocation4 [shape = 's32[2]{0}', space=sflag, size = 0x8, scoped, tag = 'scoped memory for var_forward.19']
    #allocation5 [shape = 's32[2]{0}', space=sflag, size = 0x8, scoped, tag = 'scoped memory for var_forward.19']
    #allocation6 [shape = 'u8[1024]{0}', space=vmem, size = 0x400, scoped, tag = 'input window, operand 1']
    #allocation7 [shape = 's32[2]{0}', space=sflag, size = 0x8, scoped, tag = 'scoped memory for var_forward.19']
    #allocation8 [shape = 'u8[1024]{0}', space=vmem, size = 0x400, scoped, tag = 'input window, operand 2']
    #allocation9 [shape = 'u8[65536]{0}', space=vmem, size = 0x10000, scoped, tag = 'input window, operand 3, single buffered']
    #allocation10 [shape = 's32[1]{0}', space=sflag, size = 0x4, scoped, tag = 'scoped memory for var_forward.19']
    #allocation11 [shape = 'u8[1024]{0}', space=vmem, size = 0x400, scoped, tag = 'input window, operand 4, single buffered']
    #allocation12 [shape = 'u8[262144]{0}', space=vmem, size = 0x40000, scoped, tag = 'output window, operand 0']
    %10 = vsyncpa [#allocation4], 0
    %s11 = scalar_lea.sflag [#allocation4], 1
    %12 = vsyncpa %s11, 0
    %13 = vsyncpa [#allocation7], 0
    %s14 = scalar_lea.sflag [#allocation7], 1
    %15 = vsyncpa %s14, 0
    %16 = vsyncpa [#allocation10], 0
    %17 = vsyncpa [#allocation5], 0
    %s18 = scalar_lea.sflag [#allocation5], 1
    %19 = vsyncpa %s18, 0
    loop: start=0, step=1, limit=4
    $region2: #{var_forward.19} parent=1 // loop_pre_header
      _
    $region3: #{var_forward.19} parent=1 // loop_header
      %s21 = sphi 0, %s25
      %p22 = scmp.ge.s32.totalorder %s21, 4
      %s28 = sphi 0, %s47
      %s29 = sphi 0, %s43
      %s30 = sphi 0, %s39
      %s31 = sphi 0, %s28
      %s32 = sphi 0, %s29
      %s33 = sphi 0, %s30
      %s34 = sphi 0, %s31
      %s35 = sphi 0, %s32
      %s36 = sphi 0, %s33
      %s52 = sphi 0, %s54
      %s55 = sphi 0, %s52
      %s56 = sphi 0, %s55
      %s72 = sphi 0, %s56
      %s78 = sphi 0, %s80
      %s81 = sphi 0, %s78
      %s82 = sphi 0, %s81
      %s98 = sphi 0, %s82
      %s104 = sphi 0, %s106
      %s107 = sphi 0, %s104
      %s108 = sphi 0, %s107
      %s124 = sphi 0, %s108
      %s130 = sphi 0, %s132
      %s133 = sphi 0, %s130
      %s134 = sphi 0, %s133
      %s150 = sphi 0, %s134
      %s156 = sphi 0, %s158
      %s159 = sphi 0, %s156
      %s160 = sphi 0, %s159
      %s176 = sphi 0, %s160
      %s186 = sphi 0, %s188
      %s189 = sphi 0, %s186
      %s190 = sphi 0, %s189
      %s206 = sphi 0, %s190
    $region4: #{var_forward.19} parent=1 // loop_header_branch
      %24 = sbr.rel (%p22) target = $region8
    $region5: #{var_forward.19} parent=1 // loop_body
      %s26 = ssub.s32 %s21, 1
      %s27 = ssub.s32 %s21, 2
      %s37 = sadd.s32 1, %s30
      %p38 = scmp.ge.s32.totalorder %s37, 1
      %s39 = scalar_select %p38, 0, %s37
      %s40 = sadd.s32 1, %s29
      %s41 = scalar_select %p38, %s40, %s29
      %p42 = scmp.ge.s32.totalorder %s41, 1
      %s43 = scalar_select %p42, 0, %s41
      %s44 = sadd.s32 1, %s28
      %s45 = scalar_select %p42, %s44, %s28
      %p46 = scmp.ge.s32.totalorder %s45, 2
      %s47 = scalar_select %p46, 0, %s45
      %s48 = ssub.s32 %s28, %s47
      %s49 = ssub.s32 %s29, %s43
      %s50 = sor.u32 %s48, %s49
      %p51 = scmp.eq.s32.totalorder %s50, 0
      %s53 = sadd.s32 %s52, 1
      %s54 = scalar_select %p51, %s52, %s53
      %p57 = pneg %p51
      %p58 = scmp.eq.s32.totalorder %s21, 1
      %p59 = por %p57, %p58
      %p60 = scmp.ne.s32.totalorder %s52, %s55
      %p61 = scmp.eq.s32.totalorder %s21, 0
      %p62 = por %p60, %p61
      %p63 = scmp.ne.s32.totalorder %s52, %s55
      %p64 = scmp.eq.s32.totalorder %s26, 1
      %p65 = por %p63, %p64
      %p66 = scmp.ne.s32.totalorder %s55, %s56
      %p67 = scmp.eq.s32.totalorder %s26, 0
      %p68 = por %p66, %p67
      %p69 = scmp.ne.s32.totalorder %s55, %s56
      %p70 = scmp.eq.s32.totalorder %s27, 1
      %p71 = por %p69, %p70
      %p73 = scmp.ne.s32.totalorder %s56, %s72
      %p74 = scmp.eq.s32.totalorder %s27, 0
      %p75 = por %p73, %p74
      %s76 = ssub.s32 %s28, %s47
      %p77 = scmp.eq.s32.totalorder %s76, 0
      %s79 = sadd.s32 %s78, 1
      %s80 = scalar_select %p77, %s78, %s79
      %p83 = pneg %p77
      %p84 = scmp.eq.s32.totalorder %s21, 1
      %p85 = por %p83, %p84
      %p86 = scmp.ne.s32.totalorder %s78, %s81
      %p87 = scmp.eq.s32.totalorder %s21, 0
      %p88 = por %p86, %p87
      %p89 = scmp.ne.s32.totalorder %s78, %s81
      %p90 = scmp.eq.s32.totalorder %s26, 1
      %p91 = por %p89, %p90
      %p92 = scmp.ne.s32.totalorder %s81, %s82
      %p93 = scmp.eq.s32.totalorder %s26, 0
      %p94 = por %p92, %p93
      %p95 = scmp.ne.s32.totalorder %s81, %s82
      %p96 = scmp.eq.s32.totalorder %s27, 1
      %p97 = por %p95, %p96
      %p99 = scmp.ne.s32.totalorder %s82, %s98
      %p100 = scmp.eq.s32.totalorder %s27, 0
      %p101 = por %p99, %p100
      %s102 = ssub.s32 %s28, %s47
      %p103 = scmp.eq.s32.totalorder %s102, 0
      %s105 = sadd.s32 %s104, 1
      %s106 = scalar_select %p103, %s104, %s105
      %p109 = pneg %p103
      %p110 = scmp.eq.s32.totalorder %s21, 1
      %p111 = por %p109, %p110
      %p112 = scmp.ne.s32.totalorder %s104, %s107
      %p113 = scmp.eq.s32.totalorder %s21, 0
      %p114 = por %p112, %p113
      %p115 = scmp.ne.s32.totalorder %s104, %s107
      %p116 = scmp.eq.s32.totalorder %s26, 1
      %p117 = por %p115, %p116
      %p118 = scmp.ne.s32.totalorder %s107, %s108
      %p119 = scmp.eq.s32.totalorder %s26, 0
      %p120 = por %p118, %p119
      %p121 = scmp.ne.s32.totalorder %s107, %s108
      %p122 = scmp.eq.s32.totalorder %s27, 1
      %p123 = por %p121, %p122
      %p125 = scmp.ne.s32.totalorder %s108, %s124
      %p126 = scmp.eq.s32.totalorder %s27, 0
      %p127 = por %p125, %p126
      %s128 = ssub.s32 %s30, %s39
      %p129 = scmp.eq.s32.totalorder %s128, 0
      %s131 = sadd.s32 %s130, 1
      %s132 = scalar_select %p129, %s130, %s131
      %p135 = pneg %p129
      %p136 = scmp.eq.s32.totalorder %s21, 1
      %p137 = por %p135, %p136
      %p138 = scmp.ne.s32.totalorder %s130, %s133
      %p139 = scmp.eq.s32.totalorder %s21, 0
      %p140 = por %p138, %p139
      %p141 = scmp.ne.s32.totalorder %s130, %s133
      %p142 = scmp.eq.s32.totalorder %s26, 1
      %p143 = por %p141, %p142
      %p144 = scmp.ne.s32.totalorder %s133, %s134
      %p145 = scmp.eq.s32.totalorder %s26, 0
      %p146 = por %p144, %p145
      %p147 = scmp.ne.s32.totalorder %s133, %s134
      %p148 = scmp.eq.s32.totalorder %s27, 1
      %p149 = por %p147, %p148
      %p151 = scmp.ne.s32.totalorder %s134, %s150
      %p152 = scmp.eq.s32.totalorder %s27, 0
      %p153 = por %p151, %p152
      %s154 = ssub.s32 %s30, %s39
      %p155 = scmp.eq.s32.totalorder %s154, 0
      %s157 = sadd.s32 %s156, 1
      %s158 = scalar_select %p155, %s156, %s157
      %p161 = pneg %p155
      %p162 = scmp.eq.s32.totalorder %s21, 1
      %p163 = por %p161, %p162
      %p164 = scmp.ne.s32.totalorder %s156, %s159
      %p165 = scmp.eq.s32.totalorder %s21, 0
      %p166 = por %p164, %p165
      %p167 = scmp.ne.s32.totalorder %s156, %s159
      %p168 = scmp.eq.s32.totalorder %s26, 1
      %p169 = por %p167, %p168
      %p170 = scmp.ne.s32.totalorder %s159, %s160
      %p171 = scmp.eq.s32.totalorder %s26, 0
      %p172 = por %p170, %p171
      %p173 = scmp.ne.s32.totalorder %s159, %s160
      %p174 = scmp.eq.s32.totalorder %s27, 1
      %p175 = por %p173, %p174
      %p177 = scmp.ne.s32.totalorder %s160, %s176
      %p178 = scmp.eq.s32.totalorder %s27, 0
      %p179 = por %p177, %p178
      %s180 = ssub.s32 %s28, %s47
      %s181 = ssub.s32 %s29, %s43
      %s182 = sor.u32 %s180, %s181
      %s183 = ssub.s32 %s30, %s39
      %s184 = sor.u32 %s182, %s183
      %p185 = scmp.eq.s32.totalorder %s184, 0
      %s187 = sadd.s32 %s186, 1
      %s188 = scalar_select %p185, %s186, %s187
      %p191 = pneg %p185
      %p192 = scmp.eq.s32.totalorder %s21, 1
      %p193 = por %p191, %p192
      %p194 = scmp.ne.s32.totalorder %s186, %s189
      %p195 = scmp.eq.s32.totalorder %s21, 0
      %p196 = por %p194, %p195
      %p197 = scmp.ne.s32.totalorder %s186, %s189
      %p198 = scmp.eq.s32.totalorder %s26, 1
      %p199 = por %p197, %p198
      %p200 = scmp.ne.s32.totalorder %s189, %s190
      %p201 = scmp.eq.s32.totalorder %s26, 0
      %p202 = por %p200, %p201
      %p203 = scmp.ne.s32.totalorder %s189, %s190
      %p204 = scmp.eq.s32.totalorder %s27, 1
      %p205 = por %p203, %p204
      %p207 = scmp.ne.s32.totalorder %s190, %s206
      %p208 = scmp.eq.s32.totalorder %s27, 0
      %p209 = por %p207, %p208
      %p210 = scmp.le.s32.totalorder 1, %s21
      %p211 = scmp.lt.s32.totalorder %s21, 3
      %p212 = pnand %p210, %p211
      %p213 = pneg %p212
      // Predicated region
      $region9: #{var_forward.19} parent=5 // pred_check
        _
      $region10: #{var_forward.19} parent=5 // pred_check_branch
        %215 = sbr.rel (%p212) target = $region12
      $region11: #{var_forward.19} parent=5 // pred_region
        %s216 = ssub.s32 %s21, 1
        // Predicated region
        $region13: #{var_forward.19} parent=11 // pred_check
          %p217 = pneg %p146
        $region14: #{var_forward.19} parent=11 // pred_check_branch
          %219 = sbr.rel (%p217) target = $region16
        $region15: #{var_forward.19} parent=11 // pred_region
          %s220 = smul.u32 2, %s33
          %s222 = ssub.s32 2048, 2048
          %223 = vsyncadd [#allocation10], %s222
          %s224 = smul.addr %s220, 64
          %s225 = scalar_lea.hbm %s3, %s224
          %s226 = sshll.u32 [#allocation9], 4
          %s227 = int_to_ptr.vmem [resolvable:$true] %s226
          %232 = dma.hbm_to_vmem [thread:$0]  %s225, 2048, %s227, [#allocation10], 128, 128, 8
        $region16: #{var_forward.19} parent=11 // pred_fallthru
          _
        // Predicated region
        $region17: #{var_forward.19} parent=11 // pred_check
          %p233 = pneg %p172
        $region18: #{var_forward.19} parent=11 // pred_check_branch
          %235 = sbr.rel (%p233) target = $region20
        $region19: #{var_forward.19} parent=11 // pred_region
          %s236 = smul.u32 2, %s33
          %s238 = ssub.s32 32, 32
          %239 = vsyncadd [#allocation10], %s238
          %s240 = smul.addr %s236, 16
          %s241 = scalar_lea.hbm %s4, %s240
          %s243 = sshll.u32 [#allocation11], 4
          %s244 = int_to_ptr.vmem [resolvable:$true] %s243
          %246 = dma.hbm_to_vmem [thread:$0]  %s241, 32, %s244, [#allocation10]
        $region20: #{var_forward.19} parent=11 // pred_fallthru
          _
      $region12: #{var_forward.19} parent=5 // pred_fallthru
        _
      %p247 = scmp.lt.s32.totalorder %s21, 2
      // Predicated region
      $region21: #{var_forward.19} parent=5 // pred_check
        %p248 = pneg %p247
      $region22: #{var_forward.19} parent=5 // pred_check_branch
        %250 = sbr.rel (%p248) target = $region24
      $region23: #{var_forward.19} parent=5 // pred_region
        // Predicated region
        $region25: #{var_forward.19} parent=23 // pred_check
          %p251 = pneg %p62
        $region26: #{var_forward.19} parent=23 // pred_check_branch
          %253 = sbr.rel (%p251) target = $region28
        $region27: #{var_forward.19} parent=23 // pred_region
          %s254 = sand.u32 %s52, 1
          %s255 = scalar_lea.sflag [#allocation4], %s254
          %s256 = sand.u32 %s52, 1
          %s257 = smul.addr %s256, 128
          %s258 = scalar_lea.vmem [#allocation3], %s257
          %s259 = smul.u32 16, %s29
          %s261 = ssub.s32 2048, 2048
          %262 = vsyncadd %s255, %s261
          %s263 = smul.addr %s28, 16
          %s264 = sadd.s32 %s259, %s263
          %s265 = smul.addr %s264, 128
          %s266 = scalar_lea.hbm %s0, %s265
          %s267 = sshll.u32 %s258, 4
          %s268 = int_to_ptr.vmem [resolvable:$true] %s267
          %273 = dma.hbm_to_vmem [thread:$0]  %s266, 2048, %s268, %s255, 128, 128, 8
        $region28: #{var_forward.19} parent=23 // pred_fallthru
          _
        // Predicated region
        $region29: #{var_forward.19} parent=23 // pred_check
          %p274 = pneg %p88
        $region30: #{var_forward.19} parent=23 // pred_check_branch
          %276 = sbr.rel (%p274) target = $region32
        $region31: #{var_forward.19} parent=23 // pred_region
          %s277 = sand.u32 %s21, 1
          %s278 = scalar_lea.sflag [#allocation7], %s277
          %s279 = sand.u32 %s78, 1
          %s280 = scalar_lea.vmem [#allocation6], %s279
          %s282 = ssub.s32 16, 16
          %283 = vsyncadd %s278, %s282
          %s284 = smul.addr %s28, 16
          %s285 = scalar_lea.hbm %s1, %s284
          %s287 = sshll.u32 %s280, 4
          %s288 = int_to_ptr.vmem [resolvable:$true] %s287
          %290 = dma.hbm_to_vmem [thread:$0]  %s285, 16, %s288, %s278
        $region32: #{var_forward.19} parent=23 // pred_fallthru
          _
        // Predicated region
        $region33: #{var_forward.19} parent=23 // pred_check
          %p291 = pneg %p114
        $region34: #{var_forward.19} parent=23 // pred_check_branch
          %293 = sbr.rel (%p291) target = $region36
        $region35: #{var_forward.19} parent=23 // pred_region
          %s294 = sand.u32 %s21, 1
          %s295 = scalar_lea.sflag [#allocation7], %s294
          %s296 = sand.u32 %s104, 1
          %s297 = scalar_lea.vmem [#allocation8], %s296
          %s299 = ssub.s32 16, 16
          %300 = vsyncadd %s295, %s299
          %s301 = smul.addr %s28, 16
          %s302 = scalar_lea.hbm %s2, %s301
          %s304 = sshll.u32 %s297, 4
          %s305 = int_to_ptr.vmem [resolvable:$true] %s304
          %307 = dma.hbm_to_vmem [thread:$0]  %s302, 16, %s305, %s295
        $region36: #{var_forward.19} parent=23 // pred_fallthru
          _
      $region24: #{var_forward.19} parent=5 // pred_fallthru
        _
      %p308 = scmp.le.s32.totalorder 1, %s21
      %p309 = scmp.lt.s32.totalorder %s21, 3
      %p310 = pnand %p308, %p309
      %p311 = pneg %p310
      // Predicated region
      $region37: #{var_forward.19} parent=5 // pred_check
        _
      $region38: #{var_forward.19} parent=5 // pred_check_branch
        %313 = sbr.rel (%p310) target = $region40
      $region39: #{var_forward.19} parent=5 // pred_region
        %s314 = ssub.s32 %s21, 1
        %s315 = sand.u32 %s55, 1
        %s316 = scalar_lea.sflag [#allocation4], %s315
        %s317 = sand.u32 %s55, 1
        %s318 = smul.addr %s317, 128
        %s319 = scalar_lea.vmem [#allocation3], %s318
        // Predicated region
        $region41: #{var_forward.19} parent=39 // pred_check
          %p320 = pneg %p68
        $region42: #{var_forward.19} parent=39 // pred_check_branch
          %322 = sbr.rel (%p320) target = $region44
        $region43: #{var_forward.19} parent=39 // pred_region
          %323 = dma.done %s316, 2048
        $region44: #{var_forward.19} parent=39 // pred_fallthru
          _
        %s324 = sand.u32 %s26, 1
        %s325 = scalar_lea.sflag [#allocation7], %s324
        %s326 = sand.u32 %s81, 1
        %s327 = scalar_lea.vmem [#allocation6], %s326
        // Predicated region
        $region45: #{var_forward.19} parent=39 // pred_check
          %p328 = pneg %p94
        $region46: #{var_forward.19} parent=39 // pred_check_branch
          %330 = sbr.rel (%p328) target = $region48
        $region47: #{var_forward.19} parent=39 // pred_region
          %331 = dma.done %s325, 16
        $region48: #{var_forward.19} parent=39 // pred_fallthru
          _
        %s332 = sand.u32 %s26, 1
        %s333 = scalar_lea.sflag [#allocation7], %s332
        %s334 = sand.u32 %s107, 1
        %s335 = scalar_lea.vmem [#allocation8], %s334
        // Predicated region
        $region49: #{var_forward.19} parent=39 // pred_check
          %p336 = pneg %p120
        $region50: #{var_forward.19} parent=39 // pred_check_branch
          %338 = sbr.rel (%p336) target = $region52
        $region51: #{var_forward.19} parent=39 // pred_region
          %339 = dma.done %s333, 16
        $region52: #{var_forward.19} parent=39 // pred_fallthru
          _
        // Predicated region
        $region53: #{var_forward.19} parent=39 // pred_check
          %p340 = pneg %p146
        $region54: #{var_forward.19} parent=39 // pred_check_branch
          %342 = sbr.rel (%p340) target = $region56
        $region55: #{var_forward.19} parent=39 // pred_region
          %343 = dma.done [#allocation10], 2048
        $region56: #{var_forward.19} parent=39 // pred_fallthru
          _
        // Predicated region
        $region57: #{var_forward.19} parent=39 // pred_check
          %p344 = pneg %p172
        $region58: #{var_forward.19} parent=39 // pred_check_branch
          %346 = sbr.rel (%p344) target = $region60
        $region59: #{var_forward.19} parent=39 // pred_region
          %347 = dma.done [#allocation10], 32
        $region60: #{var_forward.19} parent=39 // pred_fallthru
          _
        %s348 = sand.u32 %s55, 1
        %s349 = scalar_lea.sflag [#allocation4], %s348
        %s350 = sand.u32 %s55, 1
        %s351 = smul.addr %s350, 128
        %s352 = scalar_lea.vmem [#allocation3], %s351
        %p353 = pneg %p68
        %p354 = pneg %p65
        %s355 = sand.u32 %s26, 1
        %s356 = scalar_lea.sflag [#allocation7], %s355
        %s357 = sand.u32 %s81, 1
        %s358 = scalar_lea.vmem [#allocation6], %s357
        %p359 = pneg %p94
        %p360 = pneg %p91
        %s361 = sand.u32 %s26, 1
        %s362 = scalar_lea.sflag [#allocation7], %s361
        %s363 = sand.u32 %s107, 1
        %s364 = scalar_lea.vmem [#allocation8], %s363
        %p365 = pneg %p120
        %p366 = pneg %p117
        %p367 = pneg %p146
        %p368 = pneg %p143
        %p369 = pneg %p172
        %p370 = pneg %p169
        %p371 = pneg %p202
        %p372 = pneg %p199
        %s373 = sand.u32 %s189, 1
        %s374 = scalar_lea.sflag [#allocation5], %s373
        %s375 = sand.u32 %s189, 1
        %s376 = smul.addr %s375, 256
        %s377 = scalar_lea.vmem [#allocation12], %s376
        %s378 = smul.u32 16, %s32
        %s379 = smul.u32 2, %s33
        %s380 = smul.u32 2, %s33
        %s381 = smul.u32 16, %s32
        %s382 = smul.u32 2, %s33
        %p384 = scmp.eq.s32.totalorder %s33, 0
        // Predicated region
        $region61: #{var_forward.19} parent=39 // pred_check
          %p385 = pneg %p384
        $region62: #{var_forward.19} parent=39 // pred_check_branch
          %387 = sbr.rel (%p385) target = $region64
        $region63: #{var_forward.19} parent=39 // pred_region
          %v388 = vld [vmem:[%s319] sm:$0xff]
          %v389 = vld [vmem:[%s319 + $0x8] sm:$0xff]
          %v390 = vld [vmem:[%s319 + $0x10] sm:$0xff]
          %v391 = vld [vmem:[%s319 + $0x18] sm:$0xff]
          %v392 = vld [vmem:[%s319 + $0x20] sm:$0xff]
          %v393 = vld [vmem:[%s319 + $0x28] sm:$0xff]
          %v394 = vld [vmem:[%s319 + $0x30] sm:$0xff]
          %v395 = vld [vmem:[%s319 + $0x38] sm:$0xff]
          %v396 = vld [vmem:[%s319 + $0x40] sm:$0xff]
          %v397 = vld [vmem:[%s319 + $0x48] sm:$0xff]
          %v398 = vld [vmem:[%s319 + $0x50] sm:$0xff]
          %v399 = vld [vmem:[%s319 + $0x58] sm:$0xff]
          %v400 = vld [vmem:[%s319 + $0x60] sm:$0xff]
          %v401 = vld [vmem:[%s319 + $0x68] sm:$0xff]
          %v402 = vld [vmem:[%s319 + $0x70] sm:$0xff]
          %v403 = vld [vmem:[%s319 + $0x78] sm:$0xff]
          %404 = vadd.xlane.f32.xlu0 %v388
          %v405 = vpop.xlane.xlu0 %404
          %406 = vadd.xlane.f32.xlu0 %v389
          %v407 = vpop.xlane.xlu0 %406
          %408 = vadd.xlane.f32.xlu0 %v390
          %v409 = vpop.xlane.xlu0 %408
          %410 = vadd.xlane.f32.xlu0 %v391
          %v411 = vpop.xlane.xlu0 %410
          %412 = vadd.xlane.f32.xlu0 %v392
          %v413 = vpop.xlane.xlu0 %412
          %414 = vadd.xlane.f32.xlu0 %v393
          %v415 = vpop.xlane.xlu0 %414
          %416 = vadd.xlane.f32.xlu0 %v394
          %v417 = vpop.xlane.xlu0 %416
          %418 = vadd.xlane.f32.xlu0 %v395
          %v419 = vpop.xlane.xlu0 %418
          %420 = vadd.xlane.f32.xlu0 %v396
          %v421 = vpop.xlane.xlu0 %420
          %422 = vadd.xlane.f32.xlu0 %v397
          %v423 = vpop.xlane.xlu0 %422
          %424 = vadd.xlane.f32.xlu0 %v398
          %v425 = vpop.xlane.xlu0 %424
          %426 = vadd.xlane.f32.xlu0 %v399
          %v427 = vpop.xlane.xlu0 %426
          %428 = vadd.xlane.f32.xlu0 %v400
          %v429 = vpop.xlane.xlu0 %428
          %430 = vadd.xlane.f32.xlu0 %v401
          %v431 = vpop.xlane.xlu0 %430
          %432 = vadd.xlane.f32.xlu0 %v402
          %v433 = vpop.xlane.xlu0 %432
          %434 = vadd.xlane.f32.xlu0 %v403
          %v435 = vpop.xlane.xlu0 %434
          %v436 = vrcp.pop 128.0
          %v437 = vmul.f32 %v405, %v436
          %v438 = vmul.f32 %v407, %v436
          %v439 = vmul.f32 %v409, %v436
          %v440 = vmul.f32 %v411, %v436
          %v441 = vmul.f32 %v413, %v436
          %v442 = vmul.f32 %v415, %v436
          %v443 = vmul.f32 %v417, %v436
          %v444 = vmul.f32 %v419, %v436
          %v445 = vmul.f32 %v421, %v436
          %v446 = vmul.f32 %v423, %v436
          %v447 = vmul.f32 %v425, %v436
          %v448 = vmul.f32 %v427, %v436
          %v449 = vmul.f32 %v429, %v436
          %v450 = vmul.f32 %v431, %v436
          %v451 = vmul.f32 %v433, %v436
          %v452 = vmul.f32 %v435, %v436
          %v453 = vsub.f32 %v388, %v437
          %v454 = vsub.f32 %v389, %v438
          %v455 = vsub.f32 %v390, %v439
          %v456 = vsub.f32 %v391, %v440
          %v457 = vsub.f32 %v392, %v441
          %v458 = vsub.f32 %v393, %v442
          %v459 = vsub.f32 %v394, %v443
          %v460 = vsub.f32 %v395, %v444
          %v461 = vsub.f32 %v396, %v445
          %v462 = vsub.f32 %v397, %v446
          %v463 = vsub.f32 %v398, %v447
          %v464 = vsub.f32 %v399, %v448
          %v465 = vsub.f32 %v400, %v449
          %v466 = vsub.f32 %v401, %v450
          %v467 = vsub.f32 %v402, %v451
          %v468 = vsub.f32 %v403, %v452
          %v469 = vmul.f32 %v453, %v453
          %v470 = vmul.f32 %v454, %v454
          %v471 = vmul.f32 %v455, %v455
          %v472 = vmul.f32 %v456, %v456
          %v473 = vmul.f32 %v457, %v457
          %v474 = vmul.f32 %v458, %v458
          %v475 = vmul.f32 %v459, %v459
          %v476 = vmul.f32 %v460, %v460
          %v477 = vmul.f32 %v461, %v461
          %v478 = vmul.f32 %v462, %v462
          %v479 = vmul.f32 %v463, %v463
          %v480 = vmul.f32 %v464, %v464
          %v481 = vmul.f32 %v465, %v465
          %v482 = vmul.f32 %v466, %v466
          %v483 = vmul.f32 %v467, %v467
          %v484 = vmul.f32 %v468, %v468
          %485 = vadd.xlane.f32.xlu0 %v469
          %v486 = vpop.xlane.xlu0 %485
          %487 = vadd.xlane.f32.xlu0 %v470
          %v488 = vpop.xlane.xlu0 %487
          %489 = vadd.xlane.f32.xlu0 %v471
          %v490 = vpop.xlane.xlu0 %489
          %491 = vadd.xlane.f32.xlu0 %v472
          %v492 = vpop.xlane.xlu0 %491
          %493 = vadd.xlane.f32.xlu0 %v473
          %v494 = vpop.xlane.xlu0 %493
          %495 = vadd.xlane.f32.xlu0 %v474
          %v496 = vpop.xlane.xlu0 %495
          %497 = vadd.xlane.f32.xlu0 %v475
          %v498 = vpop.xlane.xlu0 %497
          %499 = vadd.xlane.f32.xlu0 %v476
          %v500 = vpop.xlane.xlu0 %499
          %501 = vadd.xlane.f32.xlu0 %v477
          %v502 = vpop.xlane.xlu0 %501
          %503 = vadd.xlane.f32.xlu0 %v478
          %v504 = vpop.xlane.xlu0 %503
          %505 = vadd.xlane.f32.xlu0 %v479
          %v506 = vpop.xlane.xlu0 %505
          %507 = vadd.xlane.f32.xlu0 %v480
          %v508 = vpop.xlane.xlu0 %507
          %509 = vadd.xlane.f32.xlu0 %v481
          %v510 = vpop.xlane.xlu0 %509
          %511 = vadd.xlane.f32.xlu0 %v482
          %v512 = vpop.xlane.xlu0 %511
          %513 = vadd.xlane.f32.xlu0 %v483
          %v514 = vpop.xlane.xlu0 %513
          %515 = vadd.xlane.f32.xlu0 %v484
          %v516 = vpop.xlane.xlu0 %515
          %v517 = vmul.f32 %v486, %v436
          %v518 = vmul.f32 %v488, %v436
          %v519 = vmul.f32 %v490, %v436
          %v520 = vmul.f32 %v492, %v436
          %v521 = vmul.f32 %v494, %v436
          %v522 = vmul.f32 %v496, %v436
          %v523 = vmul.f32 %v498, %v436
          %v524 = vmul.f32 %v500, %v436
          %v525 = vmul.f32 %v502, %v436
          %v526 = vmul.f32 %v504, %v436
          %v527 = vmul.f32 %v506, %v436
          %v528 = vmul.f32 %v508, %v436
          %v529 = vmul.f32 %v510, %v436
          %v530 = vmul.f32 %v512, %v436
          %v531 = vmul.f32 %v514, %v436
          %v532 = vmul.f32 %v516, %v436
          %v533 = vadd.f32 %v517, 1e-06
          %v534 = vadd.f32 %v518, 1e-06
          %v535 = vadd.f32 %v519, 1e-06
          %v536 = vadd.f32 %v520, 1e-06
          %v537 = vadd.f32 %v521, 1e-06
          %v538 = vadd.f32 %v522, 1e-06
          %v539 = vadd.f32 %v523, 1e-06
          %v540 = vadd.f32 %v524, 1e-06
          %v541 = vadd.f32 %v525, 1e-06
          %v542 = vadd.f32 %v526, 1e-06
          %v543 = vadd.f32 %v527, 1e-06
          %v544 = vadd.f32 %v528, 1e-06
          %v545 = vadd.f32 %v529, 1e-06
          %v546 = vadd.f32 %v530, 1e-06
          %v547 = vadd.f32 %v531, 1e-06
          %v548 = vadd.f32 %v532, 1e-06
          %v549 = vrsqrt.pop %v533
          %v550 = vrsqrt.pop %v534
          %v551 = vrsqrt.pop %v535
          %v552 = vrsqrt.pop %v536
          %v553 = vrsqrt.pop %v537
          %v554 = vrsqrt.pop %v538
          %v555 = vrsqrt.pop %v539
          %v556 = vrsqrt.pop %v540
          %v557 = vrsqrt.pop %v541
          %v558 = vrsqrt.pop %v542
          %v559 = vrsqrt.pop %v543
          %v560 = vrsqrt.pop %v544
          %v561 = vrsqrt.pop %v545
          %v562 = vrsqrt.pop %v546
          %v563 = vrsqrt.pop %v547
          %v564 = vrsqrt.pop %v548
          %v565 = vmul.f32 %v453, %v549
          %v566 = vmul.f32 %v454, %v550
          %v567 = vmul.f32 %v455, %v551
          %v568 = vmul.f32 %v456, %v552
          %v569 = vmul.f32 %v457, %v553
          %v570 = vmul.f32 %v458, %v554
          %v571 = vmul.f32 %v459, %v555
          %v572 = vmul.f32 %v460, %v556
          %v573 = vmul.f32 %v461, %v557
          %v574 = vmul.f32 %v462, %v558
          %v575 = vmul.f32 %v463, %v559
          %v576 = vmul.f32 %v464, %v560
          %v577 = vmul.f32 %v465, %v561
          %v578 = vmul.f32 %v466, %v562
          %v579 = vmul.f32 %v467, %v563
          %v580 = vmul.f32 %v468, %v564
          %v581 = vld [vmem:[%s327] sm:$0x1]
          %v582 = vadd.f32 %v581, 1.0
          %v584 = vlaneseq
          %v585 = vshrl.u32 %v584, 7
          %v586 = vsub.s32 0, %v585
          %v587 = vrot.slane %v582, %v586
          %v589 = vmul.f32 %v565, %v587
          %v590 = vmul.f32 %v566, %v587
          %v591 = vmul.f32 %v567, %v587
          %v592 = vmul.f32 %v568, %v587
          %v593 = vmul.f32 %v569, %v587
          %v594 = vmul.f32 %v570, %v587
          %v595 = vmul.f32 %v571, %v587
          %v596 = vmul.f32 %v572, %v587
          %v597 = vmul.f32 %v573, %v587
          %v598 = vmul.f32 %v574, %v587
          %v599 = vmul.f32 %v575, %v587
          %v600 = vmul.f32 %v576, %v587
          %v601 = vmul.f32 %v577, %v587
          %v602 = vmul.f32 %v578, %v587
          %v603 = vmul.f32 %v579, %v587
          %v604 = vmul.f32 %v580, %v587
          %v605 = vld [vmem:[%s335] sm:$0x1]
          %v607 = vlaneseq
          %v608 = vshrl.u32 %v607, 7
          %v609 = vsub.s32 0, %v608
          %v610 = vrot.slane %v605, %v609
          %v612 = vadd.f32 %v589, %v610
          %v613 = vadd.f32 %v590, %v610
          %v614 = vadd.f32 %v591, %v610
          %v615 = vadd.f32 %v592, %v610
          %v616 = vadd.f32 %v593, %v610
          %v617 = vadd.f32 %v594, %v610
          %v618 = vadd.f32 %v595, %v610
          %v619 = vadd.f32 %v596, %v610
          %v620 = vadd.f32 %v597, %v610
          %v621 = vadd.f32 %v598, %v610
          %v622 = vadd.f32 %v599, %v610
          %v623 = vadd.f32 %v600, %v610
          %v624 = vadd.f32 %v601, %v610
          %v625 = vadd.f32 %v602, %v610
          %v626 = vadd.f32 %v603, %v610
          %v627 = vadd.f32 %v604, %v610
          %v628 = vpack.c.bf16 %v613, %v612
          %v629 = vpack.c.bf16 %v615, %v614
          %v630 = vpack.c.bf16 %v617, %v616
          %v631 = vpack.c.bf16 %v619, %v618
          %v632 = vpack.c.bf16 %v621, %v620
          %v633 = vpack.c.bf16 %v623, %v622
          %v634 = vpack.c.bf16 %v625, %v624
          %v635 = vpack.c.bf16 %v627, %v626
          %636 = vst [vmem:[#allocation2] sm:$0xff] %v628
          %637 = vst [vmem:[#allocation2 + $0x8] sm:$0xff] %v629
          %638 = vst [vmem:[#allocation2 + $0x10] sm:$0xff] %v630
          %639 = vst [vmem:[#allocation2 + $0x18] sm:$0xff] %v631
          %640 = vst [vmem:[#allocation2 + $0x20] sm:$0xff] %v632
          %641 = vst [vmem:[#allocation2 + $0x28] sm:$0xff] %v633
          %642 = vst [vmem:[#allocation2 + $0x30] sm:$0xff] %v634
          %643 = vst [vmem:[#allocation2 + $0x38] sm:$0xff] %v635
        $region64: #{var_forward.19} parent=39 // pred_fallthru
          _
        %v644 = vld [vmem:[#allocation2] sm:$0xff]
        %v645 = vld [vmem:[#allocation2 + $0x8] sm:$0xff]
        %v646 = vld [vmem:[#allocation2 + $0x10] sm:$0xff]
        %v647 = vld [vmem:[#allocation2 + $0x18] sm:$0xff]
        %v648 = vld [vmem:[#allocation2 + $0x20] sm:$0xff]
        %v649 = vld [vmem:[#allocation2 + $0x28] sm:$0xff]
        %v650 = vld [vmem:[#allocation2 + $0x30] sm:$0xff]
        %v651 = vld [vmem:[#allocation2 + $0x38] sm:$0xff]
        %v652 = vld [vmem:[#allocation9] sm:$0xff]
        %v653 = vld [vmem:[#allocation9 + $0x8] sm:$0xff]
        %v654 = vld [vmem:[#allocation9 + $0x10] sm:$0xff]
        %v655 = vld [vmem:[#allocation9 + $0x18] sm:$0xff]
        %v656 = vld [vmem:[#allocation9 + $0x20] sm:$0xff]
        %v657 = vld [vmem:[#allocation9 + $0x28] sm:$0xff]
        %v658 = vld [vmem:[#allocation9 + $0x30] sm:$0xff]
        %v659 = vld [vmem:[#allocation9 + $0x38] sm:$0xff]
        %v660 = vld [vmem:[#allocation9 + $0x40] sm:$0xff]
        %v661 = vld [vmem:[#allocation9 + $0x48] sm:$0xff]
        %v662 = vld [vmem:[#allocation9 + $0x50] sm:$0xff]
        %v663 = vld [vmem:[#allocation9 + $0x58] sm:$0xff]
        %v664 = vld [vmem:[#allocation9 + $0x60] sm:$0xff]
        %v665 = vld [vmem:[#allocation9 + $0x68] sm:$0xff]
        %v666 = vld [vmem:[#allocation9 + $0x70] sm:$0xff]
        %v667 = vld [vmem:[#allocation9 + $0x78] sm:$0xff]
        %v668 = vld [vmem:[#allocation11] sm:$0x3]
        %v670 = vlaneseq
        %v671 = vshrl.u32 %v670, 7
        %v672 = vsub.s32 0, %v671
        %v673 = vrot.slane %v668, %v672
        %v674 = vlaneseq
        %v675 = vshrl.u32 %v674, 7
        %v676 = vsub.s32 1, %v675
        %v677 = vrot.slane %v668, %v676
        %v696 = vunpack.c.l.b16 %v652
        %v697 = vunpack.c.h.b16 %v652
        %v698 = vunpack.c.l.b16 %v653
        %v699 = vunpack.c.h.b16 %v653
        %v700 = vunpack.c.l.b16 %v654
        %v701 = vunpack.c.h.b16 %v654
        %v702 = vunpack.c.l.b16 %v655
        %v703 = vunpack.c.h.b16 %v655
        %v704 = vunpack.c.l.b16 %v656
        %v705 = vunpack.c.h.b16 %v656
        %v706 = vunpack.c.l.b16 %v657
        %v707 = vunpack.c.h.b16 %v657
        %v708 = vunpack.c.l.b16 %v658
        %v709 = vunpack.c.h.b16 %v658
        %v710 = vunpack.c.l.b16 %v659
        %v711 = vunpack.c.h.b16 %v659
        %v712 = vunpack.c.l.b16 %v660
        %v713 = vunpack.c.h.b16 %v660
        %v714 = vunpack.c.l.b16 %v661
        %v715 = vunpack.c.h.b16 %v661
        %v716 = vunpack.c.l.b16 %v662
        %v717 = vunpack.c.h.b16 %v662
        %v718 = vunpack.c.l.b16 %v663
        %v719 = vunpack.c.h.b16 %v663
        %v720 = vunpack.c.l.b16 %v664
        %v721 = vunpack.c.h.b16 %v664
        %v722 = vunpack.c.l.b16 %v665
        %v723 = vunpack.c.h.b16 %v665
        %v724 = vunpack.c.l.b16 %v666
        %v725 = vunpack.c.h.b16 %v666
        %v726 = vunpack.c.l.b16 %v667
        %v727 = vunpack.c.h.b16 %v667
        %v728 = vpack.c.b16 %v698, %v696
        %v729 = vpack.c.b16 %v699, %v697
        %v730 = vpack.c.b16 %v702, %v700
        %v731 = vpack.c.b16 %v703, %v701
        %v732 = vpack.c.b16 %v706, %v704
        %v733 = vpack.c.b16 %v707, %v705
        %v734 = vpack.c.b16 %v710, %v708
        %v735 = vpack.c.b16 %v711, %v709
        %v736 = vpack.c.b16 %v714, %v712
        %v737 = vpack.c.b16 %v715, %v713
        %v738 = vpack.c.b16 %v718, %v716
        %v739 = vpack.c.b16 %v719, %v717
        %v740 = vpack.c.b16 %v722, %v720
        %v741 = vpack.c.b16 %v723, %v721
        %v742 = vpack.c.b16 %v726, %v724
        %v743 = vpack.c.b16 %v727, %v725
        %760 = vmatprep.subr.bf16.mxu0 %v729
        %761 = vmatpush1.bf16.msra.mxu0 %v728
        %762 = vmatprep.subr.bf16.mxu0 %v731
        %763 = vmatpush1.bf16.msra.mxu0 %v730
        %764 = vmatprep.subr.bf16.mxu0 %v733
        %765 = vmatpush1.bf16.msra.mxu0 %v732
        %766 = vmatprep.subr.bf16.mxu0 %v735
        %767 = vmatpush1.bf16.msra.mxu0 %v734
        %768 = vmatprep.subr.bf16.mxu0 %v737
        %769 = vmatpush1.bf16.msra.mxu0 %v736
        %770 = vmatprep.subr.bf16.mxu0 %v739
        %771 = vmatpush1.bf16.msra.mxu0 %v738
        %772 = vmatprep.subr.bf16.mxu0 %v741
        %773 = vmatpush1.bf16.msra.mxu0 %v740
        %774 = vmatprep.subr.bf16.mxu0 %v743
        %775 = vmatpush1.bf16.msra.mxu0 %v742
        %776 = vmatprep.subr.bf16.mxu0 0
        %777 = vmatpush1.bf16.msra.mxu0 0
        %778 = vmatprep.subr.bf16.mxu0 0
        %779 = vmatpush1.bf16.msra.mxu0 0
        %780 = vmatprep.subr.bf16.mxu0 0
        %781 = vmatpush1.bf16.msra.mxu0 0
        %782 = vmatprep.subr.bf16.mxu0 0
        %783 = vmatpush1.bf16.msra.mxu0 0
        %784 = vmatprep.subr.bf16.mxu0 0
        %785 = vmatpush1.bf16.msra.mxu0 0
        %786 = vmatprep.subr.bf16.mxu0 0
        %787 = vmatpush1.bf16.msra.mxu0 0
        %788 = vmatprep.subr.bf16.mxu0 0
        %789 = vmatpush1.bf16.msra.mxu0 0
        %790 = vmatprep.subr.bf16.mxu0 0
        %791 = vmatpush1.bf16.msra.mxu0 0
        %792 = vmatprep.mubr.bf16.mxu0 0
        %793 = vmatmul.mubr.bf16.gmra.mrb[0].mxu0 %v644
        %v794 = vpop.f32.mrb[0].mxu0
        %v795 = vadd.f32 %v673, %v794
        %v796 = vpop.f32.mrb[0].mxu0
        %v797 = vadd.f32 %v677, %v796
        %v798 = vpop.f32.mrb[0].mxu0
        %v799 = vadd.f32 %v673, %v798
        %v800 = vpop.f32.mrb[0].mxu0
        %v801 = vadd.f32 %v677, %v800
        %802 = vmatprep.mubr.bf16.mxu0 0
        %803 = vmatmul.mubr.bf16.gmra.mrb[0].mxu0 %v645
        %v804 = vpop.f32.mrb[0].mxu0
        %v805 = vadd.f32 %v673, %v804
        %v806 = vpop.f32.mrb[0].mxu0
        %v807 = vadd.f32 %v677, %v806
        %v808 = vpop.f32.mrb[0].mxu0
        %v809 = vadd.f32 %v673, %v808
        %v810 = vpop.f32.mrb[0].mxu0
        %v811 = vadd.f32 %v677, %v810
        %812 = vmatprep.mubr.bf16.mxu0 0
        %813 = vmatmul.mubr.bf16.gmra.mrb[0].mxu0 %v646
        %v814 = vpop.f32.mrb[0].mxu0
        %v815 = vadd.f32 %v673, %v814
        %v816 = vpop.f32.mrb[0].mxu0
        %v817 = vadd.f32 %v677, %v816
        %v818 = vpop.f32.mrb[0].mxu0
        %v819 = vadd.f32 %v673, %v818
        %v820 = vpop.f32.mrb[0].mxu0
        %v821 = vadd.f32 %v677, %v820
        %822 = vmatprep.mubr.bf16.mxu0 0
        %823 = vmatmul.mubr.bf16.gmra.mrb[0].mxu0 %v647
        %v824 = vpop.f32.mrb[0].mxu0
        %v825 = vadd.f32 %v673, %v824
        %v826 = vpop.f32.mrb[0].mxu0
        %v827 = vadd.f32 %v677, %v826
        %v828 = vpop.f32.mrb[0].mxu0
        %v829 = vadd.f32 %v673, %v828
        %v830 = vpop.f32.mrb[0].mxu0
        %v831 = vadd.f32 %v677, %v830
        %832 = vmatprep.mubr.bf16.mxu0 0
        %833 = vmatmul.mubr.bf16.gmra.mrb[0].mxu0 %v648
        %v834 = vpop.f32.mrb[0].mxu0
        %v835 = vadd.f32 %v673, %v834
        %v836 = vpop.f32.mrb[0].mxu0
        %v837 = vadd.f32 %v677, %v836
        %v838 = vpop.f32.mrb[0].mxu0
        %v839 = vadd.f32 %v673, %v838
        %v840 = vpop.f32.mrb[0].mxu0
        %v841 = vadd.f32 %v677, %v840
        %842 = vmatprep.mubr.bf16.mxu0 0
        %843 = vmatmul.mubr.bf16.gmra.mrb[0].mxu0 %v649
        %v844 = vpop.f32.mrb[0].mxu0
        %v845 = vadd.f32 %v673, %v844
        %v846 = vpop.f32.mrb[0].mxu0
        %v847 = vadd.f32 %v677, %v846
        %v848 = vpop.f32.mrb[0].mxu0
        %v849 = vadd.f32 %v673, %v848
        %v850 = vpop.f32.mrb[0].mxu0
        %v851 = vadd.f32 %v677, %v850
        %852 = vmatprep.mubr.bf16.mxu0 0
        %853 = vmatmul.mubr.bf16.gmra.mrb[0].mxu0 %v650
        %v854 = vpop.f32.mrb[0].mxu0
        %v855 = vadd.f32 %v673, %v854
        %v856 = vpop.f32.mrb[0].mxu0
        %v857 = vadd.f32 %v677, %v856
        %v858 = vpop.f32.mrb[0].mxu0
        %v859 = vadd.f32 %v673, %v858
        %v860 = vpop.f32.mrb[0].mxu0
        %v861 = vadd.f32 %v677, %v860
        %862 = vmatprep.mubr.bf16.mxu0 0
        %863 = vmatmul.mubr.bf16.gmra.mrb[0].mxu0 %v651
        %v864 = vpop.f32.mrb[0].mxu0
        %v865 = vadd.f32 %v673, %v864
        %v866 = vpop.f32.mrb[0].mxu0
        %v867 = vadd.f32 %v677, %v866
        %v868 = vpop.f32.mrb[0].mxu0
        %v869 = vadd.f32 %v673, %v868
        %v870 = vpop.f32.mrb[0].mxu0
        %v871 = vadd.f32 %v677, %v870
        %872 = vdwg.mxu0
        %873 = vst [vmem:[%s377] sm:$0xff] %v795
        %874 = vst [vmem:[%s377 + $0x8] sm:$0xff] %v797
        %875 = vst [vmem:[%s377 + $0x10] sm:$0xff] %v799
        %876 = vst [vmem:[%s377 + $0x18] sm:$0xff] %v801
        %877 = vst [vmem:[%s377 + $0x20] sm:$0xff] %v805
        %878 = vst [vmem:[%s377 + $0x28] sm:$0xff] %v807
        %879 = vst [vmem:[%s377 + $0x30] sm:$0xff] %v809
        %880 = vst [vmem:[%s377 + $0x38] sm:$0xff] %v811
        %881 = vst [vmem:[%s377 + $0x40] sm:$0xff] %v815
        %882 = vst [vmem:[%s377 + $0x48] sm:$0xff] %v817
        %883 = vst [vmem:[%s377 + $0x50] sm:$0xff] %v819
        %884 = vst [vmem:[%s377 + $0x58] sm:$0xff] %v821
        %885 = vst [vmem:[%s377 + $0x60] sm:$0xff] %v825
        %886 = vst [vmem:[%s377 + $0x68] sm:$0xff] %v827
        %887 = vst [vmem:[%s377 + $0x70] sm:$0xff] %v829
        %888 = vst [vmem:[%s377 + $0x78] sm:$0xff] %v831
        %889 = vst [vmem:[%s377 + $0x80] sm:$0xff] %v835
        %890 = vst [vmem:[%s377 + $0x88] sm:$0xff] %v837
        %891 = vst [vmem:[%s377 + $0x90] sm:$0xff] %v839
        %892 = vst [vmem:[%s377 + $0x98] sm:$0xff] %v841
        %893 = vst [vmem:[%s377 + $0xa0] sm:$0xff] %v845
        %894 = vst [vmem:[%s377 + $0xa8] sm:$0xff] %v847
        %895 = vst [vmem:[%s377 + $0xb0] sm:$0xff] %v849
        %896 = vst [vmem:[%s377 + $0xb8] sm:$0xff] %v851
        %897 = vst [vmem:[%s377 + $0xc0] sm:$0xff] %v855
        %898 = vst [vmem:[%s377 + $0xc8] sm:$0xff] %v857
        %899 = vst [vmem:[%s377 + $0xd0] sm:$0xff] %v859
        %900 = vst [vmem:[%s377 + $0xd8] sm:$0xff] %v861
        %901 = vst [vmem:[%s377 + $0xe0] sm:$0xff] %v865
        %902 = vst [vmem:[%s377 + $0xe8] sm:$0xff] %v867
        %903 = vst [vmem:[%s377 + $0xf0] sm:$0xff] %v869
        %904 = vst [vmem:[%s377 + $0xf8] sm:$0xff] %v871
        %s905 = sand.u32 %s189, 1
        %s906 = scalar_lea.sflag [#allocation5], %s905
        %s907 = sand.u32 %s189, 1
        %s908 = smul.addr %s907, 256
        %s909 = scalar_lea.vmem [#allocation12], %s908
        // Predicated region
        $region65: #{var_forward.19} parent=39 // pred_check
          %p910 = pneg %p199
        $region66: #{var_forward.19} parent=39 // pred_check_branch
          %912 = sbr.rel (%p910) target = $region68
        $region67: #{var_forward.19} parent=39 // pred_region
          %s913 = smul.u32 16, %s32
          %s914 = smul.u32 2, %s33
          %s916 = ssub.s32 4096, 4096
          %917 = vsyncadd %s906, %s916
          %s918 = smul.addr %s913, 2
          %s919 = sadd.s32 %s914, %s918
          %s920 = smul.addr %s31, 32
          %s921 = sadd.s32 %s919, %s920
          %s922 = smul.addr %s921, 128
          %s923 = scalar_lea.hbm %s5, %s922
          %s924 = sshll.u32 %s909, 4
          %s925 = int_to_ptr.vmem [resolvable:$true] %s924
          %930 = dma.vmem_to_hbm [thread:$0]  %s925, 4096, %s923, %s906, 256, 256, 16
        $region68: #{var_forward.19} parent=39 // pred_fallthru
          _
      $region40: #{var_forward.19} parent=5 // pred_fallthru
        _
      %p931 = scmp.le.s32.totalorder 2, %s21
      // Predicated region
      $region69: #{var_forward.19} parent=5 // pred_check
        %p932 = pneg %p931
      $region70: #{var_forward.19} parent=5 // pred_check_branch
        %934 = sbr.rel (%p932) target = $region72
      $region71: #{var_forward.19} parent=5 // pred_region
        %s935 = ssub.s32 %s21, 2
        // Predicated region
        $region73: #{var_forward.19} parent=71 // pred_check
          %p936 = pneg %p205
        $region74: #{var_forward.19} parent=71 // pred_check_branch
          %938 = sbr.rel (%p936) target = $region76
        $region75: #{var_forward.19} parent=71 // pred_region
          %s939 = sand.u32 %s190, 1
          %s940 = scalar_lea.sflag [#allocation5], %s939
          %s941 = sand.u32 %s190, 1
          %s942 = smul.addr %s941, 256
          %s943 = scalar_lea.vmem [#allocation12], %s942
          %944 = dma.done %s940, 4096
        $region76: #{var_forward.19} parent=71 // pred_fallthru
          _
      $region72: #{var_forward.19} parent=5 // pred_fallthru
        _
    $region6: #{var_forward.19} parent=1 // loop_footer
      %s25 = sadd.s32 1, %s21
    $region7: #{var_forward.19} parent=1 // loop_footer_branch
      %20 = sbr.rel target = $region3
    $region8: #{var_forward.19} parent=1 // loop_exit
      _
    %945 = vsyncpa [#allocation4], 1
    %s946 = scalar_lea.sflag [#allocation4], 1
    %947 = vsyncpa %s946, 1
    %948 = vsyncpa [#allocation7], 1
    %s949 = scalar_lea.sflag [#allocation7], 1
    %950 = vsyncpa %s949, 1
    %951 = vsyncpa [#allocation10], 1
    %952 = vsyncpa [#allocation5], 1
    %s953 = scalar_lea.sflag [#allocation5], 1
    %954 = vsyncpa %s953, 1

// kernel: var_forward.14
$region0: #{var_forward.14}
  #allocation0 [shape = 'u32[]', space=smem, size = 0x4, offset = 0x4, fixed_abs, tag = 'smem constant byte address 0x4 - core index']
  #allocation1 [shape = 'u32[144,128]{1,0:T(1,128)}', space=vmem, size = 0x12000, scoped, tag = 'internal scratch']
  %s0 = inlined_call_operand.hbm [shape: f32[2,128,128], index: 0, kind: input, shape index: {}, may-alias: {0,12}]
  %s1 = inlined_call_operand.hbm [shape: bf16[2,128,128], index: 1, kind: input, shape index: {}]
  %s2 = inlined_call_operand.hbm [shape: f32[2,1,128], index: 2, kind: input, shape index: {}]
  %s3 = inlined_call_operand.hbm [shape: f32[2,1,128], index: 3, kind: input, shape index: {}]
  %s4 = inlined_call_operand.hbm [shape: f32[2,1,128], index: 4, kind: input, shape index: {}]
  %s5 = inlined_call_operand.hbm [shape: f32[2,1,128], index: 5, kind: input, shape index: {}]
  %s6 = inlined_call_operand.hbm [shape: bf16[128,128], index: 6, kind: input, shape index: {}]
  %s7 = inlined_call_operand.hbm [shape: f32[1,128], index: 7, kind: input, shape index: {}]
  %s8 = inlined_call_operand.hbm [shape: bf16[128,512], index: 8, kind: input, shape index: {}]
  %s9 = inlined_call_operand.hbm [shape: f32[1,512], index: 9, kind: input, shape index: {}]
  %s10 = inlined_call_operand.hbm [shape: bf16[512,128], index: 10, kind: input, shape index: {}]
  %s11 = inlined_call_operand.hbm [shape: f32[1,128], index: 11, kind: input, shape index: {}]
  %s12 = inlined_call_operand.hbm [shape: f32[2,128,128], index: 12, kind: output, shape index: {}, may-alias: {0,12}]
  %s13 = sld [smem:[#allocation0]]
  $region129: #{var_forward.14} parent=0
    _
  %s15 = ssub.s32 1, %s13
  %s16 = scalar_select 0, %s15, %s13
  $region1: #{var_forward.14} parent=0
    #allocation2 [shape = 'u8[131072]{0}', space=vmem, size = 0x20000, scoped, tag = 'input window, operand 0']
    #allocation3 [shape = 's32[2]{0}', space=sflag, size = 0x8, scoped, tag = 'scoped memory for var_forward.14']
    #allocation4 [shape = 's32[2]{0}', space=sflag, size = 0x8, scoped, tag = 'scoped memory for var_forward.14']
    #allocation5 [shape = 'u8[65536]{0}', space=vmem, size = 0x10000, scoped, tag = 'input window, operand 1']
    #allocation6 [shape = 's32[2]{0}', space=sflag, size = 0x8, scoped, tag = 'scoped memory for var_forward.14']
    #allocation7 [shape = 'u8[1024]{0}', space=vmem, size = 0x400, scoped, tag = 'input window, operand 2']
    #allocation8 [shape = 'u8[1024]{0}', space=vmem, size = 0x400, scoped, tag = 'input window, operand 3']
    #allocation9 [shape = 's32[2]{0}', space=sflag, size = 0x8, scoped, tag = 'scoped memory for var_forward.14']
    #allocation10 [shape = 'u8[1024]{0}', space=vmem, size = 0x400, scoped, tag = 'input window, operand 4']
    #allocation11 [shape = 'u8[1024]{0}', space=vmem, size = 0x400, scoped, tag = 'input window, operand 5']
    #allocation12 [shape = 's32[2]{0}', space=sflag, size = 0x8, scoped, tag = 'scoped memory for var_forward.14']
    #allocation13 [shape = 'u8[32768]{0}', space=vmem, size = 0x8000, scoped, tag = 'input window, operand 6, single buffered']
    #allocation14 [shape = 'u8[512]{0}', space=vmem, size = 0x400, scoped, tag = 'input window, operand 7, single buffered']
    #allocation15 [shape = 's32[1]{0}', space=sflag, size = 0x4, scoped, tag = 'scoped memory for var_forward.14']
    #allocation16 [shape = 'u8[131072]{0}', space=vmem, size = 0x20000, scoped, tag = 'input window, operand 8, single buffered']
    #allocation17 [shape = 'u8[2048]{0}', space=vmem, size = 0x800, scoped, tag = 'input window, operand 9, single buffered']
    #allocation18 [shape = 's32[1]{0}', space=sflag, size = 0x4, scoped, tag = 'scoped memory for var_forward.14']
    #allocation19 [shape = 'u8[131072]{0}', space=vmem, size = 0x20000, scoped, tag = 'input window, operand 10, single buffered']
    #allocation20 [shape = 'u8[512]{0}', space=vmem, size = 0x400, scoped, tag = 'input window, operand 11, single buffered']
    #allocation21 [shape = 's32[1]{0}', space=sflag, size = 0x4, scoped, tag = 'scoped memory for var_forward.14']
    #allocation22 [shape = 'u8[131072]{0}', space=vmem, size = 0x20000, scoped, tag = 'output window, operand 0']
    %17 = vsyncpa [#allocation3], 0
    %s18 = scalar_lea.sflag [#allocation3], 1
    %19 = vsyncpa %s18, 0
    %20 = vsyncpa [#allocation6], 0
    %s21 = scalar_lea.sflag [#allocation6], 1
    %22 = vsyncpa %s21, 0
    %23 = vsyncpa [#allocation9], 0
    %s24 = scalar_lea.sflag [#allocation9], 1
    %25 = vsyncpa %s24, 0
    %26 = vsyncpa [#allocation12], 0
    %s27 = scalar_lea.sflag [#allocation12], 1
    %28 = vsyncpa %s27, 0
    %29 = vsyncpa [#allocation15], 0
    %30 = vsyncpa [#allocation18], 0
    %31 = vsyncpa [#allocation21], 0
    %32 = vsyncpa [#allocation4], 0
    %s33 = scalar_lea.sflag [#allocation4], 1
    %34 = vsyncpa %s33, 0
    loop: start=0, step=1, limit=4
    $region2: #{var_forward.14} parent=1 // loop_pre_header
      _
    $region3: #{var_forward.14} parent=1 // loop_header
      %s36 = sphi 0, %s40
      %p37 = scmp.ge.s32.totalorder %s36, 4
      %s43 = sphi 0, %s55
      %s44 = sphi 0, %s51
      %s45 = sphi 0, %s43
      %s46 = sphi 0, %s44
      %s47 = sphi 0, %s45
      %s48 = sphi 0, %s46
      %s60 = sphi 0, %s62
      %s63 = sphi 0, %s60
      %s64 = sphi 0, %s63
      %s80 = sphi 0, %s64
      %s88 = sphi 0, %s90
      %s91 = sphi 0, %s88
      %s92 = sphi 0, %s91
      %s108 = sphi 0, %s92
      %s114 = sphi 0, %s116
      %s117 = sphi 0, %s114
      %s118 = sphi 0, %s117
      %s134 = sphi 0, %s118
      %s140 = sphi 0, %s142
      %s143 = sphi 0, %s140
      %s144 = sphi 0, %s143
      %s160 = sphi 0, %s144
      %s166 = sphi 0, %s168
      %s169 = sphi 0, %s166
      %s170 = sphi 0, %s169
      %s186 = sphi 0, %s170
      %s192 = sphi 0, %s194
      %s195 = sphi 0, %s192
      %s196 = sphi 0, %s195
      %s212 = sphi 0, %s196
      %s216 = sphi 0, %s216
      %s218 = sphi 0, %s216
      %s219 = sphi 0, %s218
      %s233 = sphi 0, %s219
      %s237 = sphi 0, %s237
      %s239 = sphi 0, %s237
      %s240 = sphi 0, %s239
      %s254 = sphi 0, %s240
      %s258 = sphi 0, %s258
      %s260 = sphi 0, %s258
      %s261 = sphi 0, %s260
      %s275 = sphi 0, %s261
      %s279 = sphi 0, %s279
      %s281 = sphi 0, %s279
      %s282 = sphi 0, %s281
      %s296 = sphi 0, %s282
      %s300 = sphi 0, %s300
      %s302 = sphi 0, %s300
      %s303 = sphi 0, %s302
      %s317 = sphi 0, %s303
      %s321 = sphi 0, %s321
      %s323 = sphi 0, %s321
      %s324 = sphi 0, %s323
      %s338 = sphi 0, %s324
      %s346 = sphi 0, %s348
      %s349 = sphi 0, %s346
      %s350 = sphi 0, %s349
      %s366 = sphi 0, %s350
    $region4: #{var_forward.14} parent=1 // loop_header_branch
      %39 = sbr.rel (%p37) target = $region8
    $region5: #{var_forward.14} parent=1 // loop_body
      %s41 = ssub.s32 %s36, 1
      %s42 = ssub.s32 %s36, 2
      %s49 = sadd.s32 1, %s44
      %p50 = scmp.ge.s32.totalorder %s49, 1
      %s51 = scalar_select %p50, 0, %s49
      %s52 = sadd.s32 1, %s43
      %s53 = scalar_select %p50, %s52, %s43
      %p54 = scmp.ge.s32.totalorder %s53, 2
      %s55 = scalar_select %p54, 0, %s53
      %s56 = ssub.s32 %s43, %s55
      %s57 = ssub.s32 %s44, %s51
      %s58 = sor.u32 %s56, %s57
      %p59 = scmp.eq.s32.totalorder %s58, 0
      %s61 = sadd.s32 %s60, 1
      %s62 = scalar_select %p59, %s60, %s61
      %p65 = pneg %p59
      %p66 = scmp.eq.s32.totalorder %s36, 1
      %p67 = por %p65, %p66
      %p68 = scmp.ne.s32.totalorder %s60, %s63
      %p69 = scmp.eq.s32.totalorder %s36, 0
      %p70 = por %p68, %p69
      %p71 = scmp.ne.s32.totalorder %s60, %s63
      %p72 = scmp.eq.s32.totalorder %s41, 1
      %p73 = por %p71, %p72
      %p74 = scmp.ne.s32.totalorder %s63, %s64
      %p75 = scmp.eq.s32.totalorder %s41, 0
      %p76 = por %p74, %p75
      %p77 = scmp.ne.s32.totalorder %s63, %s64
      %p78 = scmp.eq.s32.totalorder %s42, 1
      %p79 = por %p77, %p78
      %p81 = scmp.ne.s32.totalorder %s64, %s80
      %p82 = scmp.eq.s32.totalorder %s42, 0
      %p83 = por %p81, %p82
      %s84 = ssub.s32 %s43, %s55
      %s85 = ssub.s32 %s44, %s51
      %s86 = sor.u32 %s84, %s85
      %p87 = scmp.eq.s32.totalorder %s86, 0
      %s89 = sadd.s32 %s88, 1
      %s90 = scalar_select %p87, %s88, %s89
      %p93 = pneg %p87
      %p94 = scmp.eq.s32.totalorder %s36, 1
      %p95 = por %p93, %p94
      %p96 = scmp.ne.s32.totalorder %s88, %s91
      %p97 = scmp.eq.s32.totalorder %s36, 0
      %p98 = por %p96, %p97
      %p99 = scmp.ne.s32.totalorder %s88, %s91
      %p100 = scmp.eq.s32.totalorder %s41, 1
      %p101 = por %p99, %p100
      %p102 = scmp.ne.s32.totalorder %s91, %s92
      %p103 = scmp.eq.s32.totalorder %s41, 0
      %p104 = por %p102, %p103
      %p105 = scmp.ne.s32.totalorder %s91, %s92
      %p106 = scmp.eq.s32.totalorder %s42, 1
      %p107 = por %p105, %p106
      %p109 = scmp.ne.s32.totalorder %s92, %s108
      %p110 = scmp.eq.s32.totalorder %s42, 0
      %p111 = por %p109, %p110
      %s112 = ssub.s32 %s43, %s55
      %p113 = scmp.eq.s32.totalorder %s112, 0
      %s115 = sadd.s32 %s114, 1
      %s116 = scalar_select %p113, %s114, %s115
      %p119 = pneg %p113
      %p120 = scmp.eq.s32.totalorder %s36, 1
      %p121 = por %p119, %p120
      %p122 = scmp.ne.s32.totalorder %s114, %s117
      %p123 = scmp.eq.s32.totalorder %s36, 0
      %p124 = por %p122, %p123
      %p125 = scmp.ne.s32.totalorder %s114, %s117
      %p126 = scmp.eq.s32.totalorder %s41, 1
      %p127 = por %p125, %p126
      %p128 = scmp.ne.s32.totalorder %s117, %s118
      %p129 = scmp.eq.s32.totalorder %s41, 0
      %p130 = por %p128, %p129
      %p131 = scmp.ne.s32.totalorder %s117, %s118
      %p132 = scmp.eq.s32.totalorder %s42, 1
      %p133 = por %p131, %p132
      %p135 = scmp.ne.s32.totalorder %s118, %s134
      %p136 = scmp.eq.s32.totalorder %s42, 0
      %p137 = por %p135, %p136
      %s138 = ssub.s32 %s43, %s55
      %p139 = scmp.eq.s32.totalorder %s138, 0
      %s141 = sadd.s32 %s140, 1
      %s142 = scalar_select %p139, %s140, %s141
      %p145 = pneg %p139
      %p146 = scmp.eq.s32.totalorder %s36, 1
      %p147 = por %p145, %p146
      %p148 = scmp.ne.s32.totalorder %s140, %s143
      %p149 = scmp.eq.s32.totalorder %s36, 0
      %p150 = por %p148, %p149
      %p151 = scmp.ne.s32.totalorder %s140, %s143
      %p152 = scmp.eq.s32.totalorder %s41, 1
      %p153 = por %p151, %p152
      %p154 = scmp.ne.s32.totalorder %s143, %s144
      %p155 = scmp.eq.s32.totalorder %s41, 0
      %p156 = por %p154, %p155
      %p157 = scmp.ne.s32.totalorder %s143, %s144
      %p158 = scmp.eq.s32.totalorder %s42, 1
      %p159 = por %p157, %p158
      %p161 = scmp.ne.s32.totalorder %s144, %s160
      %p162 = scmp.eq.s32.totalorder %s42, 0
      %p163 = por %p161, %p162
      %s164 = ssub.s32 %s43, %s55
      %p165 = scmp.eq.s32.totalorder %s164, 0
      %s167 = sadd.s32 %s166, 1
      %s168 = scalar_select %p165, %s166, %s167
      %p171 = pneg %p165
      %p172 = scmp.eq.s32.totalorder %s36, 1
      %p173 = por %p171, %p172
      %p174 = scmp.ne.s32.totalorder %s166, %s169
      %p175 = scmp.eq.s32.totalorder %s36, 0
      %p176 = por %p174, %p175
      %p177 = scmp.ne.s32.totalorder %s166, %s169
      %p178 = scmp.eq.s32.totalorder %s41, 1
      %p179 = por %p177, %p178
      %p180 = scmp.ne.s32.totalorder %s169, %s170
      %p181 = scmp.eq.s32.totalorder %s41, 0
      %p182 = por %p180, %p181
      %p183 = scmp.ne.s32.totalorder %s169, %s170
      %p184 = scmp.eq.s32.totalorder %s42, 1
      %p185 = por %p183, %p184
      %p187 = scmp.ne.s32.totalorder %s170, %s186
      %p188 = scmp.eq.s32.totalorder %s42, 0
      %p189 = por %p187, %p188
      %s190 = ssub.s32 %s43, %s55
      %p191 = scmp.eq.s32.totalorder %s190, 0
      %s193 = sadd.s32 %s192, 1
      %s194 = scalar_select %p191, %s192, %s193
      %p197 = pneg %p191
      %p198 = scmp.eq.s32.totalorder %s36, 1
      %p199 = por %p197, %p198
      %p200 = scmp.ne.s32.totalorder %s192, %s195
      %p201 = scmp.eq.s32.totalorder %s36, 0
      %p202 = por %p200, %p201
      %p203 = scmp.ne.s32.totalorder %s192, %s195
      %p204 = scmp.eq.s32.totalorder %s41, 1
      %p205 = por %p203, %p204
      %p206 = scmp.ne.s32.totalorder %s195, %s196
      %p207 = scmp.eq.s32.totalorder %s41, 0
      %p208 = por %p206, %p207
      %p209 = scmp.ne.s32.totalorder %s195, %s196
      %p210 = scmp.eq.s32.totalorder %s42, 1
      %p211 = por %p209, %p210
      %p213 = scmp.ne.s32.totalorder %s196, %s212
      %p214 = scmp.eq.s32.totalorder %s42, 0
      %p215 = por %p213, %p214
      %s217 = sadd.s32 %s216, 1
      %p220 = scmp.eq.s32.totalorder %s36, 1
      %p221 = scmp.ne.s32.totalorder %s216, %s218
      %p222 = scmp.eq.s32.totalorder %s36, 0
      %p223 = por %p221, %p222
      %p224 = scmp.ne.s32.totalorder %s216, %s218
      %p225 = scmp.eq.s32.totalorder %s41, 1
      %p226 = por %p224, %p225
      %p227 = scmp.ne.s32.totalorder %s218, %s219
      %p228 = scmp.eq.s32.totalorder %s41, 0
      %p229 = por %p227, %p228
      %p230 = scmp.ne.s32.totalorder %s218, %s219
      %p231 = scmp.eq.s32.totalorder %s42, 1
      %p232 = por %p230, %p231
      %p234 = scmp.ne.s32.totalorder %s219, %s233
      %p235 = scmp.eq.s32.totalorder %s42, 0
      %p236 = por %p234, %p235
      %s238 = sadd.s32 %s237, 1
      %p241 = scmp.eq.s32.totalorder %s36, 1
      %p242 = scmp.ne.s32.totalorder %s237, %s239
      %p243 = scmp.eq.s32.totalorder %s36, 0
      %p244 = por %p242, %p243
      %p245 = scmp.ne.s32.totalorder %s237, %s239
      %p246 = scmp.eq.s32.totalorder %s41, 1
      %p247 = por %p245, %p246
      %p248 = scmp.ne.s32.totalorder %s239, %s240
      %p249 = scmp.eq.s32.totalorder %s41, 0
      %p250 = por %p248, %p249
      %p251 = scmp.ne.s32.totalorder %s239, %s240
      %p252 = scmp.eq.s32.totalorder %s42, 1
      %p253 = por %p251, %p252
      %p255 = scmp.ne.s32.totalorder %s240, %s254
      %p256 = scmp.eq.s32.totalorder %s42, 0
      %p257 = por %p255, %p256
      %s259 = sadd.s32 %s258, 1
      %p262 = scmp.eq.s32.totalorder %s36, 1
      %p263 = scmp.ne.s32.totalorder %s258, %s260
      %p264 = scmp.eq.s32.totalorder %s36, 0
      %p265 = por %p263, %p264
      %p266 = scmp.ne.s32.totalorder %s258, %s260
      %p267 = scmp.eq.s32.totalorder %s41, 1
      %p268 = por %p266, %p267
      %p269 = scmp.ne.s32.totalorder %s260, %s261
      %p270 = scmp.eq.s32.totalorder %s41, 0
      %p271 = por %p269, %p270
      %p272 = scmp.ne.s32.totalorder %s260, %s261
      %p273 = scmp.eq.s32.totalorder %s42, 1
      %p274 = por %p272, %p273
      %p276 = scmp.ne.s32.totalorder %s261, %s275
      %p277 = scmp.eq.s32.totalorder %s42, 0
      %p278 = por %p276, %p277
      %s280 = sadd.s32 %s279, 1
      %p283 = scmp.eq.s32.totalorder %s36, 1
      %p284 = scmp.ne.s32.totalorder %s279, %s281
      %p285 = scmp.eq.s32.totalorder %s36, 0
      %p286 = por %p284, %p285
      %p287 = scmp.ne.s32.totalorder %s279, %s281
      %p288 = scmp.eq.s32.totalorder %s41, 1
      %p289 = por %p287, %p288
      %p290 = scmp.ne.s32.totalorder %s281, %s282
      %p291 = scmp.eq.s32.totalorder %s41, 0
      %p292 = por %p290, %p291
      %p293 = scmp.ne.s32.totalorder %s281, %s282
      %p294 = scmp.eq.s32.totalorder %s42, 1
      %p295 = por %p293, %p294
      %p297 = scmp.ne.s32.totalorder %s282, %s296
      %p298 = scmp.eq.s32.totalorder %s42, 0
      %p299 = por %p297, %p298
      %s301 = sadd.s32 %s300, 1
      %p304 = scmp.eq.s32.totalorder %s36, 1
      %p305 = scmp.ne.s32.totalorder %s300, %s302
      %p306 = scmp.eq.s32.totalorder %s36, 0
      %p307 = por %p305, %p306
      %p308 = scmp.ne.s32.totalorder %s300, %s302
      %p309 = scmp.eq.s32.totalorder %s41, 1
      %p310 = por %p308, %p309
      %p311 = scmp.ne.s32.totalorder %s302, %s303
      %p312 = scmp.eq.s32.totalorder %s41, 0
      %p313 = por %p311, %p312
      %p314 = scmp.ne.s32.totalorder %s302, %s303
      %p315 = scmp.eq.s32.totalorder %s42, 1
      %p316 = por %p314, %p315
      %p318 = scmp.ne.s32.totalorder %s303, %s317
      %p319 = scmp.eq.s32.totalorder %s42, 0
      %p320 = por %p318, %p319
      %s322 = sadd.s32 %s321, 1
      %p325 = scmp.eq.s32.totalorder %s36, 1
      %p326 = scmp.ne.s32.totalorder %s321, %s323
      %p327 = scmp.eq.s32.totalorder %s36, 0
      %p328 = por %p326, %p327
      %p329 = scmp.ne.s32.totalorder %s321, %s323
      %p330 = scmp.eq.s32.totalorder %s41, 1
      %p331 = por %p329, %p330
      %p332 = scmp.ne.s32.totalorder %s323, %s324
      %p333 = scmp.eq.s32.totalorder %s41, 0
      %p334 = por %p332, %p333
      %p335 = scmp.ne.s32.totalorder %s323, %s324
      %p336 = scmp.eq.s32.totalorder %s42, 1
      %p337 = por %p335, %p336
      %p339 = scmp.ne.s32.totalorder %s324, %s338
      %p340 = scmp.eq.s32.totalorder %s42, 0
      %p341 = por %p339, %p340
      %s342 = ssub.s32 %s43, %s55
      %s343 = ssub.s32 %s44, %s51
      %s344 = sor.u32 %s342, %s343
      %p345 = scmp.eq.s32.totalorder %s344, 0
      %s347 = sadd.s32 %s346, 1
      %s348 = scalar_select %p345, %s346, %s347
      %p351 = pneg %p345
      %p352 = scmp.eq.s32.totalorder %s36, 1
      %p353 = por %p351, %p352
      %p354 = scmp.ne.s32.totalorder %s346, %s349
      %p355 = scmp.eq.s32.totalorder %s36, 0
      %p356 = por %p354, %p355
      %p357 = scmp.ne.s32.totalorder %s346, %s349
      %p358 = scmp.eq.s32.totalorder %s41, 1
      %p359 = por %p357, %p358
      %p360 = scmp.ne.s32.totalorder %s349, %s350
      %p361 = scmp.eq.s32.totalorder %s41, 0
      %p362 = por %p360, %p361
      %p363 = scmp.ne.s32.totalorder %s349, %s350
      %p364 = scmp.eq.s32.totalorder %s42, 1
      %p365 = por %p363, %p364
      %p367 = scmp.ne.s32.totalorder %s350, %s366
      %p368 = scmp.eq.s32.totalorder %s42, 0
      %p369 = por %p367, %p368
      %p370 = scmp.le.s32.totalorder 1, %s36
      %p371 = scmp.lt.s32.totalorder %s36, 3
      %p372 = pnand %p370, %p371
      %p373 = pneg %p372
      // Predicated region
      $region9: #{var_forward.14} parent=5 // pred_check
        _
      $region10: #{var_forward.14} parent=5 // pred_check_branch
        %375 = sbr.rel (%p372) target = $region12
      $region11: #{var_forward.14} parent=5 // pred_region
        %s376 = ssub.s32 %s36, 1
        // Predicated region
        $region13: #{var_forward.14} parent=11 // pred_check
          %p377 = pneg %p229
        $region14: #{var_forward.14} parent=11 // pred_check_branch
          %379 = sbr.rel (%p377) target = $region16
        $region15: #{var_forward.14} parent=11 // pred_region
          %s381 = ssub.s32 1024, 1024
          %382 = vsyncadd [#allocation12], %s381
          %s383 = sshll.u32 [#allocation13], 4
          %s384 = int_to_ptr.vmem [resolvable:$true] %s383
          %389 = dma.hbm_to_vmem [thread:$0]  %s6, 1024, %s384, [#allocation12], 64, 64, 4
        $region16: #{var_forward.14} parent=11 // pred_fallthru
          _
        // Predicated region
        $region17: #{var_forward.14} parent=11 // pred_check
          %p390 = pneg %p250
        $region18: #{var_forward.14} parent=11 // pred_check_branch
          %392 = sbr.rel (%p390) target = $region20
        $region19: #{var_forward.14} parent=11 // pred_region
          %s394 = ssub.s32 16, 16
          %395 = vsyncadd [#allocation15], %s394
          %s397 = sshll.u32 [#allocation14], 4
          %s398 = int_to_ptr.vmem [resolvable:$true] %s397
          %400 = dma.hbm_to_vmem [thread:$0]  %s7, 16, %s398, [#allocation15]
        $region20: #{var_forward.14} parent=11 // pred_fallthru
          _
        // Predicated region
        $region21: #{var_forward.14} parent=11 // pred_check
          %p401 = pneg %p271
        $region22: #{var_forward.14} parent=11 // pred_check_branch
          %403 = sbr.rel (%p401) target = $region24
        $region23: #{var_forward.14} parent=11 // pred_region
          %s405 = ssub.s32 4096, 4096
          %406 = vsyncadd [#allocation15], %s405
          %s407 = sshll.u32 [#allocation16], 4
          %s408 = int_to_ptr.vmem [resolvable:$true] %s407
          %413 = dma.hbm_to_vmem [thread:$0]  %s8, 4096, %s408, [#allocation15], 256, 256, 16
        $region24: #{var_forward.14} parent=11 // pred_fallthru
          _
        // Predicated region
        $region25: #{var_forward.14} parent=11 // pred_check
          %p414 = pneg %p292
        $region26: #{var_forward.14} parent=11 // pred_check_branch
          %416 = sbr.rel (%p414) target = $region28
        $region27: #{var_forward.14} parent=11 // pred_region
          %s418 = ssub.s32 64, 64
          %419 = vsyncadd [#allocation18], %s418
          %s421 = sshll.u32 [#allocation17], 4
          %s422 = int_to_ptr.vmem [resolvable:$true] %s421
          %424 = dma.hbm_to_vmem [thread:$0]  %s9, 64, %s422, [#allocation18]
        $region28: #{var_forward.14} parent=11 // pred_fallthru
          _
        // Predicated region
        $region29: #{var_forward.14} parent=11 // pred_check
          %p425 = pneg %p313
        $region30: #{var_forward.14} parent=11 // pred_check_branch
          %427 = sbr.rel (%p425) target = $region32
        $region31: #{var_forward.14} parent=11 // pred_region
          %s429 = ssub.s32 4096, 4096
          %430 = vsyncadd [#allocation18], %s429
          %s431 = sshll.u32 [#allocation19], 4
          %s432 = int_to_ptr.vmem [resolvable:$true] %s431
          %437 = dma.hbm_to_vmem [thread:$0]  %s10, 4096, %s432, [#allocation18], 64, 64, 4
        $region32: #{var_forward.14} parent=11 // pred_fallthru
          _
        // Predicated region
        $region33: #{var_forward.14} parent=11 // pred_check
          %p438 = pneg %p334
        $region34: #{var_forward.14} parent=11 // pred_check_branch
          %440 = sbr.rel (%p438) target = $region36
        $region35: #{var_forward.14} parent=11 // pred_region
          %s442 = ssub.s32 16, 16
          %443 = vsyncadd [#allocation21], %s442
          %s445 = sshll.u32 [#allocation20], 4
          %s446 = int_to_ptr.vmem [resolvable:$true] %s445
          %448 = dma.hbm_to_vmem [thread:$0]  %s11, 16, %s446, [#allocation21]
        $region36: #{var_forward.14} parent=11 // pred_fallthru
          _
      $region12: #{var_forward.14} parent=5 // pred_fallthru
        _
      %p449 = scmp.lt.s32.totalorder %s36, 2
      // Predicated region
      $region37: #{var_forward.14} parent=5 // pred_check
        %p450 = pneg %p449
      $region38: #{var_forward.14} parent=5 // pred_check_branch
        %452 = sbr.rel (%p450) target = $region40
      $region39: #{var_forward.14} parent=5 // pred_region
        // Predicated region
        $region41: #{var_forward.14} parent=39 // pred_check
          %p453 = pneg %p70
        $region42: #{var_forward.14} parent=39 // pred_check_branch
          %455 = sbr.rel (%p453) target = $region44
        $region43: #{var_forward.14} parent=39 // pred_region
          %s456 = sand.u32 %s60, 1
          %s457 = scalar_lea.sflag [#allocation3], %s456
          %s458 = sand.u32 %s60, 1
          %s459 = smul.addr %s458, 128
          %s460 = scalar_lea.vmem [#allocation2], %s459
          %s461 = smul.u32 16, %s44
          %s463 = ssub.s32 2048, 2048
          %464 = vsyncadd %s457, %s463
          %s465 = smul.addr %s43, 16
          %s466 = sadd.s32 %s461, %s465
          %s467 = smul.addr %s466, 128
          %s468 = scalar_lea.hbm %s0, %s467
          %s469 = sshll.u32 %s460, 4
          %s470 = int_to_ptr.vmem [resolvable:$true] %s469
          %475 = dma.hbm_to_vmem [thread:$0]  %s468, 2048, %s470, %s457, 128, 128, 8
        $region44: #{var_forward.14} parent=39 // pred_fallthru
          _
        // Predicated region
        $region45: #{var_forward.14} parent=39 // pred_check
          %p476 = pneg %p98
        $region46: #{var_forward.14} parent=39 // pred_check_branch
          %478 = sbr.rel (%p476) target = $region48
        $region47: #{var_forward.14} parent=39 // pred_region
          %s479 = sand.u32 %s36, 1
          %s480 = scalar_lea.sflag [#allocation6], %s479
          %s481 = sand.u32 %s88, 1
          %s482 = smul.addr %s481, 64
          %s483 = scalar_lea.vmem [#allocation5], %s482
          %s484 = smul.u32 16, %s44
          %s486 = ssub.s32 1024, 1024
          %487 = vsyncadd %s480, %s486
          %s488 = smul.addr %s43, 16
          %s489 = sadd.s32 %s484, %s488
          %s490 = smul.addr %s489, 64
          %s491 = scalar_lea.hbm %s1, %s490
          %s492 = sshll.u32 %s483, 4
          %s493 = int_to_ptr.vmem [resolvable:$true] %s492
          %498 = dma.hbm_to_vmem [thread:$0]  %s491, 1024, %s493, %s480, 64, 64, 4
        $region48: #{var_forward.14} parent=39 // pred_fallthru
          _
        // Predicated region
        $region49: #{var_forward.14} parent=39 // pred_check
          %p499 = pneg %p124
        $region50: #{var_forward.14} parent=39 // pred_check_branch
          %501 = sbr.rel (%p499) target = $region52
        $region51: #{var_forward.14} parent=39 // pred_region
          %s502 = sand.u32 %s36, 1
          %s503 = scalar_lea.sflag [#allocation6], %s502
          %s504 = sand.u32 %s114, 1
          %s505 = scalar_lea.vmem [#allocation7], %s504
          %s507 = ssub.s32 16, 16
          %508 = vsyncadd %s503, %s507
          %s509 = smul.addr %s43, 16
          %s510 = scalar_lea.hbm %s2, %s509
          %s512 = sshll.u32 %s505, 4
          %s513 = int_to_ptr.vmem [resolvable:$true] %s512
          %515 = dma.hbm_to_vmem [thread:$0]  %s510, 16, %s513, %s503
        $region52: #{var_forward.14} parent=39 // pred_fallthru
          _
        // Predicated region
        $region53: #{var_forward.14} parent=39 // pred_check
          %p516 = pneg %p150
        $region54: #{var_forward.14} parent=39 // pred_check_branch
          %518 = sbr.rel (%p516) target = $region56
        $region55: #{var_forward.14} parent=39 // pred_region
          %s519 = sand.u32 %s36, 1
          %s520 = scalar_lea.sflag [#allocation9], %s519
          %s521 = sand.u32 %s140, 1
          %s522 = scalar_lea.vmem [#allocation8], %s521
          %s524 = ssub.s32 16, 16
          %525 = vsyncadd %s520, %s524
          %s526 = smul.addr %s43, 16
          %s527 = scalar_lea.hbm %s3, %s526
          %s529 = sshll.u32 %s522, 4
          %s530 = int_to_ptr.vmem [resolvable:$true] %s529
          %532 = dma.hbm_to_vmem [thread:$0]  %s527, 16, %s530, %s520
        $region56: #{var_forward.14} parent=39 // pred_fallthru
          _
        // Predicated region
        $region57: #{var_forward.14} parent=39 // pred_check
          %p533 = pneg %p176
        $region58: #{var_forward.14} parent=39 // pred_check_branch
          %535 = sbr.rel (%p533) target = $region60
        $region59: #{var_forward.14} parent=39 // pred_region
          %s536 = sand.u32 %s36, 1
          %s537 = scalar_lea.sflag [#allocation9], %s536
          %s538 = sand.u32 %s166, 1
          %s539 = scalar_lea.vmem [#allocation10], %s538
          %s541 = ssub.s32 16, 16
          %542 = vsyncadd %s537, %s541
          %s543 = smul.addr %s43, 16
          %s544 = scalar_lea.hbm %s4, %s543
          %s546 = sshll.u32 %s539, 4
          %s547 = int_to_ptr.vmem [resolvable:$true] %s546
          %549 = dma.hbm_to_vmem [thread:$0]  %s544, 16, %s547, %s537
        $region60: #{var_forward.14} parent=39 // pred_fallthru
          _
        // Predicated region
        $region61: #{var_forward.14} parent=39 // pred_check
          %p550 = pneg %p202
        $region62: #{var_forward.14} parent=39 // pred_check_branch
          %552 = sbr.rel (%p550) target = $region64
        $region63: #{var_forward.14} parent=39 // pred_region
          %s553 = sand.u32 %s36, 1
          %s554 = scalar_lea.sflag [#allocation12], %s553
          %s555 = sand.u32 %s192, 1
          %s556 = scalar_lea.vmem [#allocation11], %s555
          %s558 = ssub.s32 16, 16
          %559 = vsyncadd %s554, %s558
          %s560 = smul.addr %s43, 16
          %s561 = scalar_lea.hbm %s5, %s560
          %s563 = sshll.u32 %s556, 4
          %s564 = int_to_ptr.vmem [resolvable:$true] %s563
          %566 = dma.hbm_to_vmem [thread:$0]  %s561, 16, %s564, %s554
        $region64: #{var_forward.14} parent=39 // pred_fallthru
          _
      $region40: #{var_forward.14} parent=5 // pred_fallthru
        _
      %p567 = scmp.le.s32.totalorder 1, %s36
      %p568 = scmp.lt.s32.totalorder %s36, 3
      %p569 = pnand %p567, %p568
      %p570 = pneg %p569
      // Predicated region
      $region65: #{var_forward.14} parent=5 // pred_check
        _
      $region66: #{var_forward.14} parent=5 // pred_check_branch
        %572 = sbr.rel (%p569) target = $region68
      $region67: #{var_forward.14} parent=5 // pred_region
        %s573 = ssub.s32 %s36, 1
        %s574 = sand.u32 %s63, 1
        %s575 = scalar_lea.sflag [#allocation3], %s574
        %s576 = sand.u32 %s63, 1
        %s577 = smul.addr %s576, 128
        %s578 = scalar_lea.vmem [#allocation2], %s577
        // Predicated region
        $region69: #{var_forward.14} parent=67 // pred_check
          %p579 = pneg %p76
        $region70: #{var_forward.14} parent=67 // pred_check_branch
          %581 = sbr.rel (%p579) target = $region72
        $region71: #{var_forward.14} parent=67 // pred_region
          %582 = dma.done %s575, 2048
        $region72: #{var_forward.14} parent=67 // pred_fallthru
          _
        %s583 = sand.u32 %s41, 1
        %s584 = scalar_lea.sflag [#allocation6], %s583
        %s585 = sand.u32 %s91, 1
        %s586 = smul.addr %s585, 64
        %s587 = scalar_lea.vmem [#allocation5], %s586
        // Predicated region
        $region73: #{var_forward.14} parent=67 // pred_check
          %p588 = pneg %p104
        $region74: #{var_forward.14} parent=67 // pred_check_branch
          %590 = sbr.rel (%p588) target = $region76
        $region75: #{var_forward.14} parent=67 // pred_region
          %591 = dma.done %s584, 1024
        $region76: #{var_forward.14} parent=67 // pred_fallthru
          _
        %s592 = sand.u32 %s41, 1
        %s593 = scalar_lea.sflag [#allocation6], %s592
        %s594 = sand.u32 %s117, 1
        %s595 = scalar_lea.vmem [#allocation7], %s594
        // Predicated region
        $region77: #{var_forward.14} parent=67 // pred_check
          %p596 = pneg %p130
        $region78: #{var_forward.14} parent=67 // pred_check_branch
          %598 = sbr.rel (%p596) target = $region80
        $region79: #{var_forward.14} parent=67 // pred_region
          %599 = dma.done %s593, 16
        $region80: #{var_forward.14} parent=67 // pred_fallthru
          _
        %s600 = sand.u32 %s41, 1
        %s601 = scalar_lea.sflag [#allocation9], %s600
        %s602 = sand.u32 %s143, 1
        %s603 = scalar_lea.vmem [#allocation8], %s602
        // Predicated region
        $region81: #{var_forward.14} parent=67 // pred_check
          %p604 = pneg %p156
        $region82: #{var_forward.14} parent=67 // pred_check_branch
          %606 = sbr.rel (%p604) target = $region84
        $region83: #{var_forward.14} parent=67 // pred_region
          %607 = dma.done %s601, 16
        $region84: #{var_forward.14} parent=67 // pred_fallthru
          _
        %s608 = sand.u32 %s41, 1
        %s609 = scalar_lea.sflag [#allocation9], %s608
        %s610 = sand.u32 %s169, 1
        %s611 = scalar_lea.vmem [#allocation10], %s610
        // Predicated region
        $region85: #{var_forward.14} parent=67 // pred_check
          %p612 = pneg %p182
        $region86: #{var_forward.14} parent=67 // pred_check_branch
          %614 = sbr.rel (%p612) target = $region88
        $region87: #{var_forward.14} parent=67 // pred_region
          %615 = dma.done %s609, 16
        $region88: #{var_forward.14} parent=67 // pred_fallthru
          _
        %s616 = sand.u32 %s41, 1
        %s617 = scalar_lea.sflag [#allocation12], %s616
        %s618 = sand.u32 %s195, 1
        %s619 = scalar_lea.vmem [#allocation11], %s618
        // Predicated region
        $region89: #{var_forward.14} parent=67 // pred_check
          %p620 = pneg %p208
        $region90: #{var_forward.14} parent=67 // pred_check_branch
          %622 = sbr.rel (%p620) target = $region92
        $region91: #{var_forward.14} parent=67 // pred_region
          %623 = dma.done %s617, 16
        $region92: #{var_forward.14} parent=67 // pred_fallthru
          _
        // Predicated region
        $region93: #{var_forward.14} parent=67 // pred_check
          %p624 = pneg %p229
        $region94: #{var_forward.14} parent=67 // pred_check_branch
          %626 = sbr.rel (%p624) target = $region96
        $region95: #{var_forward.14} parent=67 // pred_region
          %627 = dma.done [#allocation12], 1024
        $region96: #{var_forward.14} parent=67 // pred_fallthru
          _
        // Predicated region
        $region97: #{var_forward.14} parent=67 // pred_check
          %p628 = pneg %p250
        $region98: #{var_forward.14} parent=67 // pred_check_branch
          %630 = sbr.rel (%p628) target = $region100
        $region99: #{var_forward.14} parent=67 // pred_region
          %631 = dma.done [#allocation15], 16
        $region100: #{var_forward.14} parent=67 // pred_fallthru
          _
        // Predicated region
        $region101: #{var_forward.14} parent=67 // pred_check
          %p632 = pneg %p271
        $region102: #{var_forward.14} parent=67 // pred_check_branch
          %634 = sbr.rel (%p632) target = $region104
        $region103: #{var_forward.14} parent=67 // pred_region
          %635 = dma.done [#allocation15], 4096
        $region104: #{var_forward.14} parent=67 // pred_fallthru
          _
        // Predicated region
        $region105: #{var_forward.14} parent=67 // pred_check
          %p636 = pneg %p292
        $region106: #{var_forward.14} parent=67 // pred_check_branch
          %638 = sbr.rel (%p636) target = $region108
        $region107: #{var_forward.14} parent=67 // pred_region
          %639 = dma.done [#allocation18], 64
        $region108: #{var_forward.14} parent=67 // pred_fallthru
          _
        // Predicated region
        $region109: #{var_forward.14} parent=67 // pred_check
          %p640 = pneg %p313
        $region110: #{var_forward.14} parent=67 // pred_check_branch
          %642 = sbr.rel (%p640) target = $region112
        $region111: #{var_forward.14} parent=67 // pred_region
          %643 = dma.done [#allocation18], 4096
        $region112: #{var_forward.14} parent=67 // pred_fallthru
          _
        // Predicated region
        $region113: #{var_forward.14} parent=67 // pred_check
          %p644 = pneg %p334
        $region114: #{var_forward.14} parent=67 // pred_check_branch
          %646 = sbr.rel (%p644) target = $region116
        $region115: #{var_forward.14} parent=67 // pred_region
          %647 = dma.done [#allocation21], 16
        $region116: #{var_forward.14} parent=67 // pred_fallthru
          _
        %s648 = sand.u32 %s63, 1
        %s649 = scalar_lea.sflag [#allocation3], %s648
        %s650 = sand.u32 %s63, 1
        %s651 = smul.addr %s650, 128
        %s652 = scalar_lea.vmem [#allocation2], %s651
        %p653 = pneg %p76
        %p654 = pneg %p73
        %s655 = sand.u32 %s41, 1
        %s656 = scalar_lea.sflag [#allocation6], %s655
        %s657 = sand.u32 %s91, 1
        %s658 = smul.addr %s657, 64
        %s659 = scalar_lea.vmem [#allocation5], %s658
        %p660 = pneg %p104
        %p661 = pneg %p101
        %s662 = sand.u32 %s41, 1
        %s663 = scalar_lea.sflag [#allocation6], %s662
        %s664 = sand.u32 %s117, 1
        %s665 = scalar_lea.vmem [#allocation7], %s664
        %p666 = pneg %p130
        %p667 = pneg %p127
        %s668 = sand.u32 %s41, 1
        %s669 = scalar_lea.sflag [#allocation9], %s668
        %s670 = sand.u32 %s143, 1
        %s671 = scalar_lea.vmem [#allocation8], %s670
        %p672 = pneg %p156
        %p673 = pneg %p153
        %s674 = sand.u32 %s41, 1
        %s675 = scalar_lea.sflag [#allocation9], %s674
        %s676 = sand.u32 %s169, 1
        %s677 = scalar_lea.vmem [#allocation10], %s676
        %p678 = pneg %p182
        %p679 = pneg %p179
        %s680 = sand.u32 %s41, 1
        %s681 = scalar_lea.sflag [#allocation12], %s680
        %s682 = sand.u32 %s195, 1
        %s683 = scalar_lea.vmem [#allocation11], %s682
        %p684 = pneg %p208
        %p685 = pneg %p205
        %p686 = pneg %p229
        %p687 = pneg %p226
        %p688 = pneg %p250
        %p689 = pneg %p247
        %p690 = pneg %p271
        %p691 = pneg %p268
        %p692 = pneg %p292
        %p693 = pneg %p289
        %p694 = pneg %p313
        %p695 = pneg %p310
        %p696 = pneg %p334
        %p697 = pneg %p331
        %p698 = pneg %p362
        %p699 = pneg %p359
        %s700 = sand.u32 %s349, 1
        %s701 = scalar_lea.sflag [#allocation4], %s700
        %s702 = sand.u32 %s349, 1
        %s703 = smul.addr %s702, 128
        %s704 = scalar_lea.vmem [#allocation22], %s703
        %s705 = smul.u32 16, %s46
        %s706 = smul.u32 16, %s46
        %s707 = smul.u32 16, %s46
        %v709 = vld [vmem:[%s578] sm:$0xff]
        %v710 = vld [vmem:[%s578 + $0x8] sm:$0xff]
        %v711 = vld [vmem:[%s578 + $0x10] sm:$0xff]
        %v712 = vld [vmem:[%s578 + $0x18] sm:$0xff]
        %v713 = vld [vmem:[%s578 + $0x20] sm:$0xff]
        %v714 = vld [vmem:[%s578 + $0x28] sm:$0xff]
        %v715 = vld [vmem:[%s578 + $0x30] sm:$0xff]
        %v716 = vld [vmem:[%s578 + $0x38] sm:$0xff]
        %v717 = vld [vmem:[%s578 + $0x40] sm:$0xff]
        %v718 = vld [vmem:[%s578 + $0x48] sm:$0xff]
        %v719 = vld [vmem:[%s578 + $0x50] sm:$0xff]
        %v720 = vld [vmem:[%s578 + $0x58] sm:$0xff]
        %v721 = vld [vmem:[%s578 + $0x60] sm:$0xff]
        %v722 = vld [vmem:[%s578 + $0x68] sm:$0xff]
        %v723 = vld [vmem:[%s578 + $0x70] sm:$0xff]
        %v724 = vld [vmem:[%s578 + $0x78] sm:$0xff]
        %v725 = vld [vmem:[%s587] sm:$0xf]
        %v726 = vld [vmem:[%s587 + $0x4] sm:$0xf]
        %v727 = vld [vmem:[%s587 + $0x8] sm:$0xf]
        %v728 = vld [vmem:[%s587 + $0xc] sm:$0xf]
        %v729 = vld [vmem:[%s587 + $0x10] sm:$0xf]
        %v730 = vld [vmem:[%s587 + $0x14] sm:$0xf]
        %v731 = vld [vmem:[%s587 + $0x18] sm:$0xf]
        %v732 = vld [vmem:[%s587 + $0x1c] sm:$0xf]
        %v733 = vld [vmem:[%s587 + $0x20] sm:$0xf]
        %v734 = vld [vmem:[%s587 + $0x24] sm:$0xf]
        %v735 = vld [vmem:[%s587 + $0x28] sm:$0xf]
        %v736 = vld [vmem:[%s587 + $0x2c] sm:$0xf]
        %v737 = vld [vmem:[%s587 + $0x30] sm:$0xf]
        %v738 = vld [vmem:[%s587 + $0x34] sm:$0xf]
        %v739 = vld [vmem:[%s587 + $0x38] sm:$0xf]
        %v740 = vld [vmem:[%s587 + $0x3c] sm:$0xf]
        %v741 = vld [vmem:[#allocation13] sm:$0xf]
        %v742 = vld [vmem:[#allocation13 + $0x4] sm:$0xf]
        %v743 = vld [vmem:[#allocation13 + $0x8] sm:$0xf]
        %v744 = vld [vmem:[#allocation13 + $0xc] sm:$0xf]
        %v745 = vld [vmem:[#allocation13 + $0x10] sm:$0xf]
        %v746 = vld [vmem:[#allocation13 + $0x14] sm:$0xf]
        %v747 = vld [vmem:[#allocation13 + $0x18] sm:$0xf]
        %v748 = vld [vmem:[#allocation13 + $0x1c] sm:$0xf]
        %v749 = vld [vmem:[#allocation13 + $0x20] sm:$0xf]
        %v750 = vld [vmem:[#allocation13 + $0x24] sm:$0xf]
        %v751 = vld [vmem:[#allocation13 + $0x28] sm:$0xf]
        %v752 = vld [vmem:[#allocation13 + $0x2c] sm:$0xf]
        %v753 = vld [vmem:[#allocation13 + $0x30] sm:$0xf]
        %v754 = vld [vmem:[#allocation13 + $0x34] sm:$0xf]
        %v755 = vld [vmem:[#allocation13 + $0x38] sm:$0xf]
        %v756 = vld [vmem:[#allocation13 + $0x3c] sm:$0xf]
        %v757 = vld [vmem:[#allocation14] sm:$0x1]
        %v759 = vlaneseq
        %v760 = vshrl.u32 %v759, 7
        %v761 = vsub.s32 0, %v760
        %v762 = vrot.slane %v757, %v761
        %v780 = vunpack.c.l.b16 %v725
        %v781 = vunpack.c.l.b16 %v726
        %v782 = vunpack.c.l.b16 %v727
        %v783 = vunpack.c.l.b16 %v728
        %v784 = vunpack.c.l.b16 %v729
        %v785 = vunpack.c.l.b16 %v730
        %v786 = vunpack.c.l.b16 %v731
        %v787 = vunpack.c.l.b16 %v732
        %v788 = vunpack.c.l.b16 %v733
        %v789 = vunpack.c.l.b16 %v734
        %v790 = vunpack.c.l.b16 %v735
        %v791 = vunpack.c.l.b16 %v736
        %v792 = vunpack.c.l.b16 %v737
        %v793 = vunpack.c.l.b16 %v738
        %v794 = vunpack.c.l.b16 %v739
        %v795 = vunpack.c.l.b16 %v740
        %v796 = vpack.c.b16 %v781, %v780
        %v797 = vpack.c.b16 %v783, %v782
        %v798 = vpack.c.b16 %v785, %v784
        %v799 = vpack.c.b16 %v787, %v786
        %v800 = vpack.c.b16 %v789, %v788
        %v801 = vpack.c.b16 %v791, %v790
        %v802 = vpack.c.b16 %v793, %v792
        %v803 = vpack.c.b16 %v795, %v794
        %v828 = vunpack.c.l.b16 %v741
        %v829 = vunpack.c.l.b16 %v742
        %v830 = vunpack.c.l.b16 %v743
        %v831 = vunpack.c.l.b16 %v744
        %v832 = vunpack.c.l.b16 %v745
        %v833 = vunpack.c.l.b16 %v746
        %v834 = vunpack.c.l.b16 %v747
        %v835 = vunpack.c.l.b16 %v748
        %v836 = vunpack.c.l.b16 %v749
        %v837 = vunpack.c.l.b16 %v750
        %v838 = vunpack.c.l.b16 %v751
        %v839 = vunpack.c.l.b16 %v752
        %v840 = vunpack.c.l.b16 %v753
        %v841 = vunpack.c.l.b16 %v754
        %v842 = vunpack.c.l.b16 %v755
        %v843 = vunpack.c.l.b16 %v756
        %v844 = vpack.c.b16 %v829, %v828
        %v845 = vpack.c.b16 %v831, %v830
        %v846 = vpack.c.b16 %v833, %v832
        %v847 = vpack.c.b16 %v835, %v834
        %v848 = vpack.c.b16 %v837, %v836
        %v849 = vpack.c.b16 %v839, %v838
        %v850 = vpack.c.b16 %v841, %v840
        %v851 = vpack.c.b16 %v843, %v842
        %860 = vmatprep.subr.bf16.mxu0 0
        %861 = vmatpush1.bf16.msra.mxu0 %v844
        %862 = vmatprep.subr.bf16.mxu0 0
        %863 = vmatpush1.bf16.msra.mxu0 %v845
        %864 = vmatprep.subr.bf16.mxu0 0
        %865 = vmatpush1.bf16.msra.mxu0 %v846
        %866 = vmatprep.subr.bf16.mxu0 0
        %867 = vmatpush1.bf16.msra.mxu0 %v847
        %868 = vmatprep.subr.bf16.mxu0 0
        %869 = vmatpush1.bf16.msra.mxu0 %v848
        %870 = vmatprep.subr.bf16.mxu0 0
        %871 = vmatpush1.bf16.msra.mxu0 %v849
        %872 = vmatprep.subr.bf16.mxu0 0
        %873 = vmatpush1.bf16.msra.mxu0 %v850
        %874 = vmatprep.subr.bf16.mxu0 0
        %875 = vmatpush1.bf16.msra.mxu0 %v851
        %876 = vmatprep.subr.bf16.mxu0 0
        %877 = vmatpush1.bf16.msra.mxu0 0
        %878 = vmatprep.subr.bf16.mxu0 0
        %879 = vmatpush1.bf16.msra.mxu0 0
        %880 = vmatprep.subr.bf16.mxu0 0
        %881 = vmatpush1.bf16.msra.mxu0 0
        %882 = vmatprep.subr.bf16.mxu0 0
        %883 = vmatpush1.bf16.msra.mxu0 0
        %884 = vmatprep.subr.bf16.mxu0 0
        %885 = vmatpush1.bf16.msra.mxu0 0
        %886 = vmatprep.subr.bf16.mxu0 0
        %887 = vmatpush1.bf16.msra.mxu0 0
        %888 = vmatprep.subr.bf16.mxu0 0
        %889 = vmatpush1.bf16.msra.mxu0 0
        %890 = vmatprep.subr.bf16.mxu0 0
        %891 = vmatpush1.bf16.msra.mxu0 0
        %892 = vmatprep.mubr.bf16.mxu0 0
        %893 = vmatmul.mubr.bf16.gmra.mrb[0].mxu0 %v796
        %v894 = vpop.f32.mrb[0].mxu0
        %v895 = vadd.f32 %v762, %v894
        %v896 = vpop.f32.mrb[0].mxu0
        %v897 = vpop.f32.mrb[0].mxu0
        %v898 = vadd.f32 %v762, %v897
        %v899 = vpop.f32.mrb[0].mxu0
        %900 = vmatprep.mubr.bf16.mxu0 0
        %901 = vmatmul.mubr.bf16.gmra.mrb[0].mxu0 %v797
        %v902 = vpop.f32.mrb[0].mxu0
        %v903 = vadd.f32 %v762, %v902
        %v904 = vpop.f32.mrb[0].mxu0
        %v905 = vpop.f32.mrb[0].mxu0
        %v906 = vadd.f32 %v762, %v905
        %v907 = vpop.f32.mrb[0].mxu0
        %908 = vmatprep.mubr.bf16.mxu0 0
        %909 = vmatmul.mubr.bf16.gmra.mrb[0].mxu0 %v798
        %v910 = vpop.f32.mrb[0].mxu0
        %v911 = vadd.f32 %v762, %v910
        %v912 = vpop.f32.mrb[0].mxu0
        %v913 = vpop.f32.mrb[0].mxu0
        %v914 = vadd.f32 %v762, %v913
        %v915 = vpop.f32.mrb[0].mxu0
        %916 = vmatprep.mubr.bf16.mxu0 0
        %917 = vmatmul.mubr.bf16.gmra.mrb[0].mxu0 %v799
        %v918 = vpop.f32.mrb[0].mxu0
        %v919 = vadd.f32 %v762, %v918
        %v920 = vpop.f32.mrb[0].mxu0
        %v921 = vpop.f32.mrb[0].mxu0
        %v922 = vadd.f32 %v762, %v921
        %v923 = vpop.f32.mrb[0].mxu0
        %924 = vmatprep.mubr.bf16.mxu0 0
        %925 = vmatmul.mubr.bf16.gmra.mrb[0].mxu0 %v800
        %v926 = vpop.f32.mrb[0].mxu0
        %v927 = vadd.f32 %v762, %v926
        %v928 = vpop.f32.mrb[0].mxu0
        %v929 = vpop.f32.mrb[0].mxu0
        %v930 = vadd.f32 %v762, %v929
        %v931 = vpop.f32.mrb[0].mxu0
        %932 = vmatprep.mubr.bf16.mxu0 0
        %933 = vmatmul.mubr.bf16.gmra.mrb[0].mxu0 %v801
        %v934 = vpop.f32.mrb[0].mxu0
        %v935 = vadd.f32 %v762, %v934
        %v936 = vpop.f32.mrb[0].mxu0
        %v937 = vpop.f32.mrb[0].mxu0
        %v938 = vadd.f32 %v762, %v937
        %v939 = vpop.f32.mrb[0].mxu0
        %940 = vmatprep.mubr.bf16.mxu0 0
        %941 = vmatmul.mubr.bf16.gmra.mrb[0].mxu0 %v802
        %v942 = vpop.f32.mrb[0].mxu0
        %v943 = vadd.f32 %v762, %v942
        %v944 = vpop.f32.mrb[0].mxu0
        %v945 = vpop.f32.mrb[0].mxu0
        %v946 = vadd.f32 %v762, %v945
        %v947 = vpop.f32.mrb[0].mxu0
        %948 = vmatprep.mubr.bf16.mxu0 0
        %949 = vmatmul.mubr.bf16.gmra.mrb[0].mxu0 %v803
        %v950 = vpop.f32.mrb[0].mxu0
        %v951 = vadd.f32 %v762, %v950
        %v952 = vpop.f32.mrb[0].mxu0
        %v953 = vpop.f32.mrb[0].mxu0
        %v954 = vadd.f32 %v762, %v953
        %v955 = vpop.f32.mrb[0].mxu0
        %956 = vdwg.mxu0
        %v957 = vld [vmem:[%s595] sm:$0x1]
        %v959 = vlaneseq
        %v960 = vshrl.u32 %v959, 7
        %v961 = vsub.s32 0, %v960
        %v962 = vrot.slane %v957, %v961
        %v964 = vmul.f32 %v962, %v895
        %v965 = vmul.f32 %v962, %v898
        %v966 = vmul.f32 %v962, %v903
        %v967 = vmul.f32 %v962, %v906
        %v968 = vmul.f32 %v962, %v911
        %v969 = vmul.f32 %v962, %v914
        %v970 = vmul.f32 %v962, %v919
        %v971 = vmul.f32 %v962, %v922
        %v972 = vmul.f32 %v962, %v927
        %v973 = vmul.f32 %v962, %v930
        %v974 = vmul.f32 %v962, %v935
        %v975 = vmul.f32 %v962, %v938
        %v976 = vmul.f32 %v962, %v943
        %v977 = vmul.f32 %v962, %v946
        %v978 = vmul.f32 %v962, %v951
        %v979 = vmul.f32 %v962, %v954
        %v980 = vadd.f32 %v709, %v964
        %v981 = vadd.f32 %v710, %v965
        %v982 = vadd.f32 %v711, %v966
        %v983 = vadd.f32 %v712, %v967
        %v984 = vadd.f32 %v713, %v968
        %v985 = vadd.f32 %v714, %v969
        %v986 = vadd.f32 %v715, %v970
        %v987 = vadd.f32 %v716, %v971
        %v988 = vadd.f32 %v717, %v972
        %v989 = vadd.f32 %v718, %v973
        %v990 = vadd.f32 %v719, %v974
        %v991 = vadd.f32 %v720, %v975
        %v992 = vadd.f32 %v721, %v976
        %v993 = vadd.f32 %v722, %v977
        %v994 = vadd.f32 %v723, %v978
        %v995 = vadd.f32 %v724, %v979
        %996 = vadd.xlane.f32.xlu0 %v980
        %v997 = vpop.xlane.xlu0 %996
        %998 = vadd.xlane.f32.xlu0 %v981
        %v999 = vpop.xlane.xlu0 %998
        %1000 = vadd.xlane.f32.xlu0 %v982
        %v1001 = vpop.xlane.xlu0 %1000
        %1002 = vadd.xlane.f32.xlu0 %v983
        %v1003 = vpop.xlane.xlu0 %1002
        %1004 = vadd.xlane.f32.xlu0 %v984
        %v1005 = vpop.xlane.xlu0 %1004
        %1006 = vadd.xlane.f32.xlu0 %v985
        %v1007 = vpop.xlane.xlu0 %1006
        %1008 = vadd.xlane.f32.xlu0 %v986
        %v1009 = vpop.xlane.xlu0 %1008
        %1010 = vadd.xlane.f32.xlu0 %v987
        %v1011 = vpop.xlane.xlu0 %1010
        %1012 = vadd.xlane.f32.xlu0 %v988
        %v1013 = vpop.xlane.xlu0 %1012
        %1014 = vadd.xlane.f32.xlu0 %v989
        %v1015 = vpop.xlane.xlu0 %1014
        %1016 = vadd.xlane.f32.xlu0 %v990
        %v1017 = vpop.xlane.xlu0 %1016
        %1018 = vadd.xlane.f32.xlu0 %v991
        %v1019 = vpop.xlane.xlu0 %1018
        %1020 = vadd.xlane.f32.xlu0 %v992
        %v1021 = vpop.xlane.xlu0 %1020
        %1022 = vadd.xlane.f32.xlu0 %v993
        %v1023 = vpop.xlane.xlu0 %1022
        %1024 = vadd.xlane.f32.xlu0 %v994
        %v1025 = vpop.xlane.xlu0 %1024
        %1026 = vadd.xlane.f32.xlu0 %v995
        %v1027 = vpop.xlane.xlu0 %1026
        %v1028 = vrcp.pop 128.0
        %v1029 = vmul.f32 %v997, %v1028
        %v1030 = vmul.f32 %v999, %v1028
        %v1031 = vmul.f32 %v1001, %v1028
        %v1032 = vmul.f32 %v1003, %v1028
        %v1033 = vmul.f32 %v1005, %v1028
        %v1034 = vmul.f32 %v1007, %v1028
        %v1035 = vmul.f32 %v1009, %v1028
        %v1036 = vmul.f32 %v1011, %v1028
        %v1037 = vmul.f32 %v1013, %v1028
        %v1038 = vmul.f32 %v1015, %v1028
        %v1039 = vmul.f32 %v1017, %v1028
        %v1040 = vmul.f32 %v1019, %v1028
        %v1041 = vmul.f32 %v1021, %v1028
        %v1042 = vmul.f32 %v1023, %v1028
        %v1043 = vmul.f32 %v1025, %v1028
        %v1044 = vmul.f32 %v1027, %v1028
        %v1045 = vsub.f32 %v980, %v1029
        %v1046 = vsub.f32 %v981, %v1030
        %v1047 = vsub.f32 %v982, %v1031
        %v1048 = vsub.f32 %v983, %v1032
        %v1049 = vsub.f32 %v984, %v1033
        %v1050 = vsub.f32 %v985, %v1034
        %v1051 = vsub.f32 %v986, %v1035
        %v1052 = vsub.f32 %v987, %v1036
        %v1053 = vsub.f32 %v988, %v1037
        %v1054 = vsub.f32 %v989, %v1038
        %v1055 = vsub.f32 %v990, %v1039
        %v1056 = vsub.f32 %v991, %v1040
        %v1057 = vsub.f32 %v992, %v1041
        %v1058 = vsub.f32 %v993, %v1042
        %v1059 = vsub.f32 %v994, %v1043
        %v1060 = vsub.f32 %v995, %v1044
        %v1061 = vmul.f32 %v1045, %v1045
        %v1062 = vmul.f32 %v1046, %v1046
        %v1063 = vmul.f32 %v1047, %v1047
        %v1064 = vmul.f32 %v1048, %v1048
        %v1065 = vmul.f32 %v1049, %v1049
        %v1066 = vmul.f32 %v1050, %v1050
        %v1067 = vmul.f32 %v1051, %v1051
        %v1068 = vmul.f32 %v1052, %v1052
        %v1069 = vmul.f32 %v1053, %v1053
        %v1070 = vmul.f32 %v1054, %v1054
        %v1071 = vmul.f32 %v1055, %v1055
        %v1072 = vmul.f32 %v1056, %v1056
        %v1073 = vmul.f32 %v1057, %v1057
        %v1074 = vmul.f32 %v1058, %v1058
        %v1075 = vmul.f32 %v1059, %v1059
        %v1076 = vmul.f32 %v1060, %v1060
        %1077 = vadd.xlane.f32.xlu0 %v1061
        %v1078 = vpop.xlane.xlu0 %1077
        %1079 = vadd.xlane.f32.xlu0 %v1062
        %v1080 = vpop.xlane.xlu0 %1079
        %1081 = vadd.xlane.f32.xlu0 %v1063
        %v1082 = vpop.xlane.xlu0 %1081
        %1083 = vadd.xlane.f32.xlu0 %v1064
        %v1084 = vpop.xlane.xlu0 %1083
        %1085 = vadd.xlane.f32.xlu0 %v1065
        %v1086 = vpop.xlane.xlu0 %1085
        %1087 = vadd.xlane.f32.xlu0 %v1066
        %v1088 = vpop.xlane.xlu0 %1087
        %1089 = vadd.xlane.f32.xlu0 %v1067
        %v1090 = vpop.xlane.xlu0 %1089
        %1091 = vadd.xlane.f32.xlu0 %v1068
        %v1092 = vpop.xlane.xlu0 %1091
        %1093 = vadd.xlane.f32.xlu0 %v1069
        %v1094 = vpop.xlane.xlu0 %1093
        %1095 = vadd.xlane.f32.xlu0 %v1070
        %v1096 = vpop.xlane.xlu0 %1095
        %1097 = vadd.xlane.f32.xlu0 %v1071
        %v1098 = vpop.xlane.xlu0 %1097
        %1099 = vadd.xlane.f32.xlu0 %v1072
        %v1100 = vpop.xlane.xlu0 %1099
        %1101 = vadd.xlane.f32.xlu0 %v1073
        %v1102 = vpop.xlane.xlu0 %1101
        %1103 = vadd.xlane.f32.xlu0 %v1074
        %v1104 = vpop.xlane.xlu0 %1103
        %1105 = vadd.xlane.f32.xlu0 %v1075
        %v1106 = vpop.xlane.xlu0 %1105
        %1107 = vadd.xlane.f32.xlu0 %v1076
        %v1108 = vpop.xlane.xlu0 %1107
        %v1109 = vmul.f32 %v1078, %v1028
        %v1110 = vmul.f32 %v1080, %v1028
        %v1111 = vmul.f32 %v1082, %v1028
        %v1112 = vmul.f32 %v1084, %v1028
        %v1113 = vmul.f32 %v1086, %v1028
        %v1114 = vmul.f32 %v1088, %v1028
        %v1115 = vmul.f32 %v1090, %v1028
        %v1116 = vmul.f32 %v1092, %v1028
        %v1117 = vmul.f32 %v1094, %v1028
        %v1118 = vmul.f32 %v1096, %v1028
        %v1119 = vmul.f32 %v1098, %v1028
        %v1120 = vmul.f32 %v1100, %v1028
        %v1121 = vmul.f32 %v1102, %v1028
        %v1122 = vmul.f32 %v1104, %v1028
        %v1123 = vmul.f32 %v1106, %v1028
        %v1124 = vmul.f32 %v1108, %v1028
        %v1125 = vadd.f32 %v1109, 1e-06
        %v1126 = vadd.f32 %v1110, 1e-06
        %v1127 = vadd.f32 %v1111, 1e-06
        %v1128 = vadd.f32 %v1112, 1e-06
        %v1129 = vadd.f32 %v1113, 1e-06
        %v1130 = vadd.f32 %v1114, 1e-06
        %v1131 = vadd.f32 %v1115, 1e-06
        %v1132 = vadd.f32 %v1116, 1e-06
        %v1133 = vadd.f32 %v1117, 1e-06
        %v1134 = vadd.f32 %v1118, 1e-06
        %v1135 = vadd.f32 %v1119, 1e-06
        %v1136 = vadd.f32 %v1120, 1e-06
        %v1137 = vadd.f32 %v1121, 1e-06
        %v1138 = vadd.f32 %v1122, 1e-06
        %v1139 = vadd.f32 %v1123, 1e-06
        %v1140 = vadd.f32 %v1124, 1e-06
        %v1141 = vrsqrt.pop %v1125
        %v1142 = vrsqrt.pop %v1126
        %v1143 = vrsqrt.pop %v1127
        %v1144 = vrsqrt.pop %v1128
        %v1145 = vrsqrt.pop %v1129
        %v1146 = vrsqrt.pop %v1130
        %v1147 = vrsqrt.pop %v1131
        %v1148 = vrsqrt.pop %v1132
        %v1149 = vrsqrt.pop %v1133
        %v1150 = vrsqrt.pop %v1134
        %v1151 = vrsqrt.pop %v1135
        %v1152 = vrsqrt.pop %v1136
        %v1153 = vrsqrt.pop %v1137
        %v1154 = vrsqrt.pop %v1138
        %v1155 = vrsqrt.pop %v1139
        %v1156 = vrsqrt.pop %v1140
        %v1157 = vmul.f32 %v1045, %v1141
        %v1158 = vmul.f32 %v1046, %v1142
        %v1159 = vmul.f32 %v1047, %v1143
        %v1160 = vmul.f32 %v1048, %v1144
        %v1161 = vmul.f32 %v1049, %v1145
        %v1162 = vmul.f32 %v1050, %v1146
        %v1163 = vmul.f32 %v1051, %v1147
        %v1164 = vmul.f32 %v1052, %v1148
        %v1165 = vmul.f32 %v1053, %v1149
        %v1166 = vmul.f32 %v1054, %v1150
        %v1167 = vmul.f32 %v1055, %v1151
        %v1168 = vmul.f32 %v1056, %v1152
        %v1169 = vmul.f32 %v1057, %v1153
        %v1170 = vmul.f32 %v1058, %v1154
        %v1171 = vmul.f32 %v1059, %v1155
        %v1172 = vmul.f32 %v1060, %v1156
        %v1173 = vld [vmem:[%s603] sm:$0x1]
        %v1174 = vadd.f32 %v1173, 1.0
        %v1176 = vlaneseq
        %v1177 = vshrl.u32 %v1176, 7
        %v1178 = vsub.s32 0, %v1177
        %v1179 = vrot.slane %v1174, %v1178
        %v1181 = vmul.f32 %v1157, %v1179
        %v1182 = vmul.f32 %v1158, %v1179
        %v1183 = vmul.f32 %v1159, %v1179
        %v1184 = vmul.f32 %v1160, %v1179
        %v1185 = vmul.f32 %v1161, %v1179
        %v1186 = vmul.f32 %v1162, %v1179
        %v1187 = vmul.f32 %v1163, %v1179
        %v1188 = vmul.f32 %v1164, %v1179
        %v1189 = vmul.f32 %v1165, %v1179
        %v1190 = vmul.f32 %v1166, %v1179
        %v1191 = vmul.f32 %v1167, %v1179
        %v1192 = vmul.f32 %v1168, %v1179
        %v1193 = vmul.f32 %v1169, %v1179
        %v1194 = vmul.f32 %v1170, %v1179
        %v1195 = vmul.f32 %v1171, %v1179
        %v1196 = vmul.f32 %v1172, %v1179
        %v1197 = vld [vmem:[%s611] sm:$0x1]
        %v1199 = vlaneseq
        %v1200 = vshrl.u32 %v1199, 7
        %v1201 = vsub.s32 0, %v1200
        %v1202 = vrot.slane %v1197, %v1201
        %v1204 = vadd.f32 %v1181, %v1202
        %v1205 = vadd.f32 %v1182, %v1202
        %v1206 = vadd.f32 %v1183, %v1202
        %v1207 = vadd.f32 %v1184, %v1202
        %v1208 = vadd.f32 %v1185, %v1202
        %v1209 = vadd.f32 %v1186, %v1202
        %v1210 = vadd.f32 %v1187, %v1202
        %v1211 = vadd.f32 %v1188, %v1202
        %v1212 = vadd.f32 %v1189, %v1202
        %v1213 = vadd.f32 %v1190, %v1202
        %v1214 = vadd.f32 %v1191, %v1202
        %v1215 = vadd.f32 %v1192, %v1202
        %v1216 = vadd.f32 %v1193, %v1202
        %v1217 = vadd.f32 %v1194, %v1202
        %v1218 = vadd.f32 %v1195, %v1202
        %v1219 = vadd.f32 %v1196, %v1202
        %v1220 = vpack.c.bf16 %v1205, %v1204
        %v1221 = vpack.c.bf16 %v1207, %v1206
        %v1222 = vpack.c.bf16 %v1209, %v1208
        %v1223 = vpack.c.bf16 %v1211, %v1210
        %v1224 = vpack.c.bf16 %v1213, %v1212
        %v1225 = vpack.c.bf16 %v1215, %v1214
        %v1226 = vpack.c.bf16 %v1217, %v1216
        %v1227 = vpack.c.bf16 %v1219, %v1218
        %v1228 = vld [vmem:[#allocation16] sm:$0xff]
        %v1229 = vld [vmem:[#allocation16 + $0x8] sm:$0xff]
        %v1230 = vld [vmem:[#allocation16 + $0x10] sm:$0xff]
        %v1231 = vld [vmem:[#allocation16 + $0x18] sm:$0xff]
        %v1232 = vld [vmem:[#allocation16 + $0x20] sm:$0xff]
        %v1233 = vld [vmem:[#allocation16 + $0x28] sm:$0xff]
        %v1234 = vld [vmem:[#allocation16 + $0x30] sm:$0xff]
        %v1235 = vld [vmem:[#allocation16 + $0x38] sm:$0xff]
        %v1236 = vld [vmem:[#allocation16 + $0x40] sm:$0xff]
        %v1237 = vld [vmem:[#allocation16 + $0x48] sm:$0xff]
        %v1238 = vld [vmem:[#allocation16 + $0x50] sm:$0xff]
        %v1239 = vld [vmem:[#allocation16 + $0x58] sm:$0xff]
        %v1240 = vld [vmem:[#allocation16 + $0x60] sm:$0xff]
        %v1241 = vld [vmem:[#allocation16 + $0x68] sm:$0xff]
        %v1242 = vld [vmem:[#allocation16 + $0x70] sm:$0xff]
        %v1243 = vld [vmem:[#allocation16 + $0x78] sm:$0xff]
        %v1244 = vld [vmem:[#allocation16 + $0x80] sm:$0xff]
        %v1245 = vld [vmem:[#allocation16 + $0x88] sm:$0xff]
        %v1246 = vld [vmem:[#allocation16 + $0x90] sm:$0xff]
        %v1247 = vld [vmem:[#allocation16 + $0x98] sm:$0xff]
        %v1248 = vld [vmem:[#allocation16 + $0xa0] sm:$0xff]
        %v1249 = vld [vmem:[#allocation16 + $0xa8] sm:$0xff]
        %v1250 = vld [vmem:[#allocation16 + $0xb0] sm:$0xff]
        %v1251 = vld [vmem:[#allocation16 + $0xb8] sm:$0xff]
        %v1252 = vld [vmem:[#allocation16 + $0xc0] sm:$0xff]
        %v1253 = vld [vmem:[#allocation16 + $0xc8] sm:$0xff]
        %v1254 = vld [vmem:[#allocation16 + $0xd0] sm:$0xff]
        %v1255 = vld [vmem:[#allocation16 + $0xd8] sm:$0xff]
        %v1256 = vld [vmem:[#allocation16 + $0xe0] sm:$0xff]
        %v1257 = vld [vmem:[#allocation16 + $0xe8] sm:$0xff]
        %v1258 = vld [vmem:[#allocation16 + $0xf0] sm:$0xff]
        %v1259 = vld [vmem:[#allocation16 + $0xf8] sm:$0xff]
        %v1260 = vld [vmem:[#allocation17] sm:$0xf]
        %v1262 = vlaneseq
        %v1263 = vshrl.u32 %v1262, 7
        %v1264 = vsub.s32 0, %v1263
        %v1265 = vrot.slane %v1260, %v1264
        %v1266 = vlaneseq
        %v1267 = vshrl.u32 %v1266, 7
        %v1268 = vsub.s32 1, %v1267
        %v1269 = vrot.slane %v1260, %v1268
        %v1270 = vlaneseq
        %v1271 = vshrl.u32 %v1270, 7
        %v1272 = vsub.s32 2, %v1271
        %v1273 = vrot.slane %v1260, %v1272
        %v1274 = vlaneseq
        %v1275 = vshrl.u32 %v1274, 7
        %v1276 = vsub.s32 3, %v1275
        %v1277 = vrot.slane %v1260, %v1276
        %v1314 = vunpack.c.l.b16 %v1228
        %v1315 = vunpack.c.h.b16 %v1228
        %v1316 = vunpack.c.l.b16 %v1229
        %v1317 = vunpack.c.h.b16 %v1229
        %v1318 = vunpack.c.l.b16 %v1230
        %v1319 = vunpack.c.h.b16 %v1230
        %v1320 = vunpack.c.l.b16 %v1231
        %v1321 = vunpack.c.h.b16 %v1231
        %v1322 = vunpack.c.l.b16 %v1232
        %v1323 = vunpack.c.h.b16 %v1232
        %v1324 = vunpack.c.l.b16 %v1233
        %v1325 = vunpack.c.h.b16 %v1233
        %v1326 = vunpack.c.l.b16 %v1234
        %v1327 = vunpack.c.h.b16 %v1234
        %v1328 = vunpack.c.l.b16 %v1235
        %v1329 = vunpack.c.h.b16 %v1235
        %v1330 = vunpack.c.l.b16 %v1236
        %v1331 = vunpack.c.h.b16 %v1236
        %v1332 = vunpack.c.l.b16 %v1237
        %v1333 = vunpack.c.h.b16 %v1237
        %v1334 = vunpack.c.l.b16 %v1238
        %v1335 = vunpack.c.h.b16 %v1238
        %v1336 = vunpack.c.l.b16 %v1239
        %v1337 = vunpack.c.h.b16 %v1239
        %v1338 = vunpack.c.l.b16 %v1240
        %v1339 = vunpack.c.h.b16 %v1240
        %v1340 = vunpack.c.l.b16 %v1241
        %v1341 = vunpack.c.h.b16 %v1241
        %v1342 = vunpack.c.l.b16 %v1242
        %v1343 = vunpack.c.h.b16 %v1242
        %v1344 = vunpack.c.l.b16 %v1243
        %v1345 = vunpack.c.h.b16 %v1243
        %v1346 = vunpack.c.l.b16 %v1244
        %v1347 = vunpack.c.h.b16 %v1244
        %v1348 = vunpack.c.l.b16 %v1245
        %v1349 = vunpack.c.h.b16 %v1245
        %v1350 = vunpack.c.l.b16 %v1246
        %v1351 = vunpack.c.h.b16 %v1246
        %v1352 = vunpack.c.l.b16 %v1247
        %v1353 = vunpack.c.h.b16 %v1247
        %v1354 = vunpack.c.l.b16 %v1248
        %v1355 = vunpack.c.h.b16 %v1248
        %v1356 = vunpack.c.l.b16 %v1249
        %v1357 = vunpack.c.h.b16 %v1249
        %v1358 = vunpack.c.l.b16 %v1250
        %v1359 = vunpack.c.h.b16 %v1250
        %v1360 = vunpack.c.l.b16 %v1251
        %v1361 = vunpack.c.h.b16 %v1251
        %v1362 = vunpack.c.l.b16 %v1252
        %v1363 = vunpack.c.h.b16 %v1252
        %v1364 = vunpack.c.l.b16 %v1253
        %v1365 = vunpack.c.h.b16 %v1253
        %v1366 = vunpack.c.l.b16 %v1254
        %v1367 = vunpack.c.h.b16 %v1254
        %v1368 = vunpack.c.l.b16 %v1255
        %v1369 = vunpack.c.h.b16 %v1255
        %v1370 = vunpack.c.l.b16 %v1256
        %v1371 = vunpack.c.h.b16 %v1256
        %v1372 = vunpack.c.l.b16 %v1257
        %v1373 = vunpack.c.h.b16 %v1257
        %v1374 = vunpack.c.l.b16 %v1258
        %v1375 = vunpack.c.h.b16 %v1258
        %v1376 = vunpack.c.l.b16 %v1259
        %v1377 = vunpack.c.h.b16 %v1259
        %v1378 = vpack.c.b16 %v1318, %v1314
        %v1379 = vpack.c.b16 %v1319, %v1315
        %v1380 = vpack.c.b16 %v1320, %v1316
        %v1381 = vpack.c.b16 %v1321, %v1317
        %v1382 = vpack.c.b16 %v1326, %v1322
        %v1383 = vpack.c.b16 %v1327, %v1323
        %v1384 = vpack.c.b16 %v1328, %v1324
        %v1385 = vpack.c.b16 %v1329, %v1325
        %v1386 = vpack.c.b16 %v1334, %v1330
        %v1387 = vpack.c.b16 %v1335, %v1331
        %v1388 = vpack.c.b16 %v1336, %v1332
        %v1389 = vpack.c.b16 %v1337, %v1333
        %v1390 = vpack.c.b16 %v1342, %v1338
        %v1391 = vpack.c.b16 %v1343, %v1339
        %v1392 = vpack.c.b16 %v1344, %v1340
        %v1393 = vpack.c.b16 %v1345, %v1341
        %v1394 = vpack.c.b16 %v1350, %v1346
        %v1395 = vpack.c.b16 %v1351, %v1347
        %v1396 = vpack.c.b16 %v1352, %v1348
        %v1397 = vpack.c.b16 %v1353, %v1349
        %v1398 = vpack.c.b16 %v1358, %v1354
        %v1399 = vpack.c.b16 %v1359, %v1355
        %v1400 = vpack.c.b16 %v1360, %v1356
        %v1401 = vpack.c.b16 %v1361, %v1357
        %v1402 = vpack.c.b16 %v1366, %v1362
        %v1403 = vpack.c.b16 %v1367, %v1363
        %v1404 = vpack.c.b16 %v1368, %v1364
        %v1405 = vpack.c.b16 %v1369, %v1365
        %v1406 = vpack.c.b16 %v1374, %v1370
        %v1407 = vpack.c.b16 %v1375, %v1371
        %v1408 = vpack.c.b16 %v1376, %v1372
        %v1409 = vpack.c.b16 %v1377, %v1373
        %1442 = vmatprep.subr.bf16.mxu0 %v1379
        %1443 = vmatpush1.bf16.msra.mxu0 %v1378
        %1444 = vmatprep.subr.bf16.mxu0 %v1383
        %1445 = vmatpush1.bf16.msra.mxu0 %v1382
        %1446 = vmatprep.subr.bf16.mxu0 %v1387
        %1447 = vmatpush1.bf16.msra.mxu0 %v1386
        %1448 = vmatprep.subr.bf16.mxu0 %v1391
        %1449 = vmatpush1.bf16.msra.mxu0 %v1390
        %1450 = vmatprep.subr.bf16.mxu0 %v1395
        %1451 = vmatpush1.bf16.msra.mxu0 %v1394
        %1452 = vmatprep.subr.bf16.mxu0 %v1399
        %1453 = vmatpush1.bf16.msra.mxu0 %v1398
        %1454 = vmatprep.subr.bf16.mxu0 %v1403
        %1455 = vmatpush1.bf16.msra.mxu0 %v1402
        %1456 = vmatprep.subr.bf16.mxu0 %v1407
        %1457 = vmatpush1.bf16.msra.mxu0 %v1406
        %1458 = vmatprep.subr.bf16.mxu0 0
        %1459 = vmatpush1.bf16.msra.mxu0 0
        %1460 = vmatprep.subr.bf16.mxu0 0
        %1461 = vmatpush1.bf16.msra.mxu0 0
        %1462 = vmatprep.subr.bf16.mxu0 0
        %1463 = vmatpush1.bf16.msra.mxu0 0
        %1464 = vmatprep.subr.bf16.mxu0 0
        %1465 = vmatpush1.bf16.msra.mxu0 0
        %1466 = vmatprep.subr.bf16.mxu0 0
        %1467 = vmatpush1.bf16.msra.mxu0 0
        %1468 = vmatprep.subr.bf16.mxu0 0
        %1469 = vmatpush1.bf16.msra.mxu0 0
        %1470 = vmatprep.subr.bf16.mxu0 0
        %1471 = vmatpush1.bf16.msra.mxu0 0
        %1472 = vmatprep.subr.bf16.mxu0 0
        %1473 = vmatpush1.bf16.msra.mxu0 0
        %1474 = vmatprep.mubr.bf16.mxu0 0
        %1475 = vmatmul.mubr.bf16.gmra.mrb[0].mxu0 %v1220
        %v1476 = vpop.f32.mrb[0].mxu0
        %v1477 = vadd.f32 %v1265, %v1476
        %v1478 = vpop.f32.mrb[0].mxu0
        %v1479 = vadd.f32 %v1269, %v1478
        %v1480 = vpop.f32.mrb[0].mxu0
        %v1481 = vadd.f32 %v1265, %v1480
        %v1482 = vpop.f32.mrb[0].mxu0
        %v1483 = vadd.f32 %v1269, %v1482
        %1484 = vmatprep.mubr.bf16.mxu0 0
        %1485 = vmatmul.mubr.bf16.gmra.mrb[0].mxu0 %v1221
        %v1486 = vpop.f32.mrb[0].mxu0
        %v1487 = vadd.f32 %v1265, %v1486
        %v1488 = vpop.f32.mrb[0].mxu0
        %v1489 = vadd.f32 %v1269, %v1488
        %v1490 = vpop.f32.mrb[0].mxu0
        %v1491 = vadd.f32 %v1265, %v1490
        %v1492 = vpop.f32.mrb[0].mxu0
        %v1493 = vadd.f32 %v1269, %v1492
        %1494 = vmatprep.mubr.bf16.mxu0 0
        %1495 = vmatmul.mubr.bf16.gmra.mrb[0].mxu0 %v1222
        %v1496 = vpop.f32.mrb[0].mxu0
        %v1497 = vadd.f32 %v1265, %v1496
        %v1498 = vpop.f32.mrb[0].mxu0
        %v1499 = vadd.f32 %v1269, %v1498
        %v1500 = vpop.f32.mrb[0].mxu0
        %v1501 = vadd.f32 %v1265, %v1500
        %v1502 = vpop.f32.mrb[0].mxu0
        %v1503 = vadd.f32 %v1269, %v1502
        %1504 = vmatprep.mubr.bf16.mxu0 0
        %1505 = vmatmul.mubr.bf16.gmra.mrb[0].mxu0 %v1223
        %v1506 = vpop.f32.mrb[0].mxu0
        %v1507 = vadd.f32 %v1265, %v1506
        %v1508 = vpop.f32.mrb[0].mxu0
        %v1509 = vadd.f32 %v1269, %v1508
        %v1510 = vpop.f32.mrb[0].mxu0
        %v1511 = vadd.f32 %v1265, %v1510
        %v1512 = vpop.f32.mrb[0].mxu0
        %v1513 = vadd.f32 %v1269, %v1512
        %1514 = vmatprep.mubr.bf16.mxu0 0
        %1515 = vmatmul.mubr.bf16.gmra.mrb[0].mxu0 %v1224
        %v1516 = vpop.f32.mrb[0].mxu0
        %v1517 = vadd.f32 %v1265, %v1516
        %v1518 = vpop.f32.mrb[0].mxu0
        %v1519 = vadd.f32 %v1269, %v1518
        %v1520 = vpop.f32.mrb[0].mxu0
        %v1521 = vadd.f32 %v1265, %v1520
        %v1522 = vpop.f32.mrb[0].mxu0
        %v1523 = vadd.f32 %v1269, %v1522
        %1524 = vmatprep.mubr.bf16.mxu0 0
        %1525 = vmatmul.mubr.bf16.gmra.mrb[0].mxu0 %v1225
        %v1526 = vpop.f32.mrb[0].mxu0
        %v1527 = vadd.f32 %v1265, %v1526
        %v1528 = vpop.f32.mrb[0].mxu0
        %v1529 = vadd.f32 %v1269, %v1528
        %v1530 = vpop.f32.mrb[0].mxu0
        %v1531 = vadd.f32 %v1265, %v1530
        %v1532 = vpop.f32.mrb[0].mxu0
        %v1533 = vadd.f32 %v1269, %v1532
        %1534 = vmatprep.mubr.bf16.mxu0 0
        %1535 = vmatmul.mubr.bf16.gmra.mrb[0].mxu0 %v1226
        %v1536 = vpop.f32.mrb[0].mxu0
        %v1537 = vadd.f32 %v1265, %v1536
        %v1538 = vpop.f32.mrb[0].mxu0
        %v1539 = vadd.f32 %v1269, %v1538
        %v1540 = vpop.f32.mrb[0].mxu0
        %v1541 = vadd.f32 %v1265, %v1540
        %v1542 = vpop.f32.mrb[0].mxu0
        %v1543 = vadd.f32 %v1269, %v1542
        %1544 = vmatprep.mubr.bf16.mxu0 0
        %1545 = vmatmul.mubr.bf16.gmra.mrb[0].mxu0 %v1227
        %v1546 = vpop.f32.mrb[0].mxu0
        %v1547 = vadd.f32 %v1265, %v1546
        %v1548 = vpop.f32.mrb[0].mxu0
        %v1549 = vadd.f32 %v1269, %v1548
        %v1550 = vpop.f32.mrb[0].mxu0
        %v1551 = vadd.f32 %v1265, %v1550
        %v1552 = vpop.f32.mrb[0].mxu0
        %v1553 = vadd.f32 %v1269, %v1552
        %1554 = vdwg.mxu0
        %1555 = vmatprep.subr.bf16.mxu0 %v1381
        %1556 = vmatpush1.bf16.msra.mxu0 %v1380
        %1557 = vmatprep.subr.bf16.mxu0 %v1385
        %1558 = vmatpush1.bf16.msra.mxu0 %v1384
        %1559 = vmatprep.subr.bf16.mxu0 %v1389
        %1560 = vmatpush1.bf16.msra.mxu0 %v1388
        %1561 = vmatprep.subr.bf16.mxu0 %v1393
        %1562 = vmatpush1.bf16.msra.mxu0 %v1392
        %1563 = vmatprep.subr.bf16.mxu0 %v1397
        %1564 = vmatpush1.bf16.msra.mxu0 %v1396
        %1565 = vmatprep.subr.bf16.mxu0 %v1401
        %1566 = vmatpush1.bf16.msra.mxu0 %v1400
        %1567 = vmatprep.subr.bf16.mxu0 %v1405
        %1568 = vmatpush1.bf16.msra.mxu0 %v1404
        %1569 = vmatprep.subr.bf16.mxu0 %v1409
        %1570 = vmatpush1.bf16.msra.mxu0 %v1408
        %1571 = vmatprep.subr.bf16.mxu0 0
        %1572 = vmatpush1.bf16.msra.mxu0 0
        %1573 = vmatprep.subr.bf16.mxu0 0
        %1574 = vmatpush1.bf16.msra.mxu0 0
        %1575 = vmatprep.subr.bf16.mxu0 0
        %1576 = vmatpush1.bf16.msra.mxu0 0
        %1577 = vmatprep.subr.bf16.mxu0 0
        %1578 = vmatpush1.bf16.msra.mxu0 0
        %1579 = vmatprep.subr.bf16.mxu0 0
        %1580 = vmatpush1.bf16.msra.mxu0 0
        %1581 = vmatprep.subr.bf16.mxu0 0
        %1582 = vmatpush1.bf16.msra.mxu0 0
        %1583 = vmatprep.subr.bf16.mxu0 0
        %1584 = vmatpush1.bf16.msra.mxu0 0
        %1585 = vmatprep.subr.bf16.mxu0 0
        %1586 = vmatpush1.bf16.msra.mxu0 0
        %1587 = vmatprep.mubr.bf16.mxu0 0
        %1588 = vmatmul.mubr.bf16.gmra.mrb[0].mxu0 %v1220
        %v1589 = vpop.f32.mrb[0].mxu0
        %v1590 = vadd.f32 %v1273, %v1589
        %v1591 = vpop.f32.mrb[0].mxu0
        %v1592 = vadd.f32 %v1277, %v1591
        %v1593 = vpop.f32.mrb[0].mxu0
        %v1594 = vadd.f32 %v1273, %v1593
        %v1595 = vpop.f32.mrb[0].mxu0
        %v1596 = vadd.f32 %v1277, %v1595
        %1597 = vmatprep.mubr.bf16.mxu0 0
        %1598 = vmatmul.mubr.bf16.gmra.mrb[0].mxu0 %v1221
        %v1599 = vpop.f32.mrb[0].mxu0
        %v1600 = vadd.f32 %v1273, %v1599
        %v1601 = vpop.f32.mrb[0].mxu0
        %v1602 = vadd.f32 %v1277, %v1601
        %v1603 = vpop.f32.mrb[0].mxu0
        %v1604 = vadd.f32 %v1273, %v1603
        %v1605 = vpop.f32.mrb[0].mxu0
        %v1606 = vadd.f32 %v1277, %v1605
        %1607 = vmatprep.mubr.bf16.mxu0 0
        %1608 = vmatmul.mubr.bf16.gmra.mrb[0].mxu0 %v1222
        %v1609 = vpop.f32.mrb[0].mxu0
        %v1610 = vadd.f32 %v1273, %v1609
        %v1611 = vpop.f32.mrb[0].mxu0
        %v1612 = vadd.f32 %v1277, %v1611
        %v1613 = vpop.f32.mrb[0].mxu0
        %v1614 = vadd.f32 %v1273, %v1613
        %v1615 = vpop.f32.mrb[0].mxu0
        %v1616 = vadd.f32 %v1277, %v1615
        %1617 = vmatprep.mubr.bf16.mxu0 0
        %1618 = vmatmul.mubr.bf16.gmra.mrb[0].mxu0 %v1223
        %v1619 = vpop.f32.mrb[0].mxu0
        %v1620 = vadd.f32 %v1273, %v1619
        %v1621 = vpop.f32.mrb[0].mxu0
        %v1622 = vadd.f32 %v1277, %v1621
        %v1623 = vpop.f32.mrb[0].mxu0
        %v1624 = vadd.f32 %v1273, %v1623
        %v1625 = vpop.f32.mrb[0].mxu0
        %v1626 = vadd.f32 %v1277, %v1625
        %1627 = vmatprep.mubr.bf16.mxu0 0
        %1628 = vmatmul.mubr.bf16.gmra.mrb[0].mxu0 %v1224
        %v1629 = vpop.f32.mrb[0].mxu0
        %v1630 = vadd.f32 %v1273, %v1629
        %v1631 = vpop.f32.mrb[0].mxu0
        %v1632 = vadd.f32 %v1277, %v1631
        %v1633 = vpop.f32.mrb[0].mxu0
        %v1634 = vadd.f32 %v1273, %v1633
        %v1635 = vpop.f32.mrb[0].mxu0
        %v1636 = vadd.f32 %v1277, %v1635
        %1637 = vmatprep.mubr.bf16.mxu0 0
        %1638 = vmatmul.mubr.bf16.gmra.mrb[0].mxu0 %v1225
        %v1639 = vpop.f32.mrb[0].mxu0
        %v1640 = vadd.f32 %v1273, %v1639
        %v1641 = vpop.f32.mrb[0].mxu0
        %v1642 = vadd.f32 %v1277, %v1641
        %v1643 = vpop.f32.mrb[0].mxu0
        %v1644 = vadd.f32 %v1273, %v1643
        %v1645 = vpop.f32.mrb[0].mxu0
        %v1646 = vadd.f32 %v1277, %v1645
        %1647 = vmatprep.mubr.bf16.mxu0 0
        %1648 = vmatmul.mubr.bf16.gmra.mrb[0].mxu0 %v1226
        %v1649 = vpop.f32.mrb[0].mxu0
        %v1650 = vadd.f32 %v1273, %v1649
        %v1651 = vpop.f32.mrb[0].mxu0
        %v1652 = vadd.f32 %v1277, %v1651
        %v1653 = vpop.f32.mrb[0].mxu0
        %v1654 = vadd.f32 %v1273, %v1653
        %v1655 = vpop.f32.mrb[0].mxu0
        %v1656 = vadd.f32 %v1277, %v1655
        %1657 = vmatprep.mubr.bf16.mxu0 0
        %1658 = vmatmul.mubr.bf16.gmra.mrb[0].mxu0 %v1227
        %v1659 = vpop.f32.mrb[0].mxu0
        %v1660 = vadd.f32 %v1273, %v1659
        %v1661 = vpop.f32.mrb[0].mxu0
        %v1662 = vadd.f32 %v1277, %v1661
        %v1663 = vpop.f32.mrb[0].mxu0
        %v1664 = vadd.f32 %v1273, %v1663
        %v1665 = vpop.f32.mrb[0].mxu0
        %v1666 = vadd.f32 %v1277, %v1665
        %1667 = vdwg.mxu0
        %v1668 = vmul.f32 %v1477, %v1477
        %v1669 = vmul.f32 %v1479, %v1479
        %v1670 = vmul.f32 %v1590, %v1590
        %v1671 = vmul.f32 %v1592, %v1592
        %v1672 = vmul.f32 %v1481, %v1481
        %v1673 = vmul.f32 %v1483, %v1483
        %v1674 = vmul.f32 %v1594, %v1594
        %v1675 = vmul.f32 %v1596, %v1596
        %v1676 = vmul.f32 %v1487, %v1487
        %v1677 = vmul.f32 %v1489, %v1489
        %v1678 = vmul.f32 %v1600, %v1600
        %v1679 = vmul.f32 %v1602, %v1602
        %v1680 = vmul.f32 %v1491, %v1491
        %v1681 = vmul.f32 %v1493, %v1493
        %v1682 = vmul.f32 %v1604, %v1604
        %v1683 = vmul.f32 %v1606, %v1606
        %v1684 = vmul.f32 %v1497, %v1497
        %v1685 = vmul.f32 %v1499, %v1499
        %v1686 = vmul.f32 %v1610, %v1610
        %v1687 = vmul.f32 %v1612, %v1612
        %v1688 = vmul.f32 %v1501, %v1501
        %v1689 = vmul.f32 %v1503, %v1503
        %v1690 = vmul.f32 %v1614, %v1614
        %v1691 = vmul.f32 %v1616, %v1616
        %v1692 = vmul.f32 %v1507, %v1507
        %v1693 = vmul.f32 %v1509, %v1509
        %v1694 = vmul.f32 %v1620, %v1620
        %v1695 = vmul.f32 %v1622, %v1622
        %v1696 = vmul.f32 %v1511, %v1511
        %v1697 = vmul.f32 %v1513, %v1513
        %v1698 = vmul.f32 %v1624, %v1624
        %v1699 = vmul.f32 %v1626, %v1626
        %v1700 = vmul.f32 %v1517, %v1517
        %v1701 = vmul.f32 %v1519, %v1519
        %v1702 = vmul.f32 %v1630, %v1630
        %v1703 = vmul.f32 %v1632, %v1632
        %v1704 = vmul.f32 %v1521, %v1521
        %v1705 = vmul.f32 %v1523, %v1523
        %v1706 = vmul.f32 %v1634, %v1634
        %v1707 = vmul.f32 %v1636, %v1636
        %v1708 = vmul.f32 %v1527, %v1527
        %v1709 = vmul.f32 %v1529, %v1529
        %v1710 = vmul.f32 %v1640, %v1640
        %v1711 = vmul.f32 %v1642, %v1642
        %v1712 = vmul.f32 %v1531, %v1531
        %v1713 = vmul.f32 %v1533, %v1533
        %v1714 = vmul.f32 %v1644, %v1644
        %v1715 = vmul.f32 %v1646, %v1646
        %v1716 = vmul.f32 %v1537, %v1537
        %v1717 = vmul.f32 %v1539, %v1539
        %v1718 = vmul.f32 %v1650, %v1650
        %v1719 = vmul.f32 %v1652, %v1652
        %v1720 = vmul.f32 %v1541, %v1541
        %v1721 = vmul.f32 %v1543, %v1543
        %v1722 = vmul.f32 %v1654, %v1654
        %v1723 = vmul.f32 %v1656, %v1656
        %v1724 = vmul.f32 %v1547, %v1547
        %v1725 = vmul.f32 %v1549, %v1549
        %v1726 = vmul.f32 %v1660, %v1660
        %v1727 = vmul.f32 %v1662, %v1662
        %v1728 = vmul.f32 %v1551, %v1551
        %v1729 = vmul.f32 %v1553, %v1553
        %v1730 = vmul.f32 %v1664, %v1664
        %v1731 = vmul.f32 %v1666, %v1666
        %v1732 = vmul.f32 %v1477, %v1668
        %v1733 = vmul.f32 %v1479, %v1669
        %v1734 = vmul.f32 %v1590, %v1670
        %v1735 = vmul.f32 %v1592, %v1671
        %v1736 = vmul.f32 %v1481, %v1672
        %v1737 = vmul.f32 %v1483, %v1673
        %v1738 = vmul.f32 %v1594, %v1674
        %v1739 = vmul.f32 %v1596, %v1675
        %v1740 = vmul.f32 %v1487, %v1676
        %v1741 = vmul.f32 %v1489, %v1677
        %v1742 = vmul.f32 %v1600, %v1678
        %v1743 = vmul.f32 %v1602, %v1679
        %v1744 = vmul.f32 %v1491, %v1680
        %v1745 = vmul.f32 %v1493, %v1681
        %v1746 = vmul.f32 %v1604, %v1682
        %v1747 = vmul.f32 %v1606, %v1683
        %v1748 = vmul.f32 %v1497, %v1684
        %v1749 = vmul.f32 %v1499, %v1685
        %v1750 = vmul.f32 %v1610, %v1686
        %v1751 = vmul.f32 %v1612, %v1687
        %v1752 = vmul.f32 %v1501, %v1688
        %v1753 = vmul.f32 %v1503, %v1689
        %v1754 = vmul.f32 %v1614, %v1690
        %v1755 = vmul.f32 %v1616, %v1691
        %v1756 = vmul.f32 %v1507, %v1692
        %v1757 = vmul.f32 %v1509, %v1693
        %v1758 = vmul.f32 %v1620, %v1694
        %v1759 = vmul.f32 %v1622, %v1695
        %v1760 = vmul.f32 %v1511, %v1696
        %v1761 = vmul.f32 %v1513, %v1697
        %v1762 = vmul.f32 %v1624, %v1698
        %v1763 = vmul.f32 %v1626, %v1699
        %v1764 = vmul.f32 %v1517, %v1700
        %v1765 = vmul.f32 %v1519, %v1701
        %v1766 = vmul.f32 %v1630, %v1702
        %v1767 = vmul.f32 %v1632, %v1703
        %v1768 = vmul.f32 %v1521, %v1704
        %v1769 = vmul.f32 %v1523, %v1705
        %v1770 = vmul.f32 %v1634, %v1706
        %v1771 = vmul.f32 %v1636, %v1707
        %v1772 = vmul.f32 %v1527, %v1708
        %v1773 = vmul.f32 %v1529, %v1709
        %v1774 = vmul.f32 %v1640, %v1710
        %v1775 = vmul.f32 %v1642, %v1711
        %v1776 = vmul.f32 %v1531, %v1712
        %v1777 = vmul.f32 %v1533, %v1713
        %v1778 = vmul.f32 %v1644, %v1714
        %v1779 = vmul.f32 %v1646, %v1715
        %v1780 = vmul.f32 %v1537, %v1716
        %v1781 = vmul.f32 %v1539, %v1717
        %v1782 = vmul.f32 %v1650, %v1718
        %v1783 = vmul.f32 %v1652, %v1719
        %v1784 = vmul.f32 %v1541, %v1720
        %v1785 = vmul.f32 %v1543, %v1721
        %v1786 = vmul.f32 %v1654, %v1722
        %v1787 = vmul.f32 %v1656, %v1723
        %v1788 = vmul.f32 %v1547, %v1724
        %v1789 = vmul.f32 %v1549, %v1725
        %v1790 = vmul.f32 %v1660, %v1726
        %v1791 = vmul.f32 %v1662, %v1727
        %v1792 = vmul.f32 %v1551, %v1728
        %v1793 = vmul.f32 %v1553, %v1729
        %v1794 = vmul.f32 %v1664, %v1730
        %v1795 = vmul.f32 %v1666, %v1731
        %v1796 = vmul.f32 %v1732, 0.044715
        %v1797 = vmul.f32 %v1733, 0.044715
        %v1798 = vmul.f32 %v1734, 0.044715
        %v1799 = vmul.f32 %v1735, 0.044715
        %v1800 = vmul.f32 %v1736, 0.044715
        %v1801 = vmul.f32 %v1737, 0.044715
        %v1802 = vmul.f32 %v1738, 0.044715
        %v1803 = vmul.f32 %v1739, 0.044715
        %v1804 = vmul.f32 %v1740, 0.044715
        %v1805 = vmul.f32 %v1741, 0.044715
        %v1806 = vmul.f32 %v1742, 0.044715
        %v1807 = vmul.f32 %v1743, 0.044715
        %v1808 = vmul.f32 %v1744, 0.044715
        %v1809 = vmul.f32 %v1745, 0.044715
        %v1810 = vmul.f32 %v1746, 0.044715
        %v1811 = vmul.f32 %v1747, 0.044715
        %v1812 = vmul.f32 %v1748, 0.044715
        %v1813 = vmul.f32 %v1749, 0.044715
        %v1814 = vmul.f32 %v1750, 0.044715
        %v1815 = vmul.f32 %v1751, 0.044715
        %v1816 = vmul.f32 %v1752, 0.044715
        %v1817 = vmul.f32 %v1753, 0.044715
        %v1818 = vmul.f32 %v1754, 0.044715
        %v1819 = vmul.f32 %v1755, 0.044715
        %v1820 = vmul.f32 %v1756, 0.044715
        %v1821 = vmul.f32 %v1757, 0.044715
        %v1822 = vmul.f32 %v1758, 0.044715
        %v1823 = vmul.f32 %v1759, 0.044715
        %v1824 = vmul.f32 %v1760, 0.044715
        %v1825 = vmul.f32 %v1761, 0.044715
        %v1826 = vmul.f32 %v1762, 0.044715
        %v1827 = vmul.f32 %v1763, 0.044715
        %v1828 = vmul.f32 %v1764, 0.044715
        %v1829 = vmul.f32 %v1765, 0.044715
        %v1830 = vmul.f32 %v1766, 0.044715
        %v1831 = vmul.f32 %v1767, 0.044715
        %v1832 = vmul.f32 %v1768, 0.044715
        %v1833 = vmul.f32 %v1769, 0.044715
        %v1834 = vmul.f32 %v1770, 0.044715
        %v1835 = vmul.f32 %v1771, 0.044715
        %v1836 = vmul.f32 %v1772, 0.044715
        %v1837 = vmul.f32 %v1773, 0.044715
        %v1838 = vmul.f32 %v1774, 0.044715
        %v1839 = vmul.f32 %v1775, 0.044715
        %v1840 = vmul.f32 %v1776, 0.044715
        %v1841 = vmul.f32 %v1777, 0.044715
        %v1842 = vmul.f32 %v1778, 0.044715
        %v1843 = vmul.f32 %v1779, 0.044715
        %v1844 = vmul.f32 %v1780, 0.044715
        %v1845 = vmul.f32 %v1781, 0.044715
        %v1846 = vmul.f32 %v1782, 0.044715
        %v1847 = vmul.f32 %v1783, 0.044715
        %v1848 = vmul.f32 %v1784, 0.044715
        %v1849 = vmul.f32 %v1785, 0.044715
        %v1850 = vmul.f32 %v1786, 0.044715
        %v1851 = vmul.f32 %v1787, 0.044715
        %v1852 = vmul.f32 %v1788, 0.044715
        %v1853 = vmul.f32 %v1789, 0.044715
        %v1854 = vmul.f32 %v1790, 0.044715
        %v1855 = vmul.f32 %v1791, 0.044715
        %v1856 = vmul.f32 %v1792, 0.044715
        %v1857 = vmul.f32 %v1793, 0.044715
        %v1858 = vmul.f32 %v1794, 0.044715
        %v1859 = vmul.f32 %v1795, 0.044715
        %v1860 = vadd.f32 %v1477, %v1796
        %v1861 = vadd.f32 %v1479, %v1797
        %v1862 = vadd.f32 %v1590, %v1798
        %v1863 = vadd.f32 %v1592, %v1799
        %v1864 = vadd.f32 %v1481, %v1800
        %v1865 = vadd.f32 %v1483, %v1801
        %v1866 = vadd.f32 %v1594, %v1802
        %v1867 = vadd.f32 %v1596, %v1803
        %v1868 = vadd.f32 %v1487, %v1804
        %v1869 = vadd.f32 %v1489, %v1805
        %v1870 = vadd.f32 %v1600, %v1806
        %v1871 = vadd.f32 %v1602, %v1807
        %v1872 = vadd.f32 %v1491, %v1808
        %v1873 = vadd.f32 %v1493, %v1809
        %v1874 = vadd.f32 %v1604, %v1810
        %v1875 = vadd.f32 %v1606, %v1811
        %v1876 = vadd.f32 %v1497, %v1812
        %v1877 = vadd.f32 %v1499, %v1813
        %v1878 = vadd.f32 %v1610, %v1814
        %v1879 = vadd.f32 %v1612, %v1815
        %v1880 = vadd.f32 %v1501, %v1816
        %v1881 = vadd.f32 %v1503, %v1817
        %v1882 = vadd.f32 %v1614, %v1818
        %v1883 = vadd.f32 %v1616, %v1819
        %v1884 = vadd.f32 %v1507, %v1820
        %v1885 = vadd.f32 %v1509, %v1821
        %v1886 = vadd.f32 %v1620, %v1822
        %v1887 = vadd.f32 %v1622, %v1823
        %v1888 = vadd.f32 %v1511, %v1824
        %v1889 = vadd.f32 %v1513, %v1825
        %v1890 = vadd.f32 %v1624, %v1826
        %v1891 = vadd.f32 %v1626, %v1827
        %v1892 = vadd.f32 %v1517, %v1828
        %v1893 = vadd.f32 %v1519, %v1829
        %v1894 = vadd.f32 %v1630, %v1830
        %v1895 = vadd.f32 %v1632, %v1831
        %v1896 = vadd.f32 %v1521, %v1832
        %v1897 = vadd.f32 %v1523, %v1833
        %v1898 = vadd.f32 %v1634, %v1834
        %v1899 = vadd.f32 %v1636, %v1835
        %v1900 = vadd.f32 %v1527, %v1836
        %v1901 = vadd.f32 %v1529, %v1837
        %v1902 = vadd.f32 %v1640, %v1838
        %v1903 = vadd.f32 %v1642, %v1839
        %v1904 = vadd.f32 %v1531, %v1840
        %v1905 = vadd.f32 %v1533, %v1841
        %v1906 = vadd.f32 %v1644, %v1842
        %v1907 = vadd.f32 %v1646, %v1843
        %v1908 = vadd.f32 %v1537, %v1844
        %v1909 = vadd.f32 %v1539, %v1845
        %v1910 = vadd.f32 %v1650, %v1846
        %v1911 = vadd.f32 %v1652, %v1847
        %v1912 = vadd.f32 %v1541, %v1848
        %v1913 = vadd.f32 %v1543, %v1849
        %v1914 = vadd.f32 %v1654, %v1850
        %v1915 = vadd.f32 %v1656, %v1851
        %v1916 = vadd.f32 %v1547, %v1852
        %v1917 = vadd.f32 %v1549, %v1853
        %v1918 = vadd.f32 %v1660, %v1854
        %v1919 = vadd.f32 %v1662, %v1855
        %v1920 = vadd.f32 %v1551, %v1856
        %v1921 = vadd.f32 %v1553, %v1857
        %v1922 = vadd.f32 %v1664, %v1858
        %v1923 = vadd.f32 %v1666, %v1859
        %v1924 = vmul.f32 %v1860, 0.7978846
        %v1925 = vmul.f32 %v1861, 0.7978846
        %v1926 = vmul.f32 %v1862, 0.7978846
        %v1927 = vmul.f32 %v1863, 0.7978846
        %v1928 = vmul.f32 %v1864, 0.7978846
        %v1929 = vmul.f32 %v1865, 0.7978846
        %v1930 = vmul.f32 %v1866, 0.7978846
        %v1931 = vmul.f32 %v1867, 0.7978846
        %v1932 = vmul.f32 %v1868, 0.7978846
        %v1933 = vmul.f32 %v1869, 0.7978846
        %v1934 = vmul.f32 %v1870, 0.7978846
        %v1935 = vmul.f32 %v1871, 0.7978846
        %v1936 = vmul.f32 %v1872, 0.7978846
        %v1937 = vmul.f32 %v1873, 0.7978846
        %v1938 = vmul.f32 %v1874, 0.7978846
        %v1939 = vmul.f32 %v1875, 0.7978846
        %v1940 = vmul.f32 %v1876, 0.7978846
        %v1941 = vmul.f32 %v1877, 0.7978846
        %v1942 = vmul.f32 %v1878, 0.7978846
        %v1943 = vmul.f32 %v1879, 0.7978846
        %v1944 = vmul.f32 %v1880, 0.7978846
        %v1945 = vmul.f32 %v1881, 0.7978846
        %v1946 = vmul.f32 %v1882, 0.7978846
        %v1947 = vmul.f32 %v1883, 0.7978846
        %v1948 = vmul.f32 %v1884, 0.7978846
        %v1949 = vmul.f32 %v1885, 0.7978846
        %v1950 = vmul.f32 %v1886, 0.7978846
        %v1951 = vmul.f32 %v1887, 0.7978846
        %v1952 = vmul.f32 %v1888, 0.7978846
        %v1953 = vmul.f32 %v1889, 0.7978846
        %v1954 = vmul.f32 %v1890, 0.7978846
        %v1955 = vmul.f32 %v1891, 0.7978846
        %v1956 = vmul.f32 %v1892, 0.7978846
        %v1957 = vmul.f32 %v1893, 0.7978846
        %v1958 = vmul.f32 %v1894, 0.7978846
        %v1959 = vmul.f32 %v1895, 0.7978846
        %v1960 = vmul.f32 %v1896, 0.7978846
        %v1961 = vmul.f32 %v1897, 0.7978846
        %v1962 = vmul.f32 %v1898, 0.7978846
        %v1963 = vmul.f32 %v1899, 0.7978846
        %v1964 = vmul.f32 %v1900, 0.7978846
        %v1965 = vmul.f32 %v1901, 0.7978846
        %v1966 = vmul.f32 %v1902, 0.7978846
        %v1967 = vmul.f32 %v1903, 0.7978846
        %v1968 = vmul.f32 %v1904, 0.7978846
        %v1969 = vmul.f32 %v1905, 0.7978846
        %v1970 = vmul.f32 %v1906, 0.7978846
        %v1971 = vmul.f32 %v1907, 0.7978846
        %v1972 = vmul.f32 %v1908, 0.7978846
        %v1973 = vmul.f32 %v1909, 0.7978846
        %v1974 = vmul.f32 %v1910, 0.7978846
        %v1975 = vmul.f32 %v1911, 0.7978846
        %v1976 = vmul.f32 %v1912, 0.7978846
        %v1977 = vmul.f32 %v1913, 0.7978846
        %v1978 = vmul.f32 %v1914, 0.7978846
        %v1979 = vmul.f32 %v1915, 0.7978846
        %v1980 = vmul.f32 %v1916, 0.7978846
        %v1981 = vmul.f32 %v1917, 0.7978846
        %v1982 = vmul.f32 %v1918, 0.7978846
        %v1983 = vmul.f32 %v1919, 0.7978846
        %v1984 = vmul.f32 %v1920, 0.7978846
        %v1985 = vmul.f32 %v1921, 0.7978846
        %v1986 = vmul.f32 %v1922, 0.7978846
        %v1987 = vmul.f32 %v1923, 0.7978846
        %v1988 = vtanh.pop %v1924
        %v1989 = vtanh.pop %v1925
        %v1990 = vtanh.pop %v1926
        %v1991 = vtanh.pop %v1927
        %v1992 = vtanh.pop %v1928
        %v1993 = vtanh.pop %v1929
        %v1994 = vtanh.pop %v1930
        %v1995 = vtanh.pop %v1931
        %v1996 = vtanh.pop %v1932
        %v1997 = vtanh.pop %v1933
        %v1998 = vtanh.pop %v1934
        %v1999 = vtanh.pop %v1935
        %v2000 = vtanh.pop %v1936
        %v2001 = vtanh.pop %v1937
        %v2002 = vtanh.pop %v1938
        %v2003 = vtanh.pop %v1939
        %v2004 = vtanh.pop %v1940
        %v2005 = vtanh.pop %v1941
        %v2006 = vtanh.pop %v1942
        %v2007 = vtanh.pop %v1943
        %v2008 = vtanh.pop %v1944
        %v2009 = vtanh.pop %v1945
        %v2010 = vtanh.pop %v1946
        %v2011 = vtanh.pop %v1947
        %v2012 = vtanh.pop %v1948
        %v2013 = vtanh.pop %v1949
        %v2014 = vtanh.pop %v1950
        %v2015 = vtanh.pop %v1951
        %v2016 = vtanh.pop %v1952
        %v2017 = vtanh.pop %v1953
        %v2018 = vtanh.pop %v1954
        %v2019 = vtanh.pop %v1955
        %v2020 = vtanh.pop %v1956
        %v2021 = vtanh.pop %v1957
        %v2022 = vtanh.pop %v1958
        %v2023 = vtanh.pop %v1959
        %v2024 = vtanh.pop %v1960
        %v2025 = vtanh.pop %v1961
        %v2026 = vtanh.pop %v1962
        %v2027 = vtanh.pop %v1963
        %v2028 = vtanh.pop %v1964
        %v2029 = vtanh.pop %v1965
        %v2030 = vtanh.pop %v1966
        %v2031 = vtanh.pop %v1967
        %v2032 = vtanh.pop %v1968
        %v2033 = vtanh.pop %v1969
        %v2034 = vtanh.pop %v1970
        %v2035 = vtanh.pop %v1971
        %v2036 = vtanh.pop %v1972
        %v2037 = vtanh.pop %v1973
        %v2038 = vtanh.pop %v1974
        %v2039 = vtanh.pop %v1975
        %v2040 = vtanh.pop %v1976
        %v2041 = vtanh.pop %v1977
        %v2042 = vtanh.pop %v1978
        %v2043 = vtanh.pop %v1979
        %v2044 = vtanh.pop %v1980
        %v2045 = vtanh.pop %v1981
        %v2046 = vtanh.pop %v1982
        %v2047 = vtanh.pop %v1983
        %v2048 = vtanh.pop %v1984
        %v2049 = vtanh.pop %v1985
        %v2050 = vtanh.pop %v1986
        %v2051 = vtanh.pop %v1987
        %v2052 = vadd.f32 %v1988, 1.0
        %v2053 = vadd.f32 %v1989, 1.0
        %v2054 = vadd.f32 %v1990, 1.0
        %v2055 = vadd.f32 %v1991, 1.0
        %v2056 = vadd.f32 %v1992, 1.0
        %v2057 = vadd.f32 %v1993, 1.0
        %v2058 = vadd.f32 %v1994, 1.0
        %v2059 = vadd.f32 %v1995, 1.0
        %v2060 = vadd.f32 %v1996, 1.0
        %v2061 = vadd.f32 %v1997, 1.0
        %v2062 = vadd.f32 %v1998, 1.0
        %v2063 = vadd.f32 %v1999, 1.0
        %v2064 = vadd.f32 %v2000, 1.0
        %v2065 = vadd.f32 %v2001, 1.0
        %v2066 = vadd.f32 %v2002, 1.0
        %v2067 = vadd.f32 %v2003, 1.0
        %v2068 = vadd.f32 %v2004, 1.0
        %v2069 = vadd.f32 %v2005, 1.0
        %v2070 = vadd.f32 %v2006, 1.0
        %v2071 = vadd.f32 %v2007, 1.0
        %v2072 = vadd.f32 %v2008, 1.0
        %v2073 = vadd.f32 %v2009, 1.0
        %v2074 = vadd.f32 %v2010, 1.0
        %v2075 = vadd.f32 %v2011, 1.0
        %v2076 = vadd.f32 %v2012, 1.0
        %v2077 = vadd.f32 %v2013, 1.0
        %v2078 = vadd.f32 %v2014, 1.0
        %v2079 = vadd.f32 %v2015, 1.0
        %v2080 = vadd.f32 %v2016, 1.0
        %v2081 = vadd.f32 %v2017, 1.0
        %v2082 = vadd.f32 %v2018, 1.0
        %v2083 = vadd.f32 %v2019, 1.0
        %v2084 = vadd.f32 %v2020, 1.0
        %v2085 = vadd.f32 %v2021, 1.0
        %v2086 = vadd.f32 %v2022, 1.0
        %v2087 = vadd.f32 %v2023, 1.0
        %v2088 = vadd.f32 %v2024, 1.0
        %v2089 = vadd.f32 %v2025, 1.0
        %v2090 = vadd.f32 %v2026, 1.0
        %v2091 = vadd.f32 %v2027, 1.0
        %v2092 = vadd.f32 %v2028, 1.0
        %v2093 = vadd.f32 %v2029, 1.0
        %v2094 = vadd.f32 %v2030, 1.0
        %v2095 = vadd.f32 %v2031, 1.0
        %v2096 = vadd.f32 %v2032, 1.0
        %v2097 = vadd.f32 %v2033, 1.0
        %v2098 = vadd.f32 %v2034, 1.0
        %v2099 = vadd.f32 %v2035, 1.0
        %v2100 = vadd.f32 %v2036, 1.0
        %v2101 = vadd.f32 %v2037, 1.0
        %v2102 = vadd.f32 %v2038, 1.0
        %v2103 = vadd.f32 %v2039, 1.0
        %v2104 = vadd.f32 %v2040, 1.0
        %v2105 = vadd.f32 %v2041, 1.0
        %v2106 = vadd.f32 %v2042, 1.0
        %v2107 = vadd.f32 %v2043, 1.0
        %v2108 = vadd.f32 %v2044, 1.0
        %v2109 = vadd.f32 %v2045, 1.0
        %v2110 = vadd.f32 %v2046, 1.0
        %v2111 = vadd.f32 %v2047, 1.0
        %v2112 = vadd.f32 %v2048, 1.0
        %v2113 = vadd.f32 %v2049, 1.0
        %v2114 = vadd.f32 %v2050, 1.0
        %v2115 = vadd.f32 %v2051, 1.0
        %v2116 = vmul.f32 %v2052, 0.5
        %v2117 = vmul.f32 %v2053, 0.5
        %v2118 = vmul.f32 %v2054, 0.5
        %v2119 = vmul.f32 %v2055, 0.5
        %v2120 = vmul.f32 %v2056, 0.5
        %v2121 = vmul.f32 %v2057, 0.5
        %v2122 = vmul.f32 %v2058, 0.5
        %v2123 = vmul.f32 %v2059, 0.5
        %v2124 = vmul.f32 %v2060, 0.5
        %v2125 = vmul.f32 %v2061, 0.5
        %v2126 = vmul.f32 %v2062, 0.5
        %v2127 = vmul.f32 %v2063, 0.5
        %v2128 = vmul.f32 %v2064, 0.5
        %v2129 = vmul.f32 %v2065, 0.5
        %v2130 = vmul.f32 %v2066, 0.5
        %v2131 = vmul.f32 %v2067, 0.5
        %v2132 = vmul.f32 %v2068, 0.5
        %v2133 = vmul.f32 %v2069, 0.5
        %v2134 = vmul.f32 %v2070, 0.5
        %v2135 = vmul.f32 %v2071, 0.5
        %v2136 = vmul.f32 %v2072, 0.5
        %v2137 = vmul.f32 %v2073, 0.5
        %v2138 = vmul.f32 %v2074, 0.5
        %v2139 = vmul.f32 %v2075, 0.5
        %v2140 = vmul.f32 %v2076, 0.5
        %v2141 = vmul.f32 %v2077, 0.5
        %v2142 = vmul.f32 %v2078, 0.5
        %v2143 = vmul.f32 %v2079, 0.5
        %v2144 = vmul.f32 %v2080, 0.5
        %v2145 = vmul.f32 %v2081, 0.5
        %v2146 = vmul.f32 %v2082, 0.5
        %v2147 = vmul.f32 %v2083, 0.5
        %v2148 = vmul.f32 %v2084, 0.5
        %v2149 = vmul.f32 %v2085, 0.5
        %v2150 = vmul.f32 %v2086, 0.5
        %v2151 = vmul.f32 %v2087, 0.5
        %v2152 = vmul.f32 %v2088, 0.5
        %v2153 = vmul.f32 %v2089, 0.5
        %v2154 = vmul.f32 %v2090, 0.5
        %v2155 = vmul.f32 %v2091, 0.5
        %v2156 = vmul.f32 %v2092, 0.5
        %v2157 = vmul.f32 %v2093, 0.5
        %v2158 = vmul.f32 %v2094, 0.5
        %v2159 = vmul.f32 %v2095, 0.5
        %v2160 = vmul.f32 %v2096, 0.5
        %v2161 = vmul.f32 %v2097, 0.5
        %v2162 = vmul.f32 %v2098, 0.5
        %v2163 = vmul.f32 %v2099, 0.5
        %v2164 = vmul.f32 %v2100, 0.5
        %v2165 = vmul.f32 %v2101, 0.5
        %v2166 = vmul.f32 %v2102, 0.5
        %v2167 = vmul.f32 %v2103, 0.5
        %v2168 = vmul.f32 %v2104, 0.5
        %v2169 = vmul.f32 %v2105, 0.5
        %v2170 = vmul.f32 %v2106, 0.5
        %v2171 = vmul.f32 %v2107, 0.5
        %v2172 = vmul.f32 %v2108, 0.5
        %v2173 = vmul.f32 %v2109, 0.5
        %v2174 = vmul.f32 %v2110, 0.5
        %v2175 = vmul.f32 %v2111, 0.5
        %v2176 = vmul.f32 %v2112, 0.5
        %v2177 = vmul.f32 %v2113, 0.5
        %v2178 = vmul.f32 %v2114, 0.5
        %v2179 = vmul.f32 %v2115, 0.5
        %v2180 = vmul.f32 %v1477, %v2116
        %v2181 = vmul.f32 %v1479, %v2117
        %v2182 = vmul.f32 %v1590, %v2118
        %v2183 = vmul.f32 %v1592, %v2119
        %v2184 = vmul.f32 %v1481, %v2120
        %v2185 = vmul.f32 %v1483, %v2121
        %v2186 = vmul.f32 %v1594, %v2122
        %v2187 = vmul.f32 %v1596, %v2123
        %v2188 = vmul.f32 %v1487, %v2124
        %v2189 = vmul.f32 %v1489, %v2125
        %v2190 = vmul.f32 %v1600, %v2126
        %v2191 = vmul.f32 %v1602, %v2127
        %v2192 = vmul.f32 %v1491, %v2128
        %v2193 = vmul.f32 %v1493, %v2129
        %v2194 = vmul.f32 %v1604, %v2130
        %v2195 = vmul.f32 %v1606, %v2131
        %v2196 = vmul.f32 %v1497, %v2132
        %v2197 = vmul.f32 %v1499, %v2133
        %v2198 = vmul.f32 %v1610, %v2134
        %v2199 = vmul.f32 %v1612, %v2135
        %v2200 = vmul.f32 %v1501, %v2136
        %v2201 = vmul.f32 %v1503, %v2137
        %v2202 = vmul.f32 %v1614, %v2138
        %v2203 = vmul.f32 %v1616, %v2139
        %v2204 = vmul.f32 %v1507, %v2140
        %v2205 = vmul.f32 %v1509, %v2141
        %v2206 = vmul.f32 %v1620, %v2142
        %v2207 = vmul.f32 %v1622, %v2143
        %v2208 = vmul.f32 %v1511, %v2144
        %v2209 = vmul.f32 %v1513, %v2145
        %v2210 = vmul.f32 %v1624, %v2146
        %v2211 = vmul.f32 %v1626, %v2147
        %v2212 = vmul.f32 %v1517, %v2148
        %v2213 = vmul.f32 %v1519, %v2149
        %v2214 = vmul.f32 %v1630, %v2150
        %v2215 = vmul.f32 %v1632, %v2151
        %v2216 = vmul.f32 %v1521, %v2152
        %v2217 = vmul.f32 %v1523, %v2153
        %v2218 = vmul.f32 %v1634, %v2154
        %v2219 = vmul.f32 %v1636, %v2155
        %v2220 = vmul.f32 %v1527, %v2156
        %v2221 = vmul.f32 %v1529, %v2157
        %v2222 = vmul.f32 %v1640, %v2158
        %v2223 = vmul.f32 %v1642, %v2159
        %v2224 = vmul.f32 %v1531, %v2160
        %v2225 = vmul.f32 %v1533, %v2161
        %v2226 = vmul.f32 %v1644, %v2162
        %v2227 = vmul.f32 %v1646, %v2163
        %v2228 = vmul.f32 %v1537, %v2164
        %v2229 = vmul.f32 %v1539, %v2165
        %v2230 = vmul.f32 %v1650, %v2166
        %v2231 = vmul.f32 %v1652, %v2167
        %v2232 = vmul.f32 %v1541, %v2168
        %v2233 = vmul.f32 %v1543, %v2169
        %v2234 = vmul.f32 %v1654, %v2170
        %v2235 = vmul.f32 %v1656, %v2171
        %v2236 = vmul.f32 %v1547, %v2172
        %v2237 = vmul.f32 %v1549, %v2173
        %v2238 = vmul.f32 %v1660, %v2174
        %v2239 = vmul.f32 %v1662, %v2175
        %v2240 = vmul.f32 %v1551, %v2176
        %v2241 = vmul.f32 %v1553, %v2177
        %v2242 = vmul.f32 %v1664, %v2178
        %v2243 = vmul.f32 %v1666, %v2179
        %v2244 = vpack.c.bf16 %v2184, %v2180
        %v2245 = vpack.c.bf16 %v2185, %v2181
        %v2246 = vpack.c.bf16 %v2186, %v2182
        %v2247 = vpack.c.bf16 %v2187, %v2183
        %v2248 = vpack.c.bf16 %v2192, %v2188
        %v2249 = vpack.c.bf16 %v2193, %v2189
        %v2250 = vpack.c.bf16 %v2194, %v2190
        %v2251 = vpack.c.bf16 %v2195, %v2191
        %v2252 = vpack.c.bf16 %v2200, %v2196
        %v2253 = vpack.c.bf16 %v2201, %v2197
        %v2254 = vpack.c.bf16 %v2202, %v2198
        %v2255 = vpack.c.bf16 %v2203, %v2199
        %v2256 = vpack.c.bf16 %v2208, %v2204
        %v2257 = vpack.c.bf16 %v2209, %v2205
        %v2258 = vpack.c.bf16 %v2210, %v2206
        %v2259 = vpack.c.bf16 %v2211, %v2207
        %v2260 = vpack.c.bf16 %v2216, %v2212
        %v2261 = vpack.c.bf16 %v2217, %v2213
        %v2262 = vpack.c.bf16 %v2218, %v2214
        %v2263 = vpack.c.bf16 %v2219, %v2215
        %v2264 = vpack.c.bf16 %v2224, %v2220
        %v2265 = vpack.c.bf16 %v2225, %v2221
        %v2266 = vpack.c.bf16 %v2226, %v2222
        %v2267 = vpack.c.bf16 %v2227, %v2223
        %v2268 = vpack.c.bf16 %v2232, %v2228
        %v2269 = vpack.c.bf16 %v2233, %v2229
        %v2270 = vpack.c.bf16 %v2234, %v2230
        %v2271 = vpack.c.bf16 %v2235, %v2231
        %v2272 = vpack.c.bf16 %v2240, %v2236
        %v2273 = vpack.c.bf16 %v2241, %v2237
        %v2274 = vpack.c.bf16 %v2242, %v2238
        %v2275 = vpack.c.bf16 %v2243, %v2239
        %v2276 = vld [vmem:[#allocation19] sm:$0xf]
        %v2277 = vld [vmem:[#allocation19 + $0x4] sm:$0xf]
        %v2278 = vld [vmem:[#allocation19 + $0x8] sm:$0xf]
        %v2279 = vld [vmem:[#allocation19 + $0xc] sm:$0xf]
        %v2280 = vld [vmem:[#allocation19 + $0x10] sm:$0xf]
        %v2281 = vld [vmem:[#allocation19 + $0x14] sm:$0xf]
        %v2282 = vld [vmem:[#allocation19 + $0x18] sm:$0xf]
        %v2283 = vld [vmem:[#allocation19 + $0x1c] sm:$0xf]
        %v2284 = vld [vmem:[#allocation19 + $0x20] sm:$0xf]
        %v2285 = vld [vmem:[#allocation19 + $0x24] sm:$0xf]
        %v2286 = vld [vmem:[#allocation19 + $0x28] sm:$0xf]
        %v2287 = vld [vmem:[#allocation19 + $0x2c] sm:$0xf]
        %v2288 = vld [vmem:[#allocation19 + $0x30] sm:$0xf]
        %v2289 = vld [vmem:[#allocation19 + $0x34] sm:$0xf]
        %v2290 = vld [vmem:[#allocation19 + $0x38] sm:$0xf]
        %v2291 = vld [vmem:[#allocation19 + $0x3c] sm:$0xf]
        %v2292 = vld [vmem:[#allocation19 + $0x40] sm:$0xf]
        %v2293 = vld [vmem:[#allocation19 + $0x44] sm:$0xf]
        %v2294 = vld [vmem:[#allocation19 + $0x48] sm:$0xf]
        %v2295 = vld [vmem:[#allocation19 + $0x4c] sm:$0xf]
        %v2296 = vld [vmem:[#allocation19 + $0x50] sm:$0xf]
        %v2297 = vld [vmem:[#allocation19 + $0x54] sm:$0xf]
        %v2298 = vld [vmem:[#allocation19 + $0x58] sm:$0xf]
        %v2299 = vld [vmem:[#allocation19 + $0x5c] sm:$0xf]
        %v2300 = vld [vmem:[#allocation19 + $0x60] sm:$0xf]
        %v2301 = vld [vmem:[#allocation19 + $0x64] sm:$0xf]
        %v2302 = vld [vmem:[#allocation19 + $0x68] sm:$0xf]
        %v2303 = vld [vmem:[#allocation19 + $0x6c] sm:$0xf]
        %v2304 = vld [vmem:[#allocation19 + $0x70] sm:$0xf]
        %v2305 = vld [vmem:[#allocation19 + $0x74] sm:$0xf]
        %v2306 = vld [vmem:[#allocation19 + $0x78] sm:$0xf]
        %v2307 = vld [vmem:[#allocation19 + $0x7c] sm:$0xf]
        %v2308 = vld [vmem:[#allocation19 + $0x80] sm:$0xf]
        %v2309 = vld [vmem:[#allocation19 + $0x84] sm:$0xf]
        %v2310 = vld [vmem:[#allocation19 + $0x88] sm:$0xf]
        %v2311 = vld [vmem:[#allocation19 + $0x8c] sm:$0xf]
        %v2312 = vld [vmem:[#allocation19 + $0x90] sm:$0xf]
        %v2313 = vld [vmem:[#allocation19 + $0x94] sm:$0xf]
        %v2314 = vld [vmem:[#allocation19 + $0x98] sm:$0xf]
        %v2315 = vld [vmem:[#allocation19 + $0x9c] sm:$0xf]
        %v2316 = vld [vmem:[#allocation19 + $0xa0] sm:$0xf]
        %v2317 = vld [vmem:[#allocation19 + $0xa4] sm:$0xf]
        %v2318 = vld [vmem:[#allocation19 + $0xa8] sm:$0xf]
        %v2319 = vld [vmem:[#allocation19 + $0xac] sm:$0xf]
        %v2320 = vld [vmem:[#allocation19 + $0xb0] sm:$0xf]
        %v2321 = vld [vmem:[#allocation19 + $0xb4] sm:$0xf]
        %v2322 = vld [vmem:[#allocation19 + $0xb8] sm:$0xf]
        %v2323 = vld [vmem:[#allocation19 + $0xbc] sm:$0xf]
        %v2324 = vld [vmem:[#allocation19 + $0xc0] sm:$0xf]
        %v2325 = vld [vmem:[#allocation19 + $0xc4] sm:$0xf]
        %v2326 = vld [vmem:[#allocation19 + $0xc8] sm:$0xf]
        %v2327 = vld [vmem:[#allocation19 + $0xcc] sm:$0xf]
        %v2328 = vld [vmem:[#allocation19 + $0xd0] sm:$0xf]
        %v2329 = vld [vmem:[#allocation19 + $0xd4] sm:$0xf]
        %v2330 = vld [vmem:[#allocation19 + $0xd8] sm:$0xf]
        %v2331 = vld [vmem:[#allocation19 + $0xdc] sm:$0xf]
        %v2332 = vld [vmem:[#allocation19 + $0xe0] sm:$0xf]
        %v2333 = vld [vmem:[#allocation19 + $0xe4] sm:$0xf]
        %v2334 = vld [vmem:[#allocation19 + $0xe8] sm:$0xf]
        %v2335 = vld [vmem:[#allocation19 + $0xec] sm:$0xf]
        %v2336 = vld [vmem:[#allocation19 + $0xf0] sm:$0xf]
        %v2337 = vld [vmem:[#allocation19 + $0xf4] sm:$0xf]
        %v2338 = vld [vmem:[#allocation19 + $0xf8] sm:$0xf]
        %v2339 = vld [vmem:[#allocation19 + $0xfc] sm:$0xf]
        %v2340 = vld [vmem:[#allocation20] sm:$0x1]
        %v2342 = vlaneseq
        %v2343 = vshrl.u32 %v2342, 7
        %v2344 = vsub.s32 0, %v2343
        %v2345 = vrot.slane %v2340, %v2344
        %v2411 = vunpack.c.l.b16 %v2276
        %v2412 = vunpack.c.l.b16 %v2277
        %v2413 = vunpack.c.l.b16 %v2278
        %v2414 = vunpack.c.l.b16 %v2279
        %v2415 = vunpack.c.l.b16 %v2280
        %v2416 = vunpack.c.l.b16 %v2281
        %v2417 = vunpack.c.l.b16 %v2282
        %v2418 = vunpack.c.l.b16 %v2283
        %v2419 = vunpack.c.l.b16 %v2284
        %v2420 = vunpack.c.l.b16 %v2285
        %v2421 = vunpack.c.l.b16 %v2286
        %v2422 = vunpack.c.l.b16 %v2287
        %v2423 = vunpack.c.l.b16 %v2288
        %v2424 = vunpack.c.l.b16 %v2289
        %v2425 = vunpack.c.l.b16 %v2290
        %v2426 = vunpack.c.l.b16 %v2291
        %v2427 = vunpack.c.l.b16 %v2292
        %v2428 = vunpack.c.l.b16 %v2293
        %v2429 = vunpack.c.l.b16 %v2294
        %v2430 = vunpack.c.l.b16 %v2295
        %v2431 = vunpack.c.l.b16 %v2296
        %v2432 = vunpack.c.l.b16 %v2297
        %v2433 = vunpack.c.l.b16 %v2298
        %v2434 = vunpack.c.l.b16 %v2299
        %v2435 = vunpack.c.l.b16 %v2300
        %v2436 = vunpack.c.l.b16 %v2301
        %v2437 = vunpack.c.l.b16 %v2302
        %v2438 = vunpack.c.l.b16 %v2303
        %v2439 = vunpack.c.l.b16 %v2304
        %v2440 = vunpack.c.l.b16 %v2305
        %v2441 = vunpack.c.l.b16 %v2306
        %v2442 = vunpack.c.l.b16 %v2307
        %v2443 = vunpack.c.l.b16 %v2308
        %v2444 = vunpack.c.l.b16 %v2309
        %v2445 = vunpack.c.l.b16 %v2310
        %v2446 = vunpack.c.l.b16 %v2311
        %v2447 = vunpack.c.l.b16 %v2312
        %v2448 = vunpack.c.l.b16 %v2313
        %v2449 = vunpack.c.l.b16 %v2314
        %v2450 = vunpack.c.l.b16 %v2315
        %v2451 = vunpack.c.l.b16 %v2316
        %v2452 = vunpack.c.l.b16 %v2317
        %v2453 = vunpack.c.l.b16 %v2318
        %v2454 = vunpack.c.l.b16 %v2319
        %v2455 = vunpack.c.l.b16 %v2320
        %v2456 = vunpack.c.l.b16 %v2321
        %v2457 = vunpack.c.l.b16 %v2322
        %v2458 = vunpack.c.l.b16 %v2323
        %v2459 = vunpack.c.l.b16 %v2324
        %v2460 = vunpack.c.l.b16 %v2325
        %v2461 = vunpack.c.l.b16 %v2326
        %v2462 = vunpack.c.l.b16 %v2327
        %v2463 = vunpack.c.l.b16 %v2328
        %v2464 = vunpack.c.l.b16 %v2329
        %v2465 = vunpack.c.l.b16 %v2330
        %v2466 = vunpack.c.l.b16 %v2331
        %v2467 = vunpack.c.l.b16 %v2332
        %v2468 = vunpack.c.l.b16 %v2333
        %v2469 = vunpack.c.l.b16 %v2334
        %v2470 = vunpack.c.l.b16 %v2335
        %v2471 = vunpack.c.l.b16 %v2336
        %v2472 = vunpack.c.l.b16 %v2337
        %v2473 = vunpack.c.l.b16 %v2338
        %v2474 = vunpack.c.l.b16 %v2339
        %v2475 = vpack.c.b16 %v2412, %v2411
        %v2476 = vpack.c.b16 %v2414, %v2413
        %v2477 = vpack.c.b16 %v2416, %v2415
        %v2478 = vpack.c.b16 %v2418, %v2417
        %v2479 = vpack.c.b16 %v2420, %v2419
        %v2480 = vpack.c.b16 %v2422, %v2421
        %v2481 = vpack.c.b16 %v2424, %v2423
        %v2482 = vpack.c.b16 %v2426, %v2425
        %v2483 = vpack.c.b16 %v2428, %v2427
        %v2484 = vpack.c.b16 %v2430, %v2429
        %v2485 = vpack.c.b16 %v2432, %v2431
        %v2486 = vpack.c.b16 %v2434, %v2433
        %v2487 = vpack.c.b16 %v2436, %v2435
        %v2488 = vpack.c.b16 %v2438, %v2437
        %v2489 = vpack.c.b16 %v2440, %v2439
        %v2490 = vpack.c.b16 %v2442, %v2441
        %v2491 = vpack.c.b16 %v2444, %v2443
        %v2492 = vpack.c.b16 %v2446, %v2445
        %v2493 = vpack.c.b16 %v2448, %v2447
        %v2494 = vpack.c.b16 %v2450, %v2449
        %v2495 = vpack.c.b16 %v2452, %v2451
        %v2496 = vpack.c.b16 %v2454, %v2453
        %v2497 = vpack.c.b16 %v2456, %v2455
        %v2498 = vpack.c.b16 %v2458, %v2457
        %v2499 = vpack.c.b16 %v2460, %v2459
        %v2500 = vpack.c.b16 %v2462, %v2461
        %v2501 = vpack.c.b16 %v2464, %v2463
        %v2502 = vpack.c.b16 %v2466, %v2465
        %v2503 = vpack.c.b16 %v2468, %v2467
        %v2504 = vpack.c.b16 %v2470, %v2469
        %v2505 = vpack.c.b16 %v2472, %v2471
        %v2506 = vpack.c.b16 %v2474, %v2473
        %2539 = vmatprep.subr.bf16.mxu0 0
        %2540 = vmatpush1.bf16.msra.mxu0 %v2475
        %2541 = vmatprep.subr.bf16.mxu0 0
        %2542 = vmatpush1.bf16.msra.mxu0 %v2476
        %2543 = vmatprep.subr.bf16.mxu0 0
        %2544 = vmatpush1.bf16.msra.mxu0 %v2477
        %2545 = vmatprep.subr.bf16.mxu0 0
        %2546 = vmatpush1.bf16.msra.mxu0 %v2478
        %2547 = vmatprep.subr.bf16.mxu0 0
        %2548 = vmatpush1.bf16.msra.mxu0 %v2479
        %2549 = vmatprep.subr.bf16.mxu0 0
        %2550 = vmatpush1.bf16.msra.mxu0 %v2480
        %2551 = vmatprep.subr.bf16.mxu0 0
        %2552 = vmatpush1.bf16.msra.mxu0 %v2481
        %2553 = vmatprep.subr.bf16.mxu0 0
        %2554 = vmatpush1.bf16.msra.mxu0 %v2482
        %2555 = vmatprep.subr.bf16.mxu0 0
        %2556 = vmatpush1.bf16.msra.mxu0 %v2483
        %2557 = vmatprep.subr.bf16.mxu0 0
        %2558 = vmatpush1.bf16.msra.mxu0 %v2484
        %2559 = vmatprep.subr.bf16.mxu0 0
        %2560 = vmatpush1.bf16.msra.mxu0 %v2485
        %2561 = vmatprep.subr.bf16.mxu0 0
        %2562 = vmatpush1.bf16.msra.mxu0 %v2486
        %2563 = vmatprep.subr.bf16.mxu0 0
        %2564 = vmatpush1.bf16.msra.mxu0 %v2487
        %2565 = vmatprep.subr.bf16.mxu0 0
        %2566 = vmatpush1.bf16.msra.mxu0 %v2488
        %2567 = vmatprep.subr.bf16.mxu0 0
        %2568 = vmatpush1.bf16.msra.mxu0 %v2489
        %2569 = vmatprep.subr.bf16.mxu0 0
        %2570 = vmatpush1.bf16.msra.mxu0 %v2490
        %2571 = vmatprep.mubr.bf16.mxu0 %v2245
        %2572 = vmatmul.mubr.bf16.gmra.mrb[0].mxu0 %v2244
        %v2573 = vpop.f32.mrb[0].mxu0
        %v2574 = vadd.f32 %v2345, %v2573
        %v2575 = vpop.f32.mrb[0].mxu0
        %v2576 = vpop.f32.mrb[0].mxu0
        %v2577 = vadd.f32 %v2345, %v2576
        %v2578 = vpop.f32.mrb[0].mxu0
        %2579 = vmatprep.mubr.bf16.mxu0 %v2249
        %2580 = vmatmul.mubr.bf16.gmra.mrb[0].mxu0 %v2248
        %v2581 = vpop.f32.mrb[0].mxu0
        %v2582 = vadd.f32 %v2345, %v2581
        %v2583 = vpop.f32.mrb[0].mxu0
        %v2584 = vpop.f32.mrb[0].mxu0
        %v2585 = vadd.f32 %v2345, %v2584
        %v2586 = vpop.f32.mrb[0].mxu0
        %2587 = vmatprep.mubr.bf16.mxu0 %v2253
        %2588 = vmatmul.mubr.bf16.gmra.mrb[0].mxu0 %v2252
        %v2589 = vpop.f32.mrb[0].mxu0
        %v2590 = vadd.f32 %v2345, %v2589
        %v2591 = vpop.f32.mrb[0].mxu0
        %v2592 = vpop.f32.mrb[0].mxu0
        %v2593 = vadd.f32 %v2345, %v2592
        %v2594 = vpop.f32.mrb[0].mxu0
        %2595 = vmatprep.mubr.bf16.mxu0 %v2257
        %2596 = vmatmul.mubr.bf16.gmra.mrb[0].mxu0 %v2256
        %v2597 = vpop.f32.mrb[0].mxu0
        %v2598 = vadd.f32 %v2345, %v2597
        %v2599 = vpop.f32.mrb[0].mxu0
        %v2600 = vpop.f32.mrb[0].mxu0
        %v2601 = vadd.f32 %v2345, %v2600
        %v2602 = vpop.f32.mrb[0].mxu0
        %2603 = vmatprep.mubr.bf16.mxu0 %v2261
        %2604 = vmatmul.mubr.bf16.gmra.mrb[0].mxu0 %v2260
        %v2605 = vpop.f32.mrb[0].mxu0
        %v2606 = vadd.f32 %v2345, %v2605
        %v2607 = vpop.f32.mrb[0].mxu0
        %v2608 = vpop.f32.mrb[0].mxu0
        %v2609 = vadd.f32 %v2345, %v2608
        %v2610 = vpop.f32.mrb[0].mxu0
        %2611 = vmatprep.mubr.bf16.mxu0 %v2265
        %2612 = vmatmul.mubr.bf16.gmra.mrb[0].mxu0 %v2264
        %v2613 = vpop.f32.mrb[0].mxu0
        %v2614 = vadd.f32 %v2345, %v2613
        %v2615 = vpop.f32.mrb[0].mxu0
        %v2616 = vpop.f32.mrb[0].mxu0
        %v2617 = vadd.f32 %v2345, %v2616
        %v2618 = vpop.f32.mrb[0].mxu0
        %2619 = vmatprep.mubr.bf16.mxu0 %v2269
        %2620 = vmatmul.mubr.bf16.gmra.mrb[0].mxu0 %v2268
        %v2621 = vpop.f32.mrb[0].mxu0
        %v2622 = vadd.f32 %v2345, %v2621
        %v2623 = vpop.f32.mrb[0].mxu0
        %v2624 = vpop.f32.mrb[0].mxu0
        %v2625 = vadd.f32 %v2345, %v2624
        %v2626 = vpop.f32.mrb[0].mxu0
        %2627 = vmatprep.mubr.bf16.mxu0 %v2273
        %2628 = vmatmul.mubr.bf16.gmra.mrb[0].mxu0 %v2272
        %v2629 = vpop.f32.mrb[0].mxu0
        %v2630 = vadd.f32 %v2345, %v2629
        %v2631 = vpop.f32.mrb[0].mxu0
        %v2632 = vpop.f32.mrb[0].mxu0
        %v2633 = vadd.f32 %v2345, %v2632
        %v2634 = vpop.f32.mrb[0].mxu0
        %2635 = vdwg.mxu0
        %2636 = vmatprep.subr.bf16.mxu0 0
        %2637 = vmatpush1.bf16.msra.mxu0 %v2491
        %2638 = vmatprep.subr.bf16.mxu0 0
        %2639 = vmatpush1.bf16.msra.mxu0 %v2492
        %2640 = vmatprep.subr.bf16.mxu0 0
        %2641 = vmatpush1.bf16.msra.mxu0 %v2493
        %2642 = vmatprep.subr.bf16.mxu0 0
        %2643 = vmatpush1.bf16.msra.mxu0 %v2494
        %2644 = vmatprep.subr.bf16.mxu0 0
        %2645 = vmatpush1.bf16.msra.mxu0 %v2495
        %2646 = vmatprep.subr.bf16.mxu0 0
        %2647 = vmatpush1.bf16.msra.mxu0 %v2496
        %2648 = vmatprep.subr.bf16.mxu0 0
        %2649 = vmatpush1.bf16.msra.mxu0 %v2497
        %2650 = vmatprep.subr.bf16.mxu0 0
        %2651 = vmatpush1.bf16.msra.mxu0 %v2498
        %2652 = vmatprep.subr.bf16.mxu0 0
        %2653 = vmatpush1.bf16.msra.mxu0 %v2499
        %2654 = vmatprep.subr.bf16.mxu0 0
        %2655 = vmatpush1.bf16.msra.mxu0 %v2500
        %2656 = vmatprep.subr.bf16.mxu0 0
        %2657 = vmatpush1.bf16.msra.mxu0 %v2501
        %2658 = vmatprep.subr.bf16.mxu0 0
        %2659 = vmatpush1.bf16.msra.mxu0 %v2502
        %2660 = vmatprep.subr.bf16.mxu0 0
        %2661 = vmatpush1.bf16.msra.mxu0 %v2503
        %2662 = vmatprep.subr.bf16.mxu0 0
        %2663 = vmatpush1.bf16.msra.mxu0 %v2504
        %2664 = vmatprep.subr.bf16.mxu0 0
        %2665 = vmatpush1.bf16.msra.mxu0 %v2505
        %2666 = vmatprep.subr.bf16.mxu0 0
        %2667 = vmatpush1.bf16.msra.mxu0 %v2506
        %2668 = vmatprep.mubr.bf16.mxu0 %v2247
        %2669 = vmatmul.mubr.bf16.gmra.mrb[0].mxu0 %v2246
        %v2670 = vpop.f32.mrb[0].mxu0
        %v2671 = vadd.f32 %v2574, %v2670
        %v2672 = vpop.f32.mrb[0].mxu0
        %v2673 = vpop.f32.mrb[0].mxu0
        %v2674 = vadd.f32 %v2577, %v2673
        %v2675 = vpop.f32.mrb[0].mxu0
        %2676 = vmatprep.mubr.bf16.mxu0 %v2251
        %2677 = vmatmul.mubr.bf16.gmra.mrb[0].mxu0 %v2250
        %v2678 = vpop.f32.mrb[0].mxu0
        %v2679 = vadd.f32 %v2582, %v2678
        %v2680 = vpop.f32.mrb[0].mxu0
        %v2681 = vpop.f32.mrb[0].mxu0
        %v2682 = vadd.f32 %v2585, %v2681
        %v2683 = vpop.f32.mrb[0].mxu0
        %2684 = vmatprep.mubr.bf16.mxu0 %v2255
        %2685 = vmatmul.mubr.bf16.gmra.mrb[0].mxu0 %v2254
        %v2686 = vpop.f32.mrb[0].mxu0
        %v2687 = vadd.f32 %v2590, %v2686
        %v2688 = vpop.f32.mrb[0].mxu0
        %v2689 = vpop.f32.mrb[0].mxu0
        %v2690 = vadd.f32 %v2593, %v2689
        %v2691 = vpop.f32.mrb[0].mxu0
        %2692 = vmatprep.mubr.bf16.mxu0 %v2259
        %2693 = vmatmul.mubr.bf16.gmra.mrb[0].mxu0 %v2258
        %v2694 = vpop.f32.mrb[0].mxu0
        %v2695 = vadd.f32 %v2598, %v2694
        %v2696 = vpop.f32.mrb[0].mxu0
        %v2697 = vpop.f32.mrb[0].mxu0
        %v2698 = vadd.f32 %v2601, %v2697
        %v2699 = vpop.f32.mrb[0].mxu0
        %2700 = vmatprep.mubr.bf16.mxu0 %v2263
        %2701 = vmatmul.mubr.bf16.gmra.mrb[0].mxu0 %v2262
        %v2702 = vpop.f32.mrb[0].mxu0
        %v2703 = vadd.f32 %v2606, %v2702
        %v2704 = vpop.f32.mrb[0].mxu0
        %v2705 = vpop.f32.mrb[0].mxu0
        %v2706 = vadd.f32 %v2609, %v2705
        %v2707 = vpop.f32.mrb[0].mxu0
        %2708 = vmatprep.mubr.bf16.mxu0 %v2267
        %2709 = vmatmul.mubr.bf16.gmra.mrb[0].mxu0 %v2266
        %v2710 = vpop.f32.mrb[0].mxu0
        %v2711 = vadd.f32 %v2614, %v2710
        %v2712 = vpop.f32.mrb[0].mxu0
        %v2713 = vpop.f32.mrb[0].mxu0
        %v2714 = vadd.f32 %v2617, %v2713
        %v2715 = vpop.f32.mrb[0].mxu0
        %2716 = vmatprep.mubr.bf16.mxu0 %v2271
        %2717 = vmatmul.mubr.bf16.gmra.mrb[0].mxu0 %v2270
        %v2718 = vpop.f32.mrb[0].mxu0
        %v2719 = vadd.f32 %v2622, %v2718
        %v2720 = vpop.f32.mrb[0].mxu0
        %v2721 = vpop.f32.mrb[0].mxu0
        %v2722 = vadd.f32 %v2625, %v2721
        %v2723 = vpop.f32.mrb[0].mxu0
        %2724 = vmatprep.mubr.bf16.mxu0 %v2275
        %2725 = vmatmul.mubr.bf16.gmra.mrb[0].mxu0 %v2274
        %v2726 = vpop.f32.mrb[0].mxu0
        %v2727 = vadd.f32 %v2630, %v2726
        %v2728 = vpop.f32.mrb[0].mxu0
        %v2729 = vpop.f32.mrb[0].mxu0
        %v2730 = vadd.f32 %v2633, %v2729
        %v2731 = vpop.f32.mrb[0].mxu0
        %2732 = vdwg.mxu0
        %v2733 = vld [vmem:[%s619] sm:$0x1]
        %v2735 = vlaneseq
        %v2736 = vshrl.u32 %v2735, 7
        %v2737 = vsub.s32 0, %v2736
        %v2738 = vrot.slane %v2733, %v2737
        %v2740 = vmul.f32 %v2738, %v2671
        %v2741 = vmul.f32 %v2738, %v2674
        %v2742 = vmul.f32 %v2738, %v2679
        %v2743 = vmul.f32 %v2738, %v2682
        %v2744 = vmul.f32 %v2738, %v2687
        %v2745 = vmul.f32 %v2738, %v2690
        %v2746 = vmul.f32 %v2738, %v2695
        %v2747 = vmul.f32 %v2738, %v2698
        %v2748 = vmul.f32 %v2738, %v2703
        %v2749 = vmul.f32 %v2738, %v2706
        %v2750 = vmul.f32 %v2738, %v2711
        %v2751 = vmul.f32 %v2738, %v2714
        %v2752 = vmul.f32 %v2738, %v2719
        %v2753 = vmul.f32 %v2738, %v2722
        %v2754 = vmul.f32 %v2738, %v2727
        %v2755 = vmul.f32 %v2738, %v2730
        %v2756 = vadd.f32 %v980, %v2740
        %v2757 = vadd.f32 %v981, %v2741
        %v2758 = vadd.f32 %v982, %v2742
        %v2759 = vadd.f32 %v983, %v2743
        %v2760 = vadd.f32 %v984, %v2744
        %v2761 = vadd.f32 %v985, %v2745
        %v2762 = vadd.f32 %v986, %v2746
        %v2763 = vadd.f32 %v987, %v2747
        %v2764 = vadd.f32 %v988, %v2748
        %v2765 = vadd.f32 %v989, %v2749
        %v2766 = vadd.f32 %v990, %v2750
        %v2767 = vadd.f32 %v991, %v2751
        %v2768 = vadd.f32 %v992, %v2752
        %v2769 = vadd.f32 %v993, %v2753
        %v2770 = vadd.f32 %v994, %v2754
        %v2771 = vadd.f32 %v995, %v2755
        %2772 = vst [vmem:[%s704] sm:$0xff] %v2756
        %2773 = vst [vmem:[%s704 + $0x8] sm:$0xff] %v2757
        %2774 = vst [vmem:[%s704 + $0x10] sm:$0xff] %v2758
        %2775 = vst [vmem:[%s704 + $0x18] sm:$0xff] %v2759
        %2776 = vst [vmem:[%s704 + $0x20] sm:$0xff] %v2760
        %2777 = vst [vmem:[%s704 + $0x28] sm:$0xff] %v2761
        %2778 = vst [vmem:[%s704 + $0x30] sm:$0xff] %v2762
        %2779 = vst [vmem:[%s704 + $0x38] sm:$0xff] %v2763
        %2780 = vst [vmem:[%s704 + $0x40] sm:$0xff] %v2764
        %2781 = vst [vmem:[%s704 + $0x48] sm:$0xff] %v2765
        %2782 = vst [vmem:[%s704 + $0x50] sm:$0xff] %v2766
        %2783 = vst [vmem:[%s704 + $0x58] sm:$0xff] %v2767
        %2784 = vst [vmem:[%s704 + $0x60] sm:$0xff] %v2768
        %2785 = vst [vmem:[%s704 + $0x68] sm:$0xff] %v2769
        %2786 = vst [vmem:[%s704 + $0x70] sm:$0xff] %v2770
        %2787 = vst [vmem:[%s704 + $0x78] sm:$0xff] %v2771
        %s2788 = sand.u32 %s349, 1
        %s2789 = scalar_lea.sflag [#allocation4], %s2788
        %s2790 = sand.u32 %s349, 1
        %s2791 = smul.addr %s2790, 128
        %s2792 = scalar_lea.vmem [#allocation22], %s2791
        // Predicated region
        $region117: #{var_forward.14} parent=67 // pred_check
          %p2793 = pneg %p359
        $region118: #{var_forward.14} parent=67 // pred_check_branch
          %2795 = sbr.rel (%p2793) target = $region120
        $region119: #{var_forward.14} parent=67 // pred_region
          %s2796 = smul.u32 16, %s46
          %s2798 = ssub.s32 2048, 2048
          %2799 = vsyncadd %s2789, %s2798
          %s2800 = smul.addr %s45, 16
          %s2801 = sadd.s32 %s2796, %s2800
          %s2802 = smul.addr %s2801, 128
          %s2803 = scalar_lea.hbm %s12, %s2802
          %s2804 = sshll.u32 %s2792, 4
          %s2805 = int_to_ptr.vmem [resolvable:$true] %s2804
          %2810 = dma.vmem_to_hbm [thread:$0]  %s2805, 2048, %s2803, %s2789, 128, 128, 8
        $region120: #{var_forward.14} parent=67 // pred_fallthru
          _
      $region68: #{var_forward.14} parent=5 // pred_fallthru
        _
      %p2811 = scmp.le.s32.totalorder 2, %s36
      // Predicated region
      $region121: #{var_forward.14} parent=5 // pred_check
        %p2812 = pneg %p2811
      $region122: #{var_forward.14} parent=5 // pred_check_branch
        %2814 = sbr.rel (%p2812) target = $region124
      $region123: #{var_forward.14} parent=5 // pred_region
        %s2815 = ssub.s32 %s36, 2
        // Predicated region
        $region125: #{var_forward.14} parent=123 // pred_check
          %p2816 = pneg %p365
        $region126: #{var_forward.14} parent=123 // pred_check_branch
          %2818 = sbr.rel (%p2816) target = $region128
        $region127: #{var_forward.14} parent=123 // pred_region
          %s2819 = sand.u32 %s350, 1
          %s2820 = scalar_lea.sflag [#allocation4], %s2819
          %s2821 = sand.u32 %s350, 1
          %s2822 = smul.addr %s2821, 128
          %s2823 = scalar_lea.vmem [#allocation22], %s2822
          %2824 = dma.done %s2820, 2048
        $region128: #{var_forward.14} parent=123 // pred_fallthru
          _
      $region124: #{var_forward.14} parent=5 // pred_fallthru
        _
    $region6: #{var_forward.14} parent=1 // loop_footer
      %s40 = sadd.s32 1, %s36
    $region7: #{var_forward.14} parent=1 // loop_footer_branch
      %35 = sbr.rel target = $region3
    $region8: #{var_forward.14} parent=1 // loop_exit
      _
    %2825 = vsyncpa [#allocation3], 1
    %s2826 = scalar_lea.sflag [#allocation3], 1
    %2827 = vsyncpa %s2826, 1
    %2828 = vsyncpa [#allocation6], 1
    %s2829 = scalar_lea.sflag [#allocation6], 1
    %2830 = vsyncpa %s2829, 1
    %2831 = vsyncpa [#allocation9], 1
    %s2832 = scalar_lea.sflag [#allocation9], 1
    %2833 = vsyncpa %s2832, 1
    %2834 = vsyncpa [#allocation12], 1
    %s2835 = scalar_lea.sflag [#allocation12], 1
    %2836 = vsyncpa %s2835, 1
    %2837 = vsyncpa [#allocation15], 1
    %2838 = vsyncpa [#allocation18], 1
    %2839 = vsyncpa [#allocation21], 1
    %2840 = vsyncpa [#allocation4], 1
    %s2841 = scalar_lea.sflag [#allocation4], 1
    %2842 = vsyncpa %s2841, 1

</llo_original>
